<compile_context>
chip_gen: v6e
topology: v6e:2x2x1
jax: 0.10.0
libtpu: 0.0.40
codegen_flags: <defaults>
</compile_context>

<pallas_src>
import functools

import jax
import jax.numpy as jnp
from jax import lax
from jax.experimental import pallas as pl
from jax.experimental.pallas import tpu as pltpu


# ----------------------------------------------------------------------------
# Fused bidirectional-GRU + attention-pooling kernel (one level of the HAN).
# PyTorch GRU gate equations (gate order r, z, n):
#   r = sigmoid(Wx_r x + b_ir + Wh_r h + b_hr)
#   z = sigmoid(Wx_z x + b_iz + Wh_z h + b_hz)
#   n = tanh  (Wx_n x + b_in + r * (Wh_n h + b_hn))
#   h = (1 - z) * n + z * h
# Attention pooling (matches the reference module):
#   u = tanh(h @ W + b); s = sum(u * ctx_row, -1); p = softmax_T(s)
#   w = where(mask != 0, p, 0); w = w / (sum_T(w) + 1e-4); pooled = sum_T(h * w)
# ----------------------------------------------------------------------------
def _gru_attn_kernel(with_fc,
                     x_ref, mask_ref,
                     wih_f_ref, whh_f_ref, bih_f_ref, bhh_f_ref,
                     wih_b_ref, whh_b_ref, bih_b_ref, bhh_b_ref,
                     dense_w_ref, dense_b_ref, ctx_ref,
                     *rest):
    if with_fc:
        (fc_w_ref, fc_b_ref, out_ref,
         gxf_scr, gxb_scr, hf_scr, hb_scr) = rest
    else:
        (out_ref, gxf_scr, gxb_scr, hf_scr, hb_scr) = rest

    T, N, E = x_ref.shape
    H = whh_f_ref.shape[-1]
    D = 2 * H
    f32 = jnp.float32

    # ---- Hoisted input-side gate projections (off the sequential chain). ----
    # One [T*N, E] @ [E, 3H] matmul per direction, bias folded in; the
    # per-gate split happens once (static lane slices), outside the loop.
    x2d = x_ref[...].reshape(T * N, E)
    gx_f = jnp.dot(x2d, wih_f_ref[...], preferred_element_type=f32) + bih_f_ref[...]
    gx_b = jnp.dot(x2d, wih_b_ref[...], preferred_element_type=f32) + bih_b_ref[...]
    for g in range(3):  # static python loop over gates r, z, n
        gxf_scr[g] = gx_f[:, g * H:(g + 1) * H].reshape(T, N, H)
        gxb_scr[g] = gx_b[:, g * H:(g + 1) * H].reshape(T, N, H)

    # Hoist recurrent weights / biases (loaded once, reused every step).
    whhf = [whh_f_ref[g] for g in range(3)]
    bhhf = [bhh_f_ref[g] for g in range(3)]
    whhb = [whh_b_ref[g] for g in range(3)]
    bhhb = [bhh_b_ref[g] for g in range(3)]

    def cell(gx_r, gx_z, gx_n, h, whh, bhh):
        r = jax.nn.sigmoid(gx_r + jnp.dot(h, whh[0], preferred_element_type=f32) + bhh[0])
        z = jax.nn.sigmoid(gx_z + jnp.dot(h, whh[1], preferred_element_type=f32) + bhh[1])
        n = jnp.tanh(gx_n + r * (jnp.dot(h, whh[2], preferred_element_type=f32) + bhh[2]))
        return (1.0 - z) * n + z * h

    h0 = jnp.zeros((N, H), f32)

    # ---- Interleaved forward / backward recurrence (two independent chains
    #      in one unrolled loop so the scheduler can overlap them). ----
    def body(t, carry):
        h_f, h_b = carry
        tb = T - 1 - t
        h_f = cell(gxf_scr[0, t], gxf_scr[1, t], gxf_scr[2, t], h_f, whhf, bhhf)
        h_b = cell(gxb_scr[0, tb], gxb_scr[1, tb], gxb_scr[2, tb], h_b, whhb, bhhb)
        hf_scr[t] = h_f
        hb_scr[tb] = h_b
        return (h_f, h_b)

    lax.fori_loop(0, T, body, (h0, h0), unroll=True)

    # ---- Batched attention pooling over all N sequences at once. ----
    h_all = jnp.concatenate([hf_scr[...], hb_scr[...]], axis=-1)            # [T, N, D]
    u = jnp.tanh(jnp.dot(h_all.reshape(T * N, D), dense_w_ref[...],
                         preferred_element_type=f32) + dense_b_ref[...])
    # context score as a VPU multiply + lane reduction (ctx is a [1, D] row)
    s = jnp.sum(u.reshape(T, N, D) * ctx_ref[...], axis=-1, keepdims=True)  # [T, N, 1]
    s_max = jnp.max(s, axis=0, keepdims=True)
    e = jnp.exp(s - s_max)
    p = e / jnp.sum(e, axis=0, keepdims=True)
    m = mask_ref[...]                                                       # [T, N, 1]
    w = jnp.where(m != 0.0, p, jnp.zeros_like(p))
    w = w / (jnp.sum(w, axis=0, keepdims=True) + 0.0001)
    pooled = jnp.sum(h_all * w, axis=0)                                     # [N, D]

    if with_fc:
        out_ref[...] = (jnp.dot(pooled, fc_w_ref[...], preferred_element_type=f32)
                        + fc_b_ref[...])
    else:
        out_ref[...] = pooled


def gru_attn_level(x_tm, mask_tm, gru, dense_w, dense_b, ctx_row,
                   fc_w=None, fc_b=None):
    """One HAN level: x_tm [T, N, in], mask_tm [T, N, 1] -> [N, 2H] (or [N, C] if fc given)."""
    T, N, _ = x_tm.shape
    H = gru["whh_f"].shape[-1]
    D = 2 * H
    with_fc = fc_w is not None
    out_dim = fc_w.shape[1] if with_fc else D

    vmem = pl.BlockSpec(memory_space=pltpu.MemorySpace.VMEM)
    args = [x_tm, mask_tm,
            gru["wih_f"], gru["whh_f"], gru["bih_f"], gru["bhh_f"],
            gru["wih_b"], gru["whh_b"], gru["bih_b"], gru["bhh_b"],
            dense_w, dense_b, ctx_row]
    if with_fc:
        args += [fc_w, fc_b]

    return pl.pallas_call(
        functools.partial(_gru_attn_kernel, with_fc),
        out_shape=jax.ShapeDtypeStruct((N, out_dim), jnp.float32),
        in_specs=[vmem] * len(args),
        out_specs=vmem,
        scratch_shapes=[
            pltpu.VMEM((3, T, N, H), jnp.float32),   # hoisted gx, forward dir
            pltpu.VMEM((3, T, N, H), jnp.float32),   # hoisted gx, backward dir
            pltpu.VMEM((T, N, H), jnp.float32),      # forward hidden states
            pltpu.VMEM((T, N, H), jnp.float32),      # backward hidden states
        ],
    )(*args)


# ----------------------------------------------------------------------------
# Parameters (deterministic synthetic init; shapes follow HAN_Model.__init__,
# but input-side GRU weights are stored gate-stacked [in, 3H] / [1, 3H],
# recurrent weights per-gate [3, H, H] / [3, 1, H], contexts as [1, D] rows).
# ----------------------------------------------------------------------------
def init_params(key, vocab_size, embedding_size, gru_size, class_num):
    D = 2 * gru_size
    ks = list(jax.random.split(key, 25))

    def u(k, shape, scale=0.1):
        return jax.random.uniform(k, shape, jnp.float32, -1.0, 1.0) * scale

    def gru_params(keys, in_size):
        return {
            "wih_f": u(keys[0], (in_size, 3 * gru_size)),
            "whh_f": u(keys[1], (3, gru_size, gru_size)),
            "bih_f": u(keys[2], (1, 3 * gru_size)),
            "bhh_f": u(keys[3], (3, 1, gru_size)),
            "wih_b": u(keys[4], (in_size, 3 * gru_size)),
            "whh_b": u(keys[5], (3, gru_size, gru_size)),
            "bih_b": u(keys[6], (1, 3 * gru_size)),
            "bhh_b": u(keys[7], (3, 1, gru_size)),
        }

    return {
        "embedding": u(ks[0], (vocab_size, embedding_size), 0.5),
        "word_gru": gru_params(ks[1:9], embedding_size),
        "word_dense_w": u(ks[9], (D, D)),
        "word_dense_b": u(ks[10], (1, D)),
        "word_context": u(ks[11], (1, D)),     # row layout of the [D, 1] parameter
        "sent_gru": gru_params(ks[12:20], D),
        "sent_dense_w": u(ks[20], (D, D)),
        "sent_dense_b": u(ks[21], (1, D)),
        "sent_context": u(ks[22], (1, D)),
        "fc_w": u(ks[23], (D, class_num)),
        "fc_b": u(ks[24], (1, class_num)),
    }


# ----------------------------------------------------------------------------
# Forward pass (mirrors HAN_Model.forward with gpu=False).
# ----------------------------------------------------------------------------
def han_forward(params, x):
    B, S, L = x.shape
    ids = x.reshape(B * S, L)                                          # [N, L]
    # TODO(synk): embedding gather stays in plain JAX (data-dependent gather).
    emb = jnp.take(params["embedding"], ids, axis=0)                   # [N, L, E]

    # word level: fused biGRU + attention pooling (time-major inside kernel)
    emb_tm = jnp.transpose(emb, (1, 0, 2))                             # [L, N, E]
    word_mask = jnp.transpose(ids, (1, 0)).astype(jnp.float32)[:, :, None]  # [L, N, 1]
    sent_vec = gru_attn_level(emb_tm, word_mask, params["word_gru"],
                              params["word_dense_w"], params["word_dense_b"],
                              params["word_context"])                  # [N, 2H]

    D = sent_vec.shape[-1]
    sv_tm = jnp.transpose(sent_vec.reshape(B, S, D), (1, 0, 2))        # [S, B, 2H]
    sent_mask = jnp.transpose(jnp.sum(x, axis=2),
                              (1, 0)).astype(jnp.float32)[:, :, None]  # [S, B, 1]

    # sentence level: fused biGRU + attention pooling + final FC
    logits = gru_attn_level(sv_tm, sent_mask, params["sent_gru"],
                            params["sent_dense_w"], params["sent_dense_b"],
                            params["sent_context"],
                            params["fc_w"], params["fc_b"])            # [B, C]
    return logits


if __name__ == "__main__":
    vocab_size, embedding_size, gru_size, class_num = 97, 32, 32, 5
    B, S, L = 2, 4, 8   # batch, sentences per doc, words per sentence

    key = jax.random.PRNGKey(0)
    pkey, xkey = jax.random.split(key)
    params = init_params(pkey, vocab_size, embedding_size, gru_size, class_num)

    x = jax.random.randint(xkey, (B, S, L), 0, vocab_size, dtype=jnp.int32)
    x = x.at[0, 0, 5:].set(0)   # padded words (exercise word-level mask)
    x = x.at[1, 3, :].set(0)    # fully padded sentence (exercise sentence mask)

    out = jax.jit(han_forward)(params, x)
    out = jax.block_until_ready(out)
    assert out.shape == (B, class_num) and out.dtype == jnp.float32
    print("KERNEL_OK")
</pallas_src>

<mosaic_0001>
module attributes {stable_mosaic.version = 11 : i64} {
  func.func @_gru_attn_kernel(%arg0: memref<8x8x32xf32, #tpu.memory_space<vmem>>, %arg1: memref<8x8x1xf32, #tpu.memory_space<vmem>>, %arg2: memref<32x96xf32, #tpu.memory_space<vmem>>, %arg3: memref<3x32x32xf32, #tpu.memory_space<vmem>>, %arg4: memref<1x96xf32, #tpu.memory_space<vmem>>, %arg5: memref<3x1x32xf32, #tpu.memory_space<vmem>>, %arg6: memref<32x96xf32, #tpu.memory_space<vmem>>, %arg7: memref<3x32x32xf32, #tpu.memory_space<vmem>>, %arg8: memref<1x96xf32, #tpu.memory_space<vmem>>, %arg9: memref<3x1x32xf32, #tpu.memory_space<vmem>>, %arg10: memref<64x64xf32, #tpu.memory_space<vmem>>, %arg11: memref<1x64xf32, #tpu.memory_space<vmem>>, %arg12: memref<1x64xf32, #tpu.memory_space<vmem>>, %arg13: memref<8x64xf32, #tpu.memory_space<vmem>>, %arg14: memref<3x8x8x32xf32, #tpu.memory_space<vmem>>, %arg15: memref<3x8x8x32xf32, #tpu.memory_space<vmem>>, %arg16: memref<8x8x32xf32, #tpu.memory_space<vmem>>, %arg17: memref<8x8x32xf32, #tpu.memory_space<vmem>>) attributes {dimension_semantics = [], scalar_prefetch = 0 : i64, scratch_operands = 4 : i64, tpu.core_type = #tpu.core_type<tc>} {
    %c0 = arith.constant 0 : index
    %c0_0 = arith.constant 0 : index
    %c0_1 = arith.constant 0 : index
    %0 = vector.load %arg0[%c0, %c0_0, %c0_1] : memref<8x8x32xf32, #tpu.memory_space<vmem>>, vector<8x8x32xf32>
    %1 = vector.shape_cast %0 : vector<8x8x32xf32> to vector<64x32xf32>
    %c0_2 = arith.constant 0 : index
    %c0_3 = arith.constant 0 : index
    %2 = vector.load %arg2[%c0_2, %c0_3] : memref<32x96xf32, #tpu.memory_space<vmem>>, vector<32x96xf32>
    %cst = arith.constant dense<0.000000e+00> : vector<64x96xf32>
    %3 = tpu.matmul %1, %2, %cst {dimension_numbers = #tpu.dot_dimension_numbers<[1], [0], [0], [1], [0, 0, 1, 1], [], []>} : vector<64x32xf32>, vector<32x96xf32>, vector<64x96xf32> -> vector<64x96xf32>
    %c0_4 = arith.constant 0 : index
    %c0_5 = arith.constant 0 : index
    %4 = vector.load %arg4[%c0_4, %c0_5] : memref<1x96xf32, #tpu.memory_space<vmem>>, vector<1x96xf32>
    %5 = vector.broadcast %4 : vector<1x96xf32> to vector<64x96xf32>
    %6 = arith.addf %3, %5 : vector<64x96xf32>
    %c0_6 = arith.constant 0 : index
    %c0_7 = arith.constant 0 : index
    %7 = vector.load %arg6[%c0_6, %c0_7] : memref<32x96xf32, #tpu.memory_space<vmem>>, vector<32x96xf32>
    %cst_8 = arith.constant dense<0.000000e+00> : vector<64x96xf32>
    %8 = tpu.matmul %1, %7, %cst_8 {dimension_numbers = #tpu.dot_dimension_numbers<[1], [0], [0], [1], [0, 0, 1, 1], [], []>} : vector<64x32xf32>, vector<32x96xf32>, vector<64x96xf32> -> vector<64x96xf32>
    %c0_9 = arith.constant 0 : index
    %c0_10 = arith.constant 0 : index
    %9 = vector.load %arg8[%c0_9, %c0_10] : memref<1x96xf32, #tpu.memory_space<vmem>>, vector<1x96xf32>
    %10 = vector.broadcast %9 : vector<1x96xf32> to vector<64x96xf32>
    %11 = arith.addf %8, %10 : vector<64x96xf32>
    %12 = vector.extract_strided_slice %6 {offsets = [0, 0], sizes = [64, 32], strides = [1, 1]} : vector<64x96xf32> to vector<64x32xf32>
    %13 = vector.shape_cast %12 : vector<64x32xf32> to vector<8x8x32xf32>
    %c0_11 = arith.constant 0 : index
    %c0_12 = arith.constant 0 : index
    %c0_13 = arith.constant 0 : index
    %c0_14 = arith.constant 0 : index
    %14 = vector.load %arg14[%c0_11, %c0_12, %c0_13, %c0_14] : memref<3x8x8x32xf32, #tpu.memory_space<vmem>>, vector<1x8x8x32xf32>
    %15 = vector.shape_cast %14 : vector<1x8x8x32xf32> to vector<8x8x32xf32>
    %16 = vector.shape_cast %13 : vector<8x8x32xf32> to vector<1x8x8x32xf32>
    tpu.vector_store %arg14[%c0_11, %c0_12, %c0_13, %c0_14], %16 {strides = array<i32>} : memref<3x8x8x32xf32, #tpu.memory_space<vmem>>, vector<1x8x8x32xf32>,
    %17 = vector.extract_strided_slice %11 {offsets = [0, 0], sizes = [64, 32], strides = [1, 1]} : vector<64x96xf32> to vector<64x32xf32>
    %18 = vector.shape_cast %17 : vector<64x32xf32> to vector<8x8x32xf32>
    %c0_15 = arith.constant 0 : index
    %c0_16 = arith.constant 0 : index
    %c0_17 = arith.constant 0 : index
    %c0_18 = arith.constant 0 : index
    %19 = vector.load %arg15[%c0_15, %c0_16, %c0_17, %c0_18] : memref<3x8x8x32xf32, #tpu.memory_space<vmem>>, vector<1x8x8x32xf32>
    %20 = vector.shape_cast %19 : vector<1x8x8x32xf32> to vector<8x8x32xf32>
    %21 = vector.shape_cast %18 : vector<8x8x32xf32> to vector<1x8x8x32xf32>
    tpu.vector_store %arg15[%c0_15, %c0_16, %c0_17, %c0_18], %21 {strides = array<i32>} : memref<3x8x8x32xf32, #tpu.memory_space<vmem>>, vector<1x8x8x32xf32>,
    %22 = vector.extract_strided_slice %6 {offsets = [0, 32], sizes = [64, 32], strides = [1, 1]} : vector<64x96xf32> to vector<64x32xf32>
    %23 = vector.shape_cast %22 : vector<64x32xf32> to vector<8x8x32xf32>
    %c1 = arith.constant 1 : index
    %c0_19 = arith.constant 0 : index
    %c0_20 = arith.constant 0 : index
    %c0_21 = arith.constant 0 : index
    %24 = vector.load %arg14[%c1, %c0_19, %c0_20, %c0_21] : memref<3x8x8x32xf32, #tpu.memory_space<vmem>>, vector<1x8x8x32xf32>
    %25 = vector.shape_cast %24 : vector<1x8x8x32xf32> to vector<8x8x32xf32>
    %26 = vector.shape_cast %23 : vector<8x8x32xf32> to vector<1x8x8x32xf32>
    tpu.vector_store %arg14[%c1, %c0_19, %c0_20, %c0_21], %26 {strides = array<i32>} : memref<3x8x8x32xf32, #tpu.memory_space<vmem>>, vector<1x8x8x32xf32>,
    %27 = vector.extract_strided_slice %11 {offsets = [0, 32], sizes = [64, 32], strides = [1, 1]} : vector<64x96xf32> to vector<64x32xf32>
    %28 = vector.shape_cast %27 : vector<64x32xf32> to vector<8x8x32xf32>
    %c1_22 = arith.constant 1 : index
    %c0_23 = arith.constant 0 : index
    %c0_24 = arith.constant 0 : index
    %c0_25 = arith.constant 0 : index
    %29 = vector.load %arg15[%c1_22, %c0_23, %c0_24, %c0_25] : memref<3x8x8x32xf32, #tpu.memory_space<vmem>>, vector<1x8x8x32xf32>
    %30 = vector.shape_cast %29 : vector<1x8x8x32xf32> to vector<8x8x32xf32>
    %31 = vector.shape_cast %28 : vector<8x8x32xf32> to vector<1x8x8x32xf32>
    tpu.vector_store %arg15[%c1_22, %c0_23, %c0_24, %c0_25], %31 {strides = array<i32>} : memref<3x8x8x32xf32, #tpu.memory_space<vmem>>, vector<1x8x8x32xf32>,
    %32 = vector.extract_strided_slice %6 {offsets = [0, 64], sizes = [64, 32], strides = [1, 1]} : vector<64x96xf32> to vector<64x32xf32>
    %33 = vector.shape_cast %32 : vector<64x32xf32> to vector<8x8x32xf32>
    %c2 = arith.constant 2 : index
    %c0_26 = arith.constant 0 : index
    %c0_27 = arith.constant 0 : index
    %c0_28 = arith.constant 0 : index
    %34 = vector.load %arg14[%c2, %c0_26, %c0_27, %c0_28] : memref<3x8x8x32xf32, #tpu.memory_space<vmem>>, vector<1x8x8x32xf32>
    %35 = vector.shape_cast %34 : vector<1x8x8x32xf32> to vector<8x8x32xf32>
    %36 = vector.shape_cast %33 : vector<8x8x32xf32> to vector<1x8x8x32xf32>
    tpu.vector_store %arg14[%c2, %c0_26, %c0_27, %c0_28], %36 {strides = array<i32>} : memref<3x8x8x32xf32, #tpu.memory_space<vmem>>, vector<1x8x8x32xf32>,
    %37 = vector.extract_strided_slice %11 {offsets = [0, 64], sizes = [64, 32], strides = [1, 1]} : vector<64x96xf32> to vector<64x32xf32>
    %38 = vector.shape_cast %37 : vector<64x32xf32> to vector<8x8x32xf32>
    %c2_29 = arith.constant 2 : index
    %c0_30 = arith.constant 0 : index
    %c0_31 = arith.constant 0 : index
    %c0_32 = arith.constant 0 : index
    %39 = vector.load %arg15[%c2_29, %c0_30, %c0_31, %c0_32] : memref<3x8x8x32xf32, #tpu.memory_space<vmem>>, vector<1x8x8x32xf32>
    %40 = vector.shape_cast %39 : vector<1x8x8x32xf32> to vector<8x8x32xf32>
    %41 = vector.shape_cast %38 : vector<8x8x32xf32> to vector<1x8x8x32xf32>
    tpu.vector_store %arg15[%c2_29, %c0_30, %c0_31, %c0_32], %41 {strides = array<i32>} : memref<3x8x8x32xf32, #tpu.memory_space<vmem>>, vector<1x8x8x32xf32>,
    %c0_33 = arith.constant 0 : index
    %c0_34 = arith.constant 0 : index
    %c0_35 = arith.constant 0 : index
    %42 = vector.load %arg3[%c0_33, %c0_34, %c0_35] : memref<3x32x32xf32, #tpu.memory_space<vmem>>, vector<1x32x32xf32>
    %43 = vector.shape_cast %42 : vector<1x32x32xf32> to vector<32x32xf32>
    %c1_36 = arith.constant 1 : index
    %c0_37 = arith.constant 0 : index
    %c0_38 = arith.constant 0 : index
    %44 = vector.load %arg3[%c1_36, %c0_37, %c0_38] : memref<3x32x32xf32, #tpu.memory_space<vmem>>, vector<1x32x32xf32>
    %45 = vector.shape_cast %44 : vector<1x32x32xf32> to vector<32x32xf32>
    %c2_39 = arith.constant 2 : index
    %c0_40 = arith.constant 0 : index
    %c0_41 = arith.constant 0 : index
    %46 = vector.load %arg3[%c2_39, %c0_40, %c0_41] : memref<3x32x32xf32, #tpu.memory_space<vmem>>, vector<1x32x32xf32>
    %47 = vector.shape_cast %46 : vector<1x32x32xf32> to vector<32x32xf32>
    %c0_42 = arith.constant 0 : index
    %c0_43 = arith.constant 0 : index
    %c0_44 = arith.constant 0 : index
    %48 = vector.load %arg5[%c0_42, %c0_43, %c0_44] : memref<3x1x32xf32, #tpu.memory_space<vmem>>, vector<1x1x32xf32>
    %49 = vector.shape_cast %48 : vector<1x1x32xf32> to vector<1x32xf32>
    %c1_45 = arith.constant 1 : index
    %c0_46 = arith.constant 0 : index
    %c0_47 = arith.constant 0 : index
    %50 = vector.load %arg5[%c1_45, %c0_46, %c0_47] : memref<3x1x32xf32, #tpu.memory_space<vmem>>, vector<1x1x32xf32>
    %51 = vector.shape_cast %50 : vector<1x1x32xf32> to vector<1x32xf32>
    %c2_48 = arith.constant 2 : index
    %c0_49 = arith.constant 0 : index
    %c0_50 = arith.constant 0 : index
    %52 = vector.load %arg5[%c2_48, %c0_49, %c0_50] : memref<3x1x32xf32, #tpu.memory_space<vmem>>, vector<1x1x32xf32>
    %53 = vector.shape_cast %52 : vector<1x1x32xf32> to vector<1x32xf32>
    %c0_51 = arith.constant 0 : index
    %c0_52 = arith.constant 0 : index
    %c0_53 = arith.constant 0 : index
    %54 = vector.load %arg7[%c0_51, %c0_52, %c0_53] : memref<3x32x32xf32, #tpu.memory_space<vmem>>, vector<1x32x32xf32>
    %55 = vector.shape_cast %54 : vector<1x32x32xf32> to vector<32x32xf32>
    %c1_54 = arith.constant 1 : index
    %c0_55 = arith.constant 0 : index
    %c0_56 = arith.constant 0 : index
    %56 = vector.load %arg7[%c1_54, %c0_55, %c0_56] : memref<3x32x32xf32, #tpu.memory_space<vmem>>, vector<1x32x32xf32>
    %57 = vector.shape_cast %56 : vector<1x32x32xf32> to vector<32x32xf32>
    %c2_57 = arith.constant 2 : index
    %c0_58 = arith.constant 0 : index
    %c0_59 = arith.constant 0 : index
    %58 = vector.load %arg7[%c2_57, %c0_58, %c0_59] : memref<3x32x32xf32, #tpu.memory_space<vmem>>, vector<1x32x32xf32>
    %59 = vector.shape_cast %58 : vector<1x32x32xf32> to vector<32x32xf32>
    %c0_60 = arith.constant 0 : index
    %c0_61 = arith.constant 0 : index
    %c0_62 = arith.constant 0 : index
    %60 = vector.load %arg9[%c0_60, %c0_61, %c0_62] : memref<3x1x32xf32, #tpu.memory_space<vmem>>, vector<1x1x32xf32>
    %61 = vector.shape_cast %60 : vector<1x1x32xf32> to vector<1x32xf32>
    %c1_63 = arith.constant 1 : index
    %c0_64 = arith.constant 0 : index
    %c0_65 = arith.constant 0 : index
    %62 = vector.load %arg9[%c1_63, %c0_64, %c0_65] : memref<3x1x32xf32, #tpu.memory_space<vmem>>, vector<1x1x32xf32>
    %63 = vector.shape_cast %62 : vector<1x1x32xf32> to vector<1x32xf32>
    %c2_66 = arith.constant 2 : index
    %c0_67 = arith.constant 0 : index
    %c0_68 = arith.constant 0 : index
    %64 = vector.load %arg9[%c2_66, %c0_67, %c0_68] : memref<3x1x32xf32, #tpu.memory_space<vmem>>, vector<1x1x32xf32>
    %65 = vector.shape_cast %64 : vector<1x1x32xf32> to vector<1x32xf32>
    %cst_69 = arith.constant 0.000000e+00 : f32
    %66 = vector.broadcast %cst_69 : f32 to vector<8x32xf32>
    %c0_i32 = arith.constant 0 : i32
    %c7_i32 = arith.constant 7 : i32
    %67 = arith.subi %c7_i32, %c0_i32 : i32
    %c0_70 = arith.constant 0 : index
    %68 = arith.index_cast %c0_i32 : i32 to index
    %c0_71 = arith.constant 0 : index
    %c0_72 = arith.constant 0 : index
    %69 = vector.load %arg14[%c0_70, %68, %c0_71, %c0_72] : memref<3x8x8x32xf32, #tpu.memory_space<vmem>>, vector<1x1x8x32xf32>
    %70 = vector.shape_cast %69 : vector<1x1x8x32xf32> to vector<8x32xf32>
    %c1_73 = arith.constant 1 : index
    %71 = arith.index_cast %c0_i32 : i32 to index
    %c0_74 = arith.constant 0 : index
    %c0_75 = arith.constant 0 : index
    %72 = vector.load %arg14[%c1_73, %71, %c0_74, %c0_75] : memref<3x8x8x32xf32, #tpu.memory_space<vmem>>, vector<1x1x8x32xf32>
    %73 = vector.shape_cast %72 : vector<1x1x8x32xf32> to vector<8x32xf32>
    %c2_76 = arith.constant 2 : index
    %74 = arith.index_cast %c0_i32 : i32 to index
    %c0_77 = arith.constant 0 : index
    %c0_78 = arith.constant 0 : index
    %75 = vector.load %arg14[%c2_76, %74, %c0_77, %c0_78] : memref<3x8x8x32xf32, #tpu.memory_space<vmem>>, vector<1x1x8x32xf32>
    %76 = vector.shape_cast %75 : vector<1x1x8x32xf32> to vector<8x32xf32>
    %cst_79 = arith.constant dense<0.000000e+00> : vector<8x32xf32>
    %77 = tpu.matmul %66, %43, %cst_79 {dimension_numbers = #tpu.dot_dimension_numbers<[1], [0], [0], [1], [0, 0, 1, 1], [], []>} : vector<8x32xf32>, vector<32x32xf32>, vector<8x32xf32> -> vector<8x32xf32>
    %78 = arith.addf %70, %77 : vector<8x32xf32>
    %79 = vector.broadcast %49 : vector<1x32xf32> to vector<8x32xf32>
    %80 = arith.addf %78, %79 : vector<8x32xf32>
    %81 = arith.negf %80 : vector<8x32xf32>
    %82 = math.exp %81 : vector<8x32xf32>
    %cst_80 = arith.constant 1.000000e+00 : f32
    %83 = vector.broadcast %cst_80 : f32 to vector<8x32xf32>
    %84 = arith.addf %83, %82 : vector<8x32xf32>
    %85 = arith.divf %83, %84 : vector<8x32xf32>
    %cst_81 = arith.constant dense<0.000000e+00> : vector<8x32xf32>
    %86 = tpu.matmul %66, %45, %cst_81 {dimension_numbers = #tpu.dot_dimension_numbers<[1], [0], [0], [1], [0, 0, 1, 1], [], []>} : vector<8x32xf32>, vector<32x32xf32>, vector<8x32xf32> -> vector<8x32xf32>
    %87 = arith.addf %73, %86 : vector<8x32xf32>
    %88 = vector.broadcast %51 : vector<1x32xf32> to vector<8x32xf32>
    %89 = arith.addf %87, %88 : vector<8x32xf32>
    %90 = arith.negf %89 : vector<8x32xf32>
    %91 = math.exp %90 : vector<8x32xf32>
    %cst_82 = arith.constant 1.000000e+00 : f32
    %92 = vector.broadcast %cst_82 : f32 to vector<8x32xf32>
    %93 = arith.addf %92, %91 : vector<8x32xf32>
    %94 = arith.divf %92, %93 : vector<8x32xf32>
    %cst_83 = arith.constant dense<0.000000e+00> : vector<8x32xf32>
    %95 = tpu.matmul %66, %47, %cst_83 {dimension_numbers = #tpu.dot_dimension_numbers<[1], [0], [0], [1], [0, 0, 1, 1], [], []>} : vector<8x32xf32>, vector<32x32xf32>, vector<8x32xf32> -> vector<8x32xf32>
    %96 = vector.broadcast %53 : vector<1x32xf32> to vector<8x32xf32>
    %97 = arith.addf %95, %96 : vector<8x32xf32>
    %98 = arith.mulf %85, %97 : vector<8x32xf32>
    %99 = arith.addf %76, %98 : vector<8x32xf32>
    %100 = math.tanh %99 : vector<8x32xf32>
    %cst_84 = arith.constant 1.000000e+00 : f32
    %101 = vector.broadcast %cst_84 : f32 to vector<8x32xf32>
    %102 = arith.subf %101, %94 : vector<8x32xf32>
    %103 = arith.mulf %102, %100 : vector<8x32xf32>
    %104 = arith.mulf %94, %66 : vector<8x32xf32>
    %105 = arith.addf %103, %104 : vector<8x32xf32>
    %c0_85 = arith.constant 0 : index
    %106 = arith.index_cast %67 : i32 to index
    %c0_86 = arith.constant 0 : index
    %c0_87 = arith.constant 0 : index
    %107 = vector.load %arg15[%c0_85, %106, %c0_86, %c0_87] : memref<3x8x8x32xf32, #tpu.memory_space<vmem>>, vector<1x1x8x32xf32>
    %108 = vector.shape_cast %107 : vector<1x1x8x32xf32> to vector<8x32xf32>
    %c1_88 = arith.constant 1 : index
    %109 = arith.index_cast %67 : i32 to index
    %c0_89 = arith.constant 0 : index
    %c0_90 = arith.constant 0 : index
    %110 = vector.load %arg15[%c1_88, %109, %c0_89, %c0_90] : memref<3x8x8x32xf32, #tpu.memory_space<vmem>>, vector<1x1x8x32xf32>
    %111 = vector.shape_cast %110 : vector<1x1x8x32xf32> to vector<8x32xf32>
    %c2_91 = arith.constant 2 : index
    %112 = arith.index_cast %67 : i32 to index
    %c0_92 = arith.constant 0 : index
    %c0_93 = arith.constant 0 : index
    %113 = vector.load %arg15[%c2_91, %112, %c0_92, %c0_93] : memref<3x8x8x32xf32, #tpu.memory_space<vmem>>, vector<1x1x8x32xf32>
    %114 = vector.shape_cast %113 : vector<1x1x8x32xf32> to vector<8x32xf32>
    %cst_94 = arith.constant dense<0.000000e+00> : vector<8x32xf32>
    %115 = tpu.matmul %66, %55, %cst_94 {dimension_numbers = #tpu.dot_dimension_numbers<[1], [0], [0], [1], [0, 0, 1, 1], [], []>} : vector<8x32xf32>, vector<32x32xf32>, vector<8x32xf32> -> vector<8x32xf32>
    %116 = arith.addf %108, %115 : vector<8x32xf32>
    %117 = vector.broadcast %61 : vector<1x32xf32> to vector<8x32xf32>
    %118 = arith.addf %116, %117 : vector<8x32xf32>
    %119 = arith.negf %118 : vector<8x32xf32>
    %120 = math.exp %119 : vector<8x32xf32>
    %cst_95 = arith.constant 1.000000e+00 : f32
    %121 = vector.broadcast %cst_95 : f32 to vector<8x32xf32>
    %122 = arith.addf %121, %120 : vector<8x32xf32>
    %123 = arith.divf %121, %122 : vector<8x32xf32>
    %cst_96 = arith.constant dense<0.000000e+00> : vector<8x32xf32>
    %124 = tpu.matmul %66, %57, %cst_96 {dimension_numbers = #tpu.dot_dimension_numbers<[1], [0], [0], [1], [0, 0, 1, 1], [], []>} : vector<8x32xf32>, vector<32x32xf32>, vector<8x32xf32> -> vector<8x32xf32>
    %125 = arith.addf %111, %124 : vector<8x32xf32>
    %126 = vector.broadcast %63 : vector<1x32xf32> to vector<8x32xf32>
    %127 = arith.addf %125, %126 : vector<8x32xf32>
    %128 = arith.negf %127 : vector<8x32xf32>
    %129 = math.exp %128 : vector<8x32xf32>
    %cst_97 = arith.constant 1.000000e+00 : f32
    %130 = vector.broadcast %cst_97 : f32 to vector<8x32xf32>
    %131 = arith.addf %130, %129 : vector<8x32xf32>
    %132 = arith.divf %130, %131 : vector<8x32xf32>
    %cst_98 = arith.constant dense<0.000000e+00> : vector<8x32xf32>
    %133 = tpu.matmul %66, %59, %cst_98 {dimension_numbers = #tpu.dot_dimension_numbers<[1], [0], [0], [1], [0, 0, 1, 1], [], []>} : vector<8x32xf32>, vector<32x32xf32>, vector<8x32xf32> -> vector<8x32xf32>
    %134 = vector.broadcast %65 : vector<1x32xf32> to vector<8x32xf32>
    %135 = arith.addf %133, %134 : vector<8x32xf32>
    %136 = arith.mulf %123, %135 : vector<8x32xf32>
    %137 = arith.addf %114, %136 : vector<8x32xf32>
    %138 = math.tanh %137 : vector<8x32xf32>
    %cst_99 = arith.constant 1.000000e+00 : f32
    %139 = vector.broadcast %cst_99 : f32 to vector<8x32xf32>
    %140 = arith.subf %139, %132 : vector<8x32xf32>
    %141 = arith.mulf %140, %138 : vector<8x32xf32>
    %142 = arith.mulf %132, %66 : vector<8x32xf32>
    %143 = arith.addf %141, %142 : vector<8x32xf32>
    %144 = arith.index_cast %c0_i32 : i32 to index
    %c0_100 = arith.constant 0 : index
    %c0_101 = arith.constant 0 : index
    %145 = vector.load %arg16[%144, %c0_100, %c0_101] : memref<8x8x32xf32, #tpu.memory_space<vmem>>, vector<1x8x32xf32>
    %146 = vector.shape_cast %145 : vector<1x8x32xf32> to vector<8x32xf32>
    %147 = vector.shape_cast %105 : vector<8x32xf32> to vector<1x8x32xf32>
    tpu.vector_store %arg16[%144, %c0_100, %c0_101], %147 {strides = array<i32>} : memref<8x8x32xf32, #tpu.memory_space<vmem>>, vector<1x8x32xf32>,
    %148 = arith.index_cast %67 : i32 to index
    %c0_102 = arith.constant 0 : index
    %c0_103 = arith.constant 0 : index
    %149 = vector.load %arg17[%148, %c0_102, %c0_103] : memref<8x8x32xf32, #tpu.memory_space<vmem>>, vector<1x8x32xf32>
    %150 = vector.shape_cast %149 : vector<1x8x32xf32> to vector<8x32xf32>
    %151 = vector.shape_cast %143 : vector<8x32xf32> to vector<1x8x32xf32>
    tpu.vector_store %arg17[%148, %c0_102, %c0_103], %151 {strides = array<i32>} : memref<8x8x32xf32, #tpu.memory_space<vmem>>, vector<1x8x32xf32>,
    %c1_i32 = arith.constant 1 : i32
    %c7_i32_104 = arith.constant 7 : i32
    %152 = arith.subi %c7_i32_104, %c1_i32 : i32
    %c0_105 = arith.constant 0 : index
    %153 = arith.index_cast %c1_i32 : i32 to index
    %c0_106 = arith.constant 0 : index
    %c0_107 = arith.constant 0 : index
    %154 = vector.load %arg14[%c0_105, %153, %c0_106, %c0_107] : memref<3x8x8x32xf32, #tpu.memory_space<vmem>>, vector<1x1x8x32xf32>
    %155 = vector.shape_cast %154 : vector<1x1x8x32xf32> to vector<8x32xf32>
    %c1_108 = arith.constant 1 : index
    %156 = arith.index_cast %c1_i32 : i32 to index
    %c0_109 = arith.constant 0 : index
    %c0_110 = arith.constant 0 : index
    %157 = vector.load %arg14[%c1_108, %156, %c0_109, %c0_110] : memref<3x8x8x32xf32, #tpu.memory_space<vmem>>, vector<1x1x8x32xf32>
    %158 = vector.shape_cast %157 : vector<1x1x8x32xf32> to vector<8x32xf32>
    %c2_111 = arith.constant 2 : index
    %159 = arith.index_cast %c1_i32 : i32 to index
    %c0_112 = arith.constant 0 : index
    %c0_113 = arith.constant 0 : index
    %160 = vector.load %arg14[%c2_111, %159, %c0_112, %c0_113] : memref<3x8x8x32xf32, #tpu.memory_space<vmem>>, vector<1x1x8x32xf32>
    %161 = vector.shape_cast %160 : vector<1x1x8x32xf32> to vector<8x32xf32>
    %cst_114 = arith.constant dense<0.000000e+00> : vector<8x32xf32>
    %162 = tpu.matmul %105, %43, %cst_114 {dimension_numbers = #tpu.dot_dimension_numbers<[1], [0], [0], [1], [0, 0, 1, 1], [], []>} : vector<8x32xf32>, vector<32x32xf32>, vector<8x32xf32> -> vector<8x32xf32>
    %163 = arith.addf %155, %162 : vector<8x32xf32>
    %164 = vector.broadcast %49 : vector<1x32xf32> to vector<8x32xf32>
    %165 = arith.addf %163, %164 : vector<8x32xf32>
    %166 = arith.negf %165 : vector<8x32xf32>
    %167 = math.exp %166 : vector<8x32xf32>
    %cst_115 = arith.constant 1.000000e+00 : f32
    %168 = vector.broadcast %cst_115 : f32 to vector<8x32xf32>
    %169 = arith.addf %168, %167 : vector<8x32xf32>
    %170 = arith.divf %168, %169 : vector<8x32xf32>
    %cst_116 = arith.constant dense<0.000000e+00> : vector<8x32xf32>
    %171 = tpu.matmul %105, %45, %cst_116 {dimension_numbers = #tpu.dot_dimension_numbers<[1], [0], [0], [1], [0, 0, 1, 1], [], []>} : vector<8x32xf32>, vector<32x32xf32>, vector<8x32xf32> -> vector<8x32xf32>
    %172 = arith.addf %158, %171 : vector<8x32xf32>
    %173 = vector.broadcast %51 : vector<1x32xf32> to vector<8x32xf32>
    %174 = arith.addf %172, %173 : vector<8x32xf32>
    %175 = arith.negf %174 : vector<8x32xf32>
    %176 = math.exp %175 : vector<8x32xf32>
    %cst_117 = arith.constant 1.000000e+00 : f32
    %177 = vector.broadcast %cst_117 : f32 to vector<8x32xf32>
    %178 = arith.addf %177, %176 : vector<8x32xf32>
    %179 = arith.divf %177, %178 : vector<8x32xf32>
    %cst_118 = arith.constant dense<0.000000e+00> : vector<8x32xf32>
    %180 = tpu.matmul %105, %47, %cst_118 {dimension_numbers = #tpu.dot_dimension_numbers<[1], [0], [0], [1], [0, 0, 1, 1], [], []>} : vector<8x32xf32>, vector<32x32xf32>, vector<8x32xf32> -> vector<8x32xf32>
    %181 = vector.broadcast %53 : vector<1x32xf32> to vector<8x32xf32>
    %182 = arith.addf %180, %181 : vector<8x32xf32>
    %183 = arith.mulf %170, %182 : vector<8x32xf32>
    %184 = arith.addf %161, %183 : vector<8x32xf32>
    %185 = math.tanh %184 : vector<8x32xf32>
    %cst_119 = arith.constant 1.000000e+00 : f32
    %186 = vector.broadcast %cst_119 : f32 to vector<8x32xf32>
    %187 = arith.subf %186, %179 : vector<8x32xf32>
    %188 = arith.mulf %187, %185 : vector<8x32xf32>
    %189 = arith.mulf %179, %105 : vector<8x32xf32>
    %190 = arith.addf %188, %189 : vector<8x32xf32>
    %c0_120 = arith.constant 0 : index
    %191 = arith.index_cast %152 : i32 to index
    %c0_121 = arith.constant 0 : index
    %c0_122 = arith.constant 0 : index
    %192 = vector.load %arg15[%c0_120, %191, %c0_121, %c0_122] : memref<3x8x8x32xf32, #tpu.memory_space<vmem>>, vector<1x1x8x32xf32>
    %193 = vector.shape_cast %192 : vector<1x1x8x32xf32> to vector<8x32xf32>
    %c1_123 = arith.constant 1 : index
    %194 = arith.index_cast %152 : i32 to index
    %c0_124 = arith.constant 0 : index
    %c0_125 = arith.constant 0 : index
    %195 = vector.load %arg15[%c1_123, %194, %c0_124, %c0_125] : memref<3x8x8x32xf32, #tpu.memory_space<vmem>>, vector<1x1x8x32xf32>
    %196 = vector.shape_cast %195 : vector<1x1x8x32xf32> to vector<8x32xf32>
    %c2_126 = arith.constant 2 : index
    %197 = arith.index_cast %152 : i32 to index
    %c0_127 = arith.constant 0 : index
    %c0_128 = arith.constant 0 : index
    %198 = vector.load %arg15[%c2_126, %197, %c0_127, %c0_128] : memref<3x8x8x32xf32, #tpu.memory_space<vmem>>, vector<1x1x8x32xf32>
    %199 = vector.shape_cast %198 : vector<1x1x8x32xf32> to vector<8x32xf32>
    %cst_129 = arith.constant dense<0.000000e+00> : vector<8x32xf32>
    %200 = tpu.matmul %143, %55, %cst_129 {dimension_numbers = #tpu.dot_dimension_numbers<[1], [0], [0], [1], [0, 0, 1, 1], [], []>} : vector<8x32xf32>, vector<32x32xf32>, vector<8x32xf32> -> vector<8x32xf32>
    %201 = arith.addf %193, %200 : vector<8x32xf32>
    %202 = vector.broadcast %61 : vector<1x32xf32> to vector<8x32xf32>
    %203 = arith.addf %201, %202 : vector<8x32xf32>
    %204 = arith.negf %203 : vector<8x32xf32>
    %205 = math.exp %204 : vector<8x32xf32>
    %cst_130 = arith.constant 1.000000e+00 : f32
    %206 = vector.broadcast %cst_130 : f32 to vector<8x32xf32>
    %207 = arith.addf %206, %205 : vector<8x32xf32>
    %208 = arith.divf %206, %207 : vector<8x32xf32>
    %cst_131 = arith.constant dense<0.000000e+00> : vector<8x32xf32>
    %209 = tpu.matmul %143, %57, %cst_131 {dimension_numbers = #tpu.dot_dimension_numbers<[1], [0], [0], [1], [0, 0, 1, 1], [], []>} : vector<8x32xf32>, vector<32x32xf32>, vector<8x32xf32> -> vector<8x32xf32>
    %210 = arith.addf %196, %209 : vector<8x32xf32>
    %211 = vector.broadcast %63 : vector<1x32xf32> to vector<8x32xf32>
    %212 = arith.addf %210, %211 : vector<8x32xf32>
    %213 = arith.negf %212 : vector<8x32xf32>
    %214 = math.exp %213 : vector<8x32xf32>
    %cst_132 = arith.constant 1.000000e+00 : f32
    %215 = vector.broadcast %cst_132 : f32 to vector<8x32xf32>
    %216 = arith.addf %215, %214 : vector<8x32xf32>
    %217 = arith.divf %215, %216 : vector<8x32xf32>
    %cst_133 = arith.constant dense<0.000000e+00> : vector<8x32xf32>
    %218 = tpu.matmul %143, %59, %cst_133 {dimension_numbers = #tpu.dot_dimension_numbers<[1], [0], [0], [1], [0, 0, 1, 1], [], []>} : vector<8x32xf32>, vector<32x32xf32>, vector<8x32xf32> -> vector<8x32xf32>
    %219 = vector.broadcast %65 : vector<1x32xf32> to vector<8x32xf32>
    %220 = arith.addf %218, %219 : vector<8x32xf32>
    %221 = arith.mulf %208, %220 : vector<8x32xf32>
    %222 = arith.addf %199, %221 : vector<8x32xf32>
    %223 = math.tanh %222 : vector<8x32xf32>
    %cst_134 = arith.constant 1.000000e+00 : f32
    %224 = vector.broadcast %cst_134 : f32 to vector<8x32xf32>
    %225 = arith.subf %224, %217 : vector<8x32xf32>
    %226 = arith.mulf %225, %223 : vector<8x32xf32>
    %227 = arith.mulf %217, %143 : vector<8x32xf32>
    %228 = arith.addf %226, %227 : vector<8x32xf32>
    %229 = arith.index_cast %c1_i32 : i32 to index
    %c0_135 = arith.constant 0 : index
    %c0_136 = arith.constant 0 : index
    %230 = vector.load %arg16[%229, %c0_135, %c0_136] : memref<8x8x32xf32, #tpu.memory_space<vmem>>, vector<1x8x32xf32>
    %231 = vector.shape_cast %230 : vector<1x8x32xf32> to vector<8x32xf32>
    %232 = vector.shape_cast %190 : vector<8x32xf32> to vector<1x8x32xf32>
    tpu.vector_store %arg16[%229, %c0_135, %c0_136], %232 {strides = array<i32>} : memref<8x8x32xf32, #tpu.memory_space<vmem>>, vector<1x8x32xf32>,
    %233 = arith.index_cast %152 : i32 to index
    %c0_137 = arith.constant 0 : index
    %c0_138 = arith.constant 0 : index
    %234 = vector.load %arg17[%233, %c0_137, %c0_138] : memref<8x8x32xf32, #tpu.memory_space<vmem>>, vector<1x8x32xf32>
    %235 = vector.shape_cast %234 : vector<1x8x32xf32> to vector<8x32xf32>
    %236 = vector.shape_cast %228 : vector<8x32xf32> to vector<1x8x32xf32>
    tpu.vector_store %arg17[%233, %c0_137, %c0_138], %236 {strides = array<i32>} : memref<8x8x32xf32, #tpu.memory_space<vmem>>, vector<1x8x32xf32>,
    %c2_i32 = arith.constant 2 : i32
    %c7_i32_139 = arith.constant 7 : i32
    %237 = arith.subi %c7_i32_139, %c2_i32 : i32
    %c0_140 = arith.constant 0 : index
    %238 = arith.index_cast %c2_i32 : i32 to index
    %c0_141 = arith.constant 0 : index
    %c0_142 = arith.constant 0 : index
    %239 = vector.load %arg14[%c0_140, %238, %c0_141, %c0_142] : memref<3x8x8x32xf32, #tpu.memory_space<vmem>>, vector<1x1x8x32xf32>
    %240 = vector.shape_cast %239 : vector<1x1x8x32xf32> to vector<8x32xf32>
    %c1_143 = arith.constant 1 : index
    %241 = arith.index_cast %c2_i32 : i32 to index
    %c0_144 = arith.constant 0 : index
    %c0_145 = arith.constant 0 : index
    %242 = vector.load %arg14[%c1_143, %241, %c0_144, %c0_145] : memref<3x8x8x32xf32, #tpu.memory_space<vmem>>, vector<1x1x8x32xf32>
    %243 = vector.shape_cast %242 : vector<1x1x8x32xf32> to vector<8x32xf32>
    %c2_146 = arith.constant 2 : index
    %244 = arith.index_cast %c2_i32 : i32 to index
    %c0_147 = arith.constant 0 : index
    %c0_148 = arith.constant 0 : index
    %245 = vector.load %arg14[%c2_146, %244, %c0_147, %c0_148] : memref<3x8x8x32xf32, #tpu.memory_space<vmem>>, vector<1x1x8x32xf32>
    %246 = vector.shape_cast %245 : vector<1x1x8x32xf32> to vector<8x32xf32>
    %cst_149 = arith.constant dense<0.000000e+00> : vector<8x32xf32>
    %247 = tpu.matmul %190, %43, %cst_149 {dimension_numbers = #tpu.dot_dimension_numbers<[1], [0], [0], [1], [0, 0, 1, 1], [], []>} : vector<8x32xf32>, vector<32x32xf32>, vector<8x32xf32> -> vector<8x32xf32>
    %248 = arith.addf %240, %247 : vector<8x32xf32>
    %249 = vector.broadcast %49 : vector<1x32xf32> to vector<8x32xf32>
    %250 = arith.addf %248, %249 : vector<8x32xf32>
    %251 = arith.negf %250 : vector<8x32xf32>
    %252 = math.exp %251 : vector<8x32xf32>
    %cst_150 = arith.constant 1.000000e+00 : f32
    %253 = vector.broadcast %cst_150 : f32 to vector<8x32xf32>
    %254 = arith.addf %253, %252 : vector<8x32xf32>
    %255 = arith.divf %253, %254 : vector<8x32xf32>
    %cst_151 = arith.constant dense<0.000000e+00> : vector<8x32xf32>
    %256 = tpu.matmul %190, %45, %cst_151 {dimension_numbers = #tpu.dot_dimension_numbers<[1], [0], [0], [1], [0, 0, 1, 1], [], []>} : vector<8x32xf32>, vector<32x32xf32>, vector<8x32xf32> -> vector<8x32xf32>
    %257 = arith.addf %243, %256 : vector<8x32xf32>
    %258 = vector.broadcast %51 : vector<1x32xf32> to vector<8x32xf32>
    %259 = arith.addf %257, %258 : vector<8x32xf32>
    %260 = arith.negf %259 : vector<8x32xf32>
    %261 = math.exp %260 : vector<8x32xf32>
    %cst_152 = arith.constant 1.000000e+00 : f32
    %262 = vector.broadcast %cst_152 : f32 to vector<8x32xf32>
    %263 = arith.addf %262, %261 : vector<8x32xf32>
    %264 = arith.divf %262, %263 : vector<8x32xf32>
    %cst_153 = arith.constant dense<0.000000e+00> : vector<8x32xf32>
    %265 = tpu.matmul %190, %47, %cst_153 {dimension_numbers = #tpu.dot_dimension_numbers<[1], [0], [0], [1], [0, 0, 1, 1], [], []>} : vector<8x32xf32>, vector<32x32xf32>, vector<8x32xf32> -> vector<8x32xf32>
    %266 = vector.broadcast %53 : vector<1x32xf32> to vector<8x32xf32>
    %267 = arith.addf %265, %266 : vector<8x32xf32>
    %268 = arith.mulf %255, %267 : vector<8x32xf32>
    %269 = arith.addf %246, %268 : vector<8x32xf32>
    %270 = math.tanh %269 : vector<8x32xf32>
    %cst_154 = arith.constant 1.000000e+00 : f32
    %271 = vector.broadcast %cst_154 : f32 to vector<8x32xf32>
    %272 = arith.subf %271, %264 : vector<8x32xf32>
    %273 = arith.mulf %272, %270 : vector<8x32xf32>
    %274 = arith.mulf %264, %190 : vector<8x32xf32>
    %275 = arith.addf %273, %274 : vector<8x32xf32>
    %c0_155 = arith.constant 0 : index
    %276 = arith.index_cast %237 : i32 to index
    %c0_156 = arith.constant 0 : index
    %c0_157 = arith.constant 0 : index
    %277 = vector.load %arg15[%c0_155, %276, %c0_156, %c0_157] : memref<3x8x8x32xf32, #tpu.memory_space<vmem>>, vector<1x1x8x32xf32>
    %278 = vector.shape_cast %277 : vector<1x1x8x32xf32> to vector<8x32xf32>
    %c1_158 = arith.constant 1 : index
    %279 = arith.index_cast %237 : i32 to index
    %c0_159 = arith.constant 0 : index
    %c0_160 = arith.constant 0 : index
    %280 = vector.load %arg15[%c1_158, %279, %c0_159, %c0_160] : memref<3x8x8x32xf32, #tpu.memory_space<vmem>>, vector<1x1x8x32xf32>
    %281 = vector.shape_cast %280 : vector<1x1x8x32xf32> to vector<8x32xf32>
    %c2_161 = arith.constant 2 : index
    %282 = arith.index_cast %237 : i32 to index
    %c0_162 = arith.constant 0 : index
    %c0_163 = arith.constant 0 : index
    %283 = vector.load %arg15[%c2_161, %282, %c0_162, %c0_163] : memref<3x8x8x32xf32, #tpu.memory_space<vmem>>, vector<1x1x8x32xf32>
    %284 = vector.shape_cast %283 : vector<1x1x8x32xf32> to vector<8x32xf32>
    %cst_164 = arith.constant dense<0.000000e+00> : vector<8x32xf32>
    %285 = tpu.matmul %228, %55, %cst_164 {dimension_numbers = #tpu.dot_dimension_numbers<[1], [0], [0], [1], [0, 0, 1, 1], [], []>} : vector<8x32xf32>, vector<32x32xf32>, vector<8x32xf32> -> vector<8x32xf32>
    %286 = arith.addf %278, %285 : vector<8x32xf32>
    %287 = vector.broadcast %61 : vector<1x32xf32> to vector<8x32xf32>
    %288 = arith.addf %286, %287 : vector<8x32xf32>
    %289 = arith.negf %288 : vector<8x32xf32>
    %290 = math.exp %289 : vector<8x32xf32>
    %cst_165 = arith.constant 1.000000e+00 : f32
    %291 = vector.broadcast %cst_165 : f32 to vector<8x32xf32>
    %292 = arith.addf %291, %290 : vector<8x32xf32>
    %293 = arith.divf %291, %292 : vector<8x32xf32>
    %cst_166 = arith.constant dense<0.000000e+00> : vector<8x32xf32>
    %294 = tpu.matmul %228, %57, %cst_166 {dimension_numbers = #tpu.dot_dimension_numbers<[1], [0], [0], [1], [0, 0, 1, 1], [], []>} : vector<8x32xf32>, vector<32x32xf32>, vector<8x32xf32> -> vector<8x32xf32>
    %295 = arith.addf %281, %294 : vector<8x32xf32>
    %296 = vector.broadcast %63 : vector<1x32xf32> to vector<8x32xf32>
    %297 = arith.addf %295, %296 : vector<8x32xf32>
    %298 = arith.negf %297 : vector<8x32xf32>
    %299 = math.exp %298 : vector<8x32xf32>
    %cst_167 = arith.constant 1.000000e+00 : f32
    %300 = vector.broadcast %cst_167 : f32 to vector<8x32xf32>
    %301 = arith.addf %300, %299 : vector<8x32xf32>
    %302 = arith.divf %300, %301 : vector<8x32xf32>
    %cst_168 = arith.constant dense<0.000000e+00> : vector<8x32xf32>
    %303 = tpu.matmul %228, %59, %cst_168 {dimension_numbers = #tpu.dot_dimension_numbers<[1], [0], [0], [1], [0, 0, 1, 1], [], []>} : vector<8x32xf32>, vector<32x32xf32>, vector<8x32xf32> -> vector<8x32xf32>
    %304 = vector.broadcast %65 : vector<1x32xf32> to vector<8x32xf32>
    %305 = arith.addf %303, %304 : vector<8x32xf32>
    %306 = arith.mulf %293, %305 : vector<8x32xf32>
    %307 = arith.addf %284, %306 : vector<8x32xf32>
    %308 = math.tanh %307 : vector<8x32xf32>
    %cst_169 = arith.constant 1.000000e+00 : f32
    %309 = vector.broadcast %cst_169 : f32 to vector<8x32xf32>
    %310 = arith.subf %309, %302 : vector<8x32xf32>
    %311 = arith.mulf %310, %308 : vector<8x32xf32>
    %312 = arith.mulf %302, %228 : vector<8x32xf32>
    %313 = arith.addf %311, %312 : vector<8x32xf32>
    %314 = arith.index_cast %c2_i32 : i32 to index
    %c0_170 = arith.constant 0 : index
    %c0_171 = arith.constant 0 : index
    %315 = vector.load %arg16[%314, %c0_170, %c0_171] : memref<8x8x32xf32, #tpu.memory_space<vmem>>, vector<1x8x32xf32>
    %316 = vector.shape_cast %315 : vector<1x8x32xf32> to vector<8x32xf32>
    %317 = vector.shape_cast %275 : vector<8x32xf32> to vector<1x8x32xf32>
    tpu.vector_store %arg16[%314, %c0_170, %c0_171], %317 {strides = array<i32>} : memref<8x8x32xf32, #tpu.memory_space<vmem>>, vector<1x8x32xf32>,
    %318 = arith.index_cast %237 : i32 to index
    %c0_172 = arith.constant 0 : index
    %c0_173 = arith.constant 0 : index
    %319 = vector.load %arg17[%318, %c0_172, %c0_173] : memref<8x8x32xf32, #tpu.memory_space<vmem>>, vector<1x8x32xf32>
    %320 = vector.shape_cast %319 : vector<1x8x32xf32> to vector<8x32xf32>
    %321 = vector.shape_cast %313 : vector<8x32xf32> to vector<1x8x32xf32>
    tpu.vector_store %arg17[%318, %c0_172, %c0_173], %321 {strides = array<i32>} : memref<8x8x32xf32, #tpu.memory_space<vmem>>, vector<1x8x32xf32>,
    %c3_i32 = arith.constant 3 : i32
    %c7_i32_174 = arith.constant 7 : i32
    %322 = arith.subi %c7_i32_174, %c3_i32 : i32
    %c0_175 = arith.constant 0 : index
    %323 = arith.index_cast %c3_i32 : i32 to index
    %c0_176 = arith.constant 0 : index
    %c0_177 = arith.constant 0 : index
    %324 = vector.load %arg14[%c0_175, %323, %c0_176, %c0_177] : memref<3x8x8x32xf32, #tpu.memory_space<vmem>>, vector<1x1x8x32xf32>
    %325 = vector.shape_cast %324 : vector<1x1x8x32xf32> to vector<8x32xf32>
    %c1_178 = arith.constant 1 : index
    %326 = arith.index_cast %c3_i32 : i32 to index
    %c0_179 = arith.constant 0 : index
    %c0_180 = arith.constant 0 : index
    %327 = vector.load %arg14[%c1_178, %326, %c0_179, %c0_180] : memref<3x8x8x32xf32, #tpu.memory_space<vmem>>, vector<1x1x8x32xf32>
    %328 = vector.shape_cast %327 : vector<1x1x8x32xf32> to vector<8x32xf32>
    %c2_181 = arith.constant 2 : index
    %329 = arith.index_cast %c3_i32 : i32 to index
    %c0_182 = arith.constant 0 : index
    %c0_183 = arith.constant 0 : index
    %330 = vector.load %arg14[%c2_181, %329, %c0_182, %c0_183] : memref<3x8x8x32xf32, #tpu.memory_space<vmem>>, vector<1x1x8x32xf32>
    %331 = vector.shape_cast %330 : vector<1x1x8x32xf32> to vector<8x32xf32>
    %cst_184 = arith.constant dense<0.000000e+00> : vector<8x32xf32>
    %332 = tpu.matmul %275, %43, %cst_184 {dimension_numbers = #tpu.dot_dimension_numbers<[1], [0], [0], [1], [0, 0, 1, 1], [], []>} : vector<8x32xf32>, vector<32x32xf32>, vector<8x32xf32> -> vector<8x32xf32>
    %333 = arith.addf %325, %332 : vector<8x32xf32>
    %334 = vector.broadcast %49 : vector<1x32xf32> to vector<8x32xf32>
    %335 = arith.addf %333, %334 : vector<8x32xf32>
    %336 = arith.negf %335 : vector<8x32xf32>
    %337 = math.exp %336 : vector<8x32xf32>
    %cst_185 = arith.constant 1.000000e+00 : f32
    %338 = vector.broadcast %cst_185 : f32 to vector<8x32xf32>
    %339 = arith.addf %338, %337 : vector<8x32xf32>
    %340 = arith.divf %338, %339 : vector<8x32xf32>
    %cst_186 = arith.constant dense<0.000000e+00> : vector<8x32xf32>
    %341 = tpu.matmul %275, %45, %cst_186 {dimension_numbers = #tpu.dot_dimension_numbers<[1], [0], [0], [1], [0, 0, 1, 1], [], []>} : vector<8x32xf32>, vector<32x32xf32>, vector<8x32xf32> -> vector<8x32xf32>
    %342 = arith.addf %328, %341 : vector<8x32xf32>
    %343 = vector.broadcast %51 : vector<1x32xf32> to vector<8x32xf32>
    %344 = arith.addf %342, %343 : vector<8x32xf32>
    %345 = arith.negf %344 : vector<8x32xf32>
    %346 = math.exp %345 : vector<8x32xf32>
    %cst_187 = arith.constant 1.000000e+00 : f32
    %347 = vector.broadcast %cst_187 : f32 to vector<8x32xf32>
    %348 = arith.addf %347, %346 : vector<8x32xf32>
    %349 = arith.divf %347, %348 : vector<8x32xf32>
    %cst_188 = arith.constant dense<0.000000e+00> : vector<8x32xf32>
    %350 = tpu.matmul %275, %47, %cst_188 {dimension_numbers = #tpu.dot_dimension_numbers<[1], [0], [0], [1], [0, 0, 1, 1], [], []>} : vector<8x32xf32>, vector<32x32xf32>, vector<8x32xf32> -> vector<8x32xf32>
    %351 = vector.broadcast %53 : vector<1x32xf32> to vector<8x32xf32>
    %352 = arith.addf %350, %351 : vector<8x32xf32>
    %353 = arith.mulf %340, %352 : vector<8x32xf32>
    %354 = arith.addf %331, %353 : vector<8x32xf32>
    %355 = math.tanh %354 : vector<8x32xf32>
    %cst_189 = arith.constant 1.000000e+00 : f32
    %356 = vector.broadcast %cst_189 : f32 to vector<8x32xf32>
    %357 = arith.subf %356, %349 : vector<8x32xf32>
    %358 = arith.mulf %357, %355 : vector<8x32xf32>
    %359 = arith.mulf %349, %275 : vector<8x32xf32>
    %360 = arith.addf %358, %359 : vector<8x32xf32>
    %c0_190 = arith.constant 0 : index
    %361 = arith.index_cast %322 : i32 to index
    %c0_191 = arith.constant 0 : index
    %c0_192 = arith.constant 0 : index
    %362 = vector.load %arg15[%c0_190, %361, %c0_191, %c0_192] : memref<3x8x8x32xf32, #tpu.memory_space<vmem>>, vector<1x1x8x32xf32>
    %363 = vector.shape_cast %362 : vector<1x1x8x32xf32> to vector<8x32xf32>
    %c1_193 = arith.constant 1 : index
    %364 = arith.index_cast %322 : i32 to index
    %c0_194 = arith.constant 0 : index
    %c0_195 = arith.constant 0 : index
    %365 = vector.load %arg15[%c1_193, %364, %c0_194, %c0_195] : memref<3x8x8x32xf32, #tpu.memory_space<vmem>>, vector<1x1x8x32xf32>
    %366 = vector.shape_cast %365 : vector<1x1x8x32xf32> to vector<8x32xf32>
    %c2_196 = arith.constant 2 : index
    %367 = arith.index_cast %322 : i32 to index
    %c0_197 = arith.constant 0 : index
    %c0_198 = arith.constant 0 : index
    %368 = vector.load %arg15[%c2_196, %367, %c0_197, %c0_198] : memref<3x8x8x32xf32, #tpu.memory_space<vmem>>, vector<1x1x8x32xf32>
    %369 = vector.shape_cast %368 : vector<1x1x8x32xf32> to vector<8x32xf32>
    %cst_199 = arith.constant dense<0.000000e+00> : vector<8x32xf32>
    %370 = tpu.matmul %313, %55, %cst_199 {dimension_numbers = #tpu.dot_dimension_numbers<[1], [0], [0], [1], [0, 0, 1, 1], [], []>} : vector<8x32xf32>, vector<32x32xf32>, vector<8x32xf32> -> vector<8x32xf32>
    %371 = arith.addf %363, %370 : vector<8x32xf32>
    %372 = vector.broadcast %61 : vector<1x32xf32> to vector<8x32xf32>
    %373 = arith.addf %371, %372 : vector<8x32xf32>
    %374 = arith.negf %373 : vector<8x32xf32>
    %375 = math.exp %374 : vector<8x32xf32>
    %cst_200 = arith.constant 1.000000e+00 : f32
    %376 = vector.broadcast %cst_200 : f32 to vector<8x32xf32>
    %377 = arith.addf %376, %375 : vector<8x32xf32>
    %378 = arith.divf %376, %377 : vector<8x32xf32>
    %cst_201 = arith.constant dense<0.000000e+00> : vector<8x32xf32>
    %379 = tpu.matmul %313, %57, %cst_201 {dimension_numbers = #tpu.dot_dimension_numbers<[1], [0], [0], [1], [0, 0, 1, 1], [], []>} : vector<8x32xf32>, vector<32x32xf32>, vector<8x32xf32> -> vector<8x32xf32>
    %380 = arith.addf %366, %379 : vector<8x32xf32>
    %381 = vector.broadcast %63 : vector<1x32xf32> to vector<8x32xf32>
    %382 = arith.addf %380, %381 : vector<8x32xf32>
    %383 = arith.negf %382 : vector<8x32xf32>
    %384 = math.exp %383 : vector<8x32xf32>
    %cst_202 = arith.constant 1.000000e+00 : f32
    %385 = vector.broadcast %cst_202 : f32 to vector<8x32xf32>
    %386 = arith.addf %385, %384 : vector<8x32xf32>
    %387 = arith.divf %385, %386 : vector<8x32xf32>
    %cst_203 = arith.constant dense<0.000000e+00> : vector<8x32xf32>
    %388 = tpu.matmul %313, %59, %cst_203 {dimension_numbers = #tpu.dot_dimension_numbers<[1], [0], [0], [1], [0, 0, 1, 1], [], []>} : vector<8x32xf32>, vector<32x32xf32>, vector<8x32xf32> -> vector<8x32xf32>
    %389 = vector.broadcast %65 : vector<1x32xf32> to vector<8x32xf32>
    %390 = arith.addf %388, %389 : vector<8x32xf32>
    %391 = arith.mulf %378, %390 : vector<8x32xf32>
    %392 = arith.addf %369, %391 : vector<8x32xf32>
    %393 = math.tanh %392 : vector<8x32xf32>
    %cst_204 = arith.constant 1.000000e+00 : f32
    %394 = vector.broadcast %cst_204 : f32 to vector<8x32xf32>
    %395 = arith.subf %394, %387 : vector<8x32xf32>
    %396 = arith.mulf %395, %393 : vector<8x32xf32>
    %397 = arith.mulf %387, %313 : vector<8x32xf32>
    %398 = arith.addf %396, %397 : vector<8x32xf32>
    %399 = arith.index_cast %c3_i32 : i32 to index
    %c0_205 = arith.constant 0 : index
    %c0_206 = arith.constant 0 : index
    %400 = vector.load %arg16[%399, %c0_205, %c0_206] : memref<8x8x32xf32, #tpu.memory_space<vmem>>, vector<1x8x32xf32>
    %401 = vector.shape_cast %400 : vector<1x8x32xf32> to vector<8x32xf32>
    %402 = vector.shape_cast %360 : vector<8x32xf32> to vector<1x8x32xf32>
    tpu.vector_store %arg16[%399, %c0_205, %c0_206], %402 {strides = array<i32>} : memref<8x8x32xf32, #tpu.memory_space<vmem>>, vector<1x8x32xf32>,
    %403 = arith.index_cast %322 : i32 to index
    %c0_207 = arith.constant 0 : index
    %c0_208 = arith.constant 0 : index
    %404 = vector.load %arg17[%403, %c0_207, %c0_208] : memref<8x8x32xf32, #tpu.memory_space<vmem>>, vector<1x8x32xf32>
    %405 = vector.shape_cast %404 : vector<1x8x32xf32> to vector<8x32xf32>
    %406 = vector.shape_cast %398 : vector<8x32xf32> to vector<1x8x32xf32>
    tpu.vector_store %arg17[%403, %c0_207, %c0_208], %406 {strides = array<i32>} : memref<8x8x32xf32, #tpu.memory_space<vmem>>, vector<1x8x32xf32>,
    %c4_i32 = arith.constant 4 : i32
    %c7_i32_209 = arith.constant 7 : i32
    %407 = arith.subi %c7_i32_209, %c4_i32 : i32
    %c0_210 = arith.constant 0 : index
    %408 = arith.index_cast %c4_i32 : i32 to index
    %c0_211 = arith.constant 0 : index
    %c0_212 = arith.constant 0 : index
    %409 = vector.load %arg14[%c0_210, %408, %c0_211, %c0_212] : memref<3x8x8x32xf32, #tpu.memory_space<vmem>>, vector<1x1x8x32xf32>
    %410 = vector.shape_cast %409 : vector<1x1x8x32xf32> to vector<8x32xf32>
    %c1_213 = arith.constant 1 : index
    %411 = arith.index_cast %c4_i32 : i32 to index
    %c0_214 = arith.constant 0 : index
    %c0_215 = arith.constant 0 : index
    %412 = vector.load %arg14[%c1_213, %411, %c0_214, %c0_215] : memref<3x8x8x32xf32, #tpu.memory_space<vmem>>, vector<1x1x8x32xf32>
    %413 = vector.shape_cast %412 : vector<1x1x8x32xf32> to vector<8x32xf32>
    %c2_216 = arith.constant 2 : index
    %414 = arith.index_cast %c4_i32 : i32 to index
    %c0_217 = arith.constant 0 : index
    %c0_218 = arith.constant 0 : index
    %415 = vector.load %arg14[%c2_216, %414, %c0_217, %c0_218] : memref<3x8x8x32xf32, #tpu.memory_space<vmem>>, vector<1x1x8x32xf32>
    %416 = vector.shape_cast %415 : vector<1x1x8x32xf32> to vector<8x32xf32>
    %cst_219 = arith.constant dense<0.000000e+00> : vector<8x32xf32>
    %417 = tpu.matmul %360, %43, %cst_219 {dimension_numbers = #tpu.dot_dimension_numbers<[1], [0], [0], [1], [0, 0, 1, 1], [], []>} : vector<8x32xf32>, vector<32x32xf32>, vector<8x32xf32> -> vector<8x32xf32>
    %418 = arith.addf %410, %417 : vector<8x32xf32>
    %419 = vector.broadcast %49 : vector<1x32xf32> to vector<8x32xf32>
    %420 = arith.addf %418, %419 : vector<8x32xf32>
    %421 = arith.negf %420 : vector<8x32xf32>
    %422 = math.exp %421 : vector<8x32xf32>
    %cst_220 = arith.constant 1.000000e+00 : f32
    %423 = vector.broadcast %cst_220 : f32 to vector<8x32xf32>
    %424 = arith.addf %423, %422 : vector<8x32xf32>
    %425 = arith.divf %423, %424 : vector<8x32xf32>
    %cst_221 = arith.constant dense<0.000000e+00> : vector<8x32xf32>
    %426 = tpu.matmul %360, %45, %cst_221 {dimension_numbers = #tpu.dot_dimension_numbers<[1], [0], [0], [1], [0, 0, 1, 1], [], []>} : vector<8x32xf32>, vector<32x32xf32>, vector<8x32xf32> -> vector<8x32xf32>
    %427 = arith.addf %413, %426 : vector<8x32xf32>
    %428 = vector.broadcast %51 : vector<1x32xf32> to vector<8x32xf32>
    %429 = arith.addf %427, %428 : vector<8x32xf32>
    %430 = arith.negf %429 : vector<8x32xf32>
    %431 = math.exp %430 : vector<8x32xf32>
    %cst_222 = arith.constant 1.000000e+00 : f32
    %432 = vector.broadcast %cst_222 : f32 to vector<8x32xf32>
    %433 = arith.addf %432, %431 : vector<8x32xf32>
    %434 = arith.divf %432, %433 : vector<8x32xf32>
    %cst_223 = arith.constant dense<0.000000e+00> : vector<8x32xf32>
    %435 = tpu.matmul %360, %47, %cst_223 {dimension_numbers = #tpu.dot_dimension_numbers<[1], [0], [0], [1], [0, 0, 1, 1], [], []>} : vector<8x32xf32>, vector<32x32xf32>, vector<8x32xf32> -> vector<8x32xf32>
    %436 = vector.broadcast %53 : vector<1x32xf32> to vector<8x32xf32>
    %437 = arith.addf %435, %436 : vector<8x32xf32>
    %438 = arith.mulf %425, %437 : vector<8x32xf32>
    %439 = arith.addf %416, %438 : vector<8x32xf32>
    %440 = math.tanh %439 : vector<8x32xf32>
    %cst_224 = arith.constant 1.000000e+00 : f32
    %441 = vector.broadcast %cst_224 : f32 to vector<8x32xf32>
    %442 = arith.subf %441, %434 : vector<8x32xf32>
    %443 = arith.mulf %442, %440 : vector<8x32xf32>
    %444 = arith.mulf %434, %360 : vector<8x32xf32>
    %445 = arith.addf %443, %444 : vector<8x32xf32>
    %c0_225 = arith.constant 0 : index
    %446 = arith.index_cast %407 : i32 to index
    %c0_226 = arith.constant 0 : index
    %c0_227 = arith.constant 0 : index
    %447 = vector.load %arg15[%c0_225, %446, %c0_226, %c0_227] : memref<3x8x8x32xf32, #tpu.memory_space<vmem>>, vector<1x1x8x32xf32>
    %448 = vector.shape_cast %447 : vector<1x1x8x32xf32> to vector<8x32xf32>
    %c1_228 = arith.constant 1 : index
    %449 = arith.index_cast %407 : i32 to index
    %c0_229 = arith.constant 0 : index
    %c0_230 = arith.constant 0 : index
    %450 = vector.load %arg15[%c1_228, %449, %c0_229, %c0_230] : memref<3x8x8x32xf32, #tpu.memory_space<vmem>>, vector<1x1x8x32xf32>
    %451 = vector.shape_cast %450 : vector<1x1x8x32xf32> to vector<8x32xf32>
    %c2_231 = arith.constant 2 : index
    %452 = arith.index_cast %407 : i32 to index
    %c0_232 = arith.constant 0 : index
    %c0_233 = arith.constant 0 : index
    %453 = vector.load %arg15[%c2_231, %452, %c0_232, %c0_233] : memref<3x8x8x32xf32, #tpu.memory_space<vmem>>, vector<1x1x8x32xf32>
    %454 = vector.shape_cast %453 : vector<1x1x8x32xf32> to vector<8x32xf32>
    %cst_234 = arith.constant dense<0.000000e+00> : vector<8x32xf32>
    %455 = tpu.matmul %398, %55, %cst_234 {dimension_numbers = #tpu.dot_dimension_numbers<[1], [0], [0], [1], [0, 0, 1, 1], [], []>} : vector<8x32xf32>, vector<32x32xf32>, vector<8x32xf32> -> vector<8x32xf32>
    %456 = arith.addf %448, %455 : vector<8x32xf32>
    %457 = vector.broadcast %61 : vector<1x32xf32> to vector<8x32xf32>
    %458 = arith.addf %456, %457 : vector<8x32xf32>
    %459 = arith.negf %458 : vector<8x32xf32>
    %460 = math.exp %459 : vector<8x32xf32>
    %cst_235 = arith.constant 1.000000e+00 : f32
    %461 = vector.broadcast %cst_235 : f32 to vector<8x32xf32>
    %462 = arith.addf %461, %460 : vector<8x32xf32>
    %463 = arith.divf %461, %462 : vector<8x32xf32>
    %cst_236 = arith.constant dense<0.000000e+00> : vector<8x32xf32>
    %464 = tpu.matmul %398, %57, %cst_236 {dimension_numbers = #tpu.dot_dimension_numbers<[1], [0], [0], [1], [0, 0, 1, 1], [], []>} : vector<8x32xf32>, vector<32x32xf32>, vector<8x32xf32> -> vector<8x32xf32>
    %465 = arith.addf %451, %464 : vector<8x32xf32>
    %466 = vector.broadcast %63 : vector<1x32xf32> to vector<8x32xf32>
    %467 = arith.addf %465, %466 : vector<8x32xf32>
    %468 = arith.negf %467 : vector<8x32xf32>
    %469 = math.exp %468 : vector<8x32xf32>
    %cst_237 = arith.constant 1.000000e+00 : f32
    %470 = vector.broadcast %cst_237 : f32 to vector<8x32xf32>
    %471 = arith.addf %470, %469 : vector<8x32xf32>
    %472 = arith.divf %470, %471 : vector<8x32xf32>
    %cst_238 = arith.constant dense<0.000000e+00> : vector<8x32xf32>
    %473 = tpu.matmul %398, %59, %cst_238 {dimension_numbers = #tpu.dot_dimension_numbers<[1], [0], [0], [1], [0, 0, 1, 1], [], []>} : vector<8x32xf32>, vector<32x32xf32>, vector<8x32xf32> -> vector<8x32xf32>
    %474 = vector.broadcast %65 : vector<1x32xf32> to vector<8x32xf32>
    %475 = arith.addf %473, %474 : vector<8x32xf32>
    %476 = arith.mulf %463, %475 : vector<8x32xf32>
    %477 = arith.addf %454, %476 : vector<8x32xf32>
    %478 = math.tanh %477 : vector<8x32xf32>
    %cst_239 = arith.constant 1.000000e+00 : f32
    %479 = vector.broadcast %cst_239 : f32 to vector<8x32xf32>
    %480 = arith.subf %479, %472 : vector<8x32xf32>
    %481 = arith.mulf %480, %478 : vector<8x32xf32>
    %482 = arith.mulf %472, %398 : vector<8x32xf32>
    %483 = arith.addf %481, %482 : vector<8x32xf32>
    %484 = arith.index_cast %c4_i32 : i32 to index
    %c0_240 = arith.constant 0 : index
    %c0_241 = arith.constant 0 : index
    %485 = vector.load %arg16[%484, %c0_240, %c0_241] : memref<8x8x32xf32, #tpu.memory_space<vmem>>, vector<1x8x32xf32>
    %486 = vector.shape_cast %485 : vector<1x8x32xf32> to vector<8x32xf32>
    %487 = vector.shape_cast %445 : vector<8x32xf32> to vector<1x8x32xf32>
    tpu.vector_store %arg16[%484, %c0_240, %c0_241], %487 {strides = array<i32>} : memref<8x8x32xf32, #tpu.memory_space<vmem>>, vector<1x8x32xf32>,
    %488 = arith.index_cast %407 : i32 to index
    %c0_242 = arith.constant 0 : index
    %c0_243 = arith.constant 0 : index
    %489 = vector.load %arg17[%488, %c0_242, %c0_243] : memref<8x8x32xf32, #tpu.memory_space<vmem>>, vector<1x8x32xf32>
    %490 = vector.shape_cast %489 : vector<1x8x32xf32> to vector<8x32xf32>
    %491 = vector.shape_cast %483 : vector<8x32xf32> to vector<1x8x32xf32>
    tpu.vector_store %arg17[%488, %c0_242, %c0_243], %491 {strides = array<i32>} : memref<8x8x32xf32, #tpu.memory_space<vmem>>, vector<1x8x32xf32>,
    %c5_i32 = arith.constant 5 : i32
    %c7_i32_244 = arith.constant 7 : i32
    %492 = arith.subi %c7_i32_244, %c5_i32 : i32
    %c0_245 = arith.constant 0 : index
    %493 = arith.index_cast %c5_i32 : i32 to index
    %c0_246 = arith.constant 0 : index
    %c0_247 = arith.constant 0 : index
    %494 = vector.load %arg14[%c0_245, %493, %c0_246, %c0_247] : memref<3x8x8x32xf32, #tpu.memory_space<vmem>>, vector<1x1x8x32xf32>
    %495 = vector.shape_cast %494 : vector<1x1x8x32xf32> to vector<8x32xf32>
    %c1_248 = arith.constant 1 : index
    %496 = arith.index_cast %c5_i32 : i32 to index
    %c0_249 = arith.constant 0 : index
    %c0_250 = arith.constant 0 : index
    %497 = vector.load %arg14[%c1_248, %496, %c0_249, %c0_250] : memref<3x8x8x32xf32, #tpu.memory_space<vmem>>, vector<1x1x8x32xf32>
    %498 = vector.shape_cast %497 : vector<1x1x8x32xf32> to vector<8x32xf32>
    %c2_251 = arith.constant 2 : index
    %499 = arith.index_cast %c5_i32 : i32 to index
    %c0_252 = arith.constant 0 : index
    %c0_253 = arith.constant 0 : index
    %500 = vector.load %arg14[%c2_251, %499, %c0_252, %c0_253] : memref<3x8x8x32xf32, #tpu.memory_space<vmem>>, vector<1x1x8x32xf32>
    %501 = vector.shape_cast %500 : vector<1x1x8x32xf32> to vector<8x32xf32>
    %cst_254 = arith.constant dense<0.000000e+00> : vector<8x32xf32>
    %502 = tpu.matmul %445, %43, %cst_254 {dimension_numbers = #tpu.dot_dimension_numbers<[1], [0], [0], [1], [0, 0, 1, 1], [], []>} : vector<8x32xf32>, vector<32x32xf32>, vector<8x32xf32> -> vector<8x32xf32>
    %503 = arith.addf %495, %502 : vector<8x32xf32>
    %504 = vector.broadcast %49 : vector<1x32xf32> to vector<8x32xf32>
    %505 = arith.addf %503, %504 : vector<8x32xf32>
    %506 = arith.negf %505 : vector<8x32xf32>
    %507 = math.exp %506 : vector<8x32xf32>
    %cst_255 = arith.constant 1.000000e+00 : f32
    %508 = vector.broadcast %cst_255 : f32 to vector<8x32xf32>
    %509 = arith.addf %508, %507 : vector<8x32xf32>
    %510 = arith.divf %508, %509 : vector<8x32xf32>
    %cst_256 = arith.constant dense<0.000000e+00> : vector<8x32xf32>
    %511 = tpu.matmul %445, %45, %cst_256 {dimension_numbers = #tpu.dot_dimension_numbers<[1], [0], [0], [1], [0, 0, 1, 1], [], []>} : vector<8x32xf32>, vector<32x32xf32>, vector<8x32xf32> -> vector<8x32xf32>
    %512 = arith.addf %498, %511 : vector<8x32xf32>
    %513 = vector.broadcast %51 : vector<1x32xf32> to vector<8x32xf32>
    %514 = arith.addf %512, %513 : vector<8x32xf32>
    %515 = arith.negf %514 : vector<8x32xf32>
    %516 = math.exp %515 : vector<8x32xf32>
    %cst_257 = arith.constant 1.000000e+00 : f32
    %517 = vector.broadcast %cst_257 : f32 to vector<8x32xf32>
    %518 = arith.addf %517, %516 : vector<8x32xf32>
    %519 = arith.divf %517, %518 : vector<8x32xf32>
    %cst_258 = arith.constant dense<0.000000e+00> : vector<8x32xf32>
    %520 = tpu.matmul %445, %47, %cst_258 {dimension_numbers = #tpu.dot_dimension_numbers<[1], [0], [0], [1], [0, 0, 1, 1], [], []>} : vector<8x32xf32>, vector<32x32xf32>, vector<8x32xf32> -> vector<8x32xf32>
    %521 = vector.broadcast %53 : vector<1x32xf32> to vector<8x32xf32>
    %522 = arith.addf %520, %521 : vector<8x32xf32>
    %523 = arith.mulf %510, %522 : vector<8x32xf32>
    %524 = arith.addf %501, %523 : vector<8x32xf32>
    %525 = math.tanh %524 : vector<8x32xf32>
    %cst_259 = arith.constant 1.000000e+00 : f32
    %526 = vector.broadcast %cst_259 : f32 to vector<8x32xf32>
    %527 = arith.subf %526, %519 : vector<8x32xf32>
    %528 = arith.mulf %527, %525 : vector<8x32xf32>
    %529 = arith.mulf %519, %445 : vector<8x32xf32>
    %530 = arith.addf %528, %529 : vector<8x32xf32>
    %c0_260 = arith.constant 0 : index
    %531 = arith.index_cast %492 : i32 to index
    %c0_261 = arith.constant 0 : index
    %c0_262 = arith.constant 0 : index
    %532 = vector.load %arg15[%c0_260, %531, %c0_261, %c0_262] : memref<3x8x8x32xf32, #tpu.memory_space<vmem>>, vector<1x1x8x32xf32>
    %533 = vector.shape_cast %532 : vector<1x1x8x32xf32> to vector<8x32xf32>
    %c1_263 = arith.constant 1 : index
    %534 = arith.index_cast %492 : i32 to index
    %c0_264 = arith.constant 0 : index
    %c0_265 = arith.constant 0 : index
    %535 = vector.load %arg15[%c1_263, %534, %c0_264, %c0_265] : memref<3x8x8x32xf32, #tpu.memory_space<vmem>>, vector<1x1x8x32xf32>
    %536 = vector.shape_cast %535 : vector<1x1x8x32xf32> to vector<8x32xf32>
    %c2_266 = arith.constant 2 : index
    %537 = arith.index_cast %492 : i32 to index
    %c0_267 = arith.constant 0 : index
    %c0_268 = arith.constant 0 : index
    %538 = vector.load %arg15[%c2_266, %537, %c0_267, %c0_268] : memref<3x8x8x32xf32, #tpu.memory_space<vmem>>, vector<1x1x8x32xf32>
    %539 = vector.shape_cast %538 : vector<1x1x8x32xf32> to vector<8x32xf32>
    %cst_269 = arith.constant dense<0.000000e+00> : vector<8x32xf32>
    %540 = tpu.matmul %483, %55, %cst_269 {dimension_numbers = #tpu.dot_dimension_numbers<[1], [0], [0], [1], [0, 0, 1, 1], [], []>} : vector<8x32xf32>, vector<32x32xf32>, vector<8x32xf32> -> vector<8x32xf32>
    %541 = arith.addf %533, %540 : vector<8x32xf32>
    %542 = vector.broadcast %61 : vector<1x32xf32> to vector<8x32xf32>
    %543 = arith.addf %541, %542 : vector<8x32xf32>
    %544 = arith.negf %543 : vector<8x32xf32>
    %545 = math.exp %544 : vector<8x32xf32>
    %cst_270 = arith.constant 1.000000e+00 : f32
    %546 = vector.broadcast %cst_270 : f32 to vector<8x32xf32>
    %547 = arith.addf %546, %545 : vector<8x32xf32>
    %548 = arith.divf %546, %547 : vector<8x32xf32>
    %cst_271 = arith.constant dense<0.000000e+00> : vector<8x32xf32>
    %549 = tpu.matmul %483, %57, %cst_271 {dimension_numbers = #tpu.dot_dimension_numbers<[1], [0], [0], [1], [0, 0, 1, 1], [], []>} : vector<8x32xf32>, vector<32x32xf32>, vector<8x32xf32> -> vector<8x32xf32>
    %550 = arith.addf %536, %549 : vector<8x32xf32>
    %551 = vector.broadcast %63 : vector<1x32xf32> to vector<8x32xf32>
    %552 = arith.addf %550, %551 : vector<8x32xf32>
    %553 = arith.negf %552 : vector<8x32xf32>
    %554 = math.exp %553 : vector<8x32xf32>
    %cst_272 = arith.constant 1.000000e+00 : f32
    %555 = vector.broadcast %cst_272 : f32 to vector<8x32xf32>
    %556 = arith.addf %555, %554 : vector<8x32xf32>
    %557 = arith.divf %555, %556 : vector<8x32xf32>
    %cst_273 = arith.constant dense<0.000000e+00> : vector<8x32xf32>
    %558 = tpu.matmul %483, %59, %cst_273 {dimension_numbers = #tpu.dot_dimension_numbers<[1], [0], [0], [1], [0, 0, 1, 1], [], []>} : vector<8x32xf32>, vector<32x32xf32>, vector<8x32xf32> -> vector<8x32xf32>
    %559 = vector.broadcast %65 : vector<1x32xf32> to vector<8x32xf32>
    %560 = arith.addf %558, %559 : vector<8x32xf32>
    %561 = arith.mulf %548, %560 : vector<8x32xf32>
    %562 = arith.addf %539, %561 : vector<8x32xf32>
    %563 = math.tanh %562 : vector<8x32xf32>
    %cst_274 = arith.constant 1.000000e+00 : f32
    %564 = vector.broadcast %cst_274 : f32 to vector<8x32xf32>
    %565 = arith.subf %564, %557 : vector<8x32xf32>
    %566 = arith.mulf %565, %563 : vector<8x32xf32>
    %567 = arith.mulf %557, %483 : vector<8x32xf32>
    %568 = arith.addf %566, %567 : vector<8x32xf32>
    %569 = arith.index_cast %c5_i32 : i32 to index
    %c0_275 = arith.constant 0 : index
    %c0_276 = arith.constant 0 : index
    %570 = vector.load %arg16[%569, %c0_275, %c0_276] : memref<8x8x32xf32, #tpu.memory_space<vmem>>, vector<1x8x32xf32>
    %571 = vector.shape_cast %570 : vector<1x8x32xf32> to vector<8x32xf32>
    %572 = vector.shape_cast %530 : vector<8x32xf32> to vector<1x8x32xf32>
    tpu.vector_store %arg16[%569, %c0_275, %c0_276], %572 {strides = array<i32>} : memref<8x8x32xf32, #tpu.memory_space<vmem>>, vector<1x8x32xf32>,
    %573 = arith.index_cast %492 : i32 to index
    %c0_277 = arith.constant 0 : index
    %c0_278 = arith.constant 0 : index
    %574 = vector.load %arg17[%573, %c0_277, %c0_278] : memref<8x8x32xf32, #tpu.memory_space<vmem>>, vector<1x8x32xf32>
    %575 = vector.shape_cast %574 : vector<1x8x32xf32> to vector<8x32xf32>
    %576 = vector.shape_cast %568 : vector<8x32xf32> to vector<1x8x32xf32>
    tpu.vector_store %arg17[%573, %c0_277, %c0_278], %576 {strides = array<i32>} : memref<8x8x32xf32, #tpu.memory_space<vmem>>, vector<1x8x32xf32>,
    %c6_i32 = arith.constant 6 : i32
    %c7_i32_279 = arith.constant 7 : i32
    %577 = arith.subi %c7_i32_279, %c6_i32 : i32
    %c0_280 = arith.constant 0 : index
    %578 = arith.index_cast %c6_i32 : i32 to index
    %c0_281 = arith.constant 0 : index
    %c0_282 = arith.constant 0 : index
    %579 = vector.load %arg14[%c0_280, %578, %c0_281, %c0_282] : memref<3x8x8x32xf32, #tpu.memory_space<vmem>>, vector<1x1x8x32xf32>
    %580 = vector.shape_cast %579 : vector<1x1x8x32xf32> to vector<8x32xf32>
    %c1_283 = arith.constant 1 : index
    %581 = arith.index_cast %c6_i32 : i32 to index
    %c0_284 = arith.constant 0 : index
    %c0_285 = arith.constant 0 : index
    %582 = vector.load %arg14[%c1_283, %581, %c0_284, %c0_285] : memref<3x8x8x32xf32, #tpu.memory_space<vmem>>, vector<1x1x8x32xf32>
    %583 = vector.shape_cast %582 : vector<1x1x8x32xf32> to vector<8x32xf32>
    %c2_286 = arith.constant 2 : index
    %584 = arith.index_cast %c6_i32 : i32 to index
    %c0_287 = arith.constant 0 : index
    %c0_288 = arith.constant 0 : index
    %585 = vector.load %arg14[%c2_286, %584, %c0_287, %c0_288] : memref<3x8x8x32xf32, #tpu.memory_space<vmem>>, vector<1x1x8x32xf32>
    %586 = vector.shape_cast %585 : vector<1x1x8x32xf32> to vector<8x32xf32>
    %cst_289 = arith.constant dense<0.000000e+00> : vector<8x32xf32>
    %587 = tpu.matmul %530, %43, %cst_289 {dimension_numbers = #tpu.dot_dimension_numbers<[1], [0], [0], [1], [0, 0, 1, 1], [], []>} : vector<8x32xf32>, vector<32x32xf32>, vector<8x32xf32> -> vector<8x32xf32>
    %588 = arith.addf %580, %587 : vector<8x32xf32>
    %589 = vector.broadcast %49 : vector<1x32xf32> to vector<8x32xf32>
    %590 = arith.addf %588, %589 : vector<8x32xf32>
    %591 = arith.negf %590 : vector<8x32xf32>
    %592 = math.exp %591 : vector<8x32xf32>
    %cst_290 = arith.constant 1.000000e+00 : f32
    %593 = vector.broadcast %cst_290 : f32 to vector<8x32xf32>
    %594 = arith.addf %593, %592 : vector<8x32xf32>
    %595 = arith.divf %593, %594 : vector<8x32xf32>
    %cst_291 = arith.constant dense<0.000000e+00> : vector<8x32xf32>
    %596 = tpu.matmul %530, %45, %cst_291 {dimension_numbers = #tpu.dot_dimension_numbers<[1], [0], [0], [1], [0, 0, 1, 1], [], []>} : vector<8x32xf32>, vector<32x32xf32>, vector<8x32xf32> -> vector<8x32xf32>
    %597 = arith.addf %583, %596 : vector<8x32xf32>
    %598 = vector.broadcast %51 : vector<1x32xf32> to vector<8x32xf32>
    %599 = arith.addf %597, %598 : vector<8x32xf32>
    %600 = arith.negf %599 : vector<8x32xf32>
    %601 = math.exp %600 : vector<8x32xf32>
    %cst_292 = arith.constant 1.000000e+00 : f32
    %602 = vector.broadcast %cst_292 : f32 to vector<8x32xf32>
    %603 = arith.addf %602, %601 : vector<8x32xf32>
    %604 = arith.divf %602, %603 : vector<8x32xf32>
    %cst_293 = arith.constant dense<0.000000e+00> : vector<8x32xf32>
    %605 = tpu.matmul %530, %47, %cst_293 {dimension_numbers = #tpu.dot_dimension_numbers<[1], [0], [0], [1], [0, 0, 1, 1], [], []>} : vector<8x32xf32>, vector<32x32xf32>, vector<8x32xf32> -> vector<8x32xf32>
    %606 = vector.broadcast %53 : vector<1x32xf32> to vector<8x32xf32>
    %607 = arith.addf %605, %606 : vector<8x32xf32>
    %608 = arith.mulf %595, %607 : vector<8x32xf32>
    %609 = arith.addf %586, %608 : vector<8x32xf32>
    %610 = math.tanh %609 : vector<8x32xf32>
    %cst_294 = arith.constant 1.000000e+00 : f32
    %611 = vector.broadcast %cst_294 : f32 to vector<8x32xf32>
    %612 = arith.subf %611, %604 : vector<8x32xf32>
    %613 = arith.mulf %612, %610 : vector<8x32xf32>
    %614 = arith.mulf %604, %530 : vector<8x32xf32>
    %615 = arith.addf %613, %614 : vector<8x32xf32>
    %c0_295 = arith.constant 0 : index
    %616 = arith.index_cast %577 : i32 to index
    %c0_296 = arith.constant 0 : index
    %c0_297 = arith.constant 0 : index
    %617 = vector.load %arg15[%c0_295, %616, %c0_296, %c0_297] : memref<3x8x8x32xf32, #tpu.memory_space<vmem>>, vector<1x1x8x32xf32>
    %618 = vector.shape_cast %617 : vector<1x1x8x32xf32> to vector<8x32xf32>
    %c1_298 = arith.constant 1 : index
    %619 = arith.index_cast %577 : i32 to index
    %c0_299 = arith.constant 0 : index
    %c0_300 = arith.constant 0 : index
    %620 = vector.load %arg15[%c1_298, %619, %c0_299, %c0_300] : memref<3x8x8x32xf32, #tpu.memory_space<vmem>>, vector<1x1x8x32xf32>
    %621 = vector.shape_cast %620 : vector<1x1x8x32xf32> to vector<8x32xf32>
    %c2_301 = arith.constant 2 : index
    %622 = arith.index_cast %577 : i32 to index
    %c0_302 = arith.constant 0 : index
    %c0_303 = arith.constant 0 : index
    %623 = vector.load %arg15[%c2_301, %622, %c0_302, %c0_303] : memref<3x8x8x32xf32, #tpu.memory_space<vmem>>, vector<1x1x8x32xf32>
    %624 = vector.shape_cast %623 : vector<1x1x8x32xf32> to vector<8x32xf32>
    %cst_304 = arith.constant dense<0.000000e+00> : vector<8x32xf32>
    %625 = tpu.matmul %568, %55, %cst_304 {dimension_numbers = #tpu.dot_dimension_numbers<[1], [0], [0], [1], [0, 0, 1, 1], [], []>} : vector<8x32xf32>, vector<32x32xf32>, vector<8x32xf32> -> vector<8x32xf32>
    %626 = arith.addf %618, %625 : vector<8x32xf32>
    %627 = vector.broadcast %61 : vector<1x32xf32> to vector<8x32xf32>
    %628 = arith.addf %626, %627 : vector<8x32xf32>
    %629 = arith.negf %628 : vector<8x32xf32>
    %630 = math.exp %629 : vector<8x32xf32>
    %cst_305 = arith.constant 1.000000e+00 : f32
    %631 = vector.broadcast %cst_305 : f32 to vector<8x32xf32>
    %632 = arith.addf %631, %630 : vector<8x32xf32>
    %633 = arith.divf %631, %632 : vector<8x32xf32>
    %cst_306 = arith.constant dense<0.000000e+00> : vector<8x32xf32>
    %634 = tpu.matmul %568, %57, %cst_306 {dimension_numbers = #tpu.dot_dimension_numbers<[1], [0], [0], [1], [0, 0, 1, 1], [], []>} : vector<8x32xf32>, vector<32x32xf32>, vector<8x32xf32> -> vector<8x32xf32>
    %635 = arith.addf %621, %634 : vector<8x32xf32>
    %636 = vector.broadcast %63 : vector<1x32xf32> to vector<8x32xf32>
    %637 = arith.addf %635, %636 : vector<8x32xf32>
    %638 = arith.negf %637 : vector<8x32xf32>
    %639 = math.exp %638 : vector<8x32xf32>
    %cst_307 = arith.constant 1.000000e+00 : f32
    %640 = vector.broadcast %cst_307 : f32 to vector<8x32xf32>
    %641 = arith.addf %640, %639 : vector<8x32xf32>
    %642 = arith.divf %640, %641 : vector<8x32xf32>
    %cst_308 = arith.constant dense<0.000000e+00> : vector<8x32xf32>
    %643 = tpu.matmul %568, %59, %cst_308 {dimension_numbers = #tpu.dot_dimension_numbers<[1], [0], [0], [1], [0, 0, 1, 1], [], []>} : vector<8x32xf32>, vector<32x32xf32>, vector<8x32xf32> -> vector<8x32xf32>
    %644 = vector.broadcast %65 : vector<1x32xf32> to vector<8x32xf32>
    %645 = arith.addf %643, %644 : vector<8x32xf32>
    %646 = arith.mulf %633, %645 : vector<8x32xf32>
    %647 = arith.addf %624, %646 : vector<8x32xf32>
    %648 = math.tanh %647 : vector<8x32xf32>
    %cst_309 = arith.constant 1.000000e+00 : f32
    %649 = vector.broadcast %cst_309 : f32 to vector<8x32xf32>
    %650 = arith.subf %649, %642 : vector<8x32xf32>
    %651 = arith.mulf %650, %648 : vector<8x32xf32>
    %652 = arith.mulf %642, %568 : vector<8x32xf32>
    %653 = arith.addf %651, %652 : vector<8x32xf32>
    %654 = arith.index_cast %c6_i32 : i32 to index
    %c0_310 = arith.constant 0 : index
    %c0_311 = arith.constant 0 : index
    %655 = vector.load %arg16[%654, %c0_310, %c0_311] : memref<8x8x32xf32, #tpu.memory_space<vmem>>, vector<1x8x32xf32>
    %656 = vector.shape_cast %655 : vector<1x8x32xf32> to vector<8x32xf32>
    %657 = vector.shape_cast %615 : vector<8x32xf32> to vector<1x8x32xf32>
    tpu.vector_store %arg16[%654, %c0_310, %c0_311], %657 {strides = array<i32>} : memref<8x8x32xf32, #tpu.memory_space<vmem>>, vector<1x8x32xf32>,
    %658 = arith.index_cast %577 : i32 to index
    %c0_312 = arith.constant 0 : index
    %c0_313 = arith.constant 0 : index
    %659 = vector.load %arg17[%658, %c0_312, %c0_313] : memref<8x8x32xf32, #tpu.memory_space<vmem>>, vector<1x8x32xf32>
    %660 = vector.shape_cast %659 : vector<1x8x32xf32> to vector<8x32xf32>
    %661 = vector.shape_cast %653 : vector<8x32xf32> to vector<1x8x32xf32>
    tpu.vector_store %arg17[%658, %c0_312, %c0_313], %661 {strides = array<i32>} : memref<8x8x32xf32, #tpu.memory_space<vmem>>, vector<1x8x32xf32>,
    %c7_i32_314 = arith.constant 7 : i32
    %c7_i32_315 = arith.constant 7 : i32
    %662 = arith.subi %c7_i32_315, %c7_i32_314 : i32
    %c0_316 = arith.constant 0 : index
    %663 = arith.index_cast %c7_i32_314 : i32 to index
    %c0_317 = arith.constant 0 : index
    %c0_318 = arith.constant 0 : index
    %664 = vector.load %arg14[%c0_316, %663, %c0_317, %c0_318] : memref<3x8x8x32xf32, #tpu.memory_space<vmem>>, vector<1x1x8x32xf32>
    %665 = vector.shape_cast %664 : vector<1x1x8x32xf32> to vector<8x32xf32>
    %c1_319 = arith.constant 1 : index
    %666 = arith.index_cast %c7_i32_314 : i32 to index
    %c0_320 = arith.constant 0 : index
    %c0_321 = arith.constant 0 : index
    %667 = vector.load %arg14[%c1_319, %666, %c0_320, %c0_321] : memref<3x8x8x32xf32, #tpu.memory_space<vmem>>, vector<1x1x8x32xf32>
    %668 = vector.shape_cast %667 : vector<1x1x8x32xf32> to vector<8x32xf32>
    %c2_322 = arith.constant 2 : index
    %669 = arith.index_cast %c7_i32_314 : i32 to index
    %c0_323 = arith.constant 0 : index
    %c0_324 = arith.constant 0 : index
    %670 = vector.load %arg14[%c2_322, %669, %c0_323, %c0_324] : memref<3x8x8x32xf32, #tpu.memory_space<vmem>>, vector<1x1x8x32xf32>
    %671 = vector.shape_cast %670 : vector<1x1x8x32xf32> to vector<8x32xf32>
    %cst_325 = arith.constant dense<0.000000e+00> : vector<8x32xf32>
    %672 = tpu.matmul %615, %43, %cst_325 {dimension_numbers = #tpu.dot_dimension_numbers<[1], [0], [0], [1], [0, 0, 1, 1], [], []>} : vector<8x32xf32>, vector<32x32xf32>, vector<8x32xf32> -> vector<8x32xf32>
    %673 = arith.addf %665, %672 : vector<8x32xf32>
    %674 = vector.broadcast %49 : vector<1x32xf32> to vector<8x32xf32>
    %675 = arith.addf %673, %674 : vector<8x32xf32>
    %676 = arith.negf %675 : vector<8x32xf32>
    %677 = math.exp %676 : vector<8x32xf32>
    %cst_326 = arith.constant 1.000000e+00 : f32
    %678 = vector.broadcast %cst_326 : f32 to vector<8x32xf32>
    %679 = arith.addf %678, %677 : vector<8x32xf32>
    %680 = arith.divf %678, %679 : vector<8x32xf32>
    %cst_327 = arith.constant dense<0.000000e+00> : vector<8x32xf32>
    %681 = tpu.matmul %615, %45, %cst_327 {dimension_numbers = #tpu.dot_dimension_numbers<[1], [0], [0], [1], [0, 0, 1, 1], [], []>} : vector<8x32xf32>, vector<32x32xf32>, vector<8x32xf32> -> vector<8x32xf32>
    %682 = arith.addf %668, %681 : vector<8x32xf32>
    %683 = vector.broadcast %51 : vector<1x32xf32> to vector<8x32xf32>
    %684 = arith.addf %682, %683 : vector<8x32xf32>
    %685 = arith.negf %684 : vector<8x32xf32>
    %686 = math.exp %685 : vector<8x32xf32>
    %cst_328 = arith.constant 1.000000e+00 : f32
    %687 = vector.broadcast %cst_328 : f32 to vector<8x32xf32>
    %688 = arith.addf %687, %686 : vector<8x32xf32>
    %689 = arith.divf %687, %688 : vector<8x32xf32>
    %cst_329 = arith.constant dense<0.000000e+00> : vector<8x32xf32>
    %690 = tpu.matmul %615, %47, %cst_329 {dimension_numbers = #tpu.dot_dimension_numbers<[1], [0], [0], [1], [0, 0, 1, 1], [], []>} : vector<8x32xf32>, vector<32x32xf32>, vector<8x32xf32> -> vector<8x32xf32>
    %691 = vector.broadcast %53 : vector<1x32xf32> to vector<8x32xf32>
    %692 = arith.addf %690, %691 : vector<8x32xf32>
    %693 = arith.mulf %680, %692 : vector<8x32xf32>
    %694 = arith.addf %671, %693 : vector<8x32xf32>
    %695 = math.tanh %694 : vector<8x32xf32>
    %cst_330 = arith.constant 1.000000e+00 : f32
    %696 = vector.broadcast %cst_330 : f32 to vector<8x32xf32>
    %697 = arith.subf %696, %689 : vector<8x32xf32>
    %698 = arith.mulf %697, %695 : vector<8x32xf32>
    %699 = arith.mulf %689, %615 : vector<8x32xf32>
    %700 = arith.addf %698, %699 : vector<8x32xf32>
    %c0_331 = arith.constant 0 : index
    %701 = arith.index_cast %662 : i32 to index
    %c0_332 = arith.constant 0 : index
    %c0_333 = arith.constant 0 : index
    %702 = vector.load %arg15[%c0_331, %701, %c0_332, %c0_333] : memref<3x8x8x32xf32, #tpu.memory_space<vmem>>, vector<1x1x8x32xf32>
    %703 = vector.shape_cast %702 : vector<1x1x8x32xf32> to vector<8x32xf32>
    %c1_334 = arith.constant 1 : index
    %704 = arith.index_cast %662 : i32 to index
    %c0_335 = arith.constant 0 : index
    %c0_336 = arith.constant 0 : index
    %705 = vector.load %arg15[%c1_334, %704, %c0_335, %c0_336] : memref<3x8x8x32xf32, #tpu.memory_space<vmem>>, vector<1x1x8x32xf32>
    %706 = vector.shape_cast %705 : vector<1x1x8x32xf32> to vector<8x32xf32>
    %c2_337 = arith.constant 2 : index
    %707 = arith.index_cast %662 : i32 to index
    %c0_338 = arith.constant 0 : index
    %c0_339 = arith.constant 0 : index
    %708 = vector.load %arg15[%c2_337, %707, %c0_338, %c0_339] : memref<3x8x8x32xf32, #tpu.memory_space<vmem>>, vector<1x1x8x32xf32>
    %709 = vector.shape_cast %708 : vector<1x1x8x32xf32> to vector<8x32xf32>
    %cst_340 = arith.constant dense<0.000000e+00> : vector<8x32xf32>
    %710 = tpu.matmul %653, %55, %cst_340 {dimension_numbers = #tpu.dot_dimension_numbers<[1], [0], [0], [1], [0, 0, 1, 1], [], []>} : vector<8x32xf32>, vector<32x32xf32>, vector<8x32xf32> -> vector<8x32xf32>
    %711 = arith.addf %703, %710 : vector<8x32xf32>
    %712 = vector.broadcast %61 : vector<1x32xf32> to vector<8x32xf32>
    %713 = arith.addf %711, %712 : vector<8x32xf32>
    %714 = arith.negf %713 : vector<8x32xf32>
    %715 = math.exp %714 : vector<8x32xf32>
    %cst_341 = arith.constant 1.000000e+00 : f32
    %716 = vector.broadcast %cst_341 : f32 to vector<8x32xf32>
    %717 = arith.addf %716, %715 : vector<8x32xf32>
    %718 = arith.divf %716, %717 : vector<8x32xf32>
    %cst_342 = arith.constant dense<0.000000e+00> : vector<8x32xf32>
    %719 = tpu.matmul %653, %57, %cst_342 {dimension_numbers = #tpu.dot_dimension_numbers<[1], [0], [0], [1], [0, 0, 1, 1], [], []>} : vector<8x32xf32>, vector<32x32xf32>, vector<8x32xf32> -> vector<8x32xf32>
    %720 = arith.addf %706, %719 : vector<8x32xf32>
    %721 = vector.broadcast %63 : vector<1x32xf32> to vector<8x32xf32>
    %722 = arith.addf %720, %721 : vector<8x32xf32>
    %723 = arith.negf %722 : vector<8x32xf32>
    %724 = math.exp %723 : vector<8x32xf32>
    %cst_343 = arith.constant 1.000000e+00 : f32
    %725 = vector.broadcast %cst_343 : f32 to vector<8x32xf32>
    %726 = arith.addf %725, %724 : vector<8x32xf32>
    %727 = arith.divf %725, %726 : vector<8x32xf32>
    %cst_344 = arith.constant dense<0.000000e+00> : vector<8x32xf32>
    %728 = tpu.matmul %653, %59, %cst_344 {dimension_numbers = #tpu.dot_dimension_numbers<[1], [0], [0], [1], [0, 0, 1, 1], [], []>} : vector<8x32xf32>, vector<32x32xf32>, vector<8x32xf32> -> vector<8x32xf32>
    %729 = vector.broadcast %65 : vector<1x32xf32> to vector<8x32xf32>
    %730 = arith.addf %728, %729 : vector<8x32xf32>
    %731 = arith.mulf %718, %730 : vector<8x32xf32>
    %732 = arith.addf %709, %731 : vector<8x32xf32>
    %733 = math.tanh %732 : vector<8x32xf32>
    %cst_345 = arith.constant 1.000000e+00 : f32
    %734 = vector.broadcast %cst_345 : f32 to vector<8x32xf32>
    %735 = arith.subf %734, %727 : vector<8x32xf32>
    %736 = arith.mulf %735, %733 : vector<8x32xf32>
    %737 = arith.mulf %727, %653 : vector<8x32xf32>
    %738 = arith.addf %736, %737 : vector<8x32xf32>
    %739 = arith.index_cast %c7_i32_314 : i32 to index
    %c0_346 = arith.constant 0 : index
    %c0_347 = arith.constant 0 : index
    %740 = vector.load %arg16[%739, %c0_346, %c0_347] : memref<8x8x32xf32, #tpu.memory_space<vmem>>, vector<1x8x32xf32>
    %741 = vector.shape_cast %740 : vector<1x8x32xf32> to vector<8x32xf32>
    %742 = vector.shape_cast %700 : vector<8x32xf32> to vector<1x8x32xf32>
    tpu.vector_store %arg16[%739, %c0_346, %c0_347], %742 {strides = array<i32>} : memref<8x8x32xf32, #tpu.memory_space<vmem>>, vector<1x8x32xf32>,
    %743 = arith.index_cast %662 : i32 to index
    %c0_348 = arith.constant 0 : index
    %c0_349 = arith.constant 0 : index
    %744 = vector.load %arg17[%743, %c0_348, %c0_349] : memref<8x8x32xf32, #tpu.memory_space<vmem>>, vector<1x8x32xf32>
    %745 = vector.shape_cast %744 : vector<1x8x32xf32> to vector<8x32xf32>
    %746 = vector.shape_cast %738 : vector<8x32xf32> to vector<1x8x32xf32>
    tpu.vector_store %arg17[%743, %c0_348, %c0_349], %746 {strides = array<i32>} : memref<8x8x32xf32, #tpu.memory_space<vmem>>, vector<1x8x32xf32>,
    %c8_i32 = arith.constant 8 : i32
    %c0_350 = arith.constant 0 : index
    %c0_351 = arith.constant 0 : index
    %c0_352 = arith.constant 0 : index
    %747 = vector.load %arg16[%c0_350, %c0_351, %c0_352] : memref<8x8x32xf32, #tpu.memory_space<vmem>>, vector<8x8x32xf32>
    %c0_353 = arith.constant 0 : index
    %c0_354 = arith.constant 0 : index
    %c0_355 = arith.constant 0 : index
    %748 = vector.load %arg17[%c0_353, %c0_354, %c0_355] : memref<8x8x32xf32, #tpu.memory_space<vmem>>, vector<8x8x32xf32>
    %749 = tpu.concatenate %747, %748 in 2 : vector<8x8x32xf32>, vector<8x8x32xf32> -> vector<8x8x64xf32>
    %750 = vector.shape_cast %749 : vector<8x8x64xf32> to vector<64x64xf32>
    %c0_356 = arith.constant 0 : index
    %c0_357 = arith.constant 0 : index
    %751 = vector.load %arg10[%c0_356, %c0_357] : memref<64x64xf32, #tpu.memory_space<vmem>>, vector<64x64xf32>
    %cst_358 = arith.constant dense<0.000000e+00> : vector<64x64xf32>
    %752 = tpu.matmul %750, %751, %cst_358 {dimension_numbers = #tpu.dot_dimension_numbers<[1], [0], [0], [1], [0, 0, 1, 1], [], []>} : vector<64x64xf32>, vector<64x64xf32>, vector<64x64xf32> -> vector<64x64xf32>
    %c0_359 = arith.constant 0 : index
    %c0_360 = arith.constant 0 : index
    %753 = vector.load %arg11[%c0_359, %c0_360] : memref<1x64xf32, #tpu.memory_space<vmem>>, vector<1x64xf32>
    %754 = vector.broadcast %753 : vector<1x64xf32> to vector<64x64xf32>
    %755 = arith.addf %752, %754 : vector<64x64xf32>
    %756 = math.tanh %755 : vector<64x64xf32>
    %757 = vector.shape_cast %756 : vector<64x64xf32> to vector<8x8x64xf32>
    %c0_361 = arith.constant 0 : index
    %c0_362 = arith.constant 0 : index
    %758 = vector.load %arg12[%c0_361, %c0_362] : memref<1x64xf32, #tpu.memory_space<vmem>>, vector<1x64xf32>
    %759 = vector.shape_cast %758 : vector<1x64xf32> to vector<1x1x64xf32>
    %760 = vector.broadcast %759 : vector<1x1x64xf32> to vector<8x8x64xf32>
    %761 = arith.mulf %757, %760 : vector<8x8x64xf32>
    %cst_363 = arith.constant dense<0.000000e+00> : vector<8x8xf32>
    %762 = vector.multi_reduction <add>, %761, %cst_363 [2] : vector<8x8x64xf32> to vector<8x8xf32>
    %763 = vector.shape_cast %762 : vector<8x8xf32> to vector<8x8x1xf32>
    %cst_364 = arith.constant dense<0xFF800000> : vector<8x1xf32>
    %764 = vector.multi_reduction <maximumf>, %763, %cst_364 [0] : vector<8x8x1xf32> to vector<8x1xf32>
    %765 = vector.shape_cast %764 : vector<8x1xf32> to vector<1x8x1xf32>
    %766 = vector.broadcast %765 : vector<1x8x1xf32> to vector<8x8x1xf32>
    %767 = arith.subf %763, %766 : vector<8x8x1xf32>
    %768 = math.exp %767 : vector<8x8x1xf32>
    %cst_365 = arith.constant dense<0.000000e+00> : vector<8x1xf32>
    %769 = vector.multi_reduction <add>, %768, %cst_365 [0] : vector<8x8x1xf32> to vector<8x1xf32>
    %770 = vector.shape_cast %769 : vector<8x1xf32> to vector<1x8x1xf32>
    %771 = vector.broadcast %770 : vector<1x8x1xf32> to vector<8x8x1xf32>
    %772 = arith.divf %768, %771 : vector<8x8x1xf32>
    %c0_366 = arith.constant 0 : index
    %c0_367 = arith.constant 0 : index
    %c0_368 = arith.constant 0 : index
    %773 = vector.load %arg1[%c0_366, %c0_367, %c0_368] : memref<8x8x1xf32, #tpu.memory_space<vmem>>, vector<8x8x1xf32>
    %cst_369 = arith.constant 0.000000e+00 : f32
    %774 = vector.broadcast %cst_369 : f32 to vector<8x8x1xf32>
    %775 = arith.cmpf one, %773, %774 : vector<8x8x1xf32>
    %cst_370 = arith.constant 0.000000e+00 : f32
    %776 = vector.broadcast %cst_370 : f32 to vector<8x8x1xf32>
    %777 = arith.select %775, %772, %776 : vector<8x8x1xi1>, vector<8x8x1xf32>
    %cst_371 = arith.constant dense<0.000000e+00> : vector<8x1xf32>
    %778 = vector.multi_reduction <add>, %777, %cst_371 [0] : vector<8x8x1xf32> to vector<8x1xf32>
    %779 = vector.shape_cast %778 : vector<8x1xf32> to vector<1x8x1xf32>
    %cst_372 = arith.constant 9.99999974E-5 : f32
    %780 = vector.broadcast %cst_372 : f32 to vector<1x8x1xf32>
    %781 = arith.addf %779, %780 : vector<1x8x1xf32>
    %782 = vector.broadcast %781 : vector<1x8x1xf32> to vector<8x8x1xf32>
    %783 = arith.divf %777, %782 : vector<8x8x1xf32>
    %784 = vector.broadcast %783 : vector<8x8x1xf32> to vector<8x8x64xf32>
    %785 = arith.mulf %749, %784 : vector<8x8x64xf32>
    %cst_373 = arith.constant dense<0.000000e+00> : vector<8x64xf32>
    %786 = vector.multi_reduction <add>, %785, %cst_373 [0] : vector<8x8x64xf32> to vector<8x64xf32>
    %c0_374 = arith.constant 0 : index
    %c0_375 = arith.constant 0 : index
    %787 = vector.load %arg13[%c0_374, %c0_375] : memref<8x64xf32, #tpu.memory_space<vmem>>, vector<8x64xf32>
    tpu.vector_store %arg13[%c0_374, %c0_375], %786 {strides = array<i32>} : memref<8x64xf32, #tpu.memory_space<vmem>>, vector<8x64xf32>,
    return
  }
}

module attributes {stable_mosaic.version = 11 : i64} {
  func.func @_gru_attn_kernel(%arg0: memref<4x2x64xf32, #tpu.memory_space<vmem>>, %arg1: memref<4x2x1xf32, #tpu.memory_space<vmem>>, %arg2: memref<64x96xf32, #tpu.memory_space<vmem>>, %arg3: memref<3x32x32xf32, #tpu.memory_space<vmem>>, %arg4: memref<1x96xf32, #tpu.memory_space<vmem>>, %arg5: memref<3x1x32xf32, #tpu.memory_space<vmem>>, %arg6: memref<64x96xf32, #tpu.memory_space<vmem>>, %arg7: memref<3x32x32xf32, #tpu.memory_space<vmem>>, %arg8: memref<1x96xf32, #tpu.memory_space<vmem>>, %arg9: memref<3x1x32xf32, #tpu.memory_space<vmem>>, %arg10: memref<64x64xf32, #tpu.memory_space<vmem>>, %arg11: memref<1x64xf32, #tpu.memory_space<vmem>>, %arg12: memref<1x64xf32, #tpu.memory_space<vmem>>, %arg13: memref<64x5xf32, #tpu.memory_space<vmem>>, %arg14: memref<1x5xf32, #tpu.memory_space<vmem>>, %arg15: memref<2x5xf32, #tpu.memory_space<vmem>>, %arg16: memref<3x4x2x32xf32, #tpu.memory_space<vmem>>, %arg17: memref<3x4x2x32xf32, #tpu.memory_space<vmem>>, %arg18: memref<4x2x32xf32, #tpu.memory_space<vmem>>, %arg19: memref<4x2x32xf32, #tpu.memory_space<vmem>>) attributes {dimension_semantics = [], scalar_prefetch = 0 : i64, scratch_operands = 4 : i64, tpu.core_type = #tpu.core_type<tc>} {
    %c0 = arith.constant 0 : index
    %c0_0 = arith.constant 0 : index
    %c0_1 = arith.constant 0 : index
    %0 = vector.load %arg0[%c0, %c0_0, %c0_1] : memref<4x2x64xf32, #tpu.memory_space<vmem>>, vector<4x2x64xf32>
    %1 = vector.shape_cast %0 : vector<4x2x64xf32> to vector<8x64xf32>
    %c0_2 = arith.constant 0 : index
    %c0_3 = arith.constant 0 : index
    %2 = vector.load %arg2[%c0_2, %c0_3] : memref<64x96xf32, #tpu.memory_space<vmem>>, vector<64x96xf32>
    %cst = arith.constant dense<0.000000e+00> : vector<8x96xf32>
    %3 = tpu.matmul %1, %2, %cst {dimension_numbers = #tpu.dot_dimension_numbers<[1], [0], [0], [1], [0, 0, 1, 1], [], []>} : vector<8x64xf32>, vector<64x96xf32>, vector<8x96xf32> -> vector<8x96xf32>
    %c0_4 = arith.constant 0 : index
    %c0_5 = arith.constant 0 : index
    %4 = vector.load %arg4[%c0_4, %c0_5] : memref<1x96xf32, #tpu.memory_space<vmem>>, vector<1x96xf32>
    %5 = vector.broadcast %4 : vector<1x96xf32> to vector<8x96xf32>
    %6 = arith.addf %3, %5 : vector<8x96xf32>
    %c0_6 = arith.constant 0 : index
    %c0_7 = arith.constant 0 : index
    %7 = vector.load %arg6[%c0_6, %c0_7] : memref<64x96xf32, #tpu.memory_space<vmem>>, vector<64x96xf32>
    %cst_8 = arith.constant dense<0.000000e+00> : vector<8x96xf32>
    %8 = tpu.matmul %1, %7, %cst_8 {dimension_numbers = #tpu.dot_dimension_numbers<[1], [0], [0], [1], [0, 0, 1, 1], [], []>} : vector<8x64xf32>, vector<64x96xf32>, vector<8x96xf32> -> vector<8x96xf32>
    %c0_9 = arith.constant 0 : index
    %c0_10 = arith.constant 0 : index
    %9 = vector.load %arg8[%c0_9, %c0_10] : memref<1x96xf32, #tpu.memory_space<vmem>>, vector<1x96xf32>
    %10 = vector.broadcast %9 : vector<1x96xf32> to vector<8x96xf32>
    %11 = arith.addf %8, %10 : vector<8x96xf32>
    %12 = vector.extract_strided_slice %6 {offsets = [0, 0], sizes = [8, 32], strides = [1, 1]} : vector<8x96xf32> to vector<8x32xf32>
    %13 = vector.shape_cast %12 : vector<8x32xf32> to vector<4x2x32xf32>
    %c0_11 = arith.constant 0 : index
    %c0_12 = arith.constant 0 : index
    %c0_13 = arith.constant 0 : index
    %c0_14 = arith.constant 0 : index
    %14 = vector.load %arg16[%c0_11, %c0_12, %c0_13, %c0_14] : memref<3x4x2x32xf32, #tpu.memory_space<vmem>>, vector<1x4x2x32xf32>
    %15 = vector.shape_cast %14 : vector<1x4x2x32xf32> to vector<4x2x32xf32>
    %16 = vector.shape_cast %13 : vector<4x2x32xf32> to vector<1x4x2x32xf32>
    tpu.vector_store %arg16[%c0_11, %c0_12, %c0_13, %c0_14], %16 {strides = array<i32>} : memref<3x4x2x32xf32, #tpu.memory_space<vmem>>, vector<1x4x2x32xf32>,
    %17 = vector.extract_strided_slice %11 {offsets = [0, 0], sizes = [8, 32], strides = [1, 1]} : vector<8x96xf32> to vector<8x32xf32>
    %18 = vector.shape_cast %17 : vector<8x32xf32> to vector<4x2x32xf32>
    %c0_15 = arith.constant 0 : index
    %c0_16 = arith.constant 0 : index
    %c0_17 = arith.constant 0 : index
    %c0_18 = arith.constant 0 : index
    %19 = vector.load %arg17[%c0_15, %c0_16, %c0_17, %c0_18] : memref<3x4x2x32xf32, #tpu.memory_space<vmem>>, vector<1x4x2x32xf32>
    %20 = vector.shape_cast %19 : vector<1x4x2x32xf32> to vector<4x2x32xf32>
    %21 = vector.shape_cast %18 : vector<4x2x32xf32> to vector<1x4x2x32xf32>
    tpu.vector_store %arg17[%c0_15, %c0_16, %c0_17, %c0_18], %21 {strides = array<i32>} : memref<3x4x2x32xf32, #tpu.memory_space<vmem>>, vector<1x4x2x32xf32>,
    %22 = vector.extract_strided_slice %6 {offsets = [0, 32], sizes = [8, 32], strides = [1, 1]} : vector<8x96xf32> to vector<8x32xf32>
    %23 = vector.shape_cast %22 : vector<8x32xf32> to vector<4x2x32xf32>
    %c1 = arith.constant 1 : index
    %c0_19 = arith.constant 0 : index
    %c0_20 = arith.constant 0 : index
    %c0_21 = arith.constant 0 : index
    %24 = vector.load %arg16[%c1, %c0_19, %c0_20, %c0_21] : memref<3x4x2x32xf32, #tpu.memory_space<vmem>>, vector<1x4x2x32xf32>
    %25 = vector.shape_cast %24 : vector<1x4x2x32xf32> to vector<4x2x32xf32>
    %26 = vector.shape_cast %23 : vector<4x2x32xf32> to vector<1x4x2x32xf32>
    tpu.vector_store %arg16[%c1, %c0_19, %c0_20, %c0_21], %26 {strides = array<i32>} : memref<3x4x2x32xf32, #tpu.memory_space<vmem>>, vector<1x4x2x32xf32>,
    %27 = vector.extract_strided_slice %11 {offsets = [0, 32], sizes = [8, 32], strides = [1, 1]} : vector<8x96xf32> to vector<8x32xf32>
    %28 = vector.shape_cast %27 : vector<8x32xf32> to vector<4x2x32xf32>
    %c1_22 = arith.constant 1 : index
    %c0_23 = arith.constant 0 : index
    %c0_24 = arith.constant 0 : index
    %c0_25 = arith.constant 0 : index
    %29 = vector.load %arg17[%c1_22, %c0_23, %c0_24, %c0_25] : memref<3x4x2x32xf32, #tpu.memory_space<vmem>>, vector<1x4x2x32xf32>
    %30 = vector.shape_cast %29 : vector<1x4x2x32xf32> to vector<4x2x32xf32>
    %31 = vector.shape_cast %28 : vector<4x2x32xf32> to vector<1x4x2x32xf32>
    tpu.vector_store %arg17[%c1_22, %c0_23, %c0_24, %c0_25], %31 {strides = array<i32>} : memref<3x4x2x32xf32, #tpu.memory_space<vmem>>, vector<1x4x2x32xf32>,
    %32 = vector.extract_strided_slice %6 {offsets = [0, 64], sizes = [8, 32], strides = [1, 1]} : vector<8x96xf32> to vector<8x32xf32>
    %33 = vector.shape_cast %32 : vector<8x32xf32> to vector<4x2x32xf32>
    %c2 = arith.constant 2 : index
    %c0_26 = arith.constant 0 : index
    %c0_27 = arith.constant 0 : index
    %c0_28 = arith.constant 0 : index
    %34 = vector.load %arg16[%c2, %c0_26, %c0_27, %c0_28] : memref<3x4x2x32xf32, #tpu.memory_space<vmem>>, vector<1x4x2x32xf32>
    %35 = vector.shape_cast %34 : vector<1x4x2x32xf32> to vector<4x2x32xf32>
    %36 = vector.shape_cast %33 : vector<4x2x32xf32> to vector<1x4x2x32xf32>
    tpu.vector_store %arg16[%c2, %c0_26, %c0_27, %c0_28], %36 {strides = array<i32>} : memref<3x4x2x32xf32, #tpu.memory_space<vmem>>, vector<1x4x2x32xf32>,
    %37 = vector.extract_strided_slice %11 {offsets = [0, 64], sizes = [8, 32], strides = [1, 1]} : vector<8x96xf32> to vector<8x32xf32>
    %38 = vector.shape_cast %37 : vector<8x32xf32> to vector<4x2x32xf32>
    %c2_29 = arith.constant 2 : index
    %c0_30 = arith.constant 0 : index
    %c0_31 = arith.constant 0 : index
    %c0_32 = arith.constant 0 : index
    %39 = vector.load %arg17[%c2_29, %c0_30, %c0_31, %c0_32] : memref<3x4x2x32xf32, #tpu.memory_space<vmem>>, vector<1x4x2x32xf32>
    %40 = vector.shape_cast %39 : vector<1x4x2x32xf32> to vector<4x2x32xf32>
    %41 = vector.shape_cast %38 : vector<4x2x32xf32> to vector<1x4x2x32xf32>
    tpu.vector_store %arg17[%c2_29, %c0_30, %c0_31, %c0_32], %41 {strides = array<i32>} : memref<3x4x2x32xf32, #tpu.memory_space<vmem>>, vector<1x4x2x32xf32>,
    %c0_33 = arith.constant 0 : index
    %c0_34 = arith.constant 0 : index
    %c0_35 = arith.constant 0 : index
    %42 = vector.load %arg3[%c0_33, %c0_34, %c0_35] : memref<3x32x32xf32, #tpu.memory_space<vmem>>, vector<1x32x32xf32>
    %43 = vector.shape_cast %42 : vector<1x32x32xf32> to vector<32x32xf32>
    %c1_36 = arith.constant 1 : index
    %c0_37 = arith.constant 0 : index
    %c0_38 = arith.constant 0 : index
    %44 = vector.load %arg3[%c1_36, %c0_37, %c0_38] : memref<3x32x32xf32, #tpu.memory_space<vmem>>, vector<1x32x32xf32>
    %45 = vector.shape_cast %44 : vector<1x32x32xf32> to vector<32x32xf32>
    %c2_39 = arith.constant 2 : index
    %c0_40 = arith.constant 0 : index
    %c0_41 = arith.constant 0 : index
    %46 = vector.load %arg3[%c2_39, %c0_40, %c0_41] : memref<3x32x32xf32, #tpu.memory_space<vmem>>, vector<1x32x32xf32>
    %47 = vector.shape_cast %46 : vector<1x32x32xf32> to vector<32x32xf32>
    %c0_42 = arith.constant 0 : index
    %c0_43 = arith.constant 0 : index
    %c0_44 = arith.constant 0 : index
    %48 = vector.load %arg5[%c0_42, %c0_43, %c0_44] : memref<3x1x32xf32, #tpu.memory_space<vmem>>, vector<1x1x32xf32>
    %49 = vector.shape_cast %48 : vector<1x1x32xf32> to vector<1x32xf32>
    %c1_45 = arith.constant 1 : index
    %c0_46 = arith.constant 0 : index
    %c0_47 = arith.constant 0 : index
    %50 = vector.load %arg5[%c1_45, %c0_46, %c0_47] : memref<3x1x32xf32, #tpu.memory_space<vmem>>, vector<1x1x32xf32>
    %51 = vector.shape_cast %50 : vector<1x1x32xf32> to vector<1x32xf32>
    %c2_48 = arith.constant 2 : index
    %c0_49 = arith.constant 0 : index
    %c0_50 = arith.constant 0 : index
    %52 = vector.load %arg5[%c2_48, %c0_49, %c0_50] : memref<3x1x32xf32, #tpu.memory_space<vmem>>, vector<1x1x32xf32>
    %53 = vector.shape_cast %52 : vector<1x1x32xf32> to vector<1x32xf32>
    %c0_51 = arith.constant 0 : index
    %c0_52 = arith.constant 0 : index
    %c0_53 = arith.constant 0 : index
    %54 = vector.load %arg7[%c0_51, %c0_52, %c0_53] : memref<3x32x32xf32, #tpu.memory_space<vmem>>, vector<1x32x32xf32>
    %55 = vector.shape_cast %54 : vector<1x32x32xf32> to vector<32x32xf32>
    %c1_54 = arith.constant 1 : index
    %c0_55 = arith.constant 0 : index
    %c0_56 = arith.constant 0 : index
    %56 = vector.load %arg7[%c1_54, %c0_55, %c0_56] : memref<3x32x32xf32, #tpu.memory_space<vmem>>, vector<1x32x32xf32>
    %57 = vector.shape_cast %56 : vector<1x32x32xf32> to vector<32x32xf32>
    %c2_57 = arith.constant 2 : index
    %c0_58 = arith.constant 0 : index
    %c0_59 = arith.constant 0 : index
    %58 = vector.load %arg7[%c2_57, %c0_58, %c0_59] : memref<3x32x32xf32, #tpu.memory_space<vmem>>, vector<1x32x32xf32>
    %59 = vector.shape_cast %58 : vector<1x32x32xf32> to vector<32x32xf32>
    %c0_60 = arith.constant 0 : index
    %c0_61 = arith.constant 0 : index
    %c0_62 = arith.constant 0 : index
    %60 = vector.load %arg9[%c0_60, %c0_61, %c0_62] : memref<3x1x32xf32, #tpu.memory_space<vmem>>, vector<1x1x32xf32>
    %61 = vector.shape_cast %60 : vector<1x1x32xf32> to vector<1x32xf32>
    %c1_63 = arith.constant 1 : index
    %c0_64 = arith.constant 0 : index
    %c0_65 = arith.constant 0 : index
    %62 = vector.load %arg9[%c1_63, %c0_64, %c0_65] : memref<3x1x32xf32, #tpu.memory_space<vmem>>, vector<1x1x32xf32>
    %63 = vector.shape_cast %62 : vector<1x1x32xf32> to vector<1x32xf32>
    %c2_66 = arith.constant 2 : index
    %c0_67 = arith.constant 0 : index
    %c0_68 = arith.constant 0 : index
    %64 = vector.load %arg9[%c2_66, %c0_67, %c0_68] : memref<3x1x32xf32, #tpu.memory_space<vmem>>, vector<1x1x32xf32>
    %65 = vector.shape_cast %64 : vector<1x1x32xf32> to vector<1x32xf32>
    %cst_69 = arith.constant 0.000000e+00 : f32
    %66 = vector.broadcast %cst_69 : f32 to vector<2x32xf32>
    %c0_i32 = arith.constant 0 : i32
    %c3_i32 = arith.constant 3 : i32
    %67 = arith.subi %c3_i32, %c0_i32 : i32
    %c0_70 = arith.constant 0 : index
    %68 = arith.index_cast %c0_i32 : i32 to index
    %c0_71 = arith.constant 0 : index
    %c0_72 = arith.constant 0 : index
    %69 = vector.load %arg16[%c0_70, %68, %c0_71, %c0_72] : memref<3x4x2x32xf32, #tpu.memory_space<vmem>>, vector<1x1x2x32xf32>
    %70 = vector.shape_cast %69 : vector<1x1x2x32xf32> to vector<2x32xf32>
    %c1_73 = arith.constant 1 : index
    %71 = arith.index_cast %c0_i32 : i32 to index
    %c0_74 = arith.constant 0 : index
    %c0_75 = arith.constant 0 : index
    %72 = vector.load %arg16[%c1_73, %71, %c0_74, %c0_75] : memref<3x4x2x32xf32, #tpu.memory_space<vmem>>, vector<1x1x2x32xf32>
    %73 = vector.shape_cast %72 : vector<1x1x2x32xf32> to vector<2x32xf32>
    %c2_76 = arith.constant 2 : index
    %74 = arith.index_cast %c0_i32 : i32 to index
    %c0_77 = arith.constant 0 : index
    %c0_78 = arith.constant 0 : index
    %75 = vector.load %arg16[%c2_76, %74, %c0_77, %c0_78] : memref<3x4x2x32xf32, #tpu.memory_space<vmem>>, vector<1x1x2x32xf32>
    %76 = vector.shape_cast %75 : vector<1x1x2x32xf32> to vector<2x32xf32>
    %cst_79 = arith.constant dense<0.000000e+00> : vector<2x32xf32>
    %77 = tpu.matmul %66, %43, %cst_79 {dimension_numbers = #tpu.dot_dimension_numbers<[1], [0], [0], [1], [0, 0, 1, 1], [], []>} : vector<2x32xf32>, vector<32x32xf32>, vector<2x32xf32> -> vector<2x32xf32>
    %78 = arith.addf %70, %77 : vector<2x32xf32>
    %79 = vector.broadcast %49 : vector<1x32xf32> to vector<2x32xf32>
    %80 = arith.addf %78, %79 : vector<2x32xf32>
    %81 = arith.negf %80 : vector<2x32xf32>
    %82 = math.exp %81 : vector<2x32xf32>
    %cst_80 = arith.constant 1.000000e+00 : f32
    %83 = vector.broadcast %cst_80 : f32 to vector<2x32xf32>
    %84 = arith.addf %83, %82 : vector<2x32xf32>
    %85 = arith.divf %83, %84 : vector<2x32xf32>
    %cst_81 = arith.constant dense<0.000000e+00> : vector<2x32xf32>
    %86 = tpu.matmul %66, %45, %cst_81 {dimension_numbers = #tpu.dot_dimension_numbers<[1], [0], [0], [1], [0, 0, 1, 1], [], []>} : vector<2x32xf32>, vector<32x32xf32>, vector<2x32xf32> -> vector<2x32xf32>
    %87 = arith.addf %73, %86 : vector<2x32xf32>
    %88 = vector.broadcast %51 : vector<1x32xf32> to vector<2x32xf32>
    %89 = arith.addf %87, %88 : vector<2x32xf32>
    %90 = arith.negf %89 : vector<2x32xf32>
    %91 = math.exp %90 : vector<2x32xf32>
    %cst_82 = arith.constant 1.000000e+00 : f32
    %92 = vector.broadcast %cst_82 : f32 to vector<2x32xf32>
    %93 = arith.addf %92, %91 : vector<2x32xf32>
    %94 = arith.divf %92, %93 : vector<2x32xf32>
    %cst_83 = arith.constant dense<0.000000e+00> : vector<2x32xf32>
    %95 = tpu.matmul %66, %47, %cst_83 {dimension_numbers = #tpu.dot_dimension_numbers<[1], [0], [0], [1], [0, 0, 1, 1], [], []>} : vector<2x32xf32>, vector<32x32xf32>, vector<2x32xf32> -> vector<2x32xf32>
    %96 = vector.broadcast %53 : vector<1x32xf32> to vector<2x32xf32>
    %97 = arith.addf %95, %96 : vector<2x32xf32>
    %98 = arith.mulf %85, %97 : vector<2x32xf32>
    %99 = arith.addf %76, %98 : vector<2x32xf32>
    %100 = math.tanh %99 : vector<2x32xf32>
    %cst_84 = arith.constant 1.000000e+00 : f32
    %101 = vector.broadcast %cst_84 : f32 to vector<2x32xf32>
    %102 = arith.subf %101, %94 : vector<2x32xf32>
    %103 = arith.mulf %102, %100 : vector<2x32xf32>
    %104 = arith.mulf %94, %66 : vector<2x32xf32>
    %105 = arith.addf %103, %104 : vector<2x32xf32>
    %c0_85 = arith.constant 0 : index
    %106 = arith.index_cast %67 : i32 to index
    %c0_86 = arith.constant 0 : index
    %c0_87 = arith.constant 0 : index
    %107 = vector.load %arg17[%c0_85, %106, %c0_86, %c0_87] : memref<3x4x2x32xf32, #tpu.memory_space<vmem>>, vector<1x1x2x32xf32>
    %108 = vector.shape_cast %107 : vector<1x1x2x32xf32> to vector<2x32xf32>
    %c1_88 = arith.constant 1 : index
    %109 = arith.index_cast %67 : i32 to index
    %c0_89 = arith.constant 0 : index
    %c0_90 = arith.constant 0 : index
    %110 = vector.load %arg17[%c1_88, %109, %c0_89, %c0_90] : memref<3x4x2x32xf32, #tpu.memory_space<vmem>>, vector<1x1x2x32xf32>
    %111 = vector.shape_cast %110 : vector<1x1x2x32xf32> to vector<2x32xf32>
    %c2_91 = arith.constant 2 : index
    %112 = arith.index_cast %67 : i32 to index
    %c0_92 = arith.constant 0 : index
    %c0_93 = arith.constant 0 : index
    %113 = vector.load %arg17[%c2_91, %112, %c0_92, %c0_93] : memref<3x4x2x32xf32, #tpu.memory_space<vmem>>, vector<1x1x2x32xf32>
    %114 = vector.shape_cast %113 : vector<1x1x2x32xf32> to vector<2x32xf32>
    %cst_94 = arith.constant dense<0.000000e+00> : vector<2x32xf32>
    %115 = tpu.matmul %66, %55, %cst_94 {dimension_numbers = #tpu.dot_dimension_numbers<[1], [0], [0], [1], [0, 0, 1, 1], [], []>} : vector<2x32xf32>, vector<32x32xf32>, vector<2x32xf32> -> vector<2x32xf32>
    %116 = arith.addf %108, %115 : vector<2x32xf32>
    %117 = vector.broadcast %61 : vector<1x32xf32> to vector<2x32xf32>
    %118 = arith.addf %116, %117 : vector<2x32xf32>
    %119 = arith.negf %118 : vector<2x32xf32>
    %120 = math.exp %119 : vector<2x32xf32>
    %cst_95 = arith.constant 1.000000e+00 : f32
    %121 = vector.broadcast %cst_95 : f32 to vector<2x32xf32>
    %122 = arith.addf %121, %120 : vector<2x32xf32>
    %123 = arith.divf %121, %122 : vector<2x32xf32>
    %cst_96 = arith.constant dense<0.000000e+00> : vector<2x32xf32>
    %124 = tpu.matmul %66, %57, %cst_96 {dimension_numbers = #tpu.dot_dimension_numbers<[1], [0], [0], [1], [0, 0, 1, 1], [], []>} : vector<2x32xf32>, vector<32x32xf32>, vector<2x32xf32> -> vector<2x32xf32>
    %125 = arith.addf %111, %124 : vector<2x32xf32>
    %126 = vector.broadcast %63 : vector<1x32xf32> to vector<2x32xf32>
    %127 = arith.addf %125, %126 : vector<2x32xf32>
    %128 = arith.negf %127 : vector<2x32xf32>
    %129 = math.exp %128 : vector<2x32xf32>
    %cst_97 = arith.constant 1.000000e+00 : f32
    %130 = vector.broadcast %cst_97 : f32 to vector<2x32xf32>
    %131 = arith.addf %130, %129 : vector<2x32xf32>
    %132 = arith.divf %130, %131 : vector<2x32xf32>
    %cst_98 = arith.constant dense<0.000000e+00> : vector<2x32xf32>
    %133 = tpu.matmul %66, %59, %cst_98 {dimension_numbers = #tpu.dot_dimension_numbers<[1], [0], [0], [1], [0, 0, 1, 1], [], []>} : vector<2x32xf32>, vector<32x32xf32>, vector<2x32xf32> -> vector<2x32xf32>
    %134 = vector.broadcast %65 : vector<1x32xf32> to vector<2x32xf32>
    %135 = arith.addf %133, %134 : vector<2x32xf32>
    %136 = arith.mulf %123, %135 : vector<2x32xf32>
    %137 = arith.addf %114, %136 : vector<2x32xf32>
    %138 = math.tanh %137 : vector<2x32xf32>
    %cst_99 = arith.constant 1.000000e+00 : f32
    %139 = vector.broadcast %cst_99 : f32 to vector<2x32xf32>
    %140 = arith.subf %139, %132 : vector<2x32xf32>
    %141 = arith.mulf %140, %138 : vector<2x32xf32>
    %142 = arith.mulf %132, %66 : vector<2x32xf32>
    %143 = arith.addf %141, %142 : vector<2x32xf32>
    %144 = arith.index_cast %c0_i32 : i32 to index
    %c0_100 = arith.constant 0 : index
    %c0_101 = arith.constant 0 : index
    %145 = vector.load %arg18[%144, %c0_100, %c0_101] : memref<4x2x32xf32, #tpu.memory_space<vmem>>, vector<1x2x32xf32>
    %146 = vector.shape_cast %145 : vector<1x2x32xf32> to vector<2x32xf32>
    %147 = vector.shape_cast %105 : vector<2x32xf32> to vector<1x2x32xf32>
    tpu.vector_store %arg18[%144, %c0_100, %c0_101], %147 {strides = array<i32>} : memref<4x2x32xf32, #tpu.memory_space<vmem>>, vector<1x2x32xf32>,
    %148 = arith.index_cast %67 : i32 to index
    %c0_102 = arith.constant 0 : index
    %c0_103 = arith.constant 0 : index
    %149 = vector.load %arg19[%148, %c0_102, %c0_103] : memref<4x2x32xf32, #tpu.memory_space<vmem>>, vector<1x2x32xf32>
    %150 = vector.shape_cast %149 : vector<1x2x32xf32> to vector<2x32xf32>
    %151 = vector.shape_cast %143 : vector<2x32xf32> to vector<1x2x32xf32>
    tpu.vector_store %arg19[%148, %c0_102, %c0_103], %151 {strides = array<i32>} : memref<4x2x32xf32, #tpu.memory_space<vmem>>, vector<1x2x32xf32>,
    %c1_i32 = arith.constant 1 : i32
    %c3_i32_104 = arith.constant 3 : i32
    %152 = arith.subi %c3_i32_104, %c1_i32 : i32
    %c0_105 = arith.constant 0 : index
    %153 = arith.index_cast %c1_i32 : i32 to index
    %c0_106 = arith.constant 0 : index
    %c0_107 = arith.constant 0 : index
    %154 = vector.load %arg16[%c0_105, %153, %c0_106, %c0_107] : memref<3x4x2x32xf32, #tpu.memory_space<vmem>>, vector<1x1x2x32xf32>
    %155 = vector.shape_cast %154 : vector<1x1x2x32xf32> to vector<2x32xf32>
    %c1_108 = arith.constant 1 : index
    %156 = arith.index_cast %c1_i32 : i32 to index
    %c0_109 = arith.constant 0 : index
    %c0_110 = arith.constant 0 : index
    %157 = vector.load %arg16[%c1_108, %156, %c0_109, %c0_110] : memref<3x4x2x32xf32, #tpu.memory_space<vmem>>, vector<1x1x2x32xf32>
    %158 = vector.shape_cast %157 : vector<1x1x2x32xf32> to vector<2x32xf32>
    %c2_111 = arith.constant 2 : index
    %159 = arith.index_cast %c1_i32 : i32 to index
    %c0_112 = arith.constant 0 : index
    %c0_113 = arith.constant 0 : index
    %160 = vector.load %arg16[%c2_111, %159, %c0_112, %c0_113] : memref<3x4x2x32xf32, #tpu.memory_space<vmem>>, vector<1x1x2x32xf32>
    %161 = vector.shape_cast %160 : vector<1x1x2x32xf32> to vector<2x32xf32>
    %cst_114 = arith.constant dense<0.000000e+00> : vector<2x32xf32>
    %162 = tpu.matmul %105, %43, %cst_114 {dimension_numbers = #tpu.dot_dimension_numbers<[1], [0], [0], [1], [0, 0, 1, 1], [], []>} : vector<2x32xf32>, vector<32x32xf32>, vector<2x32xf32> -> vector<2x32xf32>
    %163 = arith.addf %155, %162 : vector<2x32xf32>
    %164 = vector.broadcast %49 : vector<1x32xf32> to vector<2x32xf32>
    %165 = arith.addf %163, %164 : vector<2x32xf32>
    %166 = arith.negf %165 : vector<2x32xf32>
    %167 = math.exp %166 : vector<2x32xf32>
    %cst_115 = arith.constant 1.000000e+00 : f32
    %168 = vector.broadcast %cst_115 : f32 to vector<2x32xf32>
    %169 = arith.addf %168, %167 : vector<2x32xf32>
    %170 = arith.divf %168, %169 : vector<2x32xf32>
    %cst_116 = arith.constant dense<0.000000e+00> : vector<2x32xf32>
    %171 = tpu.matmul %105, %45, %cst_116 {dimension_numbers = #tpu.dot_dimension_numbers<[1], [0], [0], [1], [0, 0, 1, 1], [], []>} : vector<2x32xf32>, vector<32x32xf32>, vector<2x32xf32> -> vector<2x32xf32>
    %172 = arith.addf %158, %171 : vector<2x32xf32>
    %173 = vector.broadcast %51 : vector<1x32xf32> to vector<2x32xf32>
    %174 = arith.addf %172, %173 : vector<2x32xf32>
    %175 = arith.negf %174 : vector<2x32xf32>
    %176 = math.exp %175 : vector<2x32xf32>
    %cst_117 = arith.constant 1.000000e+00 : f32
    %177 = vector.broadcast %cst_117 : f32 to vector<2x32xf32>
    %178 = arith.addf %177, %176 : vector<2x32xf32>
    %179 = arith.divf %177, %178 : vector<2x32xf32>
    %cst_118 = arith.constant dense<0.000000e+00> : vector<2x32xf32>
    %180 = tpu.matmul %105, %47, %cst_118 {dimension_numbers = #tpu.dot_dimension_numbers<[1], [0], [0], [1], [0, 0, 1, 1], [], []>} : vector<2x32xf32>, vector<32x32xf32>, vector<2x32xf32> -> vector<2x32xf32>
    %181 = vector.broadcast %53 : vector<1x32xf32> to vector<2x32xf32>
    %182 = arith.addf %180, %181 : vector<2x32xf32>
    %183 = arith.mulf %170, %182 : vector<2x32xf32>
    %184 = arith.addf %161, %183 : vector<2x32xf32>
    %185 = math.tanh %184 : vector<2x32xf32>
    %cst_119 = arith.constant 1.000000e+00 : f32
    %186 = vector.broadcast %cst_119 : f32 to vector<2x32xf32>
    %187 = arith.subf %186, %179 : vector<2x32xf32>
    %188 = arith.mulf %187, %185 : vector<2x32xf32>
    %189 = arith.mulf %179, %105 : vector<2x32xf32>
    %190 = arith.addf %188, %189 : vector<2x32xf32>
    %c0_120 = arith.constant 0 : index
    %191 = arith.index_cast %152 : i32 to index
    %c0_121 = arith.constant 0 : index
    %c0_122 = arith.constant 0 : index
    %192 = vector.load %arg17[%c0_120, %191, %c0_121, %c0_122] : memref<3x4x2x32xf32, #tpu.memory_space<vmem>>, vector<1x1x2x32xf32>
    %193 = vector.shape_cast %192 : vector<1x1x2x32xf32> to vector<2x32xf32>
    %c1_123 = arith.constant 1 : index
    %194 = arith.index_cast %152 : i32 to index
    %c0_124 = arith.constant 0 : index
    %c0_125 = arith.constant 0 : index
    %195 = vector.load %arg17[%c1_123, %194, %c0_124, %c0_125] : memref<3x4x2x32xf32, #tpu.memory_space<vmem>>, vector<1x1x2x32xf32>
    %196 = vector.shape_cast %195 : vector<1x1x2x32xf32> to vector<2x32xf32>
    %c2_126 = arith.constant 2 : index
    %197 = arith.index_cast %152 : i32 to index
    %c0_127 = arith.constant 0 : index
    %c0_128 = arith.constant 0 : index
    %198 = vector.load %arg17[%c2_126, %197, %c0_127, %c0_128] : memref<3x4x2x32xf32, #tpu.memory_space<vmem>>, vector<1x1x2x32xf32>
    %199 = vector.shape_cast %198 : vector<1x1x2x32xf32> to vector<2x32xf32>
    %cst_129 = arith.constant dense<0.000000e+00> : vector<2x32xf32>
    %200 = tpu.matmul %143, %55, %cst_129 {dimension_numbers = #tpu.dot_dimension_numbers<[1], [0], [0], [1], [0, 0, 1, 1], [], []>} : vector<2x32xf32>, vector<32x32xf32>, vector<2x32xf32> -> vector<2x32xf32>
    %201 = arith.addf %193, %200 : vector<2x32xf32>
    %202 = vector.broadcast %61 : vector<1x32xf32> to vector<2x32xf32>
    %203 = arith.addf %201, %202 : vector<2x32xf32>
    %204 = arith.negf %203 : vector<2x32xf32>
    %205 = math.exp %204 : vector<2x32xf32>
    %cst_130 = arith.constant 1.000000e+00 : f32
    %206 = vector.broadcast %cst_130 : f32 to vector<2x32xf32>
    %207 = arith.addf %206, %205 : vector<2x32xf32>
    %208 = arith.divf %206, %207 : vector<2x32xf32>
    %cst_131 = arith.constant dense<0.000000e+00> : vector<2x32xf32>
    %209 = tpu.matmul %143, %57, %cst_131 {dimension_numbers = #tpu.dot_dimension_numbers<[1], [0], [0], [1], [0, 0, 1, 1], [], []>} : vector<2x32xf32>, vector<32x32xf32>, vector<2x32xf32> -> vector<2x32xf32>
    %210 = arith.addf %196, %209 : vector<2x32xf32>
    %211 = vector.broadcast %63 : vector<1x32xf32> to vector<2x32xf32>
    %212 = arith.addf %210, %211 : vector<2x32xf32>
    %213 = arith.negf %212 : vector<2x32xf32>
    %214 = math.exp %213 : vector<2x32xf32>
    %cst_132 = arith.constant 1.000000e+00 : f32
    %215 = vector.broadcast %cst_132 : f32 to vector<2x32xf32>
    %216 = arith.addf %215, %214 : vector<2x32xf32>
    %217 = arith.divf %215, %216 : vector<2x32xf32>
    %cst_133 = arith.constant dense<0.000000e+00> : vector<2x32xf32>
    %218 = tpu.matmul %143, %59, %cst_133 {dimension_numbers = #tpu.dot_dimension_numbers<[1], [0], [0], [1], [0, 0, 1, 1], [], []>} : vector<2x32xf32>, vector<32x32xf32>, vector<2x32xf32> -> vector<2x32xf32>
    %219 = vector.broadcast %65 : vector<1x32xf32> to vector<2x32xf32>
    %220 = arith.addf %218, %219 : vector<2x32xf32>
    %221 = arith.mulf %208, %220 : vector<2x32xf32>
    %222 = arith.addf %199, %221 : vector<2x32xf32>
    %223 = math.tanh %222 : vector<2x32xf32>
    %cst_134 = arith.constant 1.000000e+00 : f32
    %224 = vector.broadcast %cst_134 : f32 to vector<2x32xf32>
    %225 = arith.subf %224, %217 : vector<2x32xf32>
    %226 = arith.mulf %225, %223 : vector<2x32xf32>
    %227 = arith.mulf %217, %143 : vector<2x32xf32>
    %228 = arith.addf %226, %227 : vector<2x32xf32>
    %229 = arith.index_cast %c1_i32 : i32 to index
    %c0_135 = arith.constant 0 : index
    %c0_136 = arith.constant 0 : index
    %230 = vector.load %arg18[%229, %c0_135, %c0_136] : memref<4x2x32xf32, #tpu.memory_space<vmem>>, vector<1x2x32xf32>
    %231 = vector.shape_cast %230 : vector<1x2x32xf32> to vector<2x32xf32>
    %232 = vector.shape_cast %190 : vector<2x32xf32> to vector<1x2x32xf32>
    tpu.vector_store %arg18[%229, %c0_135, %c0_136], %232 {strides = array<i32>} : memref<4x2x32xf32, #tpu.memory_space<vmem>>, vector<1x2x32xf32>,
    %233 = arith.index_cast %152 : i32 to index
    %c0_137 = arith.constant 0 : index
    %c0_138 = arith.constant 0 : index
    %234 = vector.load %arg19[%233, %c0_137, %c0_138] : memref<4x2x32xf32, #tpu.memory_space<vmem>>, vector<1x2x32xf32>
    %235 = vector.shape_cast %234 : vector<1x2x32xf32> to vector<2x32xf32>
    %236 = vector.shape_cast %228 : vector<2x32xf32> to vector<1x2x32xf32>
    tpu.vector_store %arg19[%233, %c0_137, %c0_138], %236 {strides = array<i32>} : memref<4x2x32xf32, #tpu.memory_space<vmem>>, vector<1x2x32xf32>,
    %c2_i32 = arith.constant 2 : i32
    %c3_i32_139 = arith.constant 3 : i32
    %237 = arith.subi %c3_i32_139, %c2_i32 : i32
    %c0_140 = arith.constant 0 : index
    %238 = arith.index_cast %c2_i32 : i32 to index
    %c0_141 = arith.constant 0 : index
    %c0_142 = arith.constant 0 : index
    %239 = vector.load %arg16[%c0_140, %238, %c0_141, %c0_142] : memref<3x4x2x32xf32, #tpu.memory_space<vmem>>, vector<1x1x2x32xf32>
    %240 = vector.shape_cast %239 : vector<1x1x2x32xf32> to vector<2x32xf32>
    %c1_143 = arith.constant 1 : index
    %241 = arith.index_cast %c2_i32 : i32 to index
    %c0_144 = arith.constant 0 : index
    %c0_145 = arith.constant 0 : index
    %242 = vector.load %arg16[%c1_143, %241, %c0_144, %c0_145] : memref<3x4x2x32xf32, #tpu.memory_space<vmem>>, vector<1x1x2x32xf32>
    %243 = vector.shape_cast %242 : vector<1x1x2x32xf32> to vector<2x32xf32>
    %c2_146 = arith.constant 2 : index
    %244 = arith.index_cast %c2_i32 : i32 to index
    %c0_147 = arith.constant 0 : index
    %c0_148 = arith.constant 0 : index
    %245 = vector.load %arg16[%c2_146, %244, %c0_147, %c0_148] : memref<3x4x2x32xf32, #tpu.memory_space<vmem>>, vector<1x1x2x32xf32>
    %246 = vector.shape_cast %245 : vector<1x1x2x32xf32> to vector<2x32xf32>
    %cst_149 = arith.constant dense<0.000000e+00> : vector<2x32xf32>
    %247 = tpu.matmul %190, %43, %cst_149 {dimension_numbers = #tpu.dot_dimension_numbers<[1], [0], [0], [1], [0, 0, 1, 1], [], []>} : vector<2x32xf32>, vector<32x32xf32>, vector<2x32xf32> -> vector<2x32xf32>
    %248 = arith.addf %240, %247 : vector<2x32xf32>
    %249 = vector.broadcast %49 : vector<1x32xf32> to vector<2x32xf32>
    %250 = arith.addf %248, %249 : vector<2x32xf32>
    %251 = arith.negf %250 : vector<2x32xf32>
    %252 = math.exp %251 : vector<2x32xf32>
    %cst_150 = arith.constant 1.000000e+00 : f32
    %253 = vector.broadcast %cst_150 : f32 to vector<2x32xf32>
    %254 = arith.addf %253, %252 : vector<2x32xf32>
    %255 = arith.divf %253, %254 : vector<2x32xf32>
    %cst_151 = arith.constant dense<0.000000e+00> : vector<2x32xf32>
    %256 = tpu.matmul %190, %45, %cst_151 {dimension_numbers = #tpu.dot_dimension_numbers<[1], [0], [0], [1], [0, 0, 1, 1], [], []>} : vector<2x32xf32>, vector<32x32xf32>, vector<2x32xf32> -> vector<2x32xf32>
    %257 = arith.addf %243, %256 : vector<2x32xf32>
    %258 = vector.broadcast %51 : vector<1x32xf32> to vector<2x32xf32>
    %259 = arith.addf %257, %258 : vector<2x32xf32>
    %260 = arith.negf %259 : vector<2x32xf32>
    %261 = math.exp %260 : vector<2x32xf32>
    %cst_152 = arith.constant 1.000000e+00 : f32
    %262 = vector.broadcast %cst_152 : f32 to vector<2x32xf32>
    %263 = arith.addf %262, %261 : vector<2x32xf32>
    %264 = arith.divf %262, %263 : vector<2x32xf32>
    %cst_153 = arith.constant dense<0.000000e+00> : vector<2x32xf32>
    %265 = tpu.matmul %190, %47, %cst_153 {dimension_numbers = #tpu.dot_dimension_numbers<[1], [0], [0], [1], [0, 0, 1, 1], [], []>} : vector<2x32xf32>, vector<32x32xf32>, vector<2x32xf32> -> vector<2x32xf32>
    %266 = vector.broadcast %53 : vector<1x32xf32> to vector<2x32xf32>
    %267 = arith.addf %265, %266 : vector<2x32xf32>
    %268 = arith.mulf %255, %267 : vector<2x32xf32>
    %269 = arith.addf %246, %268 : vector<2x32xf32>
    %270 = math.tanh %269 : vector<2x32xf32>
    %cst_154 = arith.constant 1.000000e+00 : f32
    %271 = vector.broadcast %cst_154 : f32 to vector<2x32xf32>
    %272 = arith.subf %271, %264 : vector<2x32xf32>
    %273 = arith.mulf %272, %270 : vector<2x32xf32>
    %274 = arith.mulf %264, %190 : vector<2x32xf32>
    %275 = arith.addf %273, %274 : vector<2x32xf32>
    %c0_155 = arith.constant 0 : index
    %276 = arith.index_cast %237 : i32 to index
    %c0_156 = arith.constant 0 : index
    %c0_157 = arith.constant 0 : index
    %277 = vector.load %arg17[%c0_155, %276, %c0_156, %c0_157] : memref<3x4x2x32xf32, #tpu.memory_space<vmem>>, vector<1x1x2x32xf32>
    %278 = vector.shape_cast %277 : vector<1x1x2x32xf32> to vector<2x32xf32>
    %c1_158 = arith.constant 1 : index
    %279 = arith.index_cast %237 : i32 to index
    %c0_159 = arith.constant 0 : index
    %c0_160 = arith.constant 0 : index
    %280 = vector.load %arg17[%c1_158, %279, %c0_159, %c0_160] : memref<3x4x2x32xf32, #tpu.memory_space<vmem>>, vector<1x1x2x32xf32>
    %281 = vector.shape_cast %280 : vector<1x1x2x32xf32> to vector<2x32xf32>
    %c2_161 = arith.constant 2 : index
    %282 = arith.index_cast %237 : i32 to index
    %c0_162 = arith.constant 0 : index
    %c0_163 = arith.constant 0 : index
    %283 = vector.load %arg17[%c2_161, %282, %c0_162, %c0_163] : memref<3x4x2x32xf32, #tpu.memory_space<vmem>>, vector<1x1x2x32xf32>
    %284 = vector.shape_cast %283 : vector<1x1x2x32xf32> to vector<2x32xf32>
    %cst_164 = arith.constant dense<0.000000e+00> : vector<2x32xf32>
    %285 = tpu.matmul %228, %55, %cst_164 {dimension_numbers = #tpu.dot_dimension_numbers<[1], [0], [0], [1], [0, 0, 1, 1], [], []>} : vector<2x32xf32>, vector<32x32xf32>, vector<2x32xf32> -> vector<2x32xf32>
    %286 = arith.addf %278, %285 : vector<2x32xf32>
    %287 = vector.broadcast %61 : vector<1x32xf32> to vector<2x32xf32>
    %288 = arith.addf %286, %287 : vector<2x32xf32>
    %289 = arith.negf %288 : vector<2x32xf32>
    %290 = math.exp %289 : vector<2x32xf32>
    %cst_165 = arith.constant 1.000000e+00 : f32
    %291 = vector.broadcast %cst_165 : f32 to vector<2x32xf32>
    %292 = arith.addf %291, %290 : vector<2x32xf32>
    %293 = arith.divf %291, %292 : vector<2x32xf32>
    %cst_166 = arith.constant dense<0.000000e+00> : vector<2x32xf32>
    %294 = tpu.matmul %228, %57, %cst_166 {dimension_numbers = #tpu.dot_dimension_numbers<[1], [0], [0], [1], [0, 0, 1, 1], [], []>} : vector<2x32xf32>, vector<32x32xf32>, vector<2x32xf32> -> vector<2x32xf32>
    %295 = arith.addf %281, %294 : vector<2x32xf32>
    %296 = vector.broadcast %63 : vector<1x32xf32> to vector<2x32xf32>
    %297 = arith.addf %295, %296 : vector<2x32xf32>
    %298 = arith.negf %297 : vector<2x32xf32>
    %299 = math.exp %298 : vector<2x32xf32>
    %cst_167 = arith.constant 1.000000e+00 : f32
    %300 = vector.broadcast %cst_167 : f32 to vector<2x32xf32>
    %301 = arith.addf %300, %299 : vector<2x32xf32>
    %302 = arith.divf %300, %301 : vector<2x32xf32>
    %cst_168 = arith.constant dense<0.000000e+00> : vector<2x32xf32>
    %303 = tpu.matmul %228, %59, %cst_168 {dimension_numbers = #tpu.dot_dimension_numbers<[1], [0], [0], [1], [0, 0, 1, 1], [], []>} : vector<2x32xf32>, vector<32x32xf32>, vector<2x32xf32> -> vector<2x32xf32>
    %304 = vector.broadcast %65 : vector<1x32xf32> to vector<2x32xf32>
    %305 = arith.addf %303, %304 : vector<2x32xf32>
    %306 = arith.mulf %293, %305 : vector<2x32xf32>
    %307 = arith.addf %284, %306 : vector<2x32xf32>
    %308 = math.tanh %307 : vector<2x32xf32>
    %cst_169 = arith.constant 1.000000e+00 : f32
    %309 = vector.broadcast %cst_169 : f32 to vector<2x32xf32>
    %310 = arith.subf %309, %302 : vector<2x32xf32>
    %311 = arith.mulf %310, %308 : vector<2x32xf32>
    %312 = arith.mulf %302, %228 : vector<2x32xf32>
    %313 = arith.addf %311, %312 : vector<2x32xf32>
    %314 = arith.index_cast %c2_i32 : i32 to index
    %c0_170 = arith.constant 0 : index
    %c0_171 = arith.constant 0 : index
    %315 = vector.load %arg18[%314, %c0_170, %c0_171] : memref<4x2x32xf32, #tpu.memory_space<vmem>>, vector<1x2x32xf32>
    %316 = vector.shape_cast %315 : vector<1x2x32xf32> to vector<2x32xf32>
    %317 = vector.shape_cast %275 : vector<2x32xf32> to vector<1x2x32xf32>
    tpu.vector_store %arg18[%314, %c0_170, %c0_171], %317 {strides = array<i32>} : memref<4x2x32xf32, #tpu.memory_space<vmem>>, vector<1x2x32xf32>,
    %318 = arith.index_cast %237 : i32 to index
    %c0_172 = arith.constant 0 : index
    %c0_173 = arith.constant 0 : index
    %319 = vector.load %arg19[%318, %c0_172, %c0_173] : memref<4x2x32xf32, #tpu.memory_space<vmem>>, vector<1x2x32xf32>
    %320 = vector.shape_cast %319 : vector<1x2x32xf32> to vector<2x32xf32>
    %321 = vector.shape_cast %313 : vector<2x32xf32> to vector<1x2x32xf32>
    tpu.vector_store %arg19[%318, %c0_172, %c0_173], %321 {strides = array<i32>} : memref<4x2x32xf32, #tpu.memory_space<vmem>>, vector<1x2x32xf32>,
    %c3_i32_174 = arith.constant 3 : i32
    %c3_i32_175 = arith.constant 3 : i32
    %322 = arith.subi %c3_i32_175, %c3_i32_174 : i32
    %c0_176 = arith.constant 0 : index
    %323 = arith.index_cast %c3_i32_174 : i32 to index
    %c0_177 = arith.constant 0 : index
    %c0_178 = arith.constant 0 : index
    %324 = vector.load %arg16[%c0_176, %323, %c0_177, %c0_178] : memref<3x4x2x32xf32, #tpu.memory_space<vmem>>, vector<1x1x2x32xf32>
    %325 = vector.shape_cast %324 : vector<1x1x2x32xf32> to vector<2x32xf32>
    %c1_179 = arith.constant 1 : index
    %326 = arith.index_cast %c3_i32_174 : i32 to index
    %c0_180 = arith.constant 0 : index
    %c0_181 = arith.constant 0 : index
    %327 = vector.load %arg16[%c1_179, %326, %c0_180, %c0_181] : memref<3x4x2x32xf32, #tpu.memory_space<vmem>>, vector<1x1x2x32xf32>
    %328 = vector.shape_cast %327 : vector<1x1x2x32xf32> to vector<2x32xf32>
    %c2_182 = arith.constant 2 : index
    %329 = arith.index_cast %c3_i32_174 : i32 to index
    %c0_183 = arith.constant 0 : index
    %c0_184 = arith.constant 0 : index
    %330 = vector.load %arg16[%c2_182, %329, %c0_183, %c0_184] : memref<3x4x2x32xf32, #tpu.memory_space<vmem>>, vector<1x1x2x32xf32>
    %331 = vector.shape_cast %330 : vector<1x1x2x32xf32> to vector<2x32xf32>
    %cst_185 = arith.constant dense<0.000000e+00> : vector<2x32xf32>
    %332 = tpu.matmul %275, %43, %cst_185 {dimension_numbers = #tpu.dot_dimension_numbers<[1], [0], [0], [1], [0, 0, 1, 1], [], []>} : vector<2x32xf32>, vector<32x32xf32>, vector<2x32xf32> -> vector<2x32xf32>
    %333 = arith.addf %325, %332 : vector<2x32xf32>
    %334 = vector.broadcast %49 : vector<1x32xf32> to vector<2x32xf32>
    %335 = arith.addf %333, %334 : vector<2x32xf32>
    %336 = arith.negf %335 : vector<2x32xf32>
    %337 = math.exp %336 : vector<2x32xf32>
    %cst_186 = arith.constant 1.000000e+00 : f32
    %338 = vector.broadcast %cst_186 : f32 to vector<2x32xf32>
    %339 = arith.addf %338, %337 : vector<2x32xf32>
    %340 = arith.divf %338, %339 : vector<2x32xf32>
    %cst_187 = arith.constant dense<0.000000e+00> : vector<2x32xf32>
    %341 = tpu.matmul %275, %45, %cst_187 {dimension_numbers = #tpu.dot_dimension_numbers<[1], [0], [0], [1], [0, 0, 1, 1], [], []>} : vector<2x32xf32>, vector<32x32xf32>, vector<2x32xf32> -> vector<2x32xf32>
    %342 = arith.addf %328, %341 : vector<2x32xf32>
    %343 = vector.broadcast %51 : vector<1x32xf32> to vector<2x32xf32>
    %344 = arith.addf %342, %343 : vector<2x32xf32>
    %345 = arith.negf %344 : vector<2x32xf32>
    %346 = math.exp %345 : vector<2x32xf32>
    %cst_188 = arith.constant 1.000000e+00 : f32
    %347 = vector.broadcast %cst_188 : f32 to vector<2x32xf32>
    %348 = arith.addf %347, %346 : vector<2x32xf32>
    %349 = arith.divf %347, %348 : vector<2x32xf32>
    %cst_189 = arith.constant dense<0.000000e+00> : vector<2x32xf32>
    %350 = tpu.matmul %275, %47, %cst_189 {dimension_numbers = #tpu.dot_dimension_numbers<[1], [0], [0], [1], [0, 0, 1, 1], [], []>} : vector<2x32xf32>, vector<32x32xf32>, vector<2x32xf32> -> vector<2x32xf32>
    %351 = vector.broadcast %53 : vector<1x32xf32> to vector<2x32xf32>
    %352 = arith.addf %350, %351 : vector<2x32xf32>
    %353 = arith.mulf %340, %352 : vector<2x32xf32>
    %354 = arith.addf %331, %353 : vector<2x32xf32>
    %355 = math.tanh %354 : vector<2x32xf32>
    %cst_190 = arith.constant 1.000000e+00 : f32
    %356 = vector.broadcast %cst_190 : f32 to vector<2x32xf32>
    %357 = arith.subf %356, %349 : vector<2x32xf32>
    %358 = arith.mulf %357, %355 : vector<2x32xf32>
    %359 = arith.mulf %349, %275 : vector<2x32xf32>
    %360 = arith.addf %358, %359 : vector<2x32xf32>
    %c0_191 = arith.constant 0 : index
    %361 = arith.index_cast %322 : i32 to index
    %c0_192 = arith.constant 0 : index
    %c0_193 = arith.constant 0 : index
    %362 = vector.load %arg17[%c0_191, %361, %c0_192, %c0_193] : memref<3x4x2x32xf32, #tpu.memory_space<vmem>>, vector<1x1x2x32xf32>
    %363 = vector.shape_cast %362 : vector<1x1x2x32xf32> to vector<2x32xf32>
    %c1_194 = arith.constant 1 : index
    %364 = arith.index_cast %322 : i32 to index
    %c0_195 = arith.constant 0 : index
    %c0_196 = arith.constant 0 : index
    %365 = vector.load %arg17[%c1_194, %364, %c0_195, %c0_196] : memref<3x4x2x32xf32, #tpu.memory_space<vmem>>, vector<1x1x2x32xf32>
    %366 = vector.shape_cast %365 : vector<1x1x2x32xf32> to vector<2x32xf32>
    %c2_197 = arith.constant 2 : index
    %367 = arith.index_cast %322 : i32 to index
    %c0_198 = arith.constant 0 : index
    %c0_199 = arith.constant 0 : index
    %368 = vector.load %arg17[%c2_197, %367, %c0_198, %c0_199] : memref<3x4x2x32xf32, #tpu.memory_space<vmem>>, vector<1x1x2x32xf32>
    %369 = vector.shape_cast %368 : vector<1x1x2x32xf32> to vector<2x32xf32>
    %cst_200 = arith.constant dense<0.000000e+00> : vector<2x32xf32>
    %370 = tpu.matmul %313, %55, %cst_200 {dimension_numbers = #tpu.dot_dimension_numbers<[1], [0], [0], [1], [0, 0, 1, 1], [], []>} : vector<2x32xf32>, vector<32x32xf32>, vector<2x32xf32> -> vector<2x32xf32>
    %371 = arith.addf %363, %370 : vector<2x32xf32>
    %372 = vector.broadcast %61 : vector<1x32xf32> to vector<2x32xf32>
    %373 = arith.addf %371, %372 : vector<2x32xf32>
    %374 = arith.negf %373 : vector<2x32xf32>
    %375 = math.exp %374 : vector<2x32xf32>
    %cst_201 = arith.constant 1.000000e+00 : f32
    %376 = vector.broadcast %cst_201 : f32 to vector<2x32xf32>
    %377 = arith.addf %376, %375 : vector<2x32xf32>
    %378 = arith.divf %376, %377 : vector<2x32xf32>
    %cst_202 = arith.constant dense<0.000000e+00> : vector<2x32xf32>
    %379 = tpu.matmul %313, %57, %cst_202 {dimension_numbers = #tpu.dot_dimension_numbers<[1], [0], [0], [1], [0, 0, 1, 1], [], []>} : vector<2x32xf32>, vector<32x32xf32>, vector<2x32xf32> -> vector<2x32xf32>
    %380 = arith.addf %366, %379 : vector<2x32xf32>
    %381 = vector.broadcast %63 : vector<1x32xf32> to vector<2x32xf32>
    %382 = arith.addf %380, %381 : vector<2x32xf32>
    %383 = arith.negf %382 : vector<2x32xf32>
    %384 = math.exp %383 : vector<2x32xf32>
    %cst_203 = arith.constant 1.000000e+00 : f32
    %385 = vector.broadcast %cst_203 : f32 to vector<2x32xf32>
    %386 = arith.addf %385, %384 : vector<2x32xf32>
    %387 = arith.divf %385, %386 : vector<2x32xf32>
    %cst_204 = arith.constant dense<0.000000e+00> : vector<2x32xf32>
    %388 = tpu.matmul %313, %59, %cst_204 {dimension_numbers = #tpu.dot_dimension_numbers<[1], [0], [0], [1], [0, 0, 1, 1], [], []>} : vector<2x32xf32>, vector<32x32xf32>, vector<2x32xf32> -> vector<2x32xf32>
    %389 = vector.broadcast %65 : vector<1x32xf32> to vector<2x32xf32>
    %390 = arith.addf %388, %389 : vector<2x32xf32>
    %391 = arith.mulf %378, %390 : vector<2x32xf32>
    %392 = arith.addf %369, %391 : vector<2x32xf32>
    %393 = math.tanh %392 : vector<2x32xf32>
    %cst_205 = arith.constant 1.000000e+00 : f32
    %394 = vector.broadcast %cst_205 : f32 to vector<2x32xf32>
    %395 = arith.subf %394, %387 : vector<2x32xf32>
    %396 = arith.mulf %395, %393 : vector<2x32xf32>
    %397 = arith.mulf %387, %313 : vector<2x32xf32>
    %398 = arith.addf %396, %397 : vector<2x32xf32>
    %399 = arith.index_cast %c3_i32_174 : i32 to index
    %c0_206 = arith.constant 0 : index
    %c0_207 = arith.constant 0 : index
    %400 = vector.load %arg18[%399, %c0_206, %c0_207] : memref<4x2x32xf32, #tpu.memory_space<vmem>>, vector<1x2x32xf32>
    %401 = vector.shape_cast %400 : vector<1x2x32xf32> to vector<2x32xf32>
    %402 = vector.shape_cast %360 : vector<2x32xf32> to vector<1x2x32xf32>
    tpu.vector_store %arg18[%399, %c0_206, %c0_207], %402 {strides = array<i32>} : memref<4x2x32xf32, #tpu.memory_space<vmem>>, vector<1x2x32xf32>,
    %403 = arith.index_cast %322 : i32 to index
    %c0_208 = arith.constant 0 : index
    %c0_209 = arith.constant 0 : index
    %404 = vector.load %arg19[%403, %c0_208, %c0_209] : memref<4x2x32xf32, #tpu.memory_space<vmem>>, vector<1x2x32xf32>
    %405 = vector.shape_cast %404 : vector<1x2x32xf32> to vector<2x32xf32>
    %406 = vector.shape_cast %398 : vector<2x32xf32> to vector<1x2x32xf32>
    tpu.vector_store %arg19[%403, %c0_208, %c0_209], %406 {strides = array<i32>} : memref<4x2x32xf32, #tpu.memory_space<vmem>>, vector<1x2x32xf32>,
    %c4_i32 = arith.constant 4 : i32
    %c0_210 = arith.constant 0 : index
    %c0_211 = arith.constant 0 : index
    %c0_212 = arith.constant 0 : index
    %407 = vector.load %arg18[%c0_210, %c0_211, %c0_212] : memref<4x2x32xf32, #tpu.memory_space<vmem>>, vector<4x2x32xf32>
    %c0_213 = arith.constant 0 : index
    %c0_214 = arith.constant 0 : index
    %c0_215 = arith.constant 0 : index
    %408 = vector.load %arg19[%c0_213, %c0_214, %c0_215] : memref<4x2x32xf32, #tpu.memory_space<vmem>>, vector<4x2x32xf32>
    %409 = tpu.concatenate %407, %408 in 2 : vector<4x2x32xf32>, vector<4x2x32xf32> -> vector<4x2x64xf32>
    %410 = vector.shape_cast %409 : vector<4x2x64xf32> to vector<8x64xf32>
    %c0_216 = arith.constant 0 : index
    %c0_217 = arith.constant 0 : index
    %411 = vector.load %arg10[%c0_216, %c0_217] : memref<64x64xf32, #tpu.memory_space<vmem>>, vector<64x64xf32>
    %cst_218 = arith.constant dense<0.000000e+00> : vector<8x64xf32>
    %412 = tpu.matmul %410, %411, %cst_218 {dimension_numbers = #tpu.dot_dimension_numbers<[1], [0], [0], [1], [0, 0, 1, 1], [], []>} : vector<8x64xf32>, vector<64x64xf32>, vector<8x64xf32> -> vector<8x64xf32>
    %c0_219 = arith.constant 0 : index
    %c0_220 = arith.constant 0 : index
    %413 = vector.load %arg11[%c0_219, %c0_220] : memref<1x64xf32, #tpu.memory_space<vmem>>, vector<1x64xf32>
    %414 = vector.broadcast %413 : vector<1x64xf32> to vector<8x64xf32>
    %415 = arith.addf %412, %414 : vector<8x64xf32>
    %416 = math.tanh %415 : vector<8x64xf32>
    %417 = vector.shape_cast %416 : vector<8x64xf32> to vector<4x2x64xf32>
    %c0_221 = arith.constant 0 : index
    %c0_222 = arith.constant 0 : index
    %418 = vector.load %arg12[%c0_221, %c0_222] : memref<1x64xf32, #tpu.memory_space<vmem>>, vector<1x64xf32>
    %419 = vector.shape_cast %418 : vector<1x64xf32> to vector<1x1x64xf32>
    %420 = vector.broadcast %419 : vector<1x1x64xf32> to vector<4x2x64xf32>
    %421 = arith.mulf %417, %420 : vector<4x2x64xf32>
    %cst_223 = arith.constant dense<0.000000e+00> : vector<4x2xf32>
    %422 = vector.multi_reduction <add>, %421, %cst_223 [2] : vector<4x2x64xf32> to vector<4x2xf32>
    %423 = vector.shape_cast %422 : vector<4x2xf32> to vector<4x2x1xf32>
    %cst_224 = arith.constant dense<0xFF800000> : vector<2x1xf32>
    %424 = vector.multi_reduction <maximumf>, %423, %cst_224 [0] : vector<4x2x1xf32> to vector<2x1xf32>
    %425 = vector.shape_cast %424 : vector<2x1xf32> to vector<1x2x1xf32>
    %426 = vector.broadcast %425 : vector<1x2x1xf32> to vector<4x2x1xf32>
    %427 = arith.subf %423, %426 : vector<4x2x1xf32>
    %428 = math.exp %427 : vector<4x2x1xf32>
    %cst_225 = arith.constant dense<0.000000e+00> : vector<2x1xf32>
    %429 = vector.multi_reduction <add>, %428, %cst_225 [0] : vector<4x2x1xf32> to vector<2x1xf32>
    %430 = vector.shape_cast %429 : vector<2x1xf32> to vector<1x2x1xf32>
    %431 = vector.broadcast %430 : vector<1x2x1xf32> to vector<4x2x1xf32>
    %432 = arith.divf %428, %431 : vector<4x2x1xf32>
    %c0_226 = arith.constant 0 : index
    %c0_227 = arith.constant 0 : index
    %c0_228 = arith.constant 0 : index
    %433 = vector.load %arg1[%c0_226, %c0_227, %c0_228] : memref<4x2x1xf32, #tpu.memory_space<vmem>>, vector<4x2x1xf32>
    %cst_229 = arith.constant 0.000000e+00 : f32
    %434 = vector.broadcast %cst_229 : f32 to vector<4x2x1xf32>
    %435 = arith.cmpf one, %433, %434 : vector<4x2x1xf32>
    %cst_230 = arith.constant 0.000000e+00 : f32
    %436 = vector.broadcast %cst_230 : f32 to vector<4x2x1xf32>
    %437 = arith.select %435, %432, %436 : vector<4x2x1xi1>, vector<4x2x1xf32>
    %cst_231 = arith.constant dense<0.000000e+00> : vector<2x1xf32>
    %438 = vector.multi_reduction <add>, %437, %cst_231 [0] : vector<4x2x1xf32> to vector<2x1xf32>
    %439 = vector.shape_cast %438 : vector<2x1xf32> to vector<1x2x1xf32>
    %cst_232 = arith.constant 9.99999974E-5 : f32
    %440 = vector.broadcast %cst_232 : f32 to vector<1x2x1xf32>
    %441 = arith.addf %439, %440 : vector<1x2x1xf32>
    %442 = vector.broadcast %441 : vector<1x2x1xf32> to vector<4x2x1xf32>
    %443 = arith.divf %437, %442 : vector<4x2x1xf32>
    %444 = vector.broadcast %443 : vector<4x2x1xf32> to vector<4x2x64xf32>
    %445 = arith.mulf %409, %444 : vector<4x2x64xf32>
    %cst_233 = arith.constant dense<0.000000e+00> : vector<2x64xf32>
    %446 = vector.multi_reduction <add>, %445, %cst_233 [0] : vector<4x2x64xf32> to vector<2x64xf32>
    %c0_234 = arith.constant 0 : index
    %c0_235 = arith.constant 0 : index
    %447 = vector.load %arg13[%c0_234, %c0_235] : memref<64x5xf32, #tpu.memory_space<vmem>>, vector<64x5xf32>
    %cst_236 = arith.constant dense<0.000000e+00> : vector<2x5xf32>
    %448 = tpu.matmul %446, %447, %cst_236 {dimension_numbers = #tpu.dot_dimension_numbers<[1], [0], [0], [1], [0, 0, 1, 1], [], []>} : vector<2x64xf32>, vector<64x5xf32>, vector<2x5xf32> -> vector<2x5xf32>
    %c0_237 = arith.constant 0 : index
    %c0_238 = arith.constant 0 : index
    %449 = vector.load %arg14[%c0_237, %c0_238] : memref<1x5xf32, #tpu.memory_space<vmem>>, vector<1x5xf32>
    %450 = vector.broadcast %449 : vector<1x5xf32> to vector<2x5xf32>
    %451 = arith.addf %448, %450 : vector<2x5xf32>
    %c0_239 = arith.constant 0 : index
    %c0_240 = arith.constant 0 : index
    %452 = vector.load %arg15[%c0_239, %c0_240] : memref<2x5xf32, #tpu.memory_space<vmem>>, vector<2x5xf32>
    tpu.vector_store %arg15[%c0_239, %c0_240], %451 {strides = array<i32>} : memref<2x5xf32, #tpu.memory_space<vmem>>, vector<2x5xf32>,
    return
  }
}

</mosaic_0001>

<llo_original>
// kernel: han_forward.3
$region0: #{han_forward.3}
  #allocation0 [shape = 'u32[]', space=smem, size = 0x4, offset = 0x4, fixed_abs, tag = 'smem constant byte address 0x4 - core index']
  #allocation1 [shape = 'u32[144,128]{1,0:T(1,128)}', space=vmem, size = 0x12000, scoped, tag = 'internal scratch']
  #allocation2 [shape = 'f32[3,4,2,32]{3,2,1,0:T(2,128)}', space=vmem, size = 0x3000, scoped, tag = 'scratch operand']
  #allocation3 [shape = 'f32[3,4,2,32]{3,2,1,0:T(2,128)}', space=vmem, size = 0x3000, scoped, tag = 'scratch operand']
  #allocation4 [shape = 'f32[4,2,32]{2,1,0:T(2,128)}', space=vmem, size = 0x1000, scoped, tag = 'scratch operand']
  #allocation5 [shape = 'f32[4,2,32]{2,1,0:T(2,128)}', space=vmem, size = 0x1000, scoped, tag = 'scratch operand']
  %s0 = inlined_call_operand.vmem [shape: f32[4,2,64], index: 0, kind: input, shape index: {}]
  %s1 = inlined_call_operand.vmem [shape: f32[4,2,1], index: 1, kind: input, shape index: {}]
  %s2 = inlined_call_operand.vmem [shape: f32[64,96], index: 2, kind: input, shape index: {}]
  %s3 = inlined_call_operand.vmem [shape: f32[3,32,32], index: 3, kind: input, shape index: {}]
  %s4 = inlined_call_operand.vmem [shape: f32[1,96], index: 4, kind: input, shape index: {}]
  %s5 = inlined_call_operand.vmem [shape: f32[3,1,32], index: 5, kind: input, shape index: {}]
  %s6 = inlined_call_operand.vmem [shape: f32[64,96], index: 6, kind: input, shape index: {}]
  %s7 = inlined_call_operand.vmem [shape: f32[3,32,32], index: 7, kind: input, shape index: {}]
  %s8 = inlined_call_operand.vmem [shape: f32[1,96], index: 8, kind: input, shape index: {}]
  %s9 = inlined_call_operand.vmem [shape: f32[3,1,32], index: 9, kind: input, shape index: {}]
  %s10 = inlined_call_operand.vmem [shape: f32[64,64], index: 10, kind: input, shape index: {}]
  %s11 = inlined_call_operand.vmem [shape: f32[1,64], index: 11, kind: input, shape index: {}]
  %s12 = inlined_call_operand.vmem [shape: f32[1,64], index: 12, kind: input, shape index: {}]
  %s13 = inlined_call_operand.vmem [shape: f32[64,5], index: 13, kind: input, shape index: {}]
  %s14 = inlined_call_operand.vmem [shape: f32[1,5], index: 14, kind: input, shape index: {}]
  %s15 = inlined_call_operand.hbm [shape: f32[2,5], index: 15, kind: output, shape index: {}]
  %s16 = sld [smem:[#allocation0]]
  $region70: #{han_forward.3} parent=0
    _
  %s18 = ssub.s32 1, %s16
  %s19 = scalar_select 0, %s18, %s16
  $region1: #{han_forward.3} parent=0
    #allocation6 [shape = 'u8[1024]{0}', space=vmem, size = 0x400, scoped, tag = 'output window, operand 0, single buffered']
    #allocation7 [shape = 's32[1]{0}', space=sflag, size = 0x4, scoped, tag = 'scoped memory for han_forward.3']
    %20 = vsyncpa [#allocation7], 0
    // Predicated region
    $region2: #{han_forward.3} parent=1 // pred_check
      _
    $region3: #{han_forward.3} parent=1 // pred_check_branch
      %22 = sbr.rel (0) target = $region5
    $region4: #{han_forward.3} parent=1 // pred_region
      _
    $region5: #{han_forward.3} parent=1 // pred_fallthru
      _
    // Predicated region
    $region6: #{han_forward.3} parent=1 // pred_check
      _
    $region7: #{han_forward.3} parent=1 // pred_check_branch
      %24 = sbr.rel (0) target = $region9
    $region8: #{han_forward.3} parent=1 // pred_region
      _
    $region9: #{han_forward.3} parent=1 // pred_fallthru
      _
    // Predicated region
    $region10: #{han_forward.3} parent=1 // pred_check
      _
    $region11: #{han_forward.3} parent=1 // pred_check_branch
      %26 = sbr.rel (0) target = $region13
    $region12: #{han_forward.3} parent=1 // pred_region
      _
    $region13: #{han_forward.3} parent=1 // pred_fallthru
      _
    // Predicated region
    $region14: #{han_forward.3} parent=1 // pred_check
      _
    $region15: #{han_forward.3} parent=1 // pred_check_branch
      %28 = sbr.rel (0) target = $region17
    $region16: #{han_forward.3} parent=1 // pred_region
      _
    $region17: #{han_forward.3} parent=1 // pred_fallthru
      _
    // Predicated region
    $region18: #{han_forward.3} parent=1 // pred_check
      _
    $region19: #{han_forward.3} parent=1 // pred_check_branch
      %30 = sbr.rel (0) target = $region21
    $region20: #{han_forward.3} parent=1 // pred_region
      _
    $region21: #{han_forward.3} parent=1 // pred_fallthru
      _
    // Predicated region
    $region22: #{han_forward.3} parent=1 // pred_check
      _
    $region23: #{han_forward.3} parent=1 // pred_check_branch
      %32 = sbr.rel (0) target = $region25
    $region24: #{han_forward.3} parent=1 // pred_region
      _
    $region25: #{han_forward.3} parent=1 // pred_fallthru
      _
    // Predicated region
    $region26: #{han_forward.3} parent=1 // pred_check
      _
    $region27: #{han_forward.3} parent=1 // pred_check_branch
      %34 = sbr.rel (0) target = $region29
    $region28: #{han_forward.3} parent=1 // pred_region
      _
    $region29: #{han_forward.3} parent=1 // pred_fallthru
      _
    // Predicated region
    $region30: #{han_forward.3} parent=1 // pred_check
      _
    $region31: #{han_forward.3} parent=1 // pred_check_branch
      %36 = sbr.rel (0) target = $region33
    $region32: #{han_forward.3} parent=1 // pred_region
      _
    $region33: #{han_forward.3} parent=1 // pred_fallthru
      _
    // Predicated region
    $region34: #{han_forward.3} parent=1 // pred_check
      _
    $region35: #{han_forward.3} parent=1 // pred_check_branch
      %38 = sbr.rel (0) target = $region37
    $region36: #{han_forward.3} parent=1 // pred_region
      _
    $region37: #{han_forward.3} parent=1 // pred_fallthru
      _
    // Predicated region
    $region38: #{han_forward.3} parent=1 // pred_check
      _
    $region39: #{han_forward.3} parent=1 // pred_check_branch
      %40 = sbr.rel (0) target = $region41
    $region40: #{han_forward.3} parent=1 // pred_region
      _
    $region41: #{han_forward.3} parent=1 // pred_fallthru
      _
    // Predicated region
    $region42: #{han_forward.3} parent=1 // pred_check
      _
    $region43: #{han_forward.3} parent=1 // pred_check_branch
      %42 = sbr.rel (0) target = $region45
    $region44: #{han_forward.3} parent=1 // pred_region
      _
    $region45: #{han_forward.3} parent=1 // pred_fallthru
      _
    // Predicated region
    $region46: #{han_forward.3} parent=1 // pred_check
      _
    $region47: #{han_forward.3} parent=1 // pred_check_branch
      %44 = sbr.rel (0) target = $region49
    $region48: #{han_forward.3} parent=1 // pred_region
      _
    $region49: #{han_forward.3} parent=1 // pred_fallthru
      _
    // Predicated region
    $region50: #{han_forward.3} parent=1 // pred_check
      _
    $region51: #{han_forward.3} parent=1 // pred_check_branch
      %46 = sbr.rel (0) target = $region53
    $region52: #{han_forward.3} parent=1 // pred_region
      _
    $region53: #{han_forward.3} parent=1 // pred_fallthru
      _
    // Predicated region
    $region54: #{han_forward.3} parent=1 // pred_check
      _
    $region55: #{han_forward.3} parent=1 // pred_check_branch
      %48 = sbr.rel (0) target = $region57
    $region56: #{han_forward.3} parent=1 // pred_region
      _
    $region57: #{han_forward.3} parent=1 // pred_fallthru
      _
    // Predicated region
    $region58: #{han_forward.3} parent=1 // pred_check
      _
    $region59: #{han_forward.3} parent=1 // pred_check_branch
      %50 = sbr.rel (0) target = $region61
    $region60: #{han_forward.3} parent=1 // pred_region
      _
    $region61: #{han_forward.3} parent=1 // pred_fallthru
      _
    %v51 = vld [vmem:[%s0] sm:$0x3]
    %v52 = vld [vmem:[%s0 + $0x2] sm:$0x3]
    %v53 = vld [vmem:[%s0 + $0x4] sm:$0x3]
    %v54 = vld [vmem:[%s0 + $0x6] sm:$0x3]
    %v55 = vld [vmem:[%s2] sm:$0xff]
    %v56 = vld [vmem:[%s2 + $0x8] sm:$0xff]
    %v57 = vld [vmem:[%s2 + $0x10] sm:$0xff]
    %v58 = vld [vmem:[%s2 + $0x18] sm:$0xff]
    %v59 = vld [vmem:[%s2 + $0x20] sm:$0xff]
    %v60 = vld [vmem:[%s2 + $0x28] sm:$0xff]
    %v61 = vld [vmem:[%s2 + $0x30] sm:$0xff]
    %v62 = vld [vmem:[%s2 + $0x38] sm:$0xff]
    %v63 = vld [vmem:[%s4] sm:$0x1]
    %v65 = vlaneseq
    %v66 = vshrl.u32 %v65, 7
    %v67 = vsub.s32 0, %v66
    %v68 = vrot.slane %v63, %v67
    %v74 = vcombine.low %v51, %v52
    %v75 = vcombine.low %v53, %v54
    %v77 = vunpack.c.l.s4 1983009808
    %v78 = vunpack.c.0.s8 %v77
    %v79 = vlaneseq
    %v80 = vshrl.u32 %v79, 7
    %v81 = vsub.s32 %v78, %v80
    %v82 = vrot.slane %v74, %v81
    %v84 = vunpack.c.l.s4 1983009808
    %v85 = vunpack.c.0.s8 %v84
    %v86 = vlaneseq
    %v87 = vshrl.u32 %v86, 7
    %v88 = vsub.s32 %v85, %v87
    %v89 = vrot.slane %v75, %v88
    %v90 = vcombine.low %v82, %v89
    %vm91 = vcmask 523264
    %v92 = vsel %vm91, %v90, 0
    %94 = vmatprep.subr.mxu0 0.0
    %95 = vmatpush1.msra.mxu0 0.0
    %96 = vmatprep.subr.mxu0 0.0
    %97 = vmatpush1.msra.mxu0 0.0
    %98 = vmatprep.subr.mxu0 0.0
    %99 = vmatpush1.msra.mxu0 0.0
    %100 = vmatprep.subr.mxu0 0.0
    %101 = vmatpush1.msra.mxu0 0.0
    %102 = vmatprep.subr.mxu0 0.0
    %103 = vmatpush1.msra.mxu0 0.0
    %104 = vmatprep.subr.mxu0 0.0
    %105 = vmatpush1.msra.mxu0 0.0
    %106 = vmatprep.subr.mxu0 0.0
    %107 = vmatpush1.msra.mxu0 0.0
    %108 = vmatprep.subr.mxu0 0.0
    %109 = vmatpush1.msra.mxu0 0.0
    %110 = vmatprep.subr.mxu0 0.0
    %111 = vmatpush1.msra.mxu0 %v62
    %112 = vmatprep.subr.mxu0 0.0
    %113 = vmatpush1.msra.mxu0 %v61
    %114 = vmatprep.subr.mxu0 0.0
    %115 = vmatpush1.msra.mxu0 %v60
    %116 = vmatprep.subr.mxu0 0.0
    %117 = vmatpush1.msra.mxu0 %v59
    %118 = vmatprep.subr.mxu0 0.0
    %119 = vmatpush1.msra.mxu0 %v58
    %120 = vmatprep.subr.mxu0 0.0
    %121 = vmatpush1.msra.mxu0 %v57
    %122 = vmatprep.subr.mxu0 0.0
    %123 = vmatpush1.msra.mxu0 %v56
    %124 = vmatprep.subr.mxu0 0.0
    %125 = vmatpush1.msra.mxu0 %v55
    %126 = vmatprep.subr.mxu0 0.0
    %127 = vmatpush2.msra.mxu0 0.0
    %128 = vmatprep.subr.mxu0 0.0
    %129 = vmatpush2.msra.mxu0 0.0
    %130 = vmatprep.subr.mxu0 0.0
    %131 = vmatpush2.msra.mxu0 0.0
    %132 = vmatprep.subr.mxu0 0.0
    %133 = vmatpush2.msra.mxu0 0.0
    %134 = vmatprep.subr.mxu0 0.0
    %135 = vmatpush2.msra.mxu0 0.0
    %136 = vmatprep.subr.mxu0 0.0
    %137 = vmatpush2.msra.mxu0 0.0
    %138 = vmatprep.subr.mxu0 0.0
    %139 = vmatpush2.msra.mxu0 0.0
    %140 = vmatprep.subr.mxu0 0.0
    %141 = vmatpush2.msra.mxu0 0.0
    %142 = vmatprep.subr.mxu0 0.0
    %143 = vmatpush2.msra.mxu0 0.0
    %144 = vmatprep.subr.mxu0 0.0
    %145 = vmatpush2.msra.mxu0 0.0
    %146 = vmatprep.subr.mxu0 0.0
    %147 = vmatpush2.msra.mxu0 0.0
    %148 = vmatprep.subr.mxu0 0.0
    %149 = vmatpush2.msra.mxu0 0.0
    %150 = vmatprep.subr.mxu0 0.0
    %151 = vmatpush2.msra.mxu0 0.0
    %152 = vmatprep.subr.mxu0 0.0
    %153 = vmatpush2.msra.mxu0 0.0
    %154 = vmatprep.subr.mxu0 0.0
    %155 = vmatpush2.msra.mxu0 0.0
    %156 = vmatprep.subr.mxu0 0.0
    %157 = vmatpush2.msra.mxu0 0.0
    %158 = vmatprep.mubr.f32.mxu0 0.0
    %159 = vmatmul.mubr.f32.gmra.mxu0 %v92
    %v160 = vpop.f32.mrf.mxu0
    %v161 = vadd.f32 %v68, %v160
    %v162 = vpop.f32.mrf.mxu0
    %163 = vdwg.mxu0
    %v164 = vld [vmem:[%s6] sm:$0xff]
    %v165 = vld [vmem:[%s6 + $0x8] sm:$0xff]
    %v166 = vld [vmem:[%s6 + $0x10] sm:$0xff]
    %v167 = vld [vmem:[%s6 + $0x18] sm:$0xff]
    %v168 = vld [vmem:[%s6 + $0x20] sm:$0xff]
    %v169 = vld [vmem:[%s6 + $0x28] sm:$0xff]
    %v170 = vld [vmem:[%s6 + $0x30] sm:$0xff]
    %v171 = vld [vmem:[%s6 + $0x38] sm:$0xff]
    %v172 = vld [vmem:[%s8] sm:$0x1]
    %v174 = vlaneseq
    %v175 = vshrl.u32 %v174, 7
    %v176 = vsub.s32 0, %v175
    %v177 = vrot.slane %v172, %v176
    %179 = vmatprep.subr.mxu0 0.0
    %180 = vmatpush1.msra.mxu0 0.0
    %181 = vmatprep.subr.mxu0 0.0
    %182 = vmatpush1.msra.mxu0 0.0
    %183 = vmatprep.subr.mxu0 0.0
    %184 = vmatpush1.msra.mxu0 0.0
    %185 = vmatprep.subr.mxu0 0.0
    %186 = vmatpush1.msra.mxu0 0.0
    %187 = vmatprep.subr.mxu0 0.0
    %188 = vmatpush1.msra.mxu0 0.0
    %189 = vmatprep.subr.mxu0 0.0
    %190 = vmatpush1.msra.mxu0 0.0
    %191 = vmatprep.subr.mxu0 0.0
    %192 = vmatpush1.msra.mxu0 0.0
    %193 = vmatprep.subr.mxu0 0.0
    %194 = vmatpush1.msra.mxu0 0.0
    %195 = vmatprep.subr.mxu0 0.0
    %196 = vmatpush1.msra.mxu0 %v171
    %197 = vmatprep.subr.mxu0 0.0
    %198 = vmatpush1.msra.mxu0 %v170
    %199 = vmatprep.subr.mxu0 0.0
    %200 = vmatpush1.msra.mxu0 %v169
    %201 = vmatprep.subr.mxu0 0.0
    %202 = vmatpush1.msra.mxu0 %v168
    %203 = vmatprep.subr.mxu0 0.0
    %204 = vmatpush1.msra.mxu0 %v167
    %205 = vmatprep.subr.mxu0 0.0
    %206 = vmatpush1.msra.mxu0 %v166
    %207 = vmatprep.subr.mxu0 0.0
    %208 = vmatpush1.msra.mxu0 %v165
    %209 = vmatprep.subr.mxu0 0.0
    %210 = vmatpush1.msra.mxu0 %v164
    %211 = vmatprep.subr.mxu0 0.0
    %212 = vmatpush2.msra.mxu0 0.0
    %213 = vmatprep.subr.mxu0 0.0
    %214 = vmatpush2.msra.mxu0 0.0
    %215 = vmatprep.subr.mxu0 0.0
    %216 = vmatpush2.msra.mxu0 0.0
    %217 = vmatprep.subr.mxu0 0.0
    %218 = vmatpush2.msra.mxu0 0.0
    %219 = vmatprep.subr.mxu0 0.0
    %220 = vmatpush2.msra.mxu0 0.0
    %221 = vmatprep.subr.mxu0 0.0
    %222 = vmatpush2.msra.mxu0 0.0
    %223 = vmatprep.subr.mxu0 0.0
    %224 = vmatpush2.msra.mxu0 0.0
    %225 = vmatprep.subr.mxu0 0.0
    %226 = vmatpush2.msra.mxu0 0.0
    %227 = vmatprep.subr.mxu0 0.0
    %228 = vmatpush2.msra.mxu0 0.0
    %229 = vmatprep.subr.mxu0 0.0
    %230 = vmatpush2.msra.mxu0 0.0
    %231 = vmatprep.subr.mxu0 0.0
    %232 = vmatpush2.msra.mxu0 0.0
    %233 = vmatprep.subr.mxu0 0.0
    %234 = vmatpush2.msra.mxu0 0.0
    %235 = vmatprep.subr.mxu0 0.0
    %236 = vmatpush2.msra.mxu0 0.0
    %237 = vmatprep.subr.mxu0 0.0
    %238 = vmatpush2.msra.mxu0 0.0
    %239 = vmatprep.subr.mxu0 0.0
    %240 = vmatpush2.msra.mxu0 0.0
    %241 = vmatprep.subr.mxu0 0.0
    %242 = vmatpush2.msra.mxu0 0.0
    %243 = vmatprep.mubr.f32.mxu0 0.0
    %244 = vmatmul.mubr.f32.gmra.mxu0 %v92
    %v245 = vpop.f32.mrf.mxu0
    %v246 = vadd.f32 %v177, %v245
    %v247 = vpop.f32.mrf.mxu0
    %248 = vdwg.mxu0
    %v250 = vcombine.high %v161, %v161
    %v252 = vunpack.c.l.s4 1983009808
    %v253 = vunpack.c.0.s8 %v252
    %v254 = vlaneseq
    %v255 = vshrl.u32 %v254, 7
    %v256 = vsub.s32 %v253, %v255
    %v257 = vrot.slane %v161, %v256
    %v259 = vunpack.c.l.s4 1983009808
    %v260 = vunpack.c.0.s8 %v259
    %v261 = vlaneseq
    %v262 = vshrl.u32 %v261, 7
    %v263 = vsub.s32 %v260, %v262
    %v264 = vrot.slane %v250, %v263
    %v265 = vcombine.high %v257, %v257
    %v266 = vcombine.high %v264, %v264
    %vm271 = vcmask 254976
    %272 = vst.msk [vmem:[#allocation2] sm:$0x3] %vm271, %v257
    %273 = vst.msk [vmem:[#allocation2 + $0x2] sm:$0x3] %vm271, %v265
    %274 = vst.msk [vmem:[#allocation2 + $0x4] sm:$0x3] %vm271, %v264
    %275 = vst.msk [vmem:[#allocation2 + $0x6] sm:$0x3] %vm271, %v266
    %v277 = vcombine.high %v246, %v246
    %v279 = vunpack.c.l.s4 1983009808
    %v280 = vunpack.c.0.s8 %v279
    %v281 = vlaneseq
    %v282 = vshrl.u32 %v281, 7
    %v283 = vsub.s32 %v280, %v282
    %v284 = vrot.slane %v246, %v283
    %v286 = vunpack.c.l.s4 1983009808
    %v287 = vunpack.c.0.s8 %v286
    %v288 = vlaneseq
    %v289 = vshrl.u32 %v288, 7
    %v290 = vsub.s32 %v287, %v289
    %v291 = vrot.slane %v277, %v290
    %v292 = vcombine.high %v284, %v284
    %v293 = vcombine.high %v291, %v291
    %298 = vst.msk [vmem:[#allocation3] sm:$0x3] %vm271, %v284
    %299 = vst.msk [vmem:[#allocation3 + $0x2] sm:$0x3] %vm271, %v292
    %300 = vst.msk [vmem:[#allocation3 + $0x4] sm:$0x3] %vm271, %v291
    %301 = vst.msk [vmem:[#allocation3 + $0x6] sm:$0x3] %vm271, %v293
    %v303 = vunpack.c.l.s4 1983009808
    %v304 = vunpack.c.0.s8 %v303
    %v305 = vlaneseq
    %v306 = vshrl.u32 %v305, 7
    %v307 = vsub.s32 %v304, %v306
    %v308 = vrot.slane %v257, %v307
    %v310 = vunpack.c.l.s4 1983009808
    %v311 = vunpack.c.0.s8 %v310
    %v312 = vlaneseq
    %v313 = vshrl.u32 %v312, 7
    %v314 = vsub.s32 %v311, %v313
    %v315 = vrot.slane %v265, %v314
    %v317 = vunpack.c.l.s4 1983009808
    %v318 = vunpack.c.0.s8 %v317
    %v319 = vlaneseq
    %v320 = vshrl.u32 %v319, 7
    %v321 = vsub.s32 %v318, %v320
    %v322 = vrot.slane %v264, %v321
    %v324 = vunpack.c.l.s4 1983009808
    %v325 = vunpack.c.0.s8 %v324
    %v326 = vlaneseq
    %v327 = vshrl.u32 %v326, 7
    %v328 = vsub.s32 %v325, %v327
    %v329 = vrot.slane %v266, %v328
    %330 = vrot.lane.b32.xlu0 %v308, 96
    %v331 = vpop.permute.xlu0 %330
    %332 = vrot.lane.b32.xlu0 %v315, 96
    %v333 = vpop.permute.xlu0 %332
    %334 = vrot.lane.b32.xlu0 %v322, 96
    %v335 = vpop.permute.xlu0 %334
    %336 = vrot.lane.b32.xlu0 %v329, 96
    %v337 = vpop.permute.xlu0 %336
    %s342 = scalar_lea.vmem [#allocation2], 8
    %343 = vst.msk [vmem:[%s342] sm:$0x3] %vm271, %v331
    %344 = vst.msk [vmem:[%s342 + $0x2] sm:$0x3] %vm271, %v333
    %345 = vst.msk [vmem:[%s342 + $0x4] sm:$0x3] %vm271, %v335
    %346 = vst.msk [vmem:[%s342 + $0x6] sm:$0x3] %vm271, %v337
    %v348 = vunpack.c.l.s4 1983009808
    %v349 = vunpack.c.0.s8 %v348
    %v350 = vlaneseq
    %v351 = vshrl.u32 %v350, 7
    %v352 = vsub.s32 %v349, %v351
    %v353 = vrot.slane %v284, %v352
    %v355 = vunpack.c.l.s4 1983009808
    %v356 = vunpack.c.0.s8 %v355
    %v357 = vlaneseq
    %v358 = vshrl.u32 %v357, 7
    %v359 = vsub.s32 %v356, %v358
    %v360 = vrot.slane %v292, %v359
    %v362 = vunpack.c.l.s4 1983009808
    %v363 = vunpack.c.0.s8 %v362
    %v364 = vlaneseq
    %v365 = vshrl.u32 %v364, 7
    %v366 = vsub.s32 %v363, %v365
    %v367 = vrot.slane %v291, %v366
    %v369 = vunpack.c.l.s4 1983009808
    %v370 = vunpack.c.0.s8 %v369
    %v371 = vlaneseq
    %v372 = vshrl.u32 %v371, 7
    %v373 = vsub.s32 %v370, %v372
    %v374 = vrot.slane %v293, %v373
    %375 = vrot.lane.b32.xlu0 %v353, 96
    %v376 = vpop.permute.xlu0 %375
    %377 = vrot.lane.b32.xlu0 %v360, 96
    %v378 = vpop.permute.xlu0 %377
    %379 = vrot.lane.b32.xlu0 %v367, 96
    %v380 = vpop.permute.xlu0 %379
    %381 = vrot.lane.b32.xlu0 %v374, 96
    %v382 = vpop.permute.xlu0 %381
    %s387 = scalar_lea.vmem [#allocation3], 8
    %388 = vst.msk [vmem:[%s387] sm:$0x3] %vm271, %v376
    %389 = vst.msk [vmem:[%s387 + $0x2] sm:$0x3] %vm271, %v378
    %390 = vst.msk [vmem:[%s387 + $0x4] sm:$0x3] %vm271, %v380
    %391 = vst.msk [vmem:[%s387 + $0x6] sm:$0x3] %vm271, %v382
    %392 = vrot.lane.b32.xlu0 %v308, 64
    %v393 = vpop.permute.xlu0 %392
    %394 = vrot.lane.b32.xlu0 %v315, 64
    %v395 = vpop.permute.xlu0 %394
    %396 = vrot.lane.b32.xlu0 %v322, 64
    %v397 = vpop.permute.xlu0 %396
    %398 = vrot.lane.b32.xlu0 %v329, 64
    %v399 = vpop.permute.xlu0 %398
    %s404 = scalar_lea.vmem [#allocation2], 16
    %405 = vst.msk [vmem:[%s404] sm:$0x3] %vm271, %v393
    %406 = vst.msk [vmem:[%s404 + $0x2] sm:$0x3] %vm271, %v395
    %407 = vst.msk [vmem:[%s404 + $0x4] sm:$0x3] %vm271, %v397
    %408 = vst.msk [vmem:[%s404 + $0x6] sm:$0x3] %vm271, %v399
    %409 = vrot.lane.b32.xlu0 %v353, 64
    %v410 = vpop.permute.xlu0 %409
    %411 = vrot.lane.b32.xlu0 %v360, 64
    %v412 = vpop.permute.xlu0 %411
    %413 = vrot.lane.b32.xlu0 %v367, 64
    %v414 = vpop.permute.xlu0 %413
    %415 = vrot.lane.b32.xlu0 %v374, 64
    %v416 = vpop.permute.xlu0 %415
    %s421 = scalar_lea.vmem [#allocation3], 16
    %422 = vst.msk [vmem:[%s421] sm:$0x3] %vm271, %v410
    %423 = vst.msk [vmem:[%s421 + $0x2] sm:$0x3] %vm271, %v412
    %424 = vst.msk [vmem:[%s421 + $0x4] sm:$0x3] %vm271, %v414
    %425 = vst.msk [vmem:[%s421 + $0x6] sm:$0x3] %vm271, %v416
    %v426 = vld [vmem:[%s3] sm:$0xff]
    %v427 = vld [vmem:[%s3 + $0x8] sm:$0xff]
    %v428 = vld [vmem:[%s3 + $0x10] sm:$0xff]
    %v429 = vld [vmem:[%s3 + $0x18] sm:$0xff]
    %s430 = scalar_lea.vmem %s3, 32
    %v431 = vld [vmem:[%s430] sm:$0xff]
    %v432 = vld [vmem:[%s430 + $0x8] sm:$0xff]
    %v433 = vld [vmem:[%s430 + $0x10] sm:$0xff]
    %v434 = vld [vmem:[%s430 + $0x18] sm:$0xff]
    %s435 = scalar_lea.vmem %s3, 64
    %v436 = vld [vmem:[%s435] sm:$0xff]
    %v437 = vld [vmem:[%s435 + $0x8] sm:$0xff]
    %v438 = vld [vmem:[%s435 + $0x10] sm:$0xff]
    %v439 = vld [vmem:[%s435 + $0x18] sm:$0xff]
    %v440 = vld [vmem:[%s5] sm:$0x1]
    %s441 = scalar_lea.vmem %s5, 1
    %v442 = vld [vmem:[%s441] sm:$0x1]
    %s443 = scalar_lea.vmem %s5, 2
    %v444 = vld [vmem:[%s443] sm:$0x1]
    %v445 = vld [vmem:[%s7] sm:$0xff]
    %v446 = vld [vmem:[%s7 + $0x8] sm:$0xff]
    %v447 = vld [vmem:[%s7 + $0x10] sm:$0xff]
    %v448 = vld [vmem:[%s7 + $0x18] sm:$0xff]
    %s449 = scalar_lea.vmem %s7, 32
    %v450 = vld [vmem:[%s449] sm:$0xff]
    %v451 = vld [vmem:[%s449 + $0x8] sm:$0xff]
    %v452 = vld [vmem:[%s449 + $0x10] sm:$0xff]
    %v453 = vld [vmem:[%s449 + $0x18] sm:$0xff]
    %s454 = scalar_lea.vmem %s7, 64
    %v455 = vld [vmem:[%s454] sm:$0xff]
    %v456 = vld [vmem:[%s454 + $0x8] sm:$0xff]
    %v457 = vld [vmem:[%s454 + $0x10] sm:$0xff]
    %v458 = vld [vmem:[%s454 + $0x18] sm:$0xff]
    %v459 = vld [vmem:[%s9] sm:$0x1]
    %s460 = scalar_lea.vmem %s9, 1
    %v461 = vld [vmem:[%s460] sm:$0x1]
    %s462 = scalar_lea.vmem %s9, 2
    %v463 = vld [vmem:[%s462] sm:$0x1]
    %v464 = vld [vmem:[#allocation2] sm:$0x3]
    %v465 = vld [vmem:[%s342] sm:$0x3]
    %v466 = vld [vmem:[%s404] sm:$0x3]
    %vm467 = vcmask 261120
    %v469 = vsel %vm467, 0.0, 0
    %471 = vmatprep.subr.mxu0 0.0
    %472 = vmatpush1.msra.mxu0 0.0
    %473 = vmatprep.subr.mxu0 0.0
    %474 = vmatpush1.msra.mxu0 0.0
    %475 = vmatprep.subr.mxu0 0.0
    %476 = vmatpush1.msra.mxu0 0.0
    %477 = vmatprep.subr.mxu0 0.0
    %478 = vmatpush1.msra.mxu0 0.0
    %479 = vmatprep.subr.mxu0 0.0
    %480 = vmatpush1.msra.mxu0 0.0
    %481 = vmatprep.subr.mxu0 0.0
    %482 = vmatpush1.msra.mxu0 0.0
    %483 = vmatprep.subr.mxu0 0.0
    %484 = vmatpush1.msra.mxu0 0.0
    %485 = vmatprep.subr.mxu0 0.0
    %486 = vmatpush1.msra.mxu0 0.0
    %487 = vmatprep.subr.mxu0 0.0
    %488 = vmatpush1.msra.mxu0 0.0
    %489 = vmatprep.subr.mxu0 0.0
    %490 = vmatpush1.msra.mxu0 0.0
    %491 = vmatprep.subr.mxu0 0.0
    %492 = vmatpush1.msra.mxu0 0.0
    %493 = vmatprep.subr.mxu0 0.0
    %494 = vmatpush1.msra.mxu0 0.0
    %495 = vmatprep.subr.mxu0 0.0
    %496 = vmatpush1.msra.mxu0 %v429
    %497 = vmatprep.subr.mxu0 0.0
    %498 = vmatpush1.msra.mxu0 %v428
    %499 = vmatprep.subr.mxu0 0.0
    %500 = vmatpush1.msra.mxu0 %v427
    %501 = vmatprep.subr.mxu0 0.0
    %502 = vmatpush1.msra.mxu0 %v426
    %503 = vmatprep.subr.mxu0 0.0
    %504 = vmatpush2.msra.mxu0 0.0
    %505 = vmatprep.subr.mxu0 0.0
    %506 = vmatpush2.msra.mxu0 0.0
    %507 = vmatprep.subr.mxu0 0.0
    %508 = vmatpush2.msra.mxu0 0.0
    %509 = vmatprep.subr.mxu0 0.0
    %510 = vmatpush2.msra.mxu0 0.0
    %511 = vmatprep.subr.mxu0 0.0
    %512 = vmatpush2.msra.mxu0 0.0
    %513 = vmatprep.subr.mxu0 0.0
    %514 = vmatpush2.msra.mxu0 0.0
    %515 = vmatprep.subr.mxu0 0.0
    %516 = vmatpush2.msra.mxu0 0.0
    %517 = vmatprep.subr.mxu0 0.0
    %518 = vmatpush2.msra.mxu0 0.0
    %519 = vmatprep.subr.mxu0 0.0
    %520 = vmatpush2.msra.mxu0 0.0
    %521 = vmatprep.subr.mxu0 0.0
    %522 = vmatpush2.msra.mxu0 0.0
    %523 = vmatprep.subr.mxu0 0.0
    %524 = vmatpush2.msra.mxu0 0.0
    %525 = vmatprep.subr.mxu0 0.0
    %526 = vmatpush2.msra.mxu0 0.0
    %527 = vmatprep.subr.mxu0 0.0
    %528 = vmatpush2.msra.mxu0 0.0
    %529 = vmatprep.subr.mxu0 0.0
    %530 = vmatpush2.msra.mxu0 0.0
    %531 = vmatprep.subr.mxu0 0.0
    %532 = vmatpush2.msra.mxu0 0.0
    %533 = vmatprep.subr.mxu0 0.0
    %534 = vmatpush2.msra.mxu0 0.0
    %535 = vmatprep.mubr.f32.mxu0 0.0
    %536 = vmatmul.mubr.f32.gmra.mxu0 %v469
    %v537 = vpop.f32.mrf.mxu0
    %v538 = vadd.f32 0.0, %v537
    %v539 = vpop.f32.mrf.mxu0
    %540 = vdwg.mxu0
    %v541 = vadd.f32 %v464, %v538
    %v543 = vlaneseq
    %v544 = vshrl.u32 %v543, 7
    %v545 = vsub.s32 0, %v544
    %v546 = vrot.slane %v440, %v545
    %v548 = vadd.f32 %v541, %v546
    %v549 = vxor.u32 %v548, 2147483648
    %v550 = vmul.f32 %v549, 1.442695
    %v551 = vpow.pop %v550
    %v552 = vadd.f32 %v551, 1.0
    %v553 = vrcp.pop %v552
    %v554 = vmul.f32 1.0, %v553
    %555 = vmatprep.subr.mxu0 0.0
    %556 = vmatpush1.msra.mxu0 0.0
    %557 = vmatprep.subr.mxu0 0.0
    %558 = vmatpush1.msra.mxu0 0.0
    %559 = vmatprep.subr.mxu0 0.0
    %560 = vmatpush1.msra.mxu0 0.0
    %561 = vmatprep.subr.mxu0 0.0
    %562 = vmatpush1.msra.mxu0 0.0
    %563 = vmatprep.subr.mxu0 0.0
    %564 = vmatpush1.msra.mxu0 0.0
    %565 = vmatprep.subr.mxu0 0.0
    %566 = vmatpush1.msra.mxu0 0.0
    %567 = vmatprep.subr.mxu0 0.0
    %568 = vmatpush1.msra.mxu0 0.0
    %569 = vmatprep.subr.mxu0 0.0
    %570 = vmatpush1.msra.mxu0 0.0
    %571 = vmatprep.subr.mxu0 0.0
    %572 = vmatpush1.msra.mxu0 0.0
    %573 = vmatprep.subr.mxu0 0.0
    %574 = vmatpush1.msra.mxu0 0.0
    %575 = vmatprep.subr.mxu0 0.0
    %576 = vmatpush1.msra.mxu0 0.0
    %577 = vmatprep.subr.mxu0 0.0
    %578 = vmatpush1.msra.mxu0 0.0
    %579 = vmatprep.subr.mxu0 0.0
    %580 = vmatpush1.msra.mxu0 %v434
    %581 = vmatprep.subr.mxu0 0.0
    %582 = vmatpush1.msra.mxu0 %v433
    %583 = vmatprep.subr.mxu0 0.0
    %584 = vmatpush1.msra.mxu0 %v432
    %585 = vmatprep.subr.mxu0 0.0
    %586 = vmatpush1.msra.mxu0 %v431
    %587 = vmatprep.subr.mxu0 0.0
    %588 = vmatpush2.msra.mxu0 0.0
    %589 = vmatprep.subr.mxu0 0.0
    %590 = vmatpush2.msra.mxu0 0.0
    %591 = vmatprep.subr.mxu0 0.0
    %592 = vmatpush2.msra.mxu0 0.0
    %593 = vmatprep.subr.mxu0 0.0
    %594 = vmatpush2.msra.mxu0 0.0
    %595 = vmatprep.subr.mxu0 0.0
    %596 = vmatpush2.msra.mxu0 0.0
    %597 = vmatprep.subr.mxu0 0.0
    %598 = vmatpush2.msra.mxu0 0.0
    %599 = vmatprep.subr.mxu0 0.0
    %600 = vmatpush2.msra.mxu0 0.0
    %601 = vmatprep.subr.mxu0 0.0
    %602 = vmatpush2.msra.mxu0 0.0
    %603 = vmatprep.subr.mxu0 0.0
    %604 = vmatpush2.msra.mxu0 0.0
    %605 = vmatprep.subr.mxu0 0.0
    %606 = vmatpush2.msra.mxu0 0.0
    %607 = vmatprep.subr.mxu0 0.0
    %608 = vmatpush2.msra.mxu0 0.0
    %609 = vmatprep.subr.mxu0 0.0
    %610 = vmatpush2.msra.mxu0 0.0
    %611 = vmatprep.subr.mxu0 0.0
    %612 = vmatpush2.msra.mxu0 0.0
    %613 = vmatprep.subr.mxu0 0.0
    %614 = vmatpush2.msra.mxu0 0.0
    %615 = vmatprep.subr.mxu0 0.0
    %616 = vmatpush2.msra.mxu0 0.0
    %617 = vmatprep.subr.mxu0 0.0
    %618 = vmatpush2.msra.mxu0 0.0
    %619 = vmatprep.mubr.f32.mxu0 0.0
    %620 = vmatmul.mubr.f32.gmra.mxu0 %v469
    %v621 = vpop.f32.mrf.mxu0
    %v622 = vadd.f32 0.0, %v621
    %v623 = vpop.f32.mrf.mxu0
    %624 = vdwg.mxu0
    %v625 = vadd.f32 %v465, %v622
    %v627 = vlaneseq
    %v628 = vshrl.u32 %v627, 7
    %v629 = vsub.s32 0, %v628
    %v630 = vrot.slane %v442, %v629
    %v632 = vadd.f32 %v625, %v630
    %v633 = vxor.u32 %v632, 2147483648
    %v634 = vmul.f32 %v633, 1.442695
    %v635 = vpow.pop %v634
    %v636 = vadd.f32 %v635, 1.0
    %v637 = vrcp.pop %v636
    %v638 = vmul.f32 1.0, %v637
    %v640 = vlaneseq
    %v641 = vshrl.u32 %v640, 7
    %v642 = vsub.s32 0, %v641
    %v643 = vrot.slane %v444, %v642
    %645 = vmatprep.subr.mxu0 0.0
    %646 = vmatpush1.msra.mxu0 0.0
    %647 = vmatprep.subr.mxu0 0.0
    %648 = vmatpush1.msra.mxu0 0.0
    %649 = vmatprep.subr.mxu0 0.0
    %650 = vmatpush1.msra.mxu0 0.0
    %651 = vmatprep.subr.mxu0 0.0
    %652 = vmatpush1.msra.mxu0 0.0
    %653 = vmatprep.subr.mxu0 0.0
    %654 = vmatpush1.msra.mxu0 0.0
    %655 = vmatprep.subr.mxu0 0.0
    %656 = vmatpush1.msra.mxu0 0.0
    %657 = vmatprep.subr.mxu0 0.0
    %658 = vmatpush1.msra.mxu0 0.0
    %659 = vmatprep.subr.mxu0 0.0
    %660 = vmatpush1.msra.mxu0 0.0
    %661 = vmatprep.subr.mxu0 0.0
    %662 = vmatpush1.msra.mxu0 0.0
    %663 = vmatprep.subr.mxu0 0.0
    %664 = vmatpush1.msra.mxu0 0.0
    %665 = vmatprep.subr.mxu0 0.0
    %666 = vmatpush1.msra.mxu0 0.0
    %667 = vmatprep.subr.mxu0 0.0
    %668 = vmatpush1.msra.mxu0 0.0
    %669 = vmatprep.subr.mxu0 0.0
    %670 = vmatpush1.msra.mxu0 %v439
    %671 = vmatprep.subr.mxu0 0.0
    %672 = vmatpush1.msra.mxu0 %v438
    %673 = vmatprep.subr.mxu0 0.0
    %674 = vmatpush1.msra.mxu0 %v437
    %675 = vmatprep.subr.mxu0 0.0
    %676 = vmatpush1.msra.mxu0 %v436
    %677 = vmatprep.subr.mxu0 0.0
    %678 = vmatpush2.msra.mxu0 0.0
    %679 = vmatprep.subr.mxu0 0.0
    %680 = vmatpush2.msra.mxu0 0.0
    %681 = vmatprep.subr.mxu0 0.0
    %682 = vmatpush2.msra.mxu0 0.0
    %683 = vmatprep.subr.mxu0 0.0
    %684 = vmatpush2.msra.mxu0 0.0
    %685 = vmatprep.subr.mxu0 0.0
    %686 = vmatpush2.msra.mxu0 0.0
    %687 = vmatprep.subr.mxu0 0.0
    %688 = vmatpush2.msra.mxu0 0.0
    %689 = vmatprep.subr.mxu0 0.0
    %690 = vmatpush2.msra.mxu0 0.0
    %691 = vmatprep.subr.mxu0 0.0
    %692 = vmatpush2.msra.mxu0 0.0
    %693 = vmatprep.subr.mxu0 0.0
    %694 = vmatpush2.msra.mxu0 0.0
    %695 = vmatprep.subr.mxu0 0.0
    %696 = vmatpush2.msra.mxu0 0.0
    %697 = vmatprep.subr.mxu0 0.0
    %698 = vmatpush2.msra.mxu0 0.0
    %699 = vmatprep.subr.mxu0 0.0
    %700 = vmatpush2.msra.mxu0 0.0
    %701 = vmatprep.subr.mxu0 0.0
    %702 = vmatpush2.msra.mxu0 0.0
    %703 = vmatprep.subr.mxu0 0.0
    %704 = vmatpush2.msra.mxu0 0.0
    %705 = vmatprep.subr.mxu0 0.0
    %706 = vmatpush2.msra.mxu0 0.0
    %707 = vmatprep.subr.mxu0 0.0
    %708 = vmatpush2.msra.mxu0 0.0
    %709 = vmatprep.mubr.f32.mxu0 0.0
    %710 = vmatmul.mubr.f32.gmra.mxu0 %v469
    %v711 = vpop.f32.mrf.mxu0
    %v712 = vadd.f32 %v643, %v711
    %v713 = vpop.f32.mrf.mxu0
    %714 = vdwg.mxu0
    %v715 = vmul.f32 %v554, %v712
    %v716 = vadd.f32 %v466, %v715
    %v717 = vtanh.pop %v716
    %v718 = vsub.f32 1.0, %v638
    %v719 = vmul.f32 %v718, %v717
    %v720 = vmul.f32 %v638, 0.0
    %v721 = vadd.f32 %v719, %v720
    %s722 = scalar_lea.vmem [#allocation3], 6
    %v723 = vld [vmem:[%s722] sm:$0x3]
    %s724 = scalar_lea.vmem [#allocation3], 14
    %v725 = vld [vmem:[%s724] sm:$0x3]
    %s726 = scalar_lea.vmem [#allocation3], 22
    %v727 = vld [vmem:[%s726] sm:$0x3]
    %728 = vmatprep.subr.mxu0 0.0
    %729 = vmatpush1.msra.mxu0 0.0
    %730 = vmatprep.subr.mxu0 0.0
    %731 = vmatpush1.msra.mxu0 0.0
    %732 = vmatprep.subr.mxu0 0.0
    %733 = vmatpush1.msra.mxu0 0.0
    %734 = vmatprep.subr.mxu0 0.0
    %735 = vmatpush1.msra.mxu0 0.0
    %736 = vmatprep.subr.mxu0 0.0
    %737 = vmatpush1.msra.mxu0 0.0
    %738 = vmatprep.subr.mxu0 0.0
    %739 = vmatpush1.msra.mxu0 0.0
    %740 = vmatprep.subr.mxu0 0.0
    %741 = vmatpush1.msra.mxu0 0.0
    %742 = vmatprep.subr.mxu0 0.0
    %743 = vmatpush1.msra.mxu0 0.0
    %744 = vmatprep.subr.mxu0 0.0
    %745 = vmatpush1.msra.mxu0 0.0
    %746 = vmatprep.subr.mxu0 0.0
    %747 = vmatpush1.msra.mxu0 0.0
    %748 = vmatprep.subr.mxu0 0.0
    %749 = vmatpush1.msra.mxu0 0.0
    %750 = vmatprep.subr.mxu0 0.0
    %751 = vmatpush1.msra.mxu0 0.0
    %752 = vmatprep.subr.mxu0 0.0
    %753 = vmatpush1.msra.mxu0 %v448
    %754 = vmatprep.subr.mxu0 0.0
    %755 = vmatpush1.msra.mxu0 %v447
    %756 = vmatprep.subr.mxu0 0.0
    %757 = vmatpush1.msra.mxu0 %v446
    %758 = vmatprep.subr.mxu0 0.0
    %759 = vmatpush1.msra.mxu0 %v445
    %760 = vmatprep.subr.mxu0 0.0
    %761 = vmatpush2.msra.mxu0 0.0
    %762 = vmatprep.subr.mxu0 0.0
    %763 = vmatpush2.msra.mxu0 0.0
    %764 = vmatprep.subr.mxu0 0.0
    %765 = vmatpush2.msra.mxu0 0.0
    %766 = vmatprep.subr.mxu0 0.0
    %767 = vmatpush2.msra.mxu0 0.0
    %768 = vmatprep.subr.mxu0 0.0
    %769 = vmatpush2.msra.mxu0 0.0
    %770 = vmatprep.subr.mxu0 0.0
    %771 = vmatpush2.msra.mxu0 0.0
    %772 = vmatprep.subr.mxu0 0.0
    %773 = vmatpush2.msra.mxu0 0.0
    %774 = vmatprep.subr.mxu0 0.0
    %775 = vmatpush2.msra.mxu0 0.0
    %776 = vmatprep.subr.mxu0 0.0
    %777 = vmatpush2.msra.mxu0 0.0
    %778 = vmatprep.subr.mxu0 0.0
    %779 = vmatpush2.msra.mxu0 0.0
    %780 = vmatprep.subr.mxu0 0.0
    %781 = vmatpush2.msra.mxu0 0.0
    %782 = vmatprep.subr.mxu0 0.0
    %783 = vmatpush2.msra.mxu0 0.0
    %784 = vmatprep.subr.mxu0 0.0
    %785 = vmatpush2.msra.mxu0 0.0
    %786 = vmatprep.subr.mxu0 0.0
    %787 = vmatpush2.msra.mxu0 0.0
    %788 = vmatprep.subr.mxu0 0.0
    %789 = vmatpush2.msra.mxu0 0.0
    %790 = vmatprep.subr.mxu0 0.0
    %791 = vmatpush2.msra.mxu0 0.0
    %792 = vmatprep.mubr.f32.mxu0 0.0
    %793 = vmatmul.mubr.f32.gmra.mxu0 %v469
    %v794 = vpop.f32.mrf.mxu0
    %v795 = vadd.f32 0.0, %v794
    %v796 = vpop.f32.mrf.mxu0
    %797 = vdwg.mxu0
    %v798 = vadd.f32 %v723, %v795
    %v800 = vlaneseq
    %v801 = vshrl.u32 %v800, 7
    %v802 = vsub.s32 0, %v801
    %v803 = vrot.slane %v459, %v802
    %v805 = vadd.f32 %v798, %v803
    %v806 = vxor.u32 %v805, 2147483648
    %v807 = vmul.f32 %v806, 1.442695
    %v808 = vpow.pop %v807
    %v809 = vadd.f32 %v808, 1.0
    %v810 = vrcp.pop %v809
    %v811 = vmul.f32 1.0, %v810
    %812 = vmatprep.subr.mxu0 0.0
    %813 = vmatpush1.msra.mxu0 0.0
    %814 = vmatprep.subr.mxu0 0.0
    %815 = vmatpush1.msra.mxu0 0.0
    %816 = vmatprep.subr.mxu0 0.0
    %817 = vmatpush1.msra.mxu0 0.0
    %818 = vmatprep.subr.mxu0 0.0
    %819 = vmatpush1.msra.mxu0 0.0
    %820 = vmatprep.subr.mxu0 0.0
    %821 = vmatpush1.msra.mxu0 0.0
    %822 = vmatprep.subr.mxu0 0.0
    %823 = vmatpush1.msra.mxu0 0.0
    %824 = vmatprep.subr.mxu0 0.0
    %825 = vmatpush1.msra.mxu0 0.0
    %826 = vmatprep.subr.mxu0 0.0
    %827 = vmatpush1.msra.mxu0 0.0
    %828 = vmatprep.subr.mxu0 0.0
    %829 = vmatpush1.msra.mxu0 0.0
    %830 = vmatprep.subr.mxu0 0.0
    %831 = vmatpush1.msra.mxu0 0.0
    %832 = vmatprep.subr.mxu0 0.0
    %833 = vmatpush1.msra.mxu0 0.0
    %834 = vmatprep.subr.mxu0 0.0
    %835 = vmatpush1.msra.mxu0 0.0
    %836 = vmatprep.subr.mxu0 0.0
    %837 = vmatpush1.msra.mxu0 %v453
    %838 = vmatprep.subr.mxu0 0.0
    %839 = vmatpush1.msra.mxu0 %v452
    %840 = vmatprep.subr.mxu0 0.0
    %841 = vmatpush1.msra.mxu0 %v451
    %842 = vmatprep.subr.mxu0 0.0
    %843 = vmatpush1.msra.mxu0 %v450
    %844 = vmatprep.subr.mxu0 0.0
    %845 = vmatpush2.msra.mxu0 0.0
    %846 = vmatprep.subr.mxu0 0.0
    %847 = vmatpush2.msra.mxu0 0.0
    %848 = vmatprep.subr.mxu0 0.0
    %849 = vmatpush2.msra.mxu0 0.0
    %850 = vmatprep.subr.mxu0 0.0
    %851 = vmatpush2.msra.mxu0 0.0
    %852 = vmatprep.subr.mxu0 0.0
    %853 = vmatpush2.msra.mxu0 0.0
    %854 = vmatprep.subr.mxu0 0.0
    %855 = vmatpush2.msra.mxu0 0.0
    %856 = vmatprep.subr.mxu0 0.0
    %857 = vmatpush2.msra.mxu0 0.0
    %858 = vmatprep.subr.mxu0 0.0
    %859 = vmatpush2.msra.mxu0 0.0
    %860 = vmatprep.subr.mxu0 0.0
    %861 = vmatpush2.msra.mxu0 0.0
    %862 = vmatprep.subr.mxu0 0.0
    %863 = vmatpush2.msra.mxu0 0.0
    %864 = vmatprep.subr.mxu0 0.0
    %865 = vmatpush2.msra.mxu0 0.0
    %866 = vmatprep.subr.mxu0 0.0
    %867 = vmatpush2.msra.mxu0 0.0
    %868 = vmatprep.subr.mxu0 0.0
    %869 = vmatpush2.msra.mxu0 0.0
    %870 = vmatprep.subr.mxu0 0.0
    %871 = vmatpush2.msra.mxu0 0.0
    %872 = vmatprep.subr.mxu0 0.0
    %873 = vmatpush2.msra.mxu0 0.0
    %874 = vmatprep.subr.mxu0 0.0
    %875 = vmatpush2.msra.mxu0 0.0
    %876 = vmatprep.mubr.f32.mxu0 0.0
    %877 = vmatmul.mubr.f32.gmra.mxu0 %v469
    %v878 = vpop.f32.mrf.mxu0
    %v879 = vadd.f32 0.0, %v878
    %v880 = vpop.f32.mrf.mxu0
    %881 = vdwg.mxu0
    %v882 = vadd.f32 %v725, %v879
    %v884 = vlaneseq
    %v885 = vshrl.u32 %v884, 7
    %v886 = vsub.s32 0, %v885
    %v887 = vrot.slane %v461, %v886
    %v889 = vadd.f32 %v882, %v887
    %v890 = vxor.u32 %v889, 2147483648
    %v891 = vmul.f32 %v890, 1.442695
    %v892 = vpow.pop %v891
    %v893 = vadd.f32 %v892, 1.0
    %v894 = vrcp.pop %v893
    %v895 = vmul.f32 1.0, %v894
    %v897 = vlaneseq
    %v898 = vshrl.u32 %v897, 7
    %v899 = vsub.s32 0, %v898
    %v900 = vrot.slane %v463, %v899
    %902 = vmatprep.subr.mxu0 0.0
    %903 = vmatpush1.msra.mxu0 0.0
    %904 = vmatprep.subr.mxu0 0.0
    %905 = vmatpush1.msra.mxu0 0.0
    %906 = vmatprep.subr.mxu0 0.0
    %907 = vmatpush1.msra.mxu0 0.0
    %908 = vmatprep.subr.mxu0 0.0
    %909 = vmatpush1.msra.mxu0 0.0
    %910 = vmatprep.subr.mxu0 0.0
    %911 = vmatpush1.msra.mxu0 0.0
    %912 = vmatprep.subr.mxu0 0.0
    %913 = vmatpush1.msra.mxu0 0.0
    %914 = vmatprep.subr.mxu0 0.0
    %915 = vmatpush1.msra.mxu0 0.0
    %916 = vmatprep.subr.mxu0 0.0
    %917 = vmatpush1.msra.mxu0 0.0
    %918 = vmatprep.subr.mxu0 0.0
    %919 = vmatpush1.msra.mxu0 0.0
    %920 = vmatprep.subr.mxu0 0.0
    %921 = vmatpush1.msra.mxu0 0.0
    %922 = vmatprep.subr.mxu0 0.0
    %923 = vmatpush1.msra.mxu0 0.0
    %924 = vmatprep.subr.mxu0 0.0
    %925 = vmatpush1.msra.mxu0 0.0
    %926 = vmatprep.subr.mxu0 0.0
    %927 = vmatpush1.msra.mxu0 %v458
    %928 = vmatprep.subr.mxu0 0.0
    %929 = vmatpush1.msra.mxu0 %v457
    %930 = vmatprep.subr.mxu0 0.0
    %931 = vmatpush1.msra.mxu0 %v456
    %932 = vmatprep.subr.mxu0 0.0
    %933 = vmatpush1.msra.mxu0 %v455
    %934 = vmatprep.subr.mxu0 0.0
    %935 = vmatpush2.msra.mxu0 0.0
    %936 = vmatprep.subr.mxu0 0.0
    %937 = vmatpush2.msra.mxu0 0.0
    %938 = vmatprep.subr.mxu0 0.0
    %939 = vmatpush2.msra.mxu0 0.0
    %940 = vmatprep.subr.mxu0 0.0
    %941 = vmatpush2.msra.mxu0 0.0
    %942 = vmatprep.subr.mxu0 0.0
    %943 = vmatpush2.msra.mxu0 0.0
    %944 = vmatprep.subr.mxu0 0.0
    %945 = vmatpush2.msra.mxu0 0.0
    %946 = vmatprep.subr.mxu0 0.0
    %947 = vmatpush2.msra.mxu0 0.0
    %948 = vmatprep.subr.mxu0 0.0
    %949 = vmatpush2.msra.mxu0 0.0
    %950 = vmatprep.subr.mxu0 0.0
    %951 = vmatpush2.msra.mxu0 0.0
    %952 = vmatprep.subr.mxu0 0.0
    %953 = vmatpush2.msra.mxu0 0.0
    %954 = vmatprep.subr.mxu0 0.0
    %955 = vmatpush2.msra.mxu0 0.0
    %956 = vmatprep.subr.mxu0 0.0
    %957 = vmatpush2.msra.mxu0 0.0
    %958 = vmatprep.subr.mxu0 0.0
    %959 = vmatpush2.msra.mxu0 0.0
    %960 = vmatprep.subr.mxu0 0.0
    %961 = vmatpush2.msra.mxu0 0.0
    %962 = vmatprep.subr.mxu0 0.0
    %963 = vmatpush2.msra.mxu0 0.0
    %964 = vmatprep.subr.mxu0 0.0
    %965 = vmatpush2.msra.mxu0 0.0
    %966 = vmatprep.mubr.f32.mxu0 0.0
    %967 = vmatmul.mubr.f32.gmra.mxu0 %v469
    %v968 = vpop.f32.mrf.mxu0
    %v969 = vadd.f32 %v900, %v968
    %v970 = vpop.f32.mrf.mxu0
    %971 = vdwg.mxu0
    %v972 = vmul.f32 %v811, %v969
    %v973 = vadd.f32 %v727, %v972
    %v974 = vtanh.pop %v973
    %v975 = vsub.f32 1.0, %v895
    %v976 = vmul.f32 %v975, %v974
    %v977 = vmul.f32 %v895, 0.0
    %v978 = vadd.f32 %v976, %v977
    %979 = vst.msk [vmem:[#allocation4] sm:$0x3] %vm271, %v721
    %s980 = scalar_lea.vmem [#allocation5], 6
    %981 = vst.msk [vmem:[%s980] sm:$0x3] %vm271, %v978
    %s982 = scalar_lea.vmem [#allocation2], 2
    %v983 = vld [vmem:[%s982] sm:$0x3]
    %s984 = scalar_lea.vmem [#allocation2], 10
    %v985 = vld [vmem:[%s984] sm:$0x3]
    %s986 = scalar_lea.vmem [#allocation2], 18
    %v987 = vld [vmem:[%s986] sm:$0x3]
    %v989 = vsel %vm467, %v721, 0
    %991 = vmatprep.subr.mxu0 0.0
    %992 = vmatpush1.msra.mxu0 0.0
    %993 = vmatprep.subr.mxu0 0.0
    %994 = vmatpush1.msra.mxu0 0.0
    %995 = vmatprep.subr.mxu0 0.0
    %996 = vmatpush1.msra.mxu0 0.0
    %997 = vmatprep.subr.mxu0 0.0
    %998 = vmatpush1.msra.mxu0 0.0
    %999 = vmatprep.subr.mxu0 0.0
    %1000 = vmatpush1.msra.mxu0 0.0
    %1001 = vmatprep.subr.mxu0 0.0
    %1002 = vmatpush1.msra.mxu0 0.0
    %1003 = vmatprep.subr.mxu0 0.0
    %1004 = vmatpush1.msra.mxu0 0.0
    %1005 = vmatprep.subr.mxu0 0.0
    %1006 = vmatpush1.msra.mxu0 0.0
    %1007 = vmatprep.subr.mxu0 0.0
    %1008 = vmatpush1.msra.mxu0 0.0
    %1009 = vmatprep.subr.mxu0 0.0
    %1010 = vmatpush1.msra.mxu0 0.0
    %1011 = vmatprep.subr.mxu0 0.0
    %1012 = vmatpush1.msra.mxu0 0.0
    %1013 = vmatprep.subr.mxu0 0.0
    %1014 = vmatpush1.msra.mxu0 0.0
    %1015 = vmatprep.subr.mxu0 0.0
    %1016 = vmatpush1.msra.mxu0 %v429
    %1017 = vmatprep.subr.mxu0 0.0
    %1018 = vmatpush1.msra.mxu0 %v428
    %1019 = vmatprep.subr.mxu0 0.0
    %1020 = vmatpush1.msra.mxu0 %v427
    %1021 = vmatprep.subr.mxu0 0.0
    %1022 = vmatpush1.msra.mxu0 %v426
    %1023 = vmatprep.subr.mxu0 0.0
    %1024 = vmatpush2.msra.mxu0 0.0
    %1025 = vmatprep.subr.mxu0 0.0
    %1026 = vmatpush2.msra.mxu0 0.0
    %1027 = vmatprep.subr.mxu0 0.0
    %1028 = vmatpush2.msra.mxu0 0.0
    %1029 = vmatprep.subr.mxu0 0.0
    %1030 = vmatpush2.msra.mxu0 0.0
    %1031 = vmatprep.subr.mxu0 0.0
    %1032 = vmatpush2.msra.mxu0 0.0
    %1033 = vmatprep.subr.mxu0 0.0
    %1034 = vmatpush2.msra.mxu0 0.0
    %1035 = vmatprep.subr.mxu0 0.0
    %1036 = vmatpush2.msra.mxu0 0.0
    %1037 = vmatprep.subr.mxu0 0.0
    %1038 = vmatpush2.msra.mxu0 0.0
    %1039 = vmatprep.subr.mxu0 0.0
    %1040 = vmatpush2.msra.mxu0 0.0
    %1041 = vmatprep.subr.mxu0 0.0
    %1042 = vmatpush2.msra.mxu0 0.0
    %1043 = vmatprep.subr.mxu0 0.0
    %1044 = vmatpush2.msra.mxu0 0.0
    %1045 = vmatprep.subr.mxu0 0.0
    %1046 = vmatpush2.msra.mxu0 0.0
    %1047 = vmatprep.subr.mxu0 0.0
    %1048 = vmatpush2.msra.mxu0 0.0
    %1049 = vmatprep.subr.mxu0 0.0
    %1050 = vmatpush2.msra.mxu0 0.0
    %1051 = vmatprep.subr.mxu0 0.0
    %1052 = vmatpush2.msra.mxu0 0.0
    %1053 = vmatprep.subr.mxu0 0.0
    %1054 = vmatpush2.msra.mxu0 0.0
    %1055 = vmatprep.mubr.f32.mxu0 0.0
    %1056 = vmatmul.mubr.f32.gmra.mxu0 %v989
    %v1057 = vpop.f32.mrf.mxu0
    %v1058 = vadd.f32 0.0, %v1057
    %v1059 = vpop.f32.mrf.mxu0
    %1060 = vdwg.mxu0
    %v1061 = vadd.f32 %v983, %v1058
    %v1062 = vadd.f32 %v1061, %v546
    %v1063 = vxor.u32 %v1062, 2147483648
    %v1064 = vmul.f32 %v1063, 1.442695
    %v1065 = vpow.pop %v1064
    %v1066 = vadd.f32 %v1065, 1.0
    %v1067 = vrcp.pop %v1066
    %v1068 = vmul.f32 1.0, %v1067
    %1069 = vmatprep.subr.mxu0 0.0
    %1070 = vmatpush1.msra.mxu0 0.0
    %1071 = vmatprep.subr.mxu0 0.0
    %1072 = vmatpush1.msra.mxu0 0.0
    %1073 = vmatprep.subr.mxu0 0.0
    %1074 = vmatpush1.msra.mxu0 0.0
    %1075 = vmatprep.subr.mxu0 0.0
    %1076 = vmatpush1.msra.mxu0 0.0
    %1077 = vmatprep.subr.mxu0 0.0
    %1078 = vmatpush1.msra.mxu0 0.0
    %1079 = vmatprep.subr.mxu0 0.0
    %1080 = vmatpush1.msra.mxu0 0.0
    %1081 = vmatprep.subr.mxu0 0.0
    %1082 = vmatpush1.msra.mxu0 0.0
    %1083 = vmatprep.subr.mxu0 0.0
    %1084 = vmatpush1.msra.mxu0 0.0
    %1085 = vmatprep.subr.mxu0 0.0
    %1086 = vmatpush1.msra.mxu0 0.0
    %1087 = vmatprep.subr.mxu0 0.0
    %1088 = vmatpush1.msra.mxu0 0.0
    %1089 = vmatprep.subr.mxu0 0.0
    %1090 = vmatpush1.msra.mxu0 0.0
    %1091 = vmatprep.subr.mxu0 0.0
    %1092 = vmatpush1.msra.mxu0 0.0
    %1093 = vmatprep.subr.mxu0 0.0
    %1094 = vmatpush1.msra.mxu0 %v434
    %1095 = vmatprep.subr.mxu0 0.0
    %1096 = vmatpush1.msra.mxu0 %v433
    %1097 = vmatprep.subr.mxu0 0.0
    %1098 = vmatpush1.msra.mxu0 %v432
    %1099 = vmatprep.subr.mxu0 0.0
    %1100 = vmatpush1.msra.mxu0 %v431
    %1101 = vmatprep.subr.mxu0 0.0
    %1102 = vmatpush2.msra.mxu0 0.0
    %1103 = vmatprep.subr.mxu0 0.0
    %1104 = vmatpush2.msra.mxu0 0.0
    %1105 = vmatprep.subr.mxu0 0.0
    %1106 = vmatpush2.msra.mxu0 0.0
    %1107 = vmatprep.subr.mxu0 0.0
    %1108 = vmatpush2.msra.mxu0 0.0
    %1109 = vmatprep.subr.mxu0 0.0
    %1110 = vmatpush2.msra.mxu0 0.0
    %1111 = vmatprep.subr.mxu0 0.0
    %1112 = vmatpush2.msra.mxu0 0.0
    %1113 = vmatprep.subr.mxu0 0.0
    %1114 = vmatpush2.msra.mxu0 0.0
    %1115 = vmatprep.subr.mxu0 0.0
    %1116 = vmatpush2.msra.mxu0 0.0
    %1117 = vmatprep.subr.mxu0 0.0
    %1118 = vmatpush2.msra.mxu0 0.0
    %1119 = vmatprep.subr.mxu0 0.0
    %1120 = vmatpush2.msra.mxu0 0.0
    %1121 = vmatprep.subr.mxu0 0.0
    %1122 = vmatpush2.msra.mxu0 0.0
    %1123 = vmatprep.subr.mxu0 0.0
    %1124 = vmatpush2.msra.mxu0 0.0
    %1125 = vmatprep.subr.mxu0 0.0
    %1126 = vmatpush2.msra.mxu0 0.0
    %1127 = vmatprep.subr.mxu0 0.0
    %1128 = vmatpush2.msra.mxu0 0.0
    %1129 = vmatprep.subr.mxu0 0.0
    %1130 = vmatpush2.msra.mxu0 0.0
    %1131 = vmatprep.subr.mxu0 0.0
    %1132 = vmatpush2.msra.mxu0 0.0
    %1133 = vmatprep.mubr.f32.mxu0 0.0
    %1134 = vmatmul.mubr.f32.gmra.mxu0 %v989
    %v1135 = vpop.f32.mrf.mxu0
    %v1136 = vadd.f32 0.0, %v1135
    %v1137 = vpop.f32.mrf.mxu0
    %1138 = vdwg.mxu0
    %v1139 = vadd.f32 %v985, %v1136
    %v1140 = vadd.f32 %v1139, %v630
    %v1141 = vxor.u32 %v1140, 2147483648
    %v1142 = vmul.f32 %v1141, 1.442695
    %v1143 = vpow.pop %v1142
    %v1144 = vadd.f32 %v1143, 1.0
    %v1145 = vrcp.pop %v1144
    %v1146 = vmul.f32 1.0, %v1145
    %1147 = vmatprep.subr.mxu0 0.0
    %1148 = vmatpush1.msra.mxu0 0.0
    %1149 = vmatprep.subr.mxu0 0.0
    %1150 = vmatpush1.msra.mxu0 0.0
    %1151 = vmatprep.subr.mxu0 0.0
    %1152 = vmatpush1.msra.mxu0 0.0
    %1153 = vmatprep.subr.mxu0 0.0
    %1154 = vmatpush1.msra.mxu0 0.0
    %1155 = vmatprep.subr.mxu0 0.0
    %1156 = vmatpush1.msra.mxu0 0.0
    %1157 = vmatprep.subr.mxu0 0.0
    %1158 = vmatpush1.msra.mxu0 0.0
    %1159 = vmatprep.subr.mxu0 0.0
    %1160 = vmatpush1.msra.mxu0 0.0
    %1161 = vmatprep.subr.mxu0 0.0
    %1162 = vmatpush1.msra.mxu0 0.0
    %1163 = vmatprep.subr.mxu0 0.0
    %1164 = vmatpush1.msra.mxu0 0.0
    %1165 = vmatprep.subr.mxu0 0.0
    %1166 = vmatpush1.msra.mxu0 0.0
    %1167 = vmatprep.subr.mxu0 0.0
    %1168 = vmatpush1.msra.mxu0 0.0
    %1169 = vmatprep.subr.mxu0 0.0
    %1170 = vmatpush1.msra.mxu0 0.0
    %1171 = vmatprep.subr.mxu0 0.0
    %1172 = vmatpush1.msra.mxu0 %v439
    %1173 = vmatprep.subr.mxu0 0.0
    %1174 = vmatpush1.msra.mxu0 %v438
    %1175 = vmatprep.subr.mxu0 0.0
    %1176 = vmatpush1.msra.mxu0 %v437
    %1177 = vmatprep.subr.mxu0 0.0
    %1178 = vmatpush1.msra.mxu0 %v436
    %1179 = vmatprep.subr.mxu0 0.0
    %1180 = vmatpush2.msra.mxu0 0.0
    %1181 = vmatprep.subr.mxu0 0.0
    %1182 = vmatpush2.msra.mxu0 0.0
    %1183 = vmatprep.subr.mxu0 0.0
    %1184 = vmatpush2.msra.mxu0 0.0
    %1185 = vmatprep.subr.mxu0 0.0
    %1186 = vmatpush2.msra.mxu0 0.0
    %1187 = vmatprep.subr.mxu0 0.0
    %1188 = vmatpush2.msra.mxu0 0.0
    %1189 = vmatprep.subr.mxu0 0.0
    %1190 = vmatpush2.msra.mxu0 0.0
    %1191 = vmatprep.subr.mxu0 0.0
    %1192 = vmatpush2.msra.mxu0 0.0
    %1193 = vmatprep.subr.mxu0 0.0
    %1194 = vmatpush2.msra.mxu0 0.0
    %1195 = vmatprep.subr.mxu0 0.0
    %1196 = vmatpush2.msra.mxu0 0.0
    %1197 = vmatprep.subr.mxu0 0.0
    %1198 = vmatpush2.msra.mxu0 0.0
    %1199 = vmatprep.subr.mxu0 0.0
    %1200 = vmatpush2.msra.mxu0 0.0
    %1201 = vmatprep.subr.mxu0 0.0
    %1202 = vmatpush2.msra.mxu0 0.0
    %1203 = vmatprep.subr.mxu0 0.0
    %1204 = vmatpush2.msra.mxu0 0.0
    %1205 = vmatprep.subr.mxu0 0.0
    %1206 = vmatpush2.msra.mxu0 0.0
    %1207 = vmatprep.subr.mxu0 0.0
    %1208 = vmatpush2.msra.mxu0 0.0
    %1209 = vmatprep.subr.mxu0 0.0
    %1210 = vmatpush2.msra.mxu0 0.0
    %1211 = vmatprep.mubr.f32.mxu0 0.0
    %1212 = vmatmul.mubr.f32.gmra.mxu0 %v989
    %v1213 = vpop.f32.mrf.mxu0
    %v1214 = vadd.f32 %v643, %v1213
    %v1215 = vpop.f32.mrf.mxu0
    %1216 = vdwg.mxu0
    %v1217 = vmul.f32 %v1068, %v1214
    %v1218 = vadd.f32 %v987, %v1217
    %v1219 = vtanh.pop %v1218
    %v1220 = vsub.f32 1.0, %v1146
    %v1221 = vmul.f32 %v1220, %v1219
    %v1222 = vmul.f32 %v1146, %v721
    %v1223 = vadd.f32 %v1221, %v1222
    %s1224 = scalar_lea.vmem [#allocation3], 4
    %v1225 = vld [vmem:[%s1224] sm:$0x3]
    %s1226 = scalar_lea.vmem [#allocation3], 12
    %v1227 = vld [vmem:[%s1226] sm:$0x3]
    %s1228 = scalar_lea.vmem [#allocation3], 20
    %v1229 = vld [vmem:[%s1228] sm:$0x3]
    %v1231 = vsel %vm467, %v978, 0
    %1233 = vmatprep.subr.mxu0 0.0
    %1234 = vmatpush1.msra.mxu0 0.0
    %1235 = vmatprep.subr.mxu0 0.0
    %1236 = vmatpush1.msra.mxu0 0.0
    %1237 = vmatprep.subr.mxu0 0.0
    %1238 = vmatpush1.msra.mxu0 0.0
    %1239 = vmatprep.subr.mxu0 0.0
    %1240 = vmatpush1.msra.mxu0 0.0
    %1241 = vmatprep.subr.mxu0 0.0
    %1242 = vmatpush1.msra.mxu0 0.0
    %1243 = vmatprep.subr.mxu0 0.0
    %1244 = vmatpush1.msra.mxu0 0.0
    %1245 = vmatprep.subr.mxu0 0.0
    %1246 = vmatpush1.msra.mxu0 0.0
    %1247 = vmatprep.subr.mxu0 0.0
    %1248 = vmatpush1.msra.mxu0 0.0
    %1249 = vmatprep.subr.mxu0 0.0
    %1250 = vmatpush1.msra.mxu0 0.0
    %1251 = vmatprep.subr.mxu0 0.0
    %1252 = vmatpush1.msra.mxu0 0.0
    %1253 = vmatprep.subr.mxu0 0.0
    %1254 = vmatpush1.msra.mxu0 0.0
    %1255 = vmatprep.subr.mxu0 0.0
    %1256 = vmatpush1.msra.mxu0 0.0
    %1257 = vmatprep.subr.mxu0 0.0
    %1258 = vmatpush1.msra.mxu0 %v448
    %1259 = vmatprep.subr.mxu0 0.0
    %1260 = vmatpush1.msra.mxu0 %v447
    %1261 = vmatprep.subr.mxu0 0.0
    %1262 = vmatpush1.msra.mxu0 %v446
    %1263 = vmatprep.subr.mxu0 0.0
    %1264 = vmatpush1.msra.mxu0 %v445
    %1265 = vmatprep.subr.mxu0 0.0
    %1266 = vmatpush2.msra.mxu0 0.0
    %1267 = vmatprep.subr.mxu0 0.0
    %1268 = vmatpush2.msra.mxu0 0.0
    %1269 = vmatprep.subr.mxu0 0.0
    %1270 = vmatpush2.msra.mxu0 0.0
    %1271 = vmatprep.subr.mxu0 0.0
    %1272 = vmatpush2.msra.mxu0 0.0
    %1273 = vmatprep.subr.mxu0 0.0
    %1274 = vmatpush2.msra.mxu0 0.0
    %1275 = vmatprep.subr.mxu0 0.0
    %1276 = vmatpush2.msra.mxu0 0.0
    %1277 = vmatprep.subr.mxu0 0.0
    %1278 = vmatpush2.msra.mxu0 0.0
    %1279 = vmatprep.subr.mxu0 0.0
    %1280 = vmatpush2.msra.mxu0 0.0
    %1281 = vmatprep.subr.mxu0 0.0
    %1282 = vmatpush2.msra.mxu0 0.0
    %1283 = vmatprep.subr.mxu0 0.0
    %1284 = vmatpush2.msra.mxu0 0.0
    %1285 = vmatprep.subr.mxu0 0.0
    %1286 = vmatpush2.msra.mxu0 0.0
    %1287 = vmatprep.subr.mxu0 0.0
    %1288 = vmatpush2.msra.mxu0 0.0
    %1289 = vmatprep.subr.mxu0 0.0
    %1290 = vmatpush2.msra.mxu0 0.0
    %1291 = vmatprep.subr.mxu0 0.0
    %1292 = vmatpush2.msra.mxu0 0.0
    %1293 = vmatprep.subr.mxu0 0.0
    %1294 = vmatpush2.msra.mxu0 0.0
    %1295 = vmatprep.subr.mxu0 0.0
    %1296 = vmatpush2.msra.mxu0 0.0
    %1297 = vmatprep.mubr.f32.mxu0 0.0
    %1298 = vmatmul.mubr.f32.gmra.mxu0 %v1231
    %v1299 = vpop.f32.mrf.mxu0
    %v1300 = vadd.f32 0.0, %v1299
    %v1301 = vpop.f32.mrf.mxu0
    %1302 = vdwg.mxu0
    %v1303 = vadd.f32 %v1225, %v1300
    %v1304 = vadd.f32 %v1303, %v803
    %v1305 = vxor.u32 %v1304, 2147483648
    %v1306 = vmul.f32 %v1305, 1.442695
    %v1307 = vpow.pop %v1306
    %v1308 = vadd.f32 %v1307, 1.0
    %v1309 = vrcp.pop %v1308
    %v1310 = vmul.f32 1.0, %v1309
    %1311 = vmatprep.subr.mxu0 0.0
    %1312 = vmatpush1.msra.mxu0 0.0
    %1313 = vmatprep.subr.mxu0 0.0
    %1314 = vmatpush1.msra.mxu0 0.0
    %1315 = vmatprep.subr.mxu0 0.0
    %1316 = vmatpush1.msra.mxu0 0.0
    %1317 = vmatprep.subr.mxu0 0.0
    %1318 = vmatpush1.msra.mxu0 0.0
    %1319 = vmatprep.subr.mxu0 0.0
    %1320 = vmatpush1.msra.mxu0 0.0
    %1321 = vmatprep.subr.mxu0 0.0
    %1322 = vmatpush1.msra.mxu0 0.0
    %1323 = vmatprep.subr.mxu0 0.0
    %1324 = vmatpush1.msra.mxu0 0.0
    %1325 = vmatprep.subr.mxu0 0.0
    %1326 = vmatpush1.msra.mxu0 0.0
    %1327 = vmatprep.subr.mxu0 0.0
    %1328 = vmatpush1.msra.mxu0 0.0
    %1329 = vmatprep.subr.mxu0 0.0
    %1330 = vmatpush1.msra.mxu0 0.0
    %1331 = vmatprep.subr.mxu0 0.0
    %1332 = vmatpush1.msra.mxu0 0.0
    %1333 = vmatprep.subr.mxu0 0.0
    %1334 = vmatpush1.msra.mxu0 0.0
    %1335 = vmatprep.subr.mxu0 0.0
    %1336 = vmatpush1.msra.mxu0 %v453
    %1337 = vmatprep.subr.mxu0 0.0
    %1338 = vmatpush1.msra.mxu0 %v452
    %1339 = vmatprep.subr.mxu0 0.0
    %1340 = vmatpush1.msra.mxu0 %v451
    %1341 = vmatprep.subr.mxu0 0.0
    %1342 = vmatpush1.msra.mxu0 %v450
    %1343 = vmatprep.subr.mxu0 0.0
    %1344 = vmatpush2.msra.mxu0 0.0
    %1345 = vmatprep.subr.mxu0 0.0
    %1346 = vmatpush2.msra.mxu0 0.0
    %1347 = vmatprep.subr.mxu0 0.0
    %1348 = vmatpush2.msra.mxu0 0.0
    %1349 = vmatprep.subr.mxu0 0.0
    %1350 = vmatpush2.msra.mxu0 0.0
    %1351 = vmatprep.subr.mxu0 0.0
    %1352 = vmatpush2.msra.mxu0 0.0
    %1353 = vmatprep.subr.mxu0 0.0
    %1354 = vmatpush2.msra.mxu0 0.0
    %1355 = vmatprep.subr.mxu0 0.0
    %1356 = vmatpush2.msra.mxu0 0.0
    %1357 = vmatprep.subr.mxu0 0.0
    %1358 = vmatpush2.msra.mxu0 0.0
    %1359 = vmatprep.subr.mxu0 0.0
    %1360 = vmatpush2.msra.mxu0 0.0
    %1361 = vmatprep.subr.mxu0 0.0
    %1362 = vmatpush2.msra.mxu0 0.0
    %1363 = vmatprep.subr.mxu0 0.0
    %1364 = vmatpush2.msra.mxu0 0.0
    %1365 = vmatprep.subr.mxu0 0.0
    %1366 = vmatpush2.msra.mxu0 0.0
    %1367 = vmatprep.subr.mxu0 0.0
    %1368 = vmatpush2.msra.mxu0 0.0
    %1369 = vmatprep.subr.mxu0 0.0
    %1370 = vmatpush2.msra.mxu0 0.0
    %1371 = vmatprep.subr.mxu0 0.0
    %1372 = vmatpush2.msra.mxu0 0.0
    %1373 = vmatprep.subr.mxu0 0.0
    %1374 = vmatpush2.msra.mxu0 0.0
    %1375 = vmatprep.mubr.f32.mxu0 0.0
    %1376 = vmatmul.mubr.f32.gmra.mxu0 %v1231
    %v1377 = vpop.f32.mrf.mxu0
    %v1378 = vadd.f32 0.0, %v1377
    %v1379 = vpop.f32.mrf.mxu0
    %1380 = vdwg.mxu0
    %v1381 = vadd.f32 %v1227, %v1378
    %v1382 = vadd.f32 %v1381, %v887
    %v1383 = vxor.u32 %v1382, 2147483648
    %v1384 = vmul.f32 %v1383, 1.442695
    %v1385 = vpow.pop %v1384
    %v1386 = vadd.f32 %v1385, 1.0
    %v1387 = vrcp.pop %v1386
    %v1388 = vmul.f32 1.0, %v1387
    %1389 = vmatprep.subr.mxu0 0.0
    %1390 = vmatpush1.msra.mxu0 0.0
    %1391 = vmatprep.subr.mxu0 0.0
    %1392 = vmatpush1.msra.mxu0 0.0
    %1393 = vmatprep.subr.mxu0 0.0
    %1394 = vmatpush1.msra.mxu0 0.0
    %1395 = vmatprep.subr.mxu0 0.0
    %1396 = vmatpush1.msra.mxu0 0.0
    %1397 = vmatprep.subr.mxu0 0.0
    %1398 = vmatpush1.msra.mxu0 0.0
    %1399 = vmatprep.subr.mxu0 0.0
    %1400 = vmatpush1.msra.mxu0 0.0
    %1401 = vmatprep.subr.mxu0 0.0
    %1402 = vmatpush1.msra.mxu0 0.0
    %1403 = vmatprep.subr.mxu0 0.0
    %1404 = vmatpush1.msra.mxu0 0.0
    %1405 = vmatprep.subr.mxu0 0.0
    %1406 = vmatpush1.msra.mxu0 0.0
    %1407 = vmatprep.subr.mxu0 0.0
    %1408 = vmatpush1.msra.mxu0 0.0
    %1409 = vmatprep.subr.mxu0 0.0
    %1410 = vmatpush1.msra.mxu0 0.0
    %1411 = vmatprep.subr.mxu0 0.0
    %1412 = vmatpush1.msra.mxu0 0.0
    %1413 = vmatprep.subr.mxu0 0.0
    %1414 = vmatpush1.msra.mxu0 %v458
    %1415 = vmatprep.subr.mxu0 0.0
    %1416 = vmatpush1.msra.mxu0 %v457
    %1417 = vmatprep.subr.mxu0 0.0
    %1418 = vmatpush1.msra.mxu0 %v456
    %1419 = vmatprep.subr.mxu0 0.0
    %1420 = vmatpush1.msra.mxu0 %v455
    %1421 = vmatprep.subr.mxu0 0.0
    %1422 = vmatpush2.msra.mxu0 0.0
    %1423 = vmatprep.subr.mxu0 0.0
    %1424 = vmatpush2.msra.mxu0 0.0
    %1425 = vmatprep.subr.mxu0 0.0
    %1426 = vmatpush2.msra.mxu0 0.0
    %1427 = vmatprep.subr.mxu0 0.0
    %1428 = vmatpush2.msra.mxu0 0.0
    %1429 = vmatprep.subr.mxu0 0.0
    %1430 = vmatpush2.msra.mxu0 0.0
    %1431 = vmatprep.subr.mxu0 0.0
    %1432 = vmatpush2.msra.mxu0 0.0
    %1433 = vmatprep.subr.mxu0 0.0
    %1434 = vmatpush2.msra.mxu0 0.0
    %1435 = vmatprep.subr.mxu0 0.0
    %1436 = vmatpush2.msra.mxu0 0.0
    %1437 = vmatprep.subr.mxu0 0.0
    %1438 = vmatpush2.msra.mxu0 0.0
    %1439 = vmatprep.subr.mxu0 0.0
    %1440 = vmatpush2.msra.mxu0 0.0
    %1441 = vmatprep.subr.mxu0 0.0
    %1442 = vmatpush2.msra.mxu0 0.0
    %1443 = vmatprep.subr.mxu0 0.0
    %1444 = vmatpush2.msra.mxu0 0.0
    %1445 = vmatprep.subr.mxu0 0.0
    %1446 = vmatpush2.msra.mxu0 0.0
    %1447 = vmatprep.subr.mxu0 0.0
    %1448 = vmatpush2.msra.mxu0 0.0
    %1449 = vmatprep.subr.mxu0 0.0
    %1450 = vmatpush2.msra.mxu0 0.0
    %1451 = vmatprep.subr.mxu0 0.0
    %1452 = vmatpush2.msra.mxu0 0.0
    %1453 = vmatprep.mubr.f32.mxu0 0.0
    %1454 = vmatmul.mubr.f32.gmra.mxu0 %v1231
    %v1455 = vpop.f32.mrf.mxu0
    %v1456 = vadd.f32 %v900, %v1455
    %v1457 = vpop.f32.mrf.mxu0
    %1458 = vdwg.mxu0
    %v1459 = vmul.f32 %v1310, %v1456
    %v1460 = vadd.f32 %v1229, %v1459
    %v1461 = vtanh.pop %v1460
    %v1462 = vsub.f32 1.0, %v1388
    %v1463 = vmul.f32 %v1462, %v1461
    %v1464 = vmul.f32 %v1388, %v978
    %v1465 = vadd.f32 %v1463, %v1464
    %s1466 = scalar_lea.vmem [#allocation4], 2
    %1467 = vst.msk [vmem:[%s1466] sm:$0x3] %vm271, %v1223
    %s1468 = scalar_lea.vmem [#allocation5], 4
    %1469 = vst.msk [vmem:[%s1468] sm:$0x3] %vm271, %v1465
    %s1470 = scalar_lea.vmem [#allocation2], 4
    %v1471 = vld [vmem:[%s1470] sm:$0x3]
    %s1472 = scalar_lea.vmem [#allocation2], 12
    %v1473 = vld [vmem:[%s1472] sm:$0x3]
    %s1474 = scalar_lea.vmem [#allocation2], 20
    %v1475 = vld [vmem:[%s1474] sm:$0x3]
    %v1477 = vsel %vm467, %v1223, 0
    %1479 = vmatprep.subr.mxu0 0.0
    %1480 = vmatpush1.msra.mxu0 0.0
    %1481 = vmatprep.subr.mxu0 0.0
    %1482 = vmatpush1.msra.mxu0 0.0
    %1483 = vmatprep.subr.mxu0 0.0
    %1484 = vmatpush1.msra.mxu0 0.0
    %1485 = vmatprep.subr.mxu0 0.0
    %1486 = vmatpush1.msra.mxu0 0.0
    %1487 = vmatprep.subr.mxu0 0.0
    %1488 = vmatpush1.msra.mxu0 0.0
    %1489 = vmatprep.subr.mxu0 0.0
    %1490 = vmatpush1.msra.mxu0 0.0
    %1491 = vmatprep.subr.mxu0 0.0
    %1492 = vmatpush1.msra.mxu0 0.0
    %1493 = vmatprep.subr.mxu0 0.0
    %1494 = vmatpush1.msra.mxu0 0.0
    %1495 = vmatprep.subr.mxu0 0.0
    %1496 = vmatpush1.msra.mxu0 0.0
    %1497 = vmatprep.subr.mxu0 0.0
    %1498 = vmatpush1.msra.mxu0 0.0
    %1499 = vmatprep.subr.mxu0 0.0
    %1500 = vmatpush1.msra.mxu0 0.0
    %1501 = vmatprep.subr.mxu0 0.0
    %1502 = vmatpush1.msra.mxu0 0.0
    %1503 = vmatprep.subr.mxu0 0.0
    %1504 = vmatpush1.msra.mxu0 %v429
    %1505 = vmatprep.subr.mxu0 0.0
    %1506 = vmatpush1.msra.mxu0 %v428
    %1507 = vmatprep.subr.mxu0 0.0
    %1508 = vmatpush1.msra.mxu0 %v427
    %1509 = vmatprep.subr.mxu0 0.0
    %1510 = vmatpush1.msra.mxu0 %v426
    %1511 = vmatprep.subr.mxu0 0.0
    %1512 = vmatpush2.msra.mxu0 0.0
    %1513 = vmatprep.subr.mxu0 0.0
    %1514 = vmatpush2.msra.mxu0 0.0
    %1515 = vmatprep.subr.mxu0 0.0
    %1516 = vmatpush2.msra.mxu0 0.0
    %1517 = vmatprep.subr.mxu0 0.0
    %1518 = vmatpush2.msra.mxu0 0.0
    %1519 = vmatprep.subr.mxu0 0.0
    %1520 = vmatpush2.msra.mxu0 0.0
    %1521 = vmatprep.subr.mxu0 0.0
    %1522 = vmatpush2.msra.mxu0 0.0
    %1523 = vmatprep.subr.mxu0 0.0
    %1524 = vmatpush2.msra.mxu0 0.0
    %1525 = vmatprep.subr.mxu0 0.0
    %1526 = vmatpush2.msra.mxu0 0.0
    %1527 = vmatprep.subr.mxu0 0.0
    %1528 = vmatpush2.msra.mxu0 0.0
    %1529 = vmatprep.subr.mxu0 0.0
    %1530 = vmatpush2.msra.mxu0 0.0
    %1531 = vmatprep.subr.mxu0 0.0
    %1532 = vmatpush2.msra.mxu0 0.0
    %1533 = vmatprep.subr.mxu0 0.0
    %1534 = vmatpush2.msra.mxu0 0.0
    %1535 = vmatprep.subr.mxu0 0.0
    %1536 = vmatpush2.msra.mxu0 0.0
    %1537 = vmatprep.subr.mxu0 0.0
    %1538 = vmatpush2.msra.mxu0 0.0
    %1539 = vmatprep.subr.mxu0 0.0
    %1540 = vmatpush2.msra.mxu0 0.0
    %1541 = vmatprep.subr.mxu0 0.0
    %1542 = vmatpush2.msra.mxu0 0.0
    %1543 = vmatprep.mubr.f32.mxu0 0.0
    %1544 = vmatmul.mubr.f32.gmra.mxu0 %v1477
    %v1545 = vpop.f32.mrf.mxu0
    %v1546 = vadd.f32 0.0, %v1545
    %v1547 = vpop.f32.mrf.mxu0
    %1548 = vdwg.mxu0
    %v1549 = vadd.f32 %v1471, %v1546
    %v1550 = vadd.f32 %v1549, %v546
    %v1551 = vxor.u32 %v1550, 2147483648
    %v1552 = vmul.f32 %v1551, 1.442695
    %v1553 = vpow.pop %v1552
    %v1554 = vadd.f32 %v1553, 1.0
    %v1555 = vrcp.pop %v1554
    %v1556 = vmul.f32 1.0, %v1555
    %1557 = vmatprep.subr.mxu0 0.0
    %1558 = vmatpush1.msra.mxu0 0.0
    %1559 = vmatprep.subr.mxu0 0.0
    %1560 = vmatpush1.msra.mxu0 0.0
    %1561 = vmatprep.subr.mxu0 0.0
    %1562 = vmatpush1.msra.mxu0 0.0
    %1563 = vmatprep.subr.mxu0 0.0
    %1564 = vmatpush1.msra.mxu0 0.0
    %1565 = vmatprep.subr.mxu0 0.0
    %1566 = vmatpush1.msra.mxu0 0.0
    %1567 = vmatprep.subr.mxu0 0.0
    %1568 = vmatpush1.msra.mxu0 0.0
    %1569 = vmatprep.subr.mxu0 0.0
    %1570 = vmatpush1.msra.mxu0 0.0
    %1571 = vmatprep.subr.mxu0 0.0
    %1572 = vmatpush1.msra.mxu0 0.0
    %1573 = vmatprep.subr.mxu0 0.0
    %1574 = vmatpush1.msra.mxu0 0.0
    %1575 = vmatprep.subr.mxu0 0.0
    %1576 = vmatpush1.msra.mxu0 0.0
    %1577 = vmatprep.subr.mxu0 0.0
    %1578 = vmatpush1.msra.mxu0 0.0
    %1579 = vmatprep.subr.mxu0 0.0
    %1580 = vmatpush1.msra.mxu0 0.0
    %1581 = vmatprep.subr.mxu0 0.0
    %1582 = vmatpush1.msra.mxu0 %v434
    %1583 = vmatprep.subr.mxu0 0.0
    %1584 = vmatpush1.msra.mxu0 %v433
    %1585 = vmatprep.subr.mxu0 0.0
    %1586 = vmatpush1.msra.mxu0 %v432
    %1587 = vmatprep.subr.mxu0 0.0
    %1588 = vmatpush1.msra.mxu0 %v431
    %1589 = vmatprep.subr.mxu0 0.0
    %1590 = vmatpush2.msra.mxu0 0.0
    %1591 = vmatprep.subr.mxu0 0.0
    %1592 = vmatpush2.msra.mxu0 0.0
    %1593 = vmatprep.subr.mxu0 0.0
    %1594 = vmatpush2.msra.mxu0 0.0
    %1595 = vmatprep.subr.mxu0 0.0
    %1596 = vmatpush2.msra.mxu0 0.0
    %1597 = vmatprep.subr.mxu0 0.0
    %1598 = vmatpush2.msra.mxu0 0.0
    %1599 = vmatprep.subr.mxu0 0.0
    %1600 = vmatpush2.msra.mxu0 0.0
    %1601 = vmatprep.subr.mxu0 0.0
    %1602 = vmatpush2.msra.mxu0 0.0
    %1603 = vmatprep.subr.mxu0 0.0
    %1604 = vmatpush2.msra.mxu0 0.0
    %1605 = vmatprep.subr.mxu0 0.0
    %1606 = vmatpush2.msra.mxu0 0.0
    %1607 = vmatprep.subr.mxu0 0.0
    %1608 = vmatpush2.msra.mxu0 0.0
    %1609 = vmatprep.subr.mxu0 0.0
    %1610 = vmatpush2.msra.mxu0 0.0
    %1611 = vmatprep.subr.mxu0 0.0
    %1612 = vmatpush2.msra.mxu0 0.0
    %1613 = vmatprep.subr.mxu0 0.0
    %1614 = vmatpush2.msra.mxu0 0.0
    %1615 = vmatprep.subr.mxu0 0.0
    %1616 = vmatpush2.msra.mxu0 0.0
    %1617 = vmatprep.subr.mxu0 0.0
    %1618 = vmatpush2.msra.mxu0 0.0
    %1619 = vmatprep.subr.mxu0 0.0
    %1620 = vmatpush2.msra.mxu0 0.0
    %1621 = vmatprep.mubr.f32.mxu0 0.0
    %1622 = vmatmul.mubr.f32.gmra.mxu0 %v1477
    %v1623 = vpop.f32.mrf.mxu0
    %v1624 = vadd.f32 0.0, %v1623
    %v1625 = vpop.f32.mrf.mxu0
    %1626 = vdwg.mxu0
    %v1627 = vadd.f32 %v1473, %v1624
    %v1628 = vadd.f32 %v1627, %v630
    %v1629 = vxor.u32 %v1628, 2147483648
    %v1630 = vmul.f32 %v1629, 1.442695
    %v1631 = vpow.pop %v1630
    %v1632 = vadd.f32 %v1631, 1.0
    %v1633 = vrcp.pop %v1632
    %v1634 = vmul.f32 1.0, %v1633
    %1635 = vmatprep.subr.mxu0 0.0
    %1636 = vmatpush1.msra.mxu0 0.0
    %1637 = vmatprep.subr.mxu0 0.0
    %1638 = vmatpush1.msra.mxu0 0.0
    %1639 = vmatprep.subr.mxu0 0.0
    %1640 = vmatpush1.msra.mxu0 0.0
    %1641 = vmatprep.subr.mxu0 0.0
    %1642 = vmatpush1.msra.mxu0 0.0
    %1643 = vmatprep.subr.mxu0 0.0
    %1644 = vmatpush1.msra.mxu0 0.0
    %1645 = vmatprep.subr.mxu0 0.0
    %1646 = vmatpush1.msra.mxu0 0.0
    %1647 = vmatprep.subr.mxu0 0.0
    %1648 = vmatpush1.msra.mxu0 0.0
    %1649 = vmatprep.subr.mxu0 0.0
    %1650 = vmatpush1.msra.mxu0 0.0
    %1651 = vmatprep.subr.mxu0 0.0
    %1652 = vmatpush1.msra.mxu0 0.0
    %1653 = vmatprep.subr.mxu0 0.0
    %1654 = vmatpush1.msra.mxu0 0.0
    %1655 = vmatprep.subr.mxu0 0.0
    %1656 = vmatpush1.msra.mxu0 0.0
    %1657 = vmatprep.subr.mxu0 0.0
    %1658 = vmatpush1.msra.mxu0 0.0
    %1659 = vmatprep.subr.mxu0 0.0
    %1660 = vmatpush1.msra.mxu0 %v439
    %1661 = vmatprep.subr.mxu0 0.0
    %1662 = vmatpush1.msra.mxu0 %v438
    %1663 = vmatprep.subr.mxu0 0.0
    %1664 = vmatpush1.msra.mxu0 %v437
    %1665 = vmatprep.subr.mxu0 0.0
    %1666 = vmatpush1.msra.mxu0 %v436
    %1667 = vmatprep.subr.mxu0 0.0
    %1668 = vmatpush2.msra.mxu0 0.0
    %1669 = vmatprep.subr.mxu0 0.0
    %1670 = vmatpush2.msra.mxu0 0.0
    %1671 = vmatprep.subr.mxu0 0.0
    %1672 = vmatpush2.msra.mxu0 0.0
    %1673 = vmatprep.subr.mxu0 0.0
    %1674 = vmatpush2.msra.mxu0 0.0
    %1675 = vmatprep.subr.mxu0 0.0
    %1676 = vmatpush2.msra.mxu0 0.0
    %1677 = vmatprep.subr.mxu0 0.0
    %1678 = vmatpush2.msra.mxu0 0.0
    %1679 = vmatprep.subr.mxu0 0.0
    %1680 = vmatpush2.msra.mxu0 0.0
    %1681 = vmatprep.subr.mxu0 0.0
    %1682 = vmatpush2.msra.mxu0 0.0
    %1683 = vmatprep.subr.mxu0 0.0
    %1684 = vmatpush2.msra.mxu0 0.0
    %1685 = vmatprep.subr.mxu0 0.0
    %1686 = vmatpush2.msra.mxu0 0.0
    %1687 = vmatprep.subr.mxu0 0.0
    %1688 = vmatpush2.msra.mxu0 0.0
    %1689 = vmatprep.subr.mxu0 0.0
    %1690 = vmatpush2.msra.mxu0 0.0
    %1691 = vmatprep.subr.mxu0 0.0
    %1692 = vmatpush2.msra.mxu0 0.0
    %1693 = vmatprep.subr.mxu0 0.0
    %1694 = vmatpush2.msra.mxu0 0.0
    %1695 = vmatprep.subr.mxu0 0.0
    %1696 = vmatpush2.msra.mxu0 0.0
    %1697 = vmatprep.subr.mxu0 0.0
    %1698 = vmatpush2.msra.mxu0 0.0
    %1699 = vmatprep.mubr.f32.mxu0 0.0
    %1700 = vmatmul.mubr.f32.gmra.mxu0 %v1477
    %v1701 = vpop.f32.mrf.mxu0
    %v1702 = vadd.f32 %v643, %v1701
    %v1703 = vpop.f32.mrf.mxu0
    %1704 = vdwg.mxu0
    %v1705 = vmul.f32 %v1556, %v1702
    %v1706 = vadd.f32 %v1475, %v1705
    %v1707 = vtanh.pop %v1706
    %v1708 = vsub.f32 1.0, %v1634
    %v1709 = vmul.f32 %v1708, %v1707
    %v1710 = vmul.f32 %v1634, %v1223
    %v1711 = vadd.f32 %v1709, %v1710
    %s1712 = scalar_lea.vmem [#allocation3], 2
    %v1713 = vld [vmem:[%s1712] sm:$0x3]
    %s1714 = scalar_lea.vmem [#allocation3], 10
    %v1715 = vld [vmem:[%s1714] sm:$0x3]
    %s1716 = scalar_lea.vmem [#allocation3], 18
    %v1717 = vld [vmem:[%s1716] sm:$0x3]
    %v1719 = vsel %vm467, %v1465, 0
    %1721 = vmatprep.subr.mxu0 0.0
    %1722 = vmatpush1.msra.mxu0 0.0
    %1723 = vmatprep.subr.mxu0 0.0
    %1724 = vmatpush1.msra.mxu0 0.0
    %1725 = vmatprep.subr.mxu0 0.0
    %1726 = vmatpush1.msra.mxu0 0.0
    %1727 = vmatprep.subr.mxu0 0.0
    %1728 = vmatpush1.msra.mxu0 0.0
    %1729 = vmatprep.subr.mxu0 0.0
    %1730 = vmatpush1.msra.mxu0 0.0
    %1731 = vmatprep.subr.mxu0 0.0
    %1732 = vmatpush1.msra.mxu0 0.0
    %1733 = vmatprep.subr.mxu0 0.0
    %1734 = vmatpush1.msra.mxu0 0.0
    %1735 = vmatprep.subr.mxu0 0.0
    %1736 = vmatpush1.msra.mxu0 0.0
    %1737 = vmatprep.subr.mxu0 0.0
    %1738 = vmatpush1.msra.mxu0 0.0
    %1739 = vmatprep.subr.mxu0 0.0
    %1740 = vmatpush1.msra.mxu0 0.0
    %1741 = vmatprep.subr.mxu0 0.0
    %1742 = vmatpush1.msra.mxu0 0.0
    %1743 = vmatprep.subr.mxu0 0.0
    %1744 = vmatpush1.msra.mxu0 0.0
    %1745 = vmatprep.subr.mxu0 0.0
    %1746 = vmatpush1.msra.mxu0 %v448
    %1747 = vmatprep.subr.mxu0 0.0
    %1748 = vmatpush1.msra.mxu0 %v447
    %1749 = vmatprep.subr.mxu0 0.0
    %1750 = vmatpush1.msra.mxu0 %v446
    %1751 = vmatprep.subr.mxu0 0.0
    %1752 = vmatpush1.msra.mxu0 %v445
    %1753 = vmatprep.subr.mxu0 0.0
    %1754 = vmatpush2.msra.mxu0 0.0
    %1755 = vmatprep.subr.mxu0 0.0
    %1756 = vmatpush2.msra.mxu0 0.0
    %1757 = vmatprep.subr.mxu0 0.0
    %1758 = vmatpush2.msra.mxu0 0.0
    %1759 = vmatprep.subr.mxu0 0.0
    %1760 = vmatpush2.msra.mxu0 0.0
    %1761 = vmatprep.subr.mxu0 0.0
    %1762 = vmatpush2.msra.mxu0 0.0
    %1763 = vmatprep.subr.mxu0 0.0
    %1764 = vmatpush2.msra.mxu0 0.0
    %1765 = vmatprep.subr.mxu0 0.0
    %1766 = vmatpush2.msra.mxu0 0.0
    %1767 = vmatprep.subr.mxu0 0.0
    %1768 = vmatpush2.msra.mxu0 0.0
    %1769 = vmatprep.subr.mxu0 0.0
    %1770 = vmatpush2.msra.mxu0 0.0
    %1771 = vmatprep.subr.mxu0 0.0
    %1772 = vmatpush2.msra.mxu0 0.0
    %1773 = vmatprep.subr.mxu0 0.0
    %1774 = vmatpush2.msra.mxu0 0.0
    %1775 = vmatprep.subr.mxu0 0.0
    %1776 = vmatpush2.msra.mxu0 0.0
    %1777 = vmatprep.subr.mxu0 0.0
    %1778 = vmatpush2.msra.mxu0 0.0
    %1779 = vmatprep.subr.mxu0 0.0
    %1780 = vmatpush2.msra.mxu0 0.0
    %1781 = vmatprep.subr.mxu0 0.0
    %1782 = vmatpush2.msra.mxu0 0.0
    %1783 = vmatprep.subr.mxu0 0.0
    %1784 = vmatpush2.msra.mxu0 0.0
    %1785 = vmatprep.mubr.f32.mxu0 0.0
    %1786 = vmatmul.mubr.f32.gmra.mxu0 %v1719
    %v1787 = vpop.f32.mrf.mxu0
    %v1788 = vadd.f32 0.0, %v1787
    %v1789 = vpop.f32.mrf.mxu0
    %1790 = vdwg.mxu0
    %v1791 = vadd.f32 %v1713, %v1788
    %v1792 = vadd.f32 %v1791, %v803
    %v1793 = vxor.u32 %v1792, 2147483648
    %v1794 = vmul.f32 %v1793, 1.442695
    %v1795 = vpow.pop %v1794
    %v1796 = vadd.f32 %v1795, 1.0
    %v1797 = vrcp.pop %v1796
    %v1798 = vmul.f32 1.0, %v1797
    %1799 = vmatprep.subr.mxu0 0.0
    %1800 = vmatpush1.msra.mxu0 0.0
    %1801 = vmatprep.subr.mxu0 0.0
    %1802 = vmatpush1.msra.mxu0 0.0
    %1803 = vmatprep.subr.mxu0 0.0
    %1804 = vmatpush1.msra.mxu0 0.0
    %1805 = vmatprep.subr.mxu0 0.0
    %1806 = vmatpush1.msra.mxu0 0.0
    %1807 = vmatprep.subr.mxu0 0.0
    %1808 = vmatpush1.msra.mxu0 0.0
    %1809 = vmatprep.subr.mxu0 0.0
    %1810 = vmatpush1.msra.mxu0 0.0
    %1811 = vmatprep.subr.mxu0 0.0
    %1812 = vmatpush1.msra.mxu0 0.0
    %1813 = vmatprep.subr.mxu0 0.0
    %1814 = vmatpush1.msra.mxu0 0.0
    %1815 = vmatprep.subr.mxu0 0.0
    %1816 = vmatpush1.msra.mxu0 0.0
    %1817 = vmatprep.subr.mxu0 0.0
    %1818 = vmatpush1.msra.mxu0 0.0
    %1819 = vmatprep.subr.mxu0 0.0
    %1820 = vmatpush1.msra.mxu0 0.0
    %1821 = vmatprep.subr.mxu0 0.0
    %1822 = vmatpush1.msra.mxu0 0.0
    %1823 = vmatprep.subr.mxu0 0.0
    %1824 = vmatpush1.msra.mxu0 %v453
    %1825 = vmatprep.subr.mxu0 0.0
    %1826 = vmatpush1.msra.mxu0 %v452
    %1827 = vmatprep.subr.mxu0 0.0
    %1828 = vmatpush1.msra.mxu0 %v451
    %1829 = vmatprep.subr.mxu0 0.0
    %1830 = vmatpush1.msra.mxu0 %v450
    %1831 = vmatprep.subr.mxu0 0.0
    %1832 = vmatpush2.msra.mxu0 0.0
    %1833 = vmatprep.subr.mxu0 0.0
    %1834 = vmatpush2.msra.mxu0 0.0
    %1835 = vmatprep.subr.mxu0 0.0
    %1836 = vmatpush2.msra.mxu0 0.0
    %1837 = vmatprep.subr.mxu0 0.0
    %1838 = vmatpush2.msra.mxu0 0.0
    %1839 = vmatprep.subr.mxu0 0.0
    %1840 = vmatpush2.msra.mxu0 0.0
    %1841 = vmatprep.subr.mxu0 0.0
    %1842 = vmatpush2.msra.mxu0 0.0
    %1843 = vmatprep.subr.mxu0 0.0
    %1844 = vmatpush2.msra.mxu0 0.0
    %1845 = vmatprep.subr.mxu0 0.0
    %1846 = vmatpush2.msra.mxu0 0.0
    %1847 = vmatprep.subr.mxu0 0.0
    %1848 = vmatpush2.msra.mxu0 0.0
    %1849 = vmatprep.subr.mxu0 0.0
    %1850 = vmatpush2.msra.mxu0 0.0
    %1851 = vmatprep.subr.mxu0 0.0
    %1852 = vmatpush2.msra.mxu0 0.0
    %1853 = vmatprep.subr.mxu0 0.0
    %1854 = vmatpush2.msra.mxu0 0.0
    %1855 = vmatprep.subr.mxu0 0.0
    %1856 = vmatpush2.msra.mxu0 0.0
    %1857 = vmatprep.subr.mxu0 0.0
    %1858 = vmatpush2.msra.mxu0 0.0
    %1859 = vmatprep.subr.mxu0 0.0
    %1860 = vmatpush2.msra.mxu0 0.0
    %1861 = vmatprep.subr.mxu0 0.0
    %1862 = vmatpush2.msra.mxu0 0.0
    %1863 = vmatprep.mubr.f32.mxu0 0.0
    %1864 = vmatmul.mubr.f32.gmra.mxu0 %v1719
    %v1865 = vpop.f32.mrf.mxu0
    %v1866 = vadd.f32 0.0, %v1865
    %v1867 = vpop.f32.mrf.mxu0
    %1868 = vdwg.mxu0
    %v1869 = vadd.f32 %v1715, %v1866
    %v1870 = vadd.f32 %v1869, %v887
    %v1871 = vxor.u32 %v1870, 2147483648
    %v1872 = vmul.f32 %v1871, 1.442695
    %v1873 = vpow.pop %v1872
    %v1874 = vadd.f32 %v1873, 1.0
    %v1875 = vrcp.pop %v1874
    %v1876 = vmul.f32 1.0, %v1875
    %1877 = vmatprep.subr.mxu0 0.0
    %1878 = vmatpush1.msra.mxu0 0.0
    %1879 = vmatprep.subr.mxu0 0.0
    %1880 = vmatpush1.msra.mxu0 0.0
    %1881 = vmatprep.subr.mxu0 0.0
    %1882 = vmatpush1.msra.mxu0 0.0
    %1883 = vmatprep.subr.mxu0 0.0
    %1884 = vmatpush1.msra.mxu0 0.0
    %1885 = vmatprep.subr.mxu0 0.0
    %1886 = vmatpush1.msra.mxu0 0.0
    %1887 = vmatprep.subr.mxu0 0.0
    %1888 = vmatpush1.msra.mxu0 0.0
    %1889 = vmatprep.subr.mxu0 0.0
    %1890 = vmatpush1.msra.mxu0 0.0
    %1891 = vmatprep.subr.mxu0 0.0
    %1892 = vmatpush1.msra.mxu0 0.0
    %1893 = vmatprep.subr.mxu0 0.0
    %1894 = vmatpush1.msra.mxu0 0.0
    %1895 = vmatprep.subr.mxu0 0.0
    %1896 = vmatpush1.msra.mxu0 0.0
    %1897 = vmatprep.subr.mxu0 0.0
    %1898 = vmatpush1.msra.mxu0 0.0
    %1899 = vmatprep.subr.mxu0 0.0
    %1900 = vmatpush1.msra.mxu0 0.0
    %1901 = vmatprep.subr.mxu0 0.0
    %1902 = vmatpush1.msra.mxu0 %v458
    %1903 = vmatprep.subr.mxu0 0.0
    %1904 = vmatpush1.msra.mxu0 %v457
    %1905 = vmatprep.subr.mxu0 0.0
    %1906 = vmatpush1.msra.mxu0 %v456
    %1907 = vmatprep.subr.mxu0 0.0
    %1908 = vmatpush1.msra.mxu0 %v455
    %1909 = vmatprep.subr.mxu0 0.0
    %1910 = vmatpush2.msra.mxu0 0.0
    %1911 = vmatprep.subr.mxu0 0.0
    %1912 = vmatpush2.msra.mxu0 0.0
    %1913 = vmatprep.subr.mxu0 0.0
    %1914 = vmatpush2.msra.mxu0 0.0
    %1915 = vmatprep.subr.mxu0 0.0
    %1916 = vmatpush2.msra.mxu0 0.0
    %1917 = vmatprep.subr.mxu0 0.0
    %1918 = vmatpush2.msra.mxu0 0.0
    %1919 = vmatprep.subr.mxu0 0.0
    %1920 = vmatpush2.msra.mxu0 0.0
    %1921 = vmatprep.subr.mxu0 0.0
    %1922 = vmatpush2.msra.mxu0 0.0
    %1923 = vmatprep.subr.mxu0 0.0
    %1924 = vmatpush2.msra.mxu0 0.0
    %1925 = vmatprep.subr.mxu0 0.0
    %1926 = vmatpush2.msra.mxu0 0.0
    %1927 = vmatprep.subr.mxu0 0.0
    %1928 = vmatpush2.msra.mxu0 0.0
    %1929 = vmatprep.subr.mxu0 0.0
    %1930 = vmatpush2.msra.mxu0 0.0
    %1931 = vmatprep.subr.mxu0 0.0
    %1932 = vmatpush2.msra.mxu0 0.0
    %1933 = vmatprep.subr.mxu0 0.0
    %1934 = vmatpush2.msra.mxu0 0.0
    %1935 = vmatprep.subr.mxu0 0.0
    %1936 = vmatpush2.msra.mxu0 0.0
    %1937 = vmatprep.subr.mxu0 0.0
    %1938 = vmatpush2.msra.mxu0 0.0
    %1939 = vmatprep.subr.mxu0 0.0
    %1940 = vmatpush2.msra.mxu0 0.0
    %1941 = vmatprep.mubr.f32.mxu0 0.0
    %1942 = vmatmul.mubr.f32.gmra.mxu0 %v1719
    %v1943 = vpop.f32.mrf.mxu0
    %v1944 = vadd.f32 %v900, %v1943
    %v1945 = vpop.f32.mrf.mxu0
    %1946 = vdwg.mxu0
    %v1947 = vmul.f32 %v1798, %v1944
    %v1948 = vadd.f32 %v1717, %v1947
    %v1949 = vtanh.pop %v1948
    %v1950 = vsub.f32 1.0, %v1876
    %v1951 = vmul.f32 %v1950, %v1949
    %v1952 = vmul.f32 %v1876, %v1465
    %v1953 = vadd.f32 %v1951, %v1952
    %s1954 = scalar_lea.vmem [#allocation4], 4
    %1955 = vst.msk [vmem:[%s1954] sm:$0x3] %vm271, %v1711
    %s1956 = scalar_lea.vmem [#allocation5], 2
    %1957 = vst.msk [vmem:[%s1956] sm:$0x3] %vm271, %v1953
    %s1958 = scalar_lea.vmem [#allocation2], 6
    %v1959 = vld [vmem:[%s1958] sm:$0x3]
    %s1960 = scalar_lea.vmem [#allocation2], 14
    %v1961 = vld [vmem:[%s1960] sm:$0x3]
    %s1962 = scalar_lea.vmem [#allocation2], 22
    %v1963 = vld [vmem:[%s1962] sm:$0x3]
    %v1965 = vsel %vm467, %v1711, 0
    %1967 = vmatprep.subr.mxu0 0.0
    %1968 = vmatpush1.msra.mxu0 0.0
    %1969 = vmatprep.subr.mxu0 0.0
    %1970 = vmatpush1.msra.mxu0 0.0
    %1971 = vmatprep.subr.mxu0 0.0
    %1972 = vmatpush1.msra.mxu0 0.0
    %1973 = vmatprep.subr.mxu0 0.0
    %1974 = vmatpush1.msra.mxu0 0.0
    %1975 = vmatprep.subr.mxu0 0.0
    %1976 = vmatpush1.msra.mxu0 0.0
    %1977 = vmatprep.subr.mxu0 0.0
    %1978 = vmatpush1.msra.mxu0 0.0
    %1979 = vmatprep.subr.mxu0 0.0
    %1980 = vmatpush1.msra.mxu0 0.0
    %1981 = vmatprep.subr.mxu0 0.0
    %1982 = vmatpush1.msra.mxu0 0.0
    %1983 = vmatprep.subr.mxu0 0.0
    %1984 = vmatpush1.msra.mxu0 0.0
    %1985 = vmatprep.subr.mxu0 0.0
    %1986 = vmatpush1.msra.mxu0 0.0
    %1987 = vmatprep.subr.mxu0 0.0
    %1988 = vmatpush1.msra.mxu0 0.0
    %1989 = vmatprep.subr.mxu0 0.0
    %1990 = vmatpush1.msra.mxu0 0.0
    %1991 = vmatprep.subr.mxu0 0.0
    %1992 = vmatpush1.msra.mxu0 %v429
    %1993 = vmatprep.subr.mxu0 0.0
    %1994 = vmatpush1.msra.mxu0 %v428
    %1995 = vmatprep.subr.mxu0 0.0
    %1996 = vmatpush1.msra.mxu0 %v427
    %1997 = vmatprep.subr.mxu0 0.0
    %1998 = vmatpush1.msra.mxu0 %v426
    %1999 = vmatprep.subr.mxu0 0.0
    %2000 = vmatpush2.msra.mxu0 0.0
    %2001 = vmatprep.subr.mxu0 0.0
    %2002 = vmatpush2.msra.mxu0 0.0
    %2003 = vmatprep.subr.mxu0 0.0
    %2004 = vmatpush2.msra.mxu0 0.0
    %2005 = vmatprep.subr.mxu0 0.0
    %2006 = vmatpush2.msra.mxu0 0.0
    %2007 = vmatprep.subr.mxu0 0.0
    %2008 = vmatpush2.msra.mxu0 0.0
    %2009 = vmatprep.subr.mxu0 0.0
    %2010 = vmatpush2.msra.mxu0 0.0
    %2011 = vmatprep.subr.mxu0 0.0
    %2012 = vmatpush2.msra.mxu0 0.0
    %2013 = vmatprep.subr.mxu0 0.0
    %2014 = vmatpush2.msra.mxu0 0.0
    %2015 = vmatprep.subr.mxu0 0.0
    %2016 = vmatpush2.msra.mxu0 0.0
    %2017 = vmatprep.subr.mxu0 0.0
    %2018 = vmatpush2.msra.mxu0 0.0
    %2019 = vmatprep.subr.mxu0 0.0
    %2020 = vmatpush2.msra.mxu0 0.0
    %2021 = vmatprep.subr.mxu0 0.0
    %2022 = vmatpush2.msra.mxu0 0.0
    %2023 = vmatprep.subr.mxu0 0.0
    %2024 = vmatpush2.msra.mxu0 0.0
    %2025 = vmatprep.subr.mxu0 0.0
    %2026 = vmatpush2.msra.mxu0 0.0
    %2027 = vmatprep.subr.mxu0 0.0
    %2028 = vmatpush2.msra.mxu0 0.0
    %2029 = vmatprep.subr.mxu0 0.0
    %2030 = vmatpush2.msra.mxu0 0.0
    %2031 = vmatprep.mubr.f32.mxu0 0.0
    %2032 = vmatmul.mubr.f32.gmra.mxu0 %v1965
    %v2033 = vpop.f32.mrf.mxu0
    %v2034 = vadd.f32 0.0, %v2033
    %v2035 = vpop.f32.mrf.mxu0
    %2036 = vdwg.mxu0
    %v2037 = vadd.f32 %v1959, %v2034
    %v2038 = vadd.f32 %v2037, %v546
    %v2039 = vxor.u32 %v2038, 2147483648
    %v2040 = vmul.f32 %v2039, 1.442695
    %v2041 = vpow.pop %v2040
    %v2042 = vadd.f32 %v2041, 1.0
    %v2043 = vrcp.pop %v2042
    %v2044 = vmul.f32 1.0, %v2043
    %2045 = vmatprep.subr.mxu0 0.0
    %2046 = vmatpush1.msra.mxu0 0.0
    %2047 = vmatprep.subr.mxu0 0.0
    %2048 = vmatpush1.msra.mxu0 0.0
    %2049 = vmatprep.subr.mxu0 0.0
    %2050 = vmatpush1.msra.mxu0 0.0
    %2051 = vmatprep.subr.mxu0 0.0
    %2052 = vmatpush1.msra.mxu0 0.0
    %2053 = vmatprep.subr.mxu0 0.0
    %2054 = vmatpush1.msra.mxu0 0.0
    %2055 = vmatprep.subr.mxu0 0.0
    %2056 = vmatpush1.msra.mxu0 0.0
    %2057 = vmatprep.subr.mxu0 0.0
    %2058 = vmatpush1.msra.mxu0 0.0
    %2059 = vmatprep.subr.mxu0 0.0
    %2060 = vmatpush1.msra.mxu0 0.0
    %2061 = vmatprep.subr.mxu0 0.0
    %2062 = vmatpush1.msra.mxu0 0.0
    %2063 = vmatprep.subr.mxu0 0.0
    %2064 = vmatpush1.msra.mxu0 0.0
    %2065 = vmatprep.subr.mxu0 0.0
    %2066 = vmatpush1.msra.mxu0 0.0
    %2067 = vmatprep.subr.mxu0 0.0
    %2068 = vmatpush1.msra.mxu0 0.0
    %2069 = vmatprep.subr.mxu0 0.0
    %2070 = vmatpush1.msra.mxu0 %v434
    %2071 = vmatprep.subr.mxu0 0.0
    %2072 = vmatpush1.msra.mxu0 %v433
    %2073 = vmatprep.subr.mxu0 0.0
    %2074 = vmatpush1.msra.mxu0 %v432
    %2075 = vmatprep.subr.mxu0 0.0
    %2076 = vmatpush1.msra.mxu0 %v431
    %2077 = vmatprep.subr.mxu0 0.0
    %2078 = vmatpush2.msra.mxu0 0.0
    %2079 = vmatprep.subr.mxu0 0.0
    %2080 = vmatpush2.msra.mxu0 0.0
    %2081 = vmatprep.subr.mxu0 0.0
    %2082 = vmatpush2.msra.mxu0 0.0
    %2083 = vmatprep.subr.mxu0 0.0
    %2084 = vmatpush2.msra.mxu0 0.0
    %2085 = vmatprep.subr.mxu0 0.0
    %2086 = vmatpush2.msra.mxu0 0.0
    %2087 = vmatprep.subr.mxu0 0.0
    %2088 = vmatpush2.msra.mxu0 0.0
    %2089 = vmatprep.subr.mxu0 0.0
    %2090 = vmatpush2.msra.mxu0 0.0
    %2091 = vmatprep.subr.mxu0 0.0
    %2092 = vmatpush2.msra.mxu0 0.0
    %2093 = vmatprep.subr.mxu0 0.0
    %2094 = vmatpush2.msra.mxu0 0.0
    %2095 = vmatprep.subr.mxu0 0.0
    %2096 = vmatpush2.msra.mxu0 0.0
    %2097 = vmatprep.subr.mxu0 0.0
    %2098 = vmatpush2.msra.mxu0 0.0
    %2099 = vmatprep.subr.mxu0 0.0
    %2100 = vmatpush2.msra.mxu0 0.0
    %2101 = vmatprep.subr.mxu0 0.0
    %2102 = vmatpush2.msra.mxu0 0.0
    %2103 = vmatprep.subr.mxu0 0.0
    %2104 = vmatpush2.msra.mxu0 0.0
    %2105 = vmatprep.subr.mxu0 0.0
    %2106 = vmatpush2.msra.mxu0 0.0
    %2107 = vmatprep.subr.mxu0 0.0
    %2108 = vmatpush2.msra.mxu0 0.0
    %2109 = vmatprep.mubr.f32.mxu0 0.0
    %2110 = vmatmul.mubr.f32.gmra.mxu0 %v1965
    %v2111 = vpop.f32.mrf.mxu0
    %v2112 = vadd.f32 0.0, %v2111
    %v2113 = vpop.f32.mrf.mxu0
    %2114 = vdwg.mxu0
    %v2115 = vadd.f32 %v1961, %v2112
    %v2116 = vadd.f32 %v2115, %v630
    %v2117 = vxor.u32 %v2116, 2147483648
    %v2118 = vmul.f32 %v2117, 1.442695
    %v2119 = vpow.pop %v2118
    %v2120 = vadd.f32 %v2119, 1.0
    %v2121 = vrcp.pop %v2120
    %v2122 = vmul.f32 1.0, %v2121
    %2123 = vmatprep.subr.mxu0 0.0
    %2124 = vmatpush1.msra.mxu0 0.0
    %2125 = vmatprep.subr.mxu0 0.0
    %2126 = vmatpush1.msra.mxu0 0.0
    %2127 = vmatprep.subr.mxu0 0.0
    %2128 = vmatpush1.msra.mxu0 0.0
    %2129 = vmatprep.subr.mxu0 0.0
    %2130 = vmatpush1.msra.mxu0 0.0
    %2131 = vmatprep.subr.mxu0 0.0
    %2132 = vmatpush1.msra.mxu0 0.0
    %2133 = vmatprep.subr.mxu0 0.0
    %2134 = vmatpush1.msra.mxu0 0.0
    %2135 = vmatprep.subr.mxu0 0.0
    %2136 = vmatpush1.msra.mxu0 0.0
    %2137 = vmatprep.subr.mxu0 0.0
    %2138 = vmatpush1.msra.mxu0 0.0
    %2139 = vmatprep.subr.mxu0 0.0
    %2140 = vmatpush1.msra.mxu0 0.0
    %2141 = vmatprep.subr.mxu0 0.0
    %2142 = vmatpush1.msra.mxu0 0.0
    %2143 = vmatprep.subr.mxu0 0.0
    %2144 = vmatpush1.msra.mxu0 0.0
    %2145 = vmatprep.subr.mxu0 0.0
    %2146 = vmatpush1.msra.mxu0 0.0
    %2147 = vmatprep.subr.mxu0 0.0
    %2148 = vmatpush1.msra.mxu0 %v439
    %2149 = vmatprep.subr.mxu0 0.0
    %2150 = vmatpush1.msra.mxu0 %v438
    %2151 = vmatprep.subr.mxu0 0.0
    %2152 = vmatpush1.msra.mxu0 %v437
    %2153 = vmatprep.subr.mxu0 0.0
    %2154 = vmatpush1.msra.mxu0 %v436
    %2155 = vmatprep.subr.mxu0 0.0
    %2156 = vmatpush2.msra.mxu0 0.0
    %2157 = vmatprep.subr.mxu0 0.0
    %2158 = vmatpush2.msra.mxu0 0.0
    %2159 = vmatprep.subr.mxu0 0.0
    %2160 = vmatpush2.msra.mxu0 0.0
    %2161 = vmatprep.subr.mxu0 0.0
    %2162 = vmatpush2.msra.mxu0 0.0
    %2163 = vmatprep.subr.mxu0 0.0
    %2164 = vmatpush2.msra.mxu0 0.0
    %2165 = vmatprep.subr.mxu0 0.0
    %2166 = vmatpush2.msra.mxu0 0.0
    %2167 = vmatprep.subr.mxu0 0.0
    %2168 = vmatpush2.msra.mxu0 0.0
    %2169 = vmatprep.subr.mxu0 0.0
    %2170 = vmatpush2.msra.mxu0 0.0
    %2171 = vmatprep.subr.mxu0 0.0
    %2172 = vmatpush2.msra.mxu0 0.0
    %2173 = vmatprep.subr.mxu0 0.0
    %2174 = vmatpush2.msra.mxu0 0.0
    %2175 = vmatprep.subr.mxu0 0.0
    %2176 = vmatpush2.msra.mxu0 0.0
    %2177 = vmatprep.subr.mxu0 0.0
    %2178 = vmatpush2.msra.mxu0 0.0
    %2179 = vmatprep.subr.mxu0 0.0
    %2180 = vmatpush2.msra.mxu0 0.0
    %2181 = vmatprep.subr.mxu0 0.0
    %2182 = vmatpush2.msra.mxu0 0.0
    %2183 = vmatprep.subr.mxu0 0.0
    %2184 = vmatpush2.msra.mxu0 0.0
    %2185 = vmatprep.subr.mxu0 0.0
    %2186 = vmatpush2.msra.mxu0 0.0
    %2187 = vmatprep.mubr.f32.mxu0 0.0
    %2188 = vmatmul.mubr.f32.gmra.mxu0 %v1965
    %v2189 = vpop.f32.mrf.mxu0
    %v2190 = vadd.f32 %v643, %v2189
    %v2191 = vpop.f32.mrf.mxu0
    %2192 = vdwg.mxu0
    %v2193 = vmul.f32 %v2044, %v2190
    %v2194 = vadd.f32 %v1963, %v2193
    %v2195 = vtanh.pop %v2194
    %v2196 = vsub.f32 1.0, %v2122
    %v2197 = vmul.f32 %v2196, %v2195
    %v2198 = vmul.f32 %v2122, %v1711
    %v2199 = vadd.f32 %v2197, %v2198
    %v2200 = vld [vmem:[#allocation3] sm:$0x3]
    %v2201 = vld [vmem:[%s387] sm:$0x3]
    %v2202 = vld [vmem:[%s421] sm:$0x3]
    %v2204 = vsel %vm467, %v1953, 0
    %2206 = vmatprep.subr.mxu0 0.0
    %2207 = vmatpush1.msra.mxu0 0.0
    %2208 = vmatprep.subr.mxu0 0.0
    %2209 = vmatpush1.msra.mxu0 0.0
    %2210 = vmatprep.subr.mxu0 0.0
    %2211 = vmatpush1.msra.mxu0 0.0
    %2212 = vmatprep.subr.mxu0 0.0
    %2213 = vmatpush1.msra.mxu0 0.0
    %2214 = vmatprep.subr.mxu0 0.0
    %2215 = vmatpush1.msra.mxu0 0.0
    %2216 = vmatprep.subr.mxu0 0.0
    %2217 = vmatpush1.msra.mxu0 0.0
    %2218 = vmatprep.subr.mxu0 0.0
    %2219 = vmatpush1.msra.mxu0 0.0
    %2220 = vmatprep.subr.mxu0 0.0
    %2221 = vmatpush1.msra.mxu0 0.0
    %2222 = vmatprep.subr.mxu0 0.0
    %2223 = vmatpush1.msra.mxu0 0.0
    %2224 = vmatprep.subr.mxu0 0.0
    %2225 = vmatpush1.msra.mxu0 0.0
    %2226 = vmatprep.subr.mxu0 0.0
    %2227 = vmatpush1.msra.mxu0 0.0
    %2228 = vmatprep.subr.mxu0 0.0
    %2229 = vmatpush1.msra.mxu0 0.0
    %2230 = vmatprep.subr.mxu0 0.0
    %2231 = vmatpush1.msra.mxu0 %v448
    %2232 = vmatprep.subr.mxu0 0.0
    %2233 = vmatpush1.msra.mxu0 %v447
    %2234 = vmatprep.subr.mxu0 0.0
    %2235 = vmatpush1.msra.mxu0 %v446
    %2236 = vmatprep.subr.mxu0 0.0
    %2237 = vmatpush1.msra.mxu0 %v445
    %2238 = vmatprep.subr.mxu0 0.0
    %2239 = vmatpush2.msra.mxu0 0.0
    %2240 = vmatprep.subr.mxu0 0.0
    %2241 = vmatpush2.msra.mxu0 0.0
    %2242 = vmatprep.subr.mxu0 0.0
    %2243 = vmatpush2.msra.mxu0 0.0
    %2244 = vmatprep.subr.mxu0 0.0
    %2245 = vmatpush2.msra.mxu0 0.0
    %2246 = vmatprep.subr.mxu0 0.0
    %2247 = vmatpush2.msra.mxu0 0.0
    %2248 = vmatprep.subr.mxu0 0.0
    %2249 = vmatpush2.msra.mxu0 0.0
    %2250 = vmatprep.subr.mxu0 0.0
    %2251 = vmatpush2.msra.mxu0 0.0
    %2252 = vmatprep.subr.mxu0 0.0
    %2253 = vmatpush2.msra.mxu0 0.0
    %2254 = vmatprep.subr.mxu0 0.0
    %2255 = vmatpush2.msra.mxu0 0.0
    %2256 = vmatprep.subr.mxu0 0.0
    %2257 = vmatpush2.msra.mxu0 0.0
    %2258 = vmatprep.subr.mxu0 0.0
    %2259 = vmatpush2.msra.mxu0 0.0
    %2260 = vmatprep.subr.mxu0 0.0
    %2261 = vmatpush2.msra.mxu0 0.0
    %2262 = vmatprep.subr.mxu0 0.0
    %2263 = vmatpush2.msra.mxu0 0.0
    %2264 = vmatprep.subr.mxu0 0.0
    %2265 = vmatpush2.msra.mxu0 0.0
    %2266 = vmatprep.subr.mxu0 0.0
    %2267 = vmatpush2.msra.mxu0 0.0
    %2268 = vmatprep.subr.mxu0 0.0
    %2269 = vmatpush2.msra.mxu0 0.0
    %2270 = vmatprep.mubr.f32.mxu0 0.0
    %2271 = vmatmul.mubr.f32.gmra.mxu0 %v2204
    %v2272 = vpop.f32.mrf.mxu0
    %v2273 = vadd.f32 0.0, %v2272
    %v2274 = vpop.f32.mrf.mxu0
    %2275 = vdwg.mxu0
    %v2276 = vadd.f32 %v2200, %v2273
    %v2277 = vadd.f32 %v2276, %v803
    %v2278 = vxor.u32 %v2277, 2147483648
    %v2279 = vmul.f32 %v2278, 1.442695
    %v2280 = vpow.pop %v2279
    %v2281 = vadd.f32 %v2280, 1.0
    %v2282 = vrcp.pop %v2281
    %v2283 = vmul.f32 1.0, %v2282
    %2284 = vmatprep.subr.mxu0 0.0
    %2285 = vmatpush1.msra.mxu0 0.0
    %2286 = vmatprep.subr.mxu0 0.0
    %2287 = vmatpush1.msra.mxu0 0.0
    %2288 = vmatprep.subr.mxu0 0.0
    %2289 = vmatpush1.msra.mxu0 0.0
    %2290 = vmatprep.subr.mxu0 0.0
    %2291 = vmatpush1.msra.mxu0 0.0
    %2292 = vmatprep.subr.mxu0 0.0
    %2293 = vmatpush1.msra.mxu0 0.0
    %2294 = vmatprep.subr.mxu0 0.0
    %2295 = vmatpush1.msra.mxu0 0.0
    %2296 = vmatprep.subr.mxu0 0.0
    %2297 = vmatpush1.msra.mxu0 0.0
    %2298 = vmatprep.subr.mxu0 0.0
    %2299 = vmatpush1.msra.mxu0 0.0
    %2300 = vmatprep.subr.mxu0 0.0
    %2301 = vmatpush1.msra.mxu0 0.0
    %2302 = vmatprep.subr.mxu0 0.0
    %2303 = vmatpush1.msra.mxu0 0.0
    %2304 = vmatprep.subr.mxu0 0.0
    %2305 = vmatpush1.msra.mxu0 0.0
    %2306 = vmatprep.subr.mxu0 0.0
    %2307 = vmatpush1.msra.mxu0 0.0
    %2308 = vmatprep.subr.mxu0 0.0
    %2309 = vmatpush1.msra.mxu0 %v453
    %2310 = vmatprep.subr.mxu0 0.0
    %2311 = vmatpush1.msra.mxu0 %v452
    %2312 = vmatprep.subr.mxu0 0.0
    %2313 = vmatpush1.msra.mxu0 %v451
    %2314 = vmatprep.subr.mxu0 0.0
    %2315 = vmatpush1.msra.mxu0 %v450
    %2316 = vmatprep.subr.mxu0 0.0
    %2317 = vmatpush2.msra.mxu0 0.0
    %2318 = vmatprep.subr.mxu0 0.0
    %2319 = vmatpush2.msra.mxu0 0.0
    %2320 = vmatprep.subr.mxu0 0.0
    %2321 = vmatpush2.msra.mxu0 0.0
    %2322 = vmatprep.subr.mxu0 0.0
    %2323 = vmatpush2.msra.mxu0 0.0
    %2324 = vmatprep.subr.mxu0 0.0
    %2325 = vmatpush2.msra.mxu0 0.0
    %2326 = vmatprep.subr.mxu0 0.0
    %2327 = vmatpush2.msra.mxu0 0.0
    %2328 = vmatprep.subr.mxu0 0.0
    %2329 = vmatpush2.msra.mxu0 0.0
    %2330 = vmatprep.subr.mxu0 0.0
    %2331 = vmatpush2.msra.mxu0 0.0
    %2332 = vmatprep.subr.mxu0 0.0
    %2333 = vmatpush2.msra.mxu0 0.0
    %2334 = vmatprep.subr.mxu0 0.0
    %2335 = vmatpush2.msra.mxu0 0.0
    %2336 = vmatprep.subr.mxu0 0.0
    %2337 = vmatpush2.msra.mxu0 0.0
    %2338 = vmatprep.subr.mxu0 0.0
    %2339 = vmatpush2.msra.mxu0 0.0
    %2340 = vmatprep.subr.mxu0 0.0
    %2341 = vmatpush2.msra.mxu0 0.0
    %2342 = vmatprep.subr.mxu0 0.0
    %2343 = vmatpush2.msra.mxu0 0.0
    %2344 = vmatprep.subr.mxu0 0.0
    %2345 = vmatpush2.msra.mxu0 0.0
    %2346 = vmatprep.subr.mxu0 0.0
    %2347 = vmatpush2.msra.mxu0 0.0
    %2348 = vmatprep.mubr.f32.mxu0 0.0
    %2349 = vmatmul.mubr.f32.gmra.mxu0 %v2204
    %v2350 = vpop.f32.mrf.mxu0
    %v2351 = vadd.f32 0.0, %v2350
    %v2352 = vpop.f32.mrf.mxu0
    %2353 = vdwg.mxu0
    %v2354 = vadd.f32 %v2201, %v2351
    %v2355 = vadd.f32 %v2354, %v887
    %v2356 = vxor.u32 %v2355, 2147483648
    %v2357 = vmul.f32 %v2356, 1.442695
    %v2358 = vpow.pop %v2357
    %v2359 = vadd.f32 %v2358, 1.0
    %v2360 = vrcp.pop %v2359
    %v2361 = vmul.f32 1.0, %v2360
    %2362 = vmatprep.subr.mxu0 0.0
    %2363 = vmatpush1.msra.mxu0 0.0
    %2364 = vmatprep.subr.mxu0 0.0
    %2365 = vmatpush1.msra.mxu0 0.0
    %2366 = vmatprep.subr.mxu0 0.0
    %2367 = vmatpush1.msra.mxu0 0.0
    %2368 = vmatprep.subr.mxu0 0.0
    %2369 = vmatpush1.msra.mxu0 0.0
    %2370 = vmatprep.subr.mxu0 0.0
    %2371 = vmatpush1.msra.mxu0 0.0
    %2372 = vmatprep.subr.mxu0 0.0
    %2373 = vmatpush1.msra.mxu0 0.0
    %2374 = vmatprep.subr.mxu0 0.0
    %2375 = vmatpush1.msra.mxu0 0.0
    %2376 = vmatprep.subr.mxu0 0.0
    %2377 = vmatpush1.msra.mxu0 0.0
    %2378 = vmatprep.subr.mxu0 0.0
    %2379 = vmatpush1.msra.mxu0 0.0
    %2380 = vmatprep.subr.mxu0 0.0
    %2381 = vmatpush1.msra.mxu0 0.0
    %2382 = vmatprep.subr.mxu0 0.0
    %2383 = vmatpush1.msra.mxu0 0.0
    %2384 = vmatprep.subr.mxu0 0.0
    %2385 = vmatpush1.msra.mxu0 0.0
    %2386 = vmatprep.subr.mxu0 0.0
    %2387 = vmatpush1.msra.mxu0 %v458
    %2388 = vmatprep.subr.mxu0 0.0
    %2389 = vmatpush1.msra.mxu0 %v457
    %2390 = vmatprep.subr.mxu0 0.0
    %2391 = vmatpush1.msra.mxu0 %v456
    %2392 = vmatprep.subr.mxu0 0.0
    %2393 = vmatpush1.msra.mxu0 %v455
    %2394 = vmatprep.subr.mxu0 0.0
    %2395 = vmatpush2.msra.mxu0 0.0
    %2396 = vmatprep.subr.mxu0 0.0
    %2397 = vmatpush2.msra.mxu0 0.0
    %2398 = vmatprep.subr.mxu0 0.0
    %2399 = vmatpush2.msra.mxu0 0.0
    %2400 = vmatprep.subr.mxu0 0.0
    %2401 = vmatpush2.msra.mxu0 0.0
    %2402 = vmatprep.subr.mxu0 0.0
    %2403 = vmatpush2.msra.mxu0 0.0
    %2404 = vmatprep.subr.mxu0 0.0
    %2405 = vmatpush2.msra.mxu0 0.0
    %2406 = vmatprep.subr.mxu0 0.0
    %2407 = vmatpush2.msra.mxu0 0.0
    %2408 = vmatprep.subr.mxu0 0.0
    %2409 = vmatpush2.msra.mxu0 0.0
    %2410 = vmatprep.subr.mxu0 0.0
    %2411 = vmatpush2.msra.mxu0 0.0
    %2412 = vmatprep.subr.mxu0 0.0
    %2413 = vmatpush2.msra.mxu0 0.0
    %2414 = vmatprep.subr.mxu0 0.0
    %2415 = vmatpush2.msra.mxu0 0.0
    %2416 = vmatprep.subr.mxu0 0.0
    %2417 = vmatpush2.msra.mxu0 0.0
    %2418 = vmatprep.subr.mxu0 0.0
    %2419 = vmatpush2.msra.mxu0 0.0
    %2420 = vmatprep.subr.mxu0 0.0
    %2421 = vmatpush2.msra.mxu0 0.0
    %2422 = vmatprep.subr.mxu0 0.0
    %2423 = vmatpush2.msra.mxu0 0.0
    %2424 = vmatprep.subr.mxu0 0.0
    %2425 = vmatpush2.msra.mxu0 0.0
    %2426 = vmatprep.mubr.f32.mxu0 0.0
    %2427 = vmatmul.mubr.f32.gmra.mxu0 %v2204
    %v2428 = vpop.f32.mrf.mxu0
    %v2429 = vadd.f32 %v900, %v2428
    %v2430 = vpop.f32.mrf.mxu0
    %2431 = vdwg.mxu0
    %v2432 = vmul.f32 %v2283, %v2429
    %v2433 = vadd.f32 %v2202, %v2432
    %v2434 = vtanh.pop %v2433
    %v2435 = vsub.f32 1.0, %v2361
    %v2436 = vmul.f32 %v2435, %v2434
    %v2437 = vmul.f32 %v2361, %v1953
    %v2438 = vadd.f32 %v2436, %v2437
    %s2439 = scalar_lea.vmem [#allocation4], 6
    %2440 = vst.msk [vmem:[%s2439] sm:$0x3] %vm271, %v2199
    %2441 = vst.msk [vmem:[#allocation5] sm:$0x3] %vm271, %v2438
    %v2442 = vld [vmem:[#allocation4] sm:$0x3]
    %v2443 = vld [vmem:[#allocation4 + $0x2] sm:$0x3]
    %v2444 = vld [vmem:[#allocation4 + $0x4] sm:$0x3]
    %v2445 = vld [vmem:[#allocation4 + $0x6] sm:$0x3]
    %v2446 = vld [vmem:[#allocation5] sm:$0x3]
    %v2447 = vld [vmem:[#allocation5 + $0x2] sm:$0x3]
    %v2448 = vld [vmem:[#allocation5 + $0x4] sm:$0x3]
    %v2449 = vld [vmem:[#allocation5 + $0x6] sm:$0x3]
    %2454 = vrot.lane.b32.xlu0 %v2446, 32
    %v2455 = vpop.permute.xlu0 %2454
    %2456 = vrot.lane.b32.xlu0 %v2447, 32
    %v2457 = vpop.permute.xlu0 %2456
    %2458 = vrot.lane.b32.xlu0 %v2448, 32
    %v2459 = vpop.permute.xlu0 %2458
    %2460 = vrot.lane.b32.xlu0 %v2449, 32
    %v2461 = vpop.permute.xlu0 %2460
    %v2466 = vsel %vm467, %v2442, %v2455
    %v2467 = vsel %vm467, %v2443, %v2457
    %v2468 = vsel %vm467, %v2444, %v2459
    %v2469 = vsel %vm467, %v2445, %v2461
    %v2470 = vld [vmem:[%s10] sm:$0xff]
    %v2471 = vld [vmem:[%s10 + $0x8] sm:$0xff]
    %v2472 = vld [vmem:[%s10 + $0x10] sm:$0xff]
    %v2473 = vld [vmem:[%s10 + $0x18] sm:$0xff]
    %v2474 = vld [vmem:[%s10 + $0x20] sm:$0xff]
    %v2475 = vld [vmem:[%s10 + $0x28] sm:$0xff]
    %v2476 = vld [vmem:[%s10 + $0x30] sm:$0xff]
    %v2477 = vld [vmem:[%s10 + $0x38] sm:$0xff]
    %v2478 = vld [vmem:[%s11] sm:$0x1]
    %v2480 = vlaneseq
    %v2481 = vshrl.u32 %v2480, 7
    %v2482 = vsub.s32 0, %v2481
    %v2483 = vrot.slane %v2478, %v2482
    %v2489 = vcombine.low %v2466, %v2467
    %v2490 = vcombine.low %v2468, %v2469
    %v2492 = vunpack.c.l.s4 1983009808
    %v2493 = vunpack.c.0.s8 %v2492
    %v2494 = vlaneseq
    %v2495 = vshrl.u32 %v2494, 7
    %v2496 = vsub.s32 %v2493, %v2495
    %v2497 = vrot.slane %v2489, %v2496
    %v2499 = vunpack.c.l.s4 1983009808
    %v2500 = vunpack.c.0.s8 %v2499
    %v2501 = vlaneseq
    %v2502 = vshrl.u32 %v2501, 7
    %v2503 = vsub.s32 %v2500, %v2502
    %v2504 = vrot.slane %v2490, %v2503
    %v2505 = vcombine.low %v2497, %v2504
    %v2506 = vsel %vm91, %v2505, 0
    %2508 = vmatprep.subr.mxu0 0.0
    %2509 = vmatpush1.msra.mxu0 0.0
    %2510 = vmatprep.subr.mxu0 0.0
    %2511 = vmatpush1.msra.mxu0 0.0
    %2512 = vmatprep.subr.mxu0 0.0
    %2513 = vmatpush1.msra.mxu0 0.0
    %2514 = vmatprep.subr.mxu0 0.0
    %2515 = vmatpush1.msra.mxu0 0.0
    %2516 = vmatprep.subr.mxu0 0.0
    %2517 = vmatpush1.msra.mxu0 0.0
    %2518 = vmatprep.subr.mxu0 0.0
    %2519 = vmatpush1.msra.mxu0 0.0
    %2520 = vmatprep.subr.mxu0 0.0
    %2521 = vmatpush1.msra.mxu0 0.0
    %2522 = vmatprep.subr.mxu0 0.0
    %2523 = vmatpush1.msra.mxu0 0.0
    %2524 = vmatprep.subr.mxu0 0.0
    %2525 = vmatpush1.msra.mxu0 %v2477
    %2526 = vmatprep.subr.mxu0 0.0
    %2527 = vmatpush1.msra.mxu0 %v2476
    %2528 = vmatprep.subr.mxu0 0.0
    %2529 = vmatpush1.msra.mxu0 %v2475
    %2530 = vmatprep.subr.mxu0 0.0
    %2531 = vmatpush1.msra.mxu0 %v2474
    %2532 = vmatprep.subr.mxu0 0.0
    %2533 = vmatpush1.msra.mxu0 %v2473
    %2534 = vmatprep.subr.mxu0 0.0
    %2535 = vmatpush1.msra.mxu0 %v2472
    %2536 = vmatprep.subr.mxu0 0.0
    %2537 = vmatpush1.msra.mxu0 %v2471
    %2538 = vmatprep.subr.mxu0 0.0
    %2539 = vmatpush1.msra.mxu0 %v2470
    %2540 = vmatprep.subr.mxu0 0.0
    %2541 = vmatpush2.msra.mxu0 0.0
    %2542 = vmatprep.subr.mxu0 0.0
    %2543 = vmatpush2.msra.mxu0 0.0
    %2544 = vmatprep.subr.mxu0 0.0
    %2545 = vmatpush2.msra.mxu0 0.0
    %2546 = vmatprep.subr.mxu0 0.0
    %2547 = vmatpush2.msra.mxu0 0.0
    %2548 = vmatprep.subr.mxu0 0.0
    %2549 = vmatpush2.msra.mxu0 0.0
    %2550 = vmatprep.subr.mxu0 0.0
    %2551 = vmatpush2.msra.mxu0 0.0
    %2552 = vmatprep.subr.mxu0 0.0
    %2553 = vmatpush2.msra.mxu0 0.0
    %2554 = vmatprep.subr.mxu0 0.0
    %2555 = vmatpush2.msra.mxu0 0.0
    %2556 = vmatprep.subr.mxu0 0.0
    %2557 = vmatpush2.msra.mxu0 0.0
    %2558 = vmatprep.subr.mxu0 0.0
    %2559 = vmatpush2.msra.mxu0 0.0
    %2560 = vmatprep.subr.mxu0 0.0
    %2561 = vmatpush2.msra.mxu0 0.0
    %2562 = vmatprep.subr.mxu0 0.0
    %2563 = vmatpush2.msra.mxu0 0.0
    %2564 = vmatprep.subr.mxu0 0.0
    %2565 = vmatpush2.msra.mxu0 0.0
    %2566 = vmatprep.subr.mxu0 0.0
    %2567 = vmatpush2.msra.mxu0 0.0
    %2568 = vmatprep.subr.mxu0 0.0
    %2569 = vmatpush2.msra.mxu0 0.0
    %2570 = vmatprep.subr.mxu0 0.0
    %2571 = vmatpush2.msra.mxu0 0.0
    %2572 = vmatprep.mubr.f32.mxu0 0.0
    %2573 = vmatmul.mubr.f32.gmra.mxu0 %v2506
    %v2574 = vpop.f32.mrf.mxu0
    %v2575 = vadd.f32 %v2483, %v2574
    %v2576 = vpop.f32.mrf.mxu0
    %2577 = vdwg.mxu0
    %v2578 = vtanh.pop %v2575
    %v2580 = vcombine.high %v2578, %v2578
    %v2582 = vunpack.c.l.s4 1983009808
    %v2583 = vunpack.c.0.s8 %v2582
    %v2584 = vlaneseq
    %v2585 = vshrl.u32 %v2584, 7
    %v2586 = vsub.s32 %v2583, %v2585
    %v2587 = vrot.slane %v2578, %v2586
    %v2589 = vunpack.c.l.s4 1983009808
    %v2590 = vunpack.c.0.s8 %v2589
    %v2591 = vlaneseq
    %v2592 = vshrl.u32 %v2591, 7
    %v2593 = vsub.s32 %v2590, %v2592
    %v2594 = vrot.slane %v2580, %v2593
    %v2595 = vcombine.high %v2587, %v2587
    %v2596 = vcombine.high %v2594, %v2594
    %v2601 = vld [vmem:[%s12] sm:$0x1]
    %v2603 = vlaneseq
    %v2604 = vshrl.u32 %v2603, 7
    %v2605 = vsub.s32 0, %v2604
    %v2606 = vrot.slane %v2601, %v2605
    %v2608 = vmul.f32 %v2587, %v2606
    %v2609 = vmul.f32 %v2595, %v2606
    %v2610 = vmul.f32 %v2594, %v2606
    %v2611 = vmul.f32 %v2596, %v2606
    %vm2612 = vcmask 517120
    %v2613 = vsel %vm2612, %v2608, 0.0
    %2614 = vadd.xlane.f32.xlu0 %v2613
    %v2615 = vpop.xlane.xlu0 %2614
    %v2616 = vsel %vm2612, %v2609, 0.0
    %2617 = vadd.xlane.f32.xlu0 %v2616
    %v2618 = vpop.xlane.xlu0 %2617
    %v2619 = vsel %vm2612, %v2610, 0.0
    %2620 = vadd.xlane.f32.xlu0 %v2619
    %v2621 = vpop.xlane.xlu0 %2620
    %v2622 = vsel %vm2612, %v2611, 0.0
    %2623 = vadd.xlane.f32.xlu0 %v2622
    %v2624 = vpop.xlane.xlu0 %2623
    %vm2625 = vcmask 1041408
    %v2626 = vsel %vm2625, %v2615, -inf
    %v2627 = vsel %vm2625, %v2618, -inf
    %v2628 = vsel %vm2625, %v2621, -inf
    %v2629 = vsel %vm2625, %v2624, -inf
    %v2630 = vmax.f32 %v2626, %v2627
    %v2631 = vmax.f32 %v2628, %v2629
    %v2632 = vmax.f32 %v2630, %v2631
    %v2633 = vsub.f32 %v2615, %v2632
    %v2634 = vsub.f32 %v2618, %v2632
    %v2635 = vsub.f32 %v2621, %v2632
    %v2636 = vsub.f32 %v2624, %v2632
    %v2637 = vmul.f32 %v2633, 1.442695
    %v2638 = vpow.pop %v2637
    %v2639 = vmul.f32 %v2634, 1.442695
    %v2640 = vpow.pop %v2639
    %v2641 = vmul.f32 %v2635, 1.442695
    %v2642 = vpow.pop %v2641
    %v2643 = vmul.f32 %v2636, 1.442695
    %v2644 = vpow.pop %v2643
    %v2645 = vsel %vm2625, %v2638, 0.0
    %v2646 = vsel %vm2625, %v2640, 0.0
    %v2647 = vadd.f32 %v2645, %v2646
    %v2648 = vsel %vm2625, %v2642, 0.0
    %v2649 = vadd.f32 %v2647, %v2648
    %v2650 = vsel %vm2625, %v2644, 0.0
    %v2651 = vadd.f32 %v2649, %v2650
    %v2652 = vrcp.pop %v2651
    %v2653 = vmul.f32 %v2638, %v2652
    %v2654 = vmul.f32 %v2640, %v2652
    %v2655 = vmul.f32 %v2642, %v2652
    %v2656 = vmul.f32 %v2644, %v2652
    %v2657 = vld [vmem:[%s1] sm:$0x3]
    %v2658 = vld [vmem:[%s1 + $0x2] sm:$0x3]
    %v2659 = vld [vmem:[%s1 + $0x4] sm:$0x3]
    %v2660 = vld [vmem:[%s1 + $0x6] sm:$0x3]
    %vm2661 = vcmp.ne.f32.partialorder %v2657, 0.0
    %vm2662 = vcmp.ne.f32.partialorder %v2658, 0.0
    %vm2663 = vcmp.ne.f32.partialorder %v2659, 0.0
    %vm2664 = vcmp.ne.f32.partialorder %v2660, 0.0
    %v2665 = vsel %vm2661, %v2653, 0.0
    %v2666 = vsel %vm2662, %v2654, 0.0
    %v2667 = vsel %vm2663, %v2655, 0.0
    %v2668 = vsel %vm2664, %v2656, 0.0
    %vm2669 = vcmask 1024
    %v2670 = vsel %vm2669, %v2665, 0.0
    %v2671 = vsel %vm2669, %v2666, 0.0
    %v2672 = vadd.f32 %v2670, %v2671
    %v2673 = vsel %vm2669, %v2667, 0.0
    %v2674 = vadd.f32 %v2672, %v2673
    %v2675 = vsel %vm2669, %v2668, 0.0
    %v2676 = vadd.f32 %v2674, %v2675
    %v2677 = vadd.f32 %v2676, 0.0001
    %v2678 = vrcp.pop %v2677
    %v2679 = vmul.f32 %v2665, %v2678
    %v2680 = vmul.f32 %v2666, %v2678
    %v2681 = vmul.f32 %v2667, %v2678
    %v2682 = vmul.f32 %v2668, %v2678
    %2684 = vset.pattern.permute.xlu0 0
    %2685 = vperm.xlu0 %2684, %v2679
    %v2686 = vpop.permute.xlu0 %2685
    %2689 = vset.pattern.permute.xlu0 0
    %2690 = vperm.xlu0 %2689, %v2680
    %v2691 = vpop.permute.xlu0 %2690
    %2694 = vset.pattern.permute.xlu0 0
    %2695 = vperm.xlu0 %2694, %v2681
    %v2696 = vpop.permute.xlu0 %2695
    %2699 = vset.pattern.permute.xlu0 0
    %2700 = vperm.xlu0 %2699, %v2682
    %v2701 = vpop.permute.xlu0 %2700
    %v2703 = vmul.f32 %v2466, %v2686
    %v2704 = vmul.f32 %v2467, %v2691
    %v2705 = vmul.f32 %v2468, %v2696
    %v2706 = vmul.f32 %v2469, %v2701
    %v2707 = vsel %vm2612, %v2703, 0.0
    %v2708 = vsel %vm2612, %v2704, 0.0
    %v2709 = vadd.f32 %v2707, %v2708
    %v2710 = vsel %vm2612, %v2705, 0.0
    %v2711 = vadd.f32 %v2709, %v2710
    %v2712 = vsel %vm2612, %v2706, 0.0
    %v2713 = vadd.f32 %v2711, %v2712
    %v2714 = vld [vmem:[%s13] sm:$0xff]
    %v2715 = vld [vmem:[%s13 + $0x8] sm:$0xff]
    %v2716 = vld [vmem:[%s13 + $0x10] sm:$0xff]
    %v2717 = vld [vmem:[%s13 + $0x18] sm:$0xff]
    %v2718 = vld [vmem:[%s13 + $0x20] sm:$0xff]
    %v2719 = vld [vmem:[%s13 + $0x28] sm:$0xff]
    %v2720 = vld [vmem:[%s13 + $0x30] sm:$0xff]
    %v2721 = vld [vmem:[%s13 + $0x38] sm:$0xff]
    %v2722 = vld [vmem:[%s14] sm:$0x1]
    %v2724 = vlaneseq
    %v2725 = vshrl.u32 %v2724, 7
    %v2726 = vsub.s32 0, %v2725
    %v2727 = vrot.slane %v2722, %v2726
    %v2730 = vsel %vm91, %v2713, 0
    %2732 = vmatprep.subr.mxu0 0.0
    %2733 = vmatpush1.msra.mxu0 0.0
    %2734 = vmatprep.subr.mxu0 0.0
    %2735 = vmatpush1.msra.mxu0 0.0
    %2736 = vmatprep.subr.mxu0 0.0
    %2737 = vmatpush1.msra.mxu0 0.0
    %2738 = vmatprep.subr.mxu0 0.0
    %2739 = vmatpush1.msra.mxu0 0.0
    %2740 = vmatprep.subr.mxu0 0.0
    %2741 = vmatpush1.msra.mxu0 0.0
    %2742 = vmatprep.subr.mxu0 0.0
    %2743 = vmatpush1.msra.mxu0 0.0
    %2744 = vmatprep.subr.mxu0 0.0
    %2745 = vmatpush1.msra.mxu0 0.0
    %2746 = vmatprep.subr.mxu0 0.0
    %2747 = vmatpush1.msra.mxu0 0.0
    %2748 = vmatprep.subr.mxu0 0.0
    %2749 = vmatpush1.msra.mxu0 %v2721
    %2750 = vmatprep.subr.mxu0 0.0
    %2751 = vmatpush1.msra.mxu0 %v2720
    %2752 = vmatprep.subr.mxu0 0.0
    %2753 = vmatpush1.msra.mxu0 %v2719
    %2754 = vmatprep.subr.mxu0 0.0
    %2755 = vmatpush1.msra.mxu0 %v2718
    %2756 = vmatprep.subr.mxu0 0.0
    %2757 = vmatpush1.msra.mxu0 %v2717
    %2758 = vmatprep.subr.mxu0 0.0
    %2759 = vmatpush1.msra.mxu0 %v2716
    %2760 = vmatprep.subr.mxu0 0.0
    %2761 = vmatpush1.msra.mxu0 %v2715
    %2762 = vmatprep.subr.mxu0 0.0
    %2763 = vmatpush1.msra.mxu0 %v2714
    %2764 = vmatprep.subr.mxu0 0.0
    %2765 = vmatpush2.msra.mxu0 0.0
    %2766 = vmatprep.subr.mxu0 0.0
    %2767 = vmatpush2.msra.mxu0 0.0
    %2768 = vmatprep.subr.mxu0 0.0
    %2769 = vmatpush2.msra.mxu0 0.0
    %2770 = vmatprep.subr.mxu0 0.0
    %2771 = vmatpush2.msra.mxu0 0.0
    %2772 = vmatprep.subr.mxu0 0.0
    %2773 = vmatpush2.msra.mxu0 0.0
    %2774 = vmatprep.subr.mxu0 0.0
    %2775 = vmatpush2.msra.mxu0 0.0
    %2776 = vmatprep.subr.mxu0 0.0
    %2777 = vmatpush2.msra.mxu0 0.0
    %2778 = vmatprep.subr.mxu0 0.0
    %2779 = vmatpush2.msra.mxu0 0.0
    %2780 = vmatprep.subr.mxu0 0.0
    %2781 = vmatpush2.msra.mxu0 0.0
    %2782 = vmatprep.subr.mxu0 0.0
    %2783 = vmatpush2.msra.mxu0 0.0
    %2784 = vmatprep.subr.mxu0 0.0
    %2785 = vmatpush2.msra.mxu0 0.0
    %2786 = vmatprep.subr.mxu0 0.0
    %2787 = vmatpush2.msra.mxu0 0.0
    %2788 = vmatprep.subr.mxu0 0.0
    %2789 = vmatpush2.msra.mxu0 0.0
    %2790 = vmatprep.subr.mxu0 0.0
    %2791 = vmatpush2.msra.mxu0 0.0
    %2792 = vmatprep.subr.mxu0 0.0
    %2793 = vmatpush2.msra.mxu0 0.0
    %2794 = vmatprep.subr.mxu0 0.0
    %2795 = vmatpush2.msra.mxu0 0.0
    %2796 = vmatprep.mubr.f32.mxu0 0.0
    %2797 = vmatmul.mubr.f32.gmra.mxu0 %v2730
    %v2798 = vpop.f32.mrf.mxu0
    %v2799 = vadd.f32 %v2727, %v2798
    %v2800 = vpop.f32.mrf.mxu0
    %2801 = vdwg.mxu0
    %vm2802 = vcmask 33792
    %2803 = vst.msk [vmem:[#allocation6] sm:$0x3] %vm2802, %v2799
    // Predicated region
    $region62: #{han_forward.3} parent=1 // pred_check
      _
    $region63: #{han_forward.3} parent=1 // pred_check_branch
      %2805 = sbr.rel (0) target = $region65
    $region64: #{han_forward.3} parent=1 // pred_region
      %s2807 = ssub.s32 32, 32
      %2808 = vsyncadd [#allocation7], %s2807
      %s2810 = sshll.u32 [#allocation6], 4
      %s2811 = int_to_ptr.vmem [resolvable:$true] %s2810
      %2813 = dma.vmem_to_hbm [thread:$0]  %s2811, 32, %s15, [#allocation7]
    $region65: #{han_forward.3} parent=1 // pred_fallthru
      _
    // Predicated region
    $region66: #{han_forward.3} parent=1 // pred_check
      _
    $region67: #{han_forward.3} parent=1 // pred_check_branch
      %2815 = sbr.rel (0) target = $region69
    $region68: #{han_forward.3} parent=1 // pred_region
      %2816 = dma.done [#allocation7], 32
    $region69: #{han_forward.3} parent=1 // pred_fallthru
      _
    %2817 = vsyncpa [#allocation7], 1

// kernel: han_forward.2
$region0: #{han_forward.2}
  #allocation0 [shape = 'u32[]', space=smem, size = 0x4, offset = 0x4, fixed_abs, tag = 'smem constant byte address 0x4 - core index']
  #allocation1 [shape = 'u32[144,128]{1,0:T(1,128)}', space=vmem, size = 0x12000, scoped, tag = 'internal scratch']
  #allocation2 [shape = 'f32[3,8,8,32]{3,2,1,0:T(8,128)}', space=vmem, size = 0x18000, scoped, tag = 'scratch operand']
  #allocation3 [shape = 'f32[3,8,8,32]{3,2,1,0:T(8,128)}', space=vmem, size = 0x18000, scoped, tag = 'scratch operand']
  #allocation4 [shape = 'f32[8,8,32]{2,1,0:T(8,128)}', space=vmem, size = 0x8000, scoped, tag = 'scratch operand']
  #allocation5 [shape = 'f32[8,8,32]{2,1,0:T(8,128)}', space=vmem, size = 0x8000, scoped, tag = 'scratch operand']
  %s0 = inlined_call_operand.vmem [shape: f32[8,8,32], index: 0, kind: input, shape index: {}]
  %s1 = inlined_call_operand.vmem [shape: f32[8,8,1], index: 1, kind: input, shape index: {}]
  %s2 = inlined_call_operand.vmem [shape: f32[32,96], index: 2, kind: input, shape index: {}]
  %s3 = inlined_call_operand.vmem [shape: f32[3,32,32], index: 3, kind: input, shape index: {}]
  %s4 = inlined_call_operand.vmem [shape: f32[1,96], index: 4, kind: input, shape index: {}]
  %s5 = inlined_call_operand.vmem [shape: f32[3,1,32], index: 5, kind: input, shape index: {}]
  %s6 = inlined_call_operand.vmem [shape: f32[32,96], index: 6, kind: input, shape index: {}]
  %s7 = inlined_call_operand.vmem [shape: f32[3,32,32], index: 7, kind: input, shape index: {}]
  %s8 = inlined_call_operand.vmem [shape: f32[1,96], index: 8, kind: input, shape index: {}]
  %s9 = inlined_call_operand.vmem [shape: f32[3,1,32], index: 9, kind: input, shape index: {}]
  %s10 = inlined_call_operand.vmem [shape: f32[64,64], index: 10, kind: input, shape index: {}]
  %s11 = inlined_call_operand.vmem [shape: f32[1,64], index: 11, kind: input, shape index: {}]
  %s12 = inlined_call_operand.vmem [shape: f32[1,64], index: 12, kind: input, shape index: {}]
  %s13 = inlined_call_operand.vmem [shape: f32[8,64], index: 13, kind: output, shape index: {}]
  %s14 = sld [smem:[#allocation0]]
  $region62: #{han_forward.2} parent=0
    _
  %s16 = ssub.s32 1, %s14
  %s17 = scalar_select 0, %s16, %s14
  // Predicated region
  $region2: #{han_forward.2} parent=0 // pred_check
    _
  $region3: #{han_forward.2} parent=0 // pred_check_branch
    %19 = sbr.rel (0) target = $region5
  $region4: #{han_forward.2} parent=0 // pred_region
    _
  $region5: #{han_forward.2} parent=0 // pred_fallthru
    _
  // Predicated region
  $region6: #{han_forward.2} parent=0 // pred_check
    _
  $region7: #{han_forward.2} parent=0 // pred_check_branch
    %21 = sbr.rel (0) target = $region9
  $region8: #{han_forward.2} parent=0 // pred_region
    _
  $region9: #{han_forward.2} parent=0 // pred_fallthru
    _
  // Predicated region
  $region10: #{han_forward.2} parent=0 // pred_check
    _
  $region11: #{han_forward.2} parent=0 // pred_check_branch
    %23 = sbr.rel (0) target = $region13
  $region12: #{han_forward.2} parent=0 // pred_region
    _
  $region13: #{han_forward.2} parent=0 // pred_fallthru
    _
  // Predicated region
  $region14: #{han_forward.2} parent=0 // pred_check
    _
  $region15: #{han_forward.2} parent=0 // pred_check_branch
    %25 = sbr.rel (0) target = $region17
  $region16: #{han_forward.2} parent=0 // pred_region
    _
  $region17: #{han_forward.2} parent=0 // pred_fallthru
    _
  // Predicated region
  $region18: #{han_forward.2} parent=0 // pred_check
    _
  $region19: #{han_forward.2} parent=0 // pred_check_branch
    %27 = sbr.rel (0) target = $region21
  $region20: #{han_forward.2} parent=0 // pred_region
    _
  $region21: #{han_forward.2} parent=0 // pred_fallthru
    _
  // Predicated region
  $region22: #{han_forward.2} parent=0 // pred_check
    _
  $region23: #{han_forward.2} parent=0 // pred_check_branch
    %29 = sbr.rel (0) target = $region25
  $region24: #{han_forward.2} parent=0 // pred_region
    _
  $region25: #{han_forward.2} parent=0 // pred_fallthru
    _
  // Predicated region
  $region26: #{han_forward.2} parent=0 // pred_check
    _
  $region27: #{han_forward.2} parent=0 // pred_check_branch
    %31 = sbr.rel (0) target = $region29
  $region28: #{han_forward.2} parent=0 // pred_region
    _
  $region29: #{han_forward.2} parent=0 // pred_fallthru
    _
  // Predicated region
  $region30: #{han_forward.2} parent=0 // pred_check
    _
  $region31: #{han_forward.2} parent=0 // pred_check_branch
    %33 = sbr.rel (0) target = $region33
  $region32: #{han_forward.2} parent=0 // pred_region
    _
  $region33: #{han_forward.2} parent=0 // pred_fallthru
    _
  // Predicated region
  $region34: #{han_forward.2} parent=0 // pred_check
    _
  $region35: #{han_forward.2} parent=0 // pred_check_branch
    %35 = sbr.rel (0) target = $region37
  $region36: #{han_forward.2} parent=0 // pred_region
    _
  $region37: #{han_forward.2} parent=0 // pred_fallthru
    _
  // Predicated region
  $region38: #{han_forward.2} parent=0 // pred_check
    _
  $region39: #{han_forward.2} parent=0 // pred_check_branch
    %37 = sbr.rel (0) target = $region41
  $region40: #{han_forward.2} parent=0 // pred_region
    _
  $region41: #{han_forward.2} parent=0 // pred_fallthru
    _
  // Predicated region
  $region42: #{han_forward.2} parent=0 // pred_check
    _
  $region43: #{han_forward.2} parent=0 // pred_check_branch
    %39 = sbr.rel (0) target = $region45
  $region44: #{han_forward.2} parent=0 // pred_region
    _
  $region45: #{han_forward.2} parent=0 // pred_fallthru
    _
  // Predicated region
  $region46: #{han_forward.2} parent=0 // pred_check
    _
  $region47: #{han_forward.2} parent=0 // pred_check_branch
    %41 = sbr.rel (0) target = $region49
  $region48: #{han_forward.2} parent=0 // pred_region
    _
  $region49: #{han_forward.2} parent=0 // pred_fallthru
    _
  // Predicated region
  $region50: #{han_forward.2} parent=0 // pred_check
    _
  $region51: #{han_forward.2} parent=0 // pred_check_branch
    %43 = sbr.rel (0) target = $region53
  $region52: #{han_forward.2} parent=0 // pred_region
    _
  $region53: #{han_forward.2} parent=0 // pred_fallthru
    _
  %v44 = vld [vmem:[%s0] sm:$0xff]
  %v45 = vld [vmem:[%s0 + $0x8] sm:$0xff]
  %v46 = vld [vmem:[%s0 + $0x10] sm:$0xff]
  %v47 = vld [vmem:[%s0 + $0x18] sm:$0xff]
  %v48 = vld [vmem:[%s0 + $0x20] sm:$0xff]
  %v49 = vld [vmem:[%s0 + $0x28] sm:$0xff]
  %v50 = vld [vmem:[%s0 + $0x30] sm:$0xff]
  %v51 = vld [vmem:[%s0 + $0x38] sm:$0xff]
  %v52 = vld [vmem:[%s2] sm:$0xff]
  %v53 = vld [vmem:[%s2 + $0x8] sm:$0xff]
  %v54 = vld [vmem:[%s2 + $0x10] sm:$0xff]
  %v55 = vld [vmem:[%s2 + $0x18] sm:$0xff]
  %v56 = vld [vmem:[%s4] sm:$0x1]
  %v58 = vlaneseq
  %v59 = vshrl.u32 %v58, 7
  %v60 = vsub.s32 0, %v59
  %v61 = vrot.slane %v56, %v60
  %vm63 = vcmask 261120
  %v65 = vsel %vm63, %v44, 0
  %v68 = vsel %vm63, %v45, 0
  %v71 = vsel %vm63, %v46, 0
  %v74 = vsel %vm63, %v47, 0
  %v77 = vsel %vm63, %v48, 0
  %v80 = vsel %vm63, %v49, 0
  %v83 = vsel %vm63, %v50, 0
  %v86 = vsel %vm63, %v51, 0
  %88 = vmatprep.subr.mxu0 0.0
  %89 = vmatpush1.msra.mxu0 0.0
  %90 = vmatprep.subr.mxu0 0.0
  %91 = vmatpush1.msra.mxu0 0.0
  %92 = vmatprep.subr.mxu0 0.0
  %93 = vmatpush1.msra.mxu0 0.0
  %94 = vmatprep.subr.mxu0 0.0
  %95 = vmatpush1.msra.mxu0 0.0
  %96 = vmatprep.subr.mxu0 0.0
  %97 = vmatpush1.msra.mxu0 0.0
  %98 = vmatprep.subr.mxu0 0.0
  %99 = vmatpush1.msra.mxu0 0.0
  %100 = vmatprep.subr.mxu0 0.0
  %101 = vmatpush1.msra.mxu0 0.0
  %102 = vmatprep.subr.mxu0 0.0
  %103 = vmatpush1.msra.mxu0 0.0
  %104 = vmatprep.subr.mxu0 0.0
  %105 = vmatpush1.msra.mxu0 0.0
  %106 = vmatprep.subr.mxu0 0.0
  %107 = vmatpush1.msra.mxu0 0.0
  %108 = vmatprep.subr.mxu0 0.0
  %109 = vmatpush1.msra.mxu0 0.0
  %110 = vmatprep.subr.mxu0 0.0
  %111 = vmatpush1.msra.mxu0 0.0
  %112 = vmatprep.subr.mxu0 0.0
  %113 = vmatpush1.msra.mxu0 %v55
  %114 = vmatprep.subr.mxu0 0.0
  %115 = vmatpush1.msra.mxu0 %v54
  %116 = vmatprep.subr.mxu0 0.0
  %117 = vmatpush1.msra.mxu0 %v53
  %118 = vmatprep.subr.mxu0 0.0
  %119 = vmatpush1.msra.mxu0 %v52
  %120 = vmatprep.subr.mxu0 0.0
  %121 = vmatpush2.msra.mxu0 0.0
  %122 = vmatprep.subr.mxu0 0.0
  %123 = vmatpush2.msra.mxu0 0.0
  %124 = vmatprep.subr.mxu0 0.0
  %125 = vmatpush2.msra.mxu0 0.0
  %126 = vmatprep.subr.mxu0 0.0
  %127 = vmatpush2.msra.mxu0 0.0
  %128 = vmatprep.subr.mxu0 0.0
  %129 = vmatpush2.msra.mxu0 0.0
  %130 = vmatprep.subr.mxu0 0.0
  %131 = vmatpush2.msra.mxu0 0.0
  %132 = vmatprep.subr.mxu0 0.0
  %133 = vmatpush2.msra.mxu0 0.0
  %134 = vmatprep.subr.mxu0 0.0
  %135 = vmatpush2.msra.mxu0 0.0
  %136 = vmatprep.subr.mxu0 0.0
  %137 = vmatpush2.msra.mxu0 0.0
  %138 = vmatprep.subr.mxu0 0.0
  %139 = vmatpush2.msra.mxu0 0.0
  %140 = vmatprep.subr.mxu0 0.0
  %141 = vmatpush2.msra.mxu0 0.0
  %142 = vmatprep.subr.mxu0 0.0
  %143 = vmatpush2.msra.mxu0 0.0
  %144 = vmatprep.subr.mxu0 0.0
  %145 = vmatpush2.msra.mxu0 0.0
  %146 = vmatprep.subr.mxu0 0.0
  %147 = vmatpush2.msra.mxu0 0.0
  %148 = vmatprep.subr.mxu0 0.0
  %149 = vmatpush2.msra.mxu0 0.0
  %150 = vmatprep.subr.mxu0 0.0
  %151 = vmatpush2.msra.mxu0 0.0
  %152 = vmatprep.mubr.f32.mxu0 0.0
  %153 = vmatmul.mubr.f32.gmra.mxu0 %v65
  %v154 = vpop.f32.mrf.mxu0
  %v155 = vadd.f32 %v61, %v154
  %v156 = vpop.f32.mrf.mxu0
  %157 = vmatprep.mubr.f32.mxu0 0.0
  %158 = vmatmul.mubr.f32.gmra.mxu0 %v68
  %v159 = vpop.f32.mrf.mxu0
  %v160 = vadd.f32 %v61, %v159
  %v161 = vpop.f32.mrf.mxu0
  %162 = vmatprep.mubr.f32.mxu0 0.0
  %163 = vmatmul.mubr.f32.gmra.mxu0 %v71
  %v164 = vpop.f32.mrf.mxu0
  %v165 = vadd.f32 %v61, %v164
  %v166 = vpop.f32.mrf.mxu0
  %167 = vmatprep.mubr.f32.mxu0 0.0
  %168 = vmatmul.mubr.f32.gmra.mxu0 %v74
  %v169 = vpop.f32.mrf.mxu0
  %v170 = vadd.f32 %v61, %v169
  %v171 = vpop.f32.mrf.mxu0
  %172 = vmatprep.mubr.f32.mxu0 0.0
  %173 = vmatmul.mubr.f32.gmra.mxu0 %v77
  %v174 = vpop.f32.mrf.mxu0
  %v175 = vadd.f32 %v61, %v174
  %v176 = vpop.f32.mrf.mxu0
  %177 = vmatprep.mubr.f32.mxu0 0.0
  %178 = vmatmul.mubr.f32.gmra.mxu0 %v80
  %v179 = vpop.f32.mrf.mxu0
  %v180 = vadd.f32 %v61, %v179
  %v181 = vpop.f32.mrf.mxu0
  %182 = vmatprep.mubr.f32.mxu0 0.0
  %183 = vmatmul.mubr.f32.gmra.mxu0 %v83
  %v184 = vpop.f32.mrf.mxu0
  %v185 = vadd.f32 %v61, %v184
  %v186 = vpop.f32.mrf.mxu0
  %187 = vmatprep.mubr.f32.mxu0 0.0
  %188 = vmatmul.mubr.f32.gmra.mxu0 %v86
  %v189 = vpop.f32.mrf.mxu0
  %v190 = vadd.f32 %v61, %v189
  %v191 = vpop.f32.mrf.mxu0
  %192 = vdwg.mxu0
  %v193 = vld [vmem:[%s6] sm:$0xff]
  %v194 = vld [vmem:[%s6 + $0x8] sm:$0xff]
  %v195 = vld [vmem:[%s6 + $0x10] sm:$0xff]
  %v196 = vld [vmem:[%s6 + $0x18] sm:$0xff]
  %v197 = vld [vmem:[%s8] sm:$0x1]
  %v199 = vlaneseq
  %v200 = vshrl.u32 %v199, 7
  %v201 = vsub.s32 0, %v200
  %v202 = vrot.slane %v197, %v201
  %204 = vmatprep.subr.mxu0 0.0
  %205 = vmatpush1.msra.mxu0 0.0
  %206 = vmatprep.subr.mxu0 0.0
  %207 = vmatpush1.msra.mxu0 0.0
  %208 = vmatprep.subr.mxu0 0.0
  %209 = vmatpush1.msra.mxu0 0.0
  %210 = vmatprep.subr.mxu0 0.0
  %211 = vmatpush1.msra.mxu0 0.0
  %212 = vmatprep.subr.mxu0 0.0
  %213 = vmatpush1.msra.mxu0 0.0
  %214 = vmatprep.subr.mxu0 0.0
  %215 = vmatpush1.msra.mxu0 0.0
  %216 = vmatprep.subr.mxu0 0.0
  %217 = vmatpush1.msra.mxu0 0.0
  %218 = vmatprep.subr.mxu0 0.0
  %219 = vmatpush1.msra.mxu0 0.0
  %220 = vmatprep.subr.mxu0 0.0
  %221 = vmatpush1.msra.mxu0 0.0
  %222 = vmatprep.subr.mxu0 0.0
  %223 = vmatpush1.msra.mxu0 0.0
  %224 = vmatprep.subr.mxu0 0.0
  %225 = vmatpush1.msra.mxu0 0.0
  %226 = vmatprep.subr.mxu0 0.0
  %227 = vmatpush1.msra.mxu0 0.0
  %228 = vmatprep.subr.mxu0 0.0
  %229 = vmatpush1.msra.mxu0 %v196
  %230 = vmatprep.subr.mxu0 0.0
  %231 = vmatpush1.msra.mxu0 %v195
  %232 = vmatprep.subr.mxu0 0.0
  %233 = vmatpush1.msra.mxu0 %v194
  %234 = vmatprep.subr.mxu0 0.0
  %235 = vmatpush1.msra.mxu0 %v193
  %236 = vmatprep.subr.mxu0 0.0
  %237 = vmatpush2.msra.mxu0 0.0
  %238 = vmatprep.subr.mxu0 0.0
  %239 = vmatpush2.msra.mxu0 0.0
  %240 = vmatprep.subr.mxu0 0.0
  %241 = vmatpush2.msra.mxu0 0.0
  %242 = vmatprep.subr.mxu0 0.0
  %243 = vmatpush2.msra.mxu0 0.0
  %244 = vmatprep.subr.mxu0 0.0
  %245 = vmatpush2.msra.mxu0 0.0
  %246 = vmatprep.subr.mxu0 0.0
  %247 = vmatpush2.msra.mxu0 0.0
  %248 = vmatprep.subr.mxu0 0.0
  %249 = vmatpush2.msra.mxu0 0.0
  %250 = vmatprep.subr.mxu0 0.0
  %251 = vmatpush2.msra.mxu0 0.0
  %252 = vmatprep.subr.mxu0 0.0
  %253 = vmatpush2.msra.mxu0 0.0
  %254 = vmatprep.subr.mxu0 0.0
  %255 = vmatpush2.msra.mxu0 0.0
  %256 = vmatprep.subr.mxu0 0.0
  %257 = vmatpush2.msra.mxu0 0.0
  %258 = vmatprep.subr.mxu0 0.0
  %259 = vmatpush2.msra.mxu0 0.0
  %260 = vmatprep.subr.mxu0 0.0
  %261 = vmatpush2.msra.mxu0 0.0
  %262 = vmatprep.subr.mxu0 0.0
  %263 = vmatpush2.msra.mxu0 0.0
  %264 = vmatprep.subr.mxu0 0.0
  %265 = vmatpush2.msra.mxu0 0.0
  %266 = vmatprep.subr.mxu0 0.0
  %267 = vmatpush2.msra.mxu0 0.0
  %268 = vmatprep.mubr.f32.mxu0 0.0
  %269 = vmatmul.mubr.f32.gmra.mxu0 %v65
  %v270 = vpop.f32.mrf.mxu0
  %v271 = vadd.f32 %v202, %v270
  %v272 = vpop.f32.mrf.mxu0
  %273 = vmatprep.mubr.f32.mxu0 0.0
  %274 = vmatmul.mubr.f32.gmra.mxu0 %v68
  %v275 = vpop.f32.mrf.mxu0
  %v276 = vadd.f32 %v202, %v275
  %v277 = vpop.f32.mrf.mxu0
  %278 = vmatprep.mubr.f32.mxu0 0.0
  %279 = vmatmul.mubr.f32.gmra.mxu0 %v71
  %v280 = vpop.f32.mrf.mxu0
  %v281 = vadd.f32 %v202, %v280
  %v282 = vpop.f32.mrf.mxu0
  %283 = vmatprep.mubr.f32.mxu0 0.0
  %284 = vmatmul.mubr.f32.gmra.mxu0 %v74
  %v285 = vpop.f32.mrf.mxu0
  %v286 = vadd.f32 %v202, %v285
  %v287 = vpop.f32.mrf.mxu0
  %288 = vmatprep.mubr.f32.mxu0 0.0
  %289 = vmatmul.mubr.f32.gmra.mxu0 %v77
  %v290 = vpop.f32.mrf.mxu0
  %v291 = vadd.f32 %v202, %v290
  %v292 = vpop.f32.mrf.mxu0
  %293 = vmatprep.mubr.f32.mxu0 0.0
  %294 = vmatmul.mubr.f32.gmra.mxu0 %v80
  %v295 = vpop.f32.mrf.mxu0
  %v296 = vadd.f32 %v202, %v295
  %v297 = vpop.f32.mrf.mxu0
  %298 = vmatprep.mubr.f32.mxu0 0.0
  %299 = vmatmul.mubr.f32.gmra.mxu0 %v83
  %v300 = vpop.f32.mrf.mxu0
  %v301 = vadd.f32 %v202, %v300
  %v302 = vpop.f32.mrf.mxu0
  %303 = vmatprep.mubr.f32.mxu0 0.0
  %304 = vmatmul.mubr.f32.gmra.mxu0 %v86
  %v305 = vpop.f32.mrf.mxu0
  %v306 = vadd.f32 %v202, %v305
  %v307 = vpop.f32.mrf.mxu0
  %308 = vdwg.mxu0
  %309 = vst.msk [vmem:[#allocation2] sm:$0xff] %vm63, %v155
  %310 = vst.msk [vmem:[#allocation2 + $0x8] sm:$0xff] %vm63, %v160
  %311 = vst.msk [vmem:[#allocation2 + $0x10] sm:$0xff] %vm63, %v165
  %312 = vst.msk [vmem:[#allocation2 + $0x18] sm:$0xff] %vm63, %v170
  %313 = vst.msk [vmem:[#allocation2 + $0x20] sm:$0xff] %vm63, %v175
  %314 = vst.msk [vmem:[#allocation2 + $0x28] sm:$0xff] %vm63, %v180
  %315 = vst.msk [vmem:[#allocation2 + $0x30] sm:$0xff] %vm63, %v185
  %316 = vst.msk [vmem:[#allocation2 + $0x38] sm:$0xff] %vm63, %v190
  %317 = vst.msk [vmem:[#allocation3] sm:$0xff] %vm63, %v271
  %318 = vst.msk [vmem:[#allocation3 + $0x8] sm:$0xff] %vm63, %v276
  %319 = vst.msk [vmem:[#allocation3 + $0x10] sm:$0xff] %vm63, %v281
  %320 = vst.msk [vmem:[#allocation3 + $0x18] sm:$0xff] %vm63, %v286
  %321 = vst.msk [vmem:[#allocation3 + $0x20] sm:$0xff] %vm63, %v291
  %322 = vst.msk [vmem:[#allocation3 + $0x28] sm:$0xff] %vm63, %v296
  %323 = vst.msk [vmem:[#allocation3 + $0x30] sm:$0xff] %vm63, %v301
  %324 = vst.msk [vmem:[#allocation3 + $0x38] sm:$0xff] %vm63, %v306
  %333 = vrot.lane.b32.xlu0 %v155, 96
  %v334 = vpop.permute.xlu0 %333
  %335 = vrot.lane.b32.xlu0 %v160, 96
  %v336 = vpop.permute.xlu0 %335
  %337 = vrot.lane.b32.xlu0 %v165, 96
  %v338 = vpop.permute.xlu0 %337
  %339 = vrot.lane.b32.xlu0 %v170, 96
  %v340 = vpop.permute.xlu0 %339
  %341 = vrot.lane.b32.xlu0 %v175, 96
  %v342 = vpop.permute.xlu0 %341
  %343 = vrot.lane.b32.xlu0 %v180, 96
  %v344 = vpop.permute.xlu0 %343
  %345 = vrot.lane.b32.xlu0 %v185, 96
  %v346 = vpop.permute.xlu0 %345
  %347 = vrot.lane.b32.xlu0 %v190, 96
  %v348 = vpop.permute.xlu0 %347
  %s357 = scalar_lea.vmem [#allocation2], 64
  %358 = vst.msk [vmem:[%s357] sm:$0xff] %vm63, %v334
  %359 = vst.msk [vmem:[%s357 + $0x8] sm:$0xff] %vm63, %v336
  %360 = vst.msk [vmem:[%s357 + $0x10] sm:$0xff] %vm63, %v338
  %361 = vst.msk [vmem:[%s357 + $0x18] sm:$0xff] %vm63, %v340
  %362 = vst.msk [vmem:[%s357 + $0x20] sm:$0xff] %vm63, %v342
  %363 = vst.msk [vmem:[%s357 + $0x28] sm:$0xff] %vm63, %v344
  %364 = vst.msk [vmem:[%s357 + $0x30] sm:$0xff] %vm63, %v346
  %365 = vst.msk [vmem:[%s357 + $0x38] sm:$0xff] %vm63, %v348
  %374 = vrot.lane.b32.xlu0 %v271, 96
  %v375 = vpop.permute.xlu0 %374
  %376 = vrot.lane.b32.xlu0 %v276, 96
  %v377 = vpop.permute.xlu0 %376
  %378 = vrot.lane.b32.xlu0 %v281, 96
  %v379 = vpop.permute.xlu0 %378
  %380 = vrot.lane.b32.xlu0 %v286, 96
  %v381 = vpop.permute.xlu0 %380
  %382 = vrot.lane.b32.xlu0 %v291, 96
  %v383 = vpop.permute.xlu0 %382
  %384 = vrot.lane.b32.xlu0 %v296, 96
  %v385 = vpop.permute.xlu0 %384
  %386 = vrot.lane.b32.xlu0 %v301, 96
  %v387 = vpop.permute.xlu0 %386
  %388 = vrot.lane.b32.xlu0 %v306, 96
  %v389 = vpop.permute.xlu0 %388
  %s398 = scalar_lea.vmem [#allocation3], 64
  %399 = vst.msk [vmem:[%s398] sm:$0xff] %vm63, %v375
  %400 = vst.msk [vmem:[%s398 + $0x8] sm:$0xff] %vm63, %v377
  %401 = vst.msk [vmem:[%s398 + $0x10] sm:$0xff] %vm63, %v379
  %402 = vst.msk [vmem:[%s398 + $0x18] sm:$0xff] %vm63, %v381
  %403 = vst.msk [vmem:[%s398 + $0x20] sm:$0xff] %vm63, %v383
  %404 = vst.msk [vmem:[%s398 + $0x28] sm:$0xff] %vm63, %v385
  %405 = vst.msk [vmem:[%s398 + $0x30] sm:$0xff] %vm63, %v387
  %406 = vst.msk [vmem:[%s398 + $0x38] sm:$0xff] %vm63, %v389
  %407 = vrot.lane.b32.xlu0 %v155, 64
  %v408 = vpop.permute.xlu0 %407
  %409 = vrot.lane.b32.xlu0 %v160, 64
  %v410 = vpop.permute.xlu0 %409
  %411 = vrot.lane.b32.xlu0 %v165, 64
  %v412 = vpop.permute.xlu0 %411
  %413 = vrot.lane.b32.xlu0 %v170, 64
  %v414 = vpop.permute.xlu0 %413
  %415 = vrot.lane.b32.xlu0 %v175, 64
  %v416 = vpop.permute.xlu0 %415
  %417 = vrot.lane.b32.xlu0 %v180, 64
  %v418 = vpop.permute.xlu0 %417
  %419 = vrot.lane.b32.xlu0 %v185, 64
  %v420 = vpop.permute.xlu0 %419
  %421 = vrot.lane.b32.xlu0 %v190, 64
  %v422 = vpop.permute.xlu0 %421
  %s431 = scalar_lea.vmem [#allocation2], 128
  %432 = vst.msk [vmem:[%s431] sm:$0xff] %vm63, %v408
  %433 = vst.msk [vmem:[%s431 + $0x8] sm:$0xff] %vm63, %v410
  %434 = vst.msk [vmem:[%s431 + $0x10] sm:$0xff] %vm63, %v412
  %435 = vst.msk [vmem:[%s431 + $0x18] sm:$0xff] %vm63, %v414
  %436 = vst.msk [vmem:[%s431 + $0x20] sm:$0xff] %vm63, %v416
  %437 = vst.msk [vmem:[%s431 + $0x28] sm:$0xff] %vm63, %v418
  %438 = vst.msk [vmem:[%s431 + $0x30] sm:$0xff] %vm63, %v420
  %439 = vst.msk [vmem:[%s431 + $0x38] sm:$0xff] %vm63, %v422
  %440 = vrot.lane.b32.xlu0 %v271, 64
  %v441 = vpop.permute.xlu0 %440
  %442 = vrot.lane.b32.xlu0 %v276, 64
  %v443 = vpop.permute.xlu0 %442
  %444 = vrot.lane.b32.xlu0 %v281, 64
  %v445 = vpop.permute.xlu0 %444
  %446 = vrot.lane.b32.xlu0 %v286, 64
  %v447 = vpop.permute.xlu0 %446
  %448 = vrot.lane.b32.xlu0 %v291, 64
  %v449 = vpop.permute.xlu0 %448
  %450 = vrot.lane.b32.xlu0 %v296, 64
  %v451 = vpop.permute.xlu0 %450
  %452 = vrot.lane.b32.xlu0 %v301, 64
  %v453 = vpop.permute.xlu0 %452
  %454 = vrot.lane.b32.xlu0 %v306, 64
  %v455 = vpop.permute.xlu0 %454
  %s464 = scalar_lea.vmem [#allocation3], 128
  %465 = vst.msk [vmem:[%s464] sm:$0xff] %vm63, %v441
  %466 = vst.msk [vmem:[%s464 + $0x8] sm:$0xff] %vm63, %v443
  %467 = vst.msk [vmem:[%s464 + $0x10] sm:$0xff] %vm63, %v445
  %468 = vst.msk [vmem:[%s464 + $0x18] sm:$0xff] %vm63, %v447
  %469 = vst.msk [vmem:[%s464 + $0x20] sm:$0xff] %vm63, %v449
  %470 = vst.msk [vmem:[%s464 + $0x28] sm:$0xff] %vm63, %v451
  %471 = vst.msk [vmem:[%s464 + $0x30] sm:$0xff] %vm63, %v453
  %472 = vst.msk [vmem:[%s464 + $0x38] sm:$0xff] %vm63, %v455
  %v473 = vld [vmem:[%s3] sm:$0xff]
  %v474 = vld [vmem:[%s3 + $0x8] sm:$0xff]
  %v475 = vld [vmem:[%s3 + $0x10] sm:$0xff]
  %v476 = vld [vmem:[%s3 + $0x18] sm:$0xff]
  %s477 = scalar_lea.vmem %s3, 32
  %v478 = vld [vmem:[%s477] sm:$0xff]
  %v479 = vld [vmem:[%s477 + $0x8] sm:$0xff]
  %v480 = vld [vmem:[%s477 + $0x10] sm:$0xff]
  %v481 = vld [vmem:[%s477 + $0x18] sm:$0xff]
  %s482 = scalar_lea.vmem %s3, 64
  %v483 = vld [vmem:[%s482] sm:$0xff]
  %v484 = vld [vmem:[%s482 + $0x8] sm:$0xff]
  %v485 = vld [vmem:[%s482 + $0x10] sm:$0xff]
  %v486 = vld [vmem:[%s482 + $0x18] sm:$0xff]
  %v487 = vld [vmem:[%s5] sm:$0x1]
  %s488 = scalar_lea.vmem %s5, 1
  %v489 = vld [vmem:[%s488] sm:$0x1]
  %s490 = scalar_lea.vmem %s5, 2
  %v491 = vld [vmem:[%s490] sm:$0x1]
  %v492 = vld [vmem:[%s7] sm:$0xff]
  %v493 = vld [vmem:[%s7 + $0x8] sm:$0xff]
  %v494 = vld [vmem:[%s7 + $0x10] sm:$0xff]
  %v495 = vld [vmem:[%s7 + $0x18] sm:$0xff]
  %s496 = scalar_lea.vmem %s7, 32
  %v497 = vld [vmem:[%s496] sm:$0xff]
  %v498 = vld [vmem:[%s496 + $0x8] sm:$0xff]
  %v499 = vld [vmem:[%s496 + $0x10] sm:$0xff]
  %v500 = vld [vmem:[%s496 + $0x18] sm:$0xff]
  %s501 = scalar_lea.vmem %s7, 64
  %v502 = vld [vmem:[%s501] sm:$0xff]
  %v503 = vld [vmem:[%s501 + $0x8] sm:$0xff]
  %v504 = vld [vmem:[%s501 + $0x10] sm:$0xff]
  %v505 = vld [vmem:[%s501 + $0x18] sm:$0xff]
  %v506 = vld [vmem:[%s9] sm:$0x1]
  %s507 = scalar_lea.vmem %s9, 1
  %v508 = vld [vmem:[%s507] sm:$0x1]
  %s509 = scalar_lea.vmem %s9, 2
  %v510 = vld [vmem:[%s509] sm:$0x1]
  %v511 = vld [vmem:[#allocation2] sm:$0xff]
  %v512 = vld [vmem:[%s357] sm:$0xff]
  %v513 = vld [vmem:[%s431] sm:$0xff]
  %v515 = vsel %vm63, 0.0, 0
  %517 = vmatprep.subr.mxu0 0.0
  %518 = vmatpush1.msra.mxu0 0.0
  %519 = vmatprep.subr.mxu0 0.0
  %520 = vmatpush1.msra.mxu0 0.0
  %521 = vmatprep.subr.mxu0 0.0
  %522 = vmatpush1.msra.mxu0 0.0
  %523 = vmatprep.subr.mxu0 0.0
  %524 = vmatpush1.msra.mxu0 0.0
  %525 = vmatprep.subr.mxu0 0.0
  %526 = vmatpush1.msra.mxu0 0.0
  %527 = vmatprep.subr.mxu0 0.0
  %528 = vmatpush1.msra.mxu0 0.0
  %529 = vmatprep.subr.mxu0 0.0
  %530 = vmatpush1.msra.mxu0 0.0
  %531 = vmatprep.subr.mxu0 0.0
  %532 = vmatpush1.msra.mxu0 0.0
  %533 = vmatprep.subr.mxu0 0.0
  %534 = vmatpush1.msra.mxu0 0.0
  %535 = vmatprep.subr.mxu0 0.0
  %536 = vmatpush1.msra.mxu0 0.0
  %537 = vmatprep.subr.mxu0 0.0
  %538 = vmatpush1.msra.mxu0 0.0
  %539 = vmatprep.subr.mxu0 0.0
  %540 = vmatpush1.msra.mxu0 0.0
  %541 = vmatprep.subr.mxu0 0.0
  %542 = vmatpush1.msra.mxu0 %v476
  %543 = vmatprep.subr.mxu0 0.0
  %544 = vmatpush1.msra.mxu0 %v475
  %545 = vmatprep.subr.mxu0 0.0
  %546 = vmatpush1.msra.mxu0 %v474
  %547 = vmatprep.subr.mxu0 0.0
  %548 = vmatpush1.msra.mxu0 %v473
  %549 = vmatprep.subr.mxu0 0.0
  %550 = vmatpush2.msra.mxu0 0.0
  %551 = vmatprep.subr.mxu0 0.0
  %552 = vmatpush2.msra.mxu0 0.0
  %553 = vmatprep.subr.mxu0 0.0
  %554 = vmatpush2.msra.mxu0 0.0
  %555 = vmatprep.subr.mxu0 0.0
  %556 = vmatpush2.msra.mxu0 0.0
  %557 = vmatprep.subr.mxu0 0.0
  %558 = vmatpush2.msra.mxu0 0.0
  %559 = vmatprep.subr.mxu0 0.0
  %560 = vmatpush2.msra.mxu0 0.0
  %561 = vmatprep.subr.mxu0 0.0
  %562 = vmatpush2.msra.mxu0 0.0
  %563 = vmatprep.subr.mxu0 0.0
  %564 = vmatpush2.msra.mxu0 0.0
  %565 = vmatprep.subr.mxu0 0.0
  %566 = vmatpush2.msra.mxu0 0.0
  %567 = vmatprep.subr.mxu0 0.0
  %568 = vmatpush2.msra.mxu0 0.0
  %569 = vmatprep.subr.mxu0 0.0
  %570 = vmatpush2.msra.mxu0 0.0
  %571 = vmatprep.subr.mxu0 0.0
  %572 = vmatpush2.msra.mxu0 0.0
  %573 = vmatprep.subr.mxu0 0.0
  %574 = vmatpush2.msra.mxu0 0.0
  %575 = vmatprep.subr.mxu0 0.0
  %576 = vmatpush2.msra.mxu0 0.0
  %577 = vmatprep.subr.mxu0 0.0
  %578 = vmatpush2.msra.mxu0 0.0
  %579 = vmatprep.subr.mxu0 0.0
  %580 = vmatpush2.msra.mxu0 0.0
  %581 = vmatprep.mubr.f32.mxu0 0.0
  %582 = vmatmul.mubr.f32.gmra.mxu0 %v515
  %v583 = vpop.f32.mrf.mxu0
  %v584 = vadd.f32 0.0, %v583
  %v585 = vpop.f32.mrf.mxu0
  %586 = vdwg.mxu0
  %v587 = vadd.f32 %v511, %v584
  %v589 = vlaneseq
  %v590 = vshrl.u32 %v589, 7
  %v591 = vsub.s32 0, %v590
  %v592 = vrot.slane %v487, %v591
  %v594 = vadd.f32 %v587, %v592
  %v595 = vxor.u32 %v594, 2147483648
  %v596 = vmul.f32 %v595, 1.442695
  %v597 = vpow.pop %v596
  %v598 = vadd.f32 %v597, 1.0
  %v599 = vrcp.pop %v598
  %v600 = vmul.f32 1.0, %v599
  %601 = vmatprep.subr.mxu0 0.0
  %602 = vmatpush1.msra.mxu0 0.0
  %603 = vmatprep.subr.mxu0 0.0
  %604 = vmatpush1.msra.mxu0 0.0
  %605 = vmatprep.subr.mxu0 0.0
  %606 = vmatpush1.msra.mxu0 0.0
  %607 = vmatprep.subr.mxu0 0.0
  %608 = vmatpush1.msra.mxu0 0.0
  %609 = vmatprep.subr.mxu0 0.0
  %610 = vmatpush1.msra.mxu0 0.0
  %611 = vmatprep.subr.mxu0 0.0
  %612 = vmatpush1.msra.mxu0 0.0
  %613 = vmatprep.subr.mxu0 0.0
  %614 = vmatpush1.msra.mxu0 0.0
  %615 = vmatprep.subr.mxu0 0.0
  %616 = vmatpush1.msra.mxu0 0.0
  %617 = vmatprep.subr.mxu0 0.0
  %618 = vmatpush1.msra.mxu0 0.0
  %619 = vmatprep.subr.mxu0 0.0
  %620 = vmatpush1.msra.mxu0 0.0
  %621 = vmatprep.subr.mxu0 0.0
  %622 = vmatpush1.msra.mxu0 0.0
  %623 = vmatprep.subr.mxu0 0.0
  %624 = vmatpush1.msra.mxu0 0.0
  %625 = vmatprep.subr.mxu0 0.0
  %626 = vmatpush1.msra.mxu0 %v481
  %627 = vmatprep.subr.mxu0 0.0
  %628 = vmatpush1.msra.mxu0 %v480
  %629 = vmatprep.subr.mxu0 0.0
  %630 = vmatpush1.msra.mxu0 %v479
  %631 = vmatprep.subr.mxu0 0.0
  %632 = vmatpush1.msra.mxu0 %v478
  %633 = vmatprep.subr.mxu0 0.0
  %634 = vmatpush2.msra.mxu0 0.0
  %635 = vmatprep.subr.mxu0 0.0
  %636 = vmatpush2.msra.mxu0 0.0
  %637 = vmatprep.subr.mxu0 0.0
  %638 = vmatpush2.msra.mxu0 0.0
  %639 = vmatprep.subr.mxu0 0.0
  %640 = vmatpush2.msra.mxu0 0.0
  %641 = vmatprep.subr.mxu0 0.0
  %642 = vmatpush2.msra.mxu0 0.0
  %643 = vmatprep.subr.mxu0 0.0
  %644 = vmatpush2.msra.mxu0 0.0
  %645 = vmatprep.subr.mxu0 0.0
  %646 = vmatpush2.msra.mxu0 0.0
  %647 = vmatprep.subr.mxu0 0.0
  %648 = vmatpush2.msra.mxu0 0.0
  %649 = vmatprep.subr.mxu0 0.0
  %650 = vmatpush2.msra.mxu0 0.0
  %651 = vmatprep.subr.mxu0 0.0
  %652 = vmatpush2.msra.mxu0 0.0
  %653 = vmatprep.subr.mxu0 0.0
  %654 = vmatpush2.msra.mxu0 0.0
  %655 = vmatprep.subr.mxu0 0.0
  %656 = vmatpush2.msra.mxu0 0.0
  %657 = vmatprep.subr.mxu0 0.0
  %658 = vmatpush2.msra.mxu0 0.0
  %659 = vmatprep.subr.mxu0 0.0
  %660 = vmatpush2.msra.mxu0 0.0
  %661 = vmatprep.subr.mxu0 0.0
  %662 = vmatpush2.msra.mxu0 0.0
  %663 = vmatprep.subr.mxu0 0.0
  %664 = vmatpush2.msra.mxu0 0.0
  %665 = vmatprep.mubr.f32.mxu0 0.0
  %666 = vmatmul.mubr.f32.gmra.mxu0 %v515
  %v667 = vpop.f32.mrf.mxu0
  %v668 = vadd.f32 0.0, %v667
  %v669 = vpop.f32.mrf.mxu0
  %670 = vdwg.mxu0
  %v671 = vadd.f32 %v512, %v668
  %v673 = vlaneseq
  %v674 = vshrl.u32 %v673, 7
  %v675 = vsub.s32 0, %v674
  %v676 = vrot.slane %v489, %v675
  %v678 = vadd.f32 %v671, %v676
  %v679 = vxor.u32 %v678, 2147483648
  %v680 = vmul.f32 %v679, 1.442695
  %v681 = vpow.pop %v680
  %v682 = vadd.f32 %v681, 1.0
  %v683 = vrcp.pop %v682
  %v684 = vmul.f32 1.0, %v683
  %v686 = vlaneseq
  %v687 = vshrl.u32 %v686, 7
  %v688 = vsub.s32 0, %v687
  %v689 = vrot.slane %v491, %v688
  %691 = vmatprep.subr.mxu0 0.0
  %692 = vmatpush1.msra.mxu0 0.0
  %693 = vmatprep.subr.mxu0 0.0
  %694 = vmatpush1.msra.mxu0 0.0
  %695 = vmatprep.subr.mxu0 0.0
  %696 = vmatpush1.msra.mxu0 0.0
  %697 = vmatprep.subr.mxu0 0.0
  %698 = vmatpush1.msra.mxu0 0.0
  %699 = vmatprep.subr.mxu0 0.0
  %700 = vmatpush1.msra.mxu0 0.0
  %701 = vmatprep.subr.mxu0 0.0
  %702 = vmatpush1.msra.mxu0 0.0
  %703 = vmatprep.subr.mxu0 0.0
  %704 = vmatpush1.msra.mxu0 0.0
  %705 = vmatprep.subr.mxu0 0.0
  %706 = vmatpush1.msra.mxu0 0.0
  %707 = vmatprep.subr.mxu0 0.0
  %708 = vmatpush1.msra.mxu0 0.0
  %709 = vmatprep.subr.mxu0 0.0
  %710 = vmatpush1.msra.mxu0 0.0
  %711 = vmatprep.subr.mxu0 0.0
  %712 = vmatpush1.msra.mxu0 0.0
  %713 = vmatprep.subr.mxu0 0.0
  %714 = vmatpush1.msra.mxu0 0.0
  %715 = vmatprep.subr.mxu0 0.0
  %716 = vmatpush1.msra.mxu0 %v486
  %717 = vmatprep.subr.mxu0 0.0
  %718 = vmatpush1.msra.mxu0 %v485
  %719 = vmatprep.subr.mxu0 0.0
  %720 = vmatpush1.msra.mxu0 %v484
  %721 = vmatprep.subr.mxu0 0.0
  %722 = vmatpush1.msra.mxu0 %v483
  %723 = vmatprep.subr.mxu0 0.0
  %724 = vmatpush2.msra.mxu0 0.0
  %725 = vmatprep.subr.mxu0 0.0
  %726 = vmatpush2.msra.mxu0 0.0
  %727 = vmatprep.subr.mxu0 0.0
  %728 = vmatpush2.msra.mxu0 0.0
  %729 = vmatprep.subr.mxu0 0.0
  %730 = vmatpush2.msra.mxu0 0.0
  %731 = vmatprep.subr.mxu0 0.0
  %732 = vmatpush2.msra.mxu0 0.0
  %733 = vmatprep.subr.mxu0 0.0
  %734 = vmatpush2.msra.mxu0 0.0
  %735 = vmatprep.subr.mxu0 0.0
  %736 = vmatpush2.msra.mxu0 0.0
  %737 = vmatprep.subr.mxu0 0.0
  %738 = vmatpush2.msra.mxu0 0.0
  %739 = vmatprep.subr.mxu0 0.0
  %740 = vmatpush2.msra.mxu0 0.0
  %741 = vmatprep.subr.mxu0 0.0
  %742 = vmatpush2.msra.mxu0 0.0
  %743 = vmatprep.subr.mxu0 0.0
  %744 = vmatpush2.msra.mxu0 0.0
  %745 = vmatprep.subr.mxu0 0.0
  %746 = vmatpush2.msra.mxu0 0.0
  %747 = vmatprep.subr.mxu0 0.0
  %748 = vmatpush2.msra.mxu0 0.0
  %749 = vmatprep.subr.mxu0 0.0
  %750 = vmatpush2.msra.mxu0 0.0
  %751 = vmatprep.subr.mxu0 0.0
  %752 = vmatpush2.msra.mxu0 0.0
  %753 = vmatprep.subr.mxu0 0.0
  %754 = vmatpush2.msra.mxu0 0.0
  %755 = vmatprep.mubr.f32.mxu0 0.0
  %756 = vmatmul.mubr.f32.gmra.mxu0 %v515
  %v757 = vpop.f32.mrf.mxu0
  %v758 = vadd.f32 %v689, %v757
  %v759 = vpop.f32.mrf.mxu0
  %760 = vdwg.mxu0
  %v761 = vmul.f32 %v600, %v758
  %v762 = vadd.f32 %v513, %v761
  %v763 = vtanh.pop %v762
  %v764 = vsub.f32 1.0, %v684
  %v765 = vmul.f32 %v764, %v763
  %v766 = vmul.f32 %v684, 0.0
  %v767 = vadd.f32 %v765, %v766
  %s768 = scalar_lea.vmem [#allocation3], 56
  %v769 = vld [vmem:[%s768] sm:$0xff]
  %s770 = scalar_lea.vmem [#allocation3], 120
  %v771 = vld [vmem:[%s770] sm:$0xff]
  %s772 = scalar_lea.vmem [#allocation3], 184
  %v773 = vld [vmem:[%s772] sm:$0xff]
  %774 = vmatprep.subr.mxu0 0.0
  %775 = vmatpush1.msra.mxu0 0.0
  %776 = vmatprep.subr.mxu0 0.0
  %777 = vmatpush1.msra.mxu0 0.0
  %778 = vmatprep.subr.mxu0 0.0
  %779 = vmatpush1.msra.mxu0 0.0
  %780 = vmatprep.subr.mxu0 0.0
  %781 = vmatpush1.msra.mxu0 0.0
  %782 = vmatprep.subr.mxu0 0.0
  %783 = vmatpush1.msra.mxu0 0.0
  %784 = vmatprep.subr.mxu0 0.0
  %785 = vmatpush1.msra.mxu0 0.0
  %786 = vmatprep.subr.mxu0 0.0
  %787 = vmatpush1.msra.mxu0 0.0
  %788 = vmatprep.subr.mxu0 0.0
  %789 = vmatpush1.msra.mxu0 0.0
  %790 = vmatprep.subr.mxu0 0.0
  %791 = vmatpush1.msra.mxu0 0.0
  %792 = vmatprep.subr.mxu0 0.0
  %793 = vmatpush1.msra.mxu0 0.0
  %794 = vmatprep.subr.mxu0 0.0
  %795 = vmatpush1.msra.mxu0 0.0
  %796 = vmatprep.subr.mxu0 0.0
  %797 = vmatpush1.msra.mxu0 0.0
  %798 = vmatprep.subr.mxu0 0.0
  %799 = vmatpush1.msra.mxu0 %v495
  %800 = vmatprep.subr.mxu0 0.0
  %801 = vmatpush1.msra.mxu0 %v494
  %802 = vmatprep.subr.mxu0 0.0
  %803 = vmatpush1.msra.mxu0 %v493
  %804 = vmatprep.subr.mxu0 0.0
  %805 = vmatpush1.msra.mxu0 %v492
  %806 = vmatprep.subr.mxu0 0.0
  %807 = vmatpush2.msra.mxu0 0.0
  %808 = vmatprep.subr.mxu0 0.0
  %809 = vmatpush2.msra.mxu0 0.0
  %810 = vmatprep.subr.mxu0 0.0
  %811 = vmatpush2.msra.mxu0 0.0
  %812 = vmatprep.subr.mxu0 0.0
  %813 = vmatpush2.msra.mxu0 0.0
  %814 = vmatprep.subr.mxu0 0.0
  %815 = vmatpush2.msra.mxu0 0.0
  %816 = vmatprep.subr.mxu0 0.0
  %817 = vmatpush2.msra.mxu0 0.0
  %818 = vmatprep.subr.mxu0 0.0
  %819 = vmatpush2.msra.mxu0 0.0
  %820 = vmatprep.subr.mxu0 0.0
  %821 = vmatpush2.msra.mxu0 0.0
  %822 = vmatprep.subr.mxu0 0.0
  %823 = vmatpush2.msra.mxu0 0.0
  %824 = vmatprep.subr.mxu0 0.0
  %825 = vmatpush2.msra.mxu0 0.0
  %826 = vmatprep.subr.mxu0 0.0
  %827 = vmatpush2.msra.mxu0 0.0
  %828 = vmatprep.subr.mxu0 0.0
  %829 = vmatpush2.msra.mxu0 0.0
  %830 = vmatprep.subr.mxu0 0.0
  %831 = vmatpush2.msra.mxu0 0.0
  %832 = vmatprep.subr.mxu0 0.0
  %833 = vmatpush2.msra.mxu0 0.0
  %834 = vmatprep.subr.mxu0 0.0
  %835 = vmatpush2.msra.mxu0 0.0
  %836 = vmatprep.subr.mxu0 0.0
  %837 = vmatpush2.msra.mxu0 0.0
  %838 = vmatprep.mubr.f32.mxu0 0.0
  %839 = vmatmul.mubr.f32.gmra.mxu0 %v515
  %v840 = vpop.f32.mrf.mxu0
  %v841 = vadd.f32 0.0, %v840
  %v842 = vpop.f32.mrf.mxu0
  %843 = vdwg.mxu0
  %v844 = vadd.f32 %v769, %v841
  %v846 = vlaneseq
  %v847 = vshrl.u32 %v846, 7
  %v848 = vsub.s32 0, %v847
  %v849 = vrot.slane %v506, %v848
  %v851 = vadd.f32 %v844, %v849
  %v852 = vxor.u32 %v851, 2147483648
  %v853 = vmul.f32 %v852, 1.442695
  %v854 = vpow.pop %v853
  %v855 = vadd.f32 %v854, 1.0
  %v856 = vrcp.pop %v855
  %v857 = vmul.f32 1.0, %v856
  %858 = vmatprep.subr.mxu0 0.0
  %859 = vmatpush1.msra.mxu0 0.0
  %860 = vmatprep.subr.mxu0 0.0
  %861 = vmatpush1.msra.mxu0 0.0
  %862 = vmatprep.subr.mxu0 0.0
  %863 = vmatpush1.msra.mxu0 0.0
  %864 = vmatprep.subr.mxu0 0.0
  %865 = vmatpush1.msra.mxu0 0.0
  %866 = vmatprep.subr.mxu0 0.0
  %867 = vmatpush1.msra.mxu0 0.0
  %868 = vmatprep.subr.mxu0 0.0
  %869 = vmatpush1.msra.mxu0 0.0
  %870 = vmatprep.subr.mxu0 0.0
  %871 = vmatpush1.msra.mxu0 0.0
  %872 = vmatprep.subr.mxu0 0.0
  %873 = vmatpush1.msra.mxu0 0.0
  %874 = vmatprep.subr.mxu0 0.0
  %875 = vmatpush1.msra.mxu0 0.0
  %876 = vmatprep.subr.mxu0 0.0
  %877 = vmatpush1.msra.mxu0 0.0
  %878 = vmatprep.subr.mxu0 0.0
  %879 = vmatpush1.msra.mxu0 0.0
  %880 = vmatprep.subr.mxu0 0.0
  %881 = vmatpush1.msra.mxu0 0.0
  %882 = vmatprep.subr.mxu0 0.0
  %883 = vmatpush1.msra.mxu0 %v500
  %884 = vmatprep.subr.mxu0 0.0
  %885 = vmatpush1.msra.mxu0 %v499
  %886 = vmatprep.subr.mxu0 0.0
  %887 = vmatpush1.msra.mxu0 %v498
  %888 = vmatprep.subr.mxu0 0.0
  %889 = vmatpush1.msra.mxu0 %v497
  %890 = vmatprep.subr.mxu0 0.0
  %891 = vmatpush2.msra.mxu0 0.0
  %892 = vmatprep.subr.mxu0 0.0
  %893 = vmatpush2.msra.mxu0 0.0
  %894 = vmatprep.subr.mxu0 0.0
  %895 = vmatpush2.msra.mxu0 0.0
  %896 = vmatprep.subr.mxu0 0.0
  %897 = vmatpush2.msra.mxu0 0.0
  %898 = vmatprep.subr.mxu0 0.0
  %899 = vmatpush2.msra.mxu0 0.0
  %900 = vmatprep.subr.mxu0 0.0
  %901 = vmatpush2.msra.mxu0 0.0
  %902 = vmatprep.subr.mxu0 0.0
  %903 = vmatpush2.msra.mxu0 0.0
  %904 = vmatprep.subr.mxu0 0.0
  %905 = vmatpush2.msra.mxu0 0.0
  %906 = vmatprep.subr.mxu0 0.0
  %907 = vmatpush2.msra.mxu0 0.0
  %908 = vmatprep.subr.mxu0 0.0
  %909 = vmatpush2.msra.mxu0 0.0
  %910 = vmatprep.subr.mxu0 0.0
  %911 = vmatpush2.msra.mxu0 0.0
  %912 = vmatprep.subr.mxu0 0.0
  %913 = vmatpush2.msra.mxu0 0.0
  %914 = vmatprep.subr.mxu0 0.0
  %915 = vmatpush2.msra.mxu0 0.0
  %916 = vmatprep.subr.mxu0 0.0
  %917 = vmatpush2.msra.mxu0 0.0
  %918 = vmatprep.subr.mxu0 0.0
  %919 = vmatpush2.msra.mxu0 0.0
  %920 = vmatprep.subr.mxu0 0.0
  %921 = vmatpush2.msra.mxu0 0.0
  %922 = vmatprep.mubr.f32.mxu0 0.0
  %923 = vmatmul.mubr.f32.gmra.mxu0 %v515
  %v924 = vpop.f32.mrf.mxu0
  %v925 = vadd.f32 0.0, %v924
  %v926 = vpop.f32.mrf.mxu0
  %927 = vdwg.mxu0
  %v928 = vadd.f32 %v771, %v925
  %v930 = vlaneseq
  %v931 = vshrl.u32 %v930, 7
  %v932 = vsub.s32 0, %v931
  %v933 = vrot.slane %v508, %v932
  %v935 = vadd.f32 %v928, %v933
  %v936 = vxor.u32 %v935, 2147483648
  %v937 = vmul.f32 %v936, 1.442695
  %v938 = vpow.pop %v937
  %v939 = vadd.f32 %v938, 1.0
  %v940 = vrcp.pop %v939
  %v941 = vmul.f32 1.0, %v940
  %v943 = vlaneseq
  %v944 = vshrl.u32 %v943, 7
  %v945 = vsub.s32 0, %v944
  %v946 = vrot.slane %v510, %v945
  %948 = vmatprep.subr.mxu0 0.0
  %949 = vmatpush1.msra.mxu0 0.0
  %950 = vmatprep.subr.mxu0 0.0
  %951 = vmatpush1.msra.mxu0 0.0
  %952 = vmatprep.subr.mxu0 0.0
  %953 = vmatpush1.msra.mxu0 0.0
  %954 = vmatprep.subr.mxu0 0.0
  %955 = vmatpush1.msra.mxu0 0.0
  %956 = vmatprep.subr.mxu0 0.0
  %957 = vmatpush1.msra.mxu0 0.0
  %958 = vmatprep.subr.mxu0 0.0
  %959 = vmatpush1.msra.mxu0 0.0
  %960 = vmatprep.subr.mxu0 0.0
  %961 = vmatpush1.msra.mxu0 0.0
  %962 = vmatprep.subr.mxu0 0.0
  %963 = vmatpush1.msra.mxu0 0.0
  %964 = vmatprep.subr.mxu0 0.0
  %965 = vmatpush1.msra.mxu0 0.0
  %966 = vmatprep.subr.mxu0 0.0
  %967 = vmatpush1.msra.mxu0 0.0
  %968 = vmatprep.subr.mxu0 0.0
  %969 = vmatpush1.msra.mxu0 0.0
  %970 = vmatprep.subr.mxu0 0.0
  %971 = vmatpush1.msra.mxu0 0.0
  %972 = vmatprep.subr.mxu0 0.0
  %973 = vmatpush1.msra.mxu0 %v505
  %974 = vmatprep.subr.mxu0 0.0
  %975 = vmatpush1.msra.mxu0 %v504
  %976 = vmatprep.subr.mxu0 0.0
  %977 = vmatpush1.msra.mxu0 %v503
  %978 = vmatprep.subr.mxu0 0.0
  %979 = vmatpush1.msra.mxu0 %v502
  %980 = vmatprep.subr.mxu0 0.0
  %981 = vmatpush2.msra.mxu0 0.0
  %982 = vmatprep.subr.mxu0 0.0
  %983 = vmatpush2.msra.mxu0 0.0
  %984 = vmatprep.subr.mxu0 0.0
  %985 = vmatpush2.msra.mxu0 0.0
  %986 = vmatprep.subr.mxu0 0.0
  %987 = vmatpush2.msra.mxu0 0.0
  %988 = vmatprep.subr.mxu0 0.0
  %989 = vmatpush2.msra.mxu0 0.0
  %990 = vmatprep.subr.mxu0 0.0
  %991 = vmatpush2.msra.mxu0 0.0
  %992 = vmatprep.subr.mxu0 0.0
  %993 = vmatpush2.msra.mxu0 0.0
  %994 = vmatprep.subr.mxu0 0.0
  %995 = vmatpush2.msra.mxu0 0.0
  %996 = vmatprep.subr.mxu0 0.0
  %997 = vmatpush2.msra.mxu0 0.0
  %998 = vmatprep.subr.mxu0 0.0
  %999 = vmatpush2.msra.mxu0 0.0
  %1000 = vmatprep.subr.mxu0 0.0
  %1001 = vmatpush2.msra.mxu0 0.0
  %1002 = vmatprep.subr.mxu0 0.0
  %1003 = vmatpush2.msra.mxu0 0.0
  %1004 = vmatprep.subr.mxu0 0.0
  %1005 = vmatpush2.msra.mxu0 0.0
  %1006 = vmatprep.subr.mxu0 0.0
  %1007 = vmatpush2.msra.mxu0 0.0
  %1008 = vmatprep.subr.mxu0 0.0
  %1009 = vmatpush2.msra.mxu0 0.0
  %1010 = vmatprep.subr.mxu0 0.0
  %1011 = vmatpush2.msra.mxu0 0.0
  %1012 = vmatprep.mubr.f32.mxu0 0.0
  %1013 = vmatmul.mubr.f32.gmra.mxu0 %v515
  %v1014 = vpop.f32.mrf.mxu0
  %v1015 = vadd.f32 %v946, %v1014
  %v1016 = vpop.f32.mrf.mxu0
  %1017 = vdwg.mxu0
  %v1018 = vmul.f32 %v857, %v1015
  %v1019 = vadd.f32 %v773, %v1018
  %v1020 = vtanh.pop %v1019
  %v1021 = vsub.f32 1.0, %v941
  %v1022 = vmul.f32 %v1021, %v1020
  %v1023 = vmul.f32 %v941, 0.0
  %v1024 = vadd.f32 %v1022, %v1023
  %1025 = vst.msk [vmem:[#allocation4] sm:$0xff] %vm63, %v767
  %s1026 = scalar_lea.vmem [#allocation5], 56
  %1027 = vst.msk [vmem:[%s1026] sm:$0xff] %vm63, %v1024
  %s1028 = scalar_lea.vmem [#allocation2], 8
  %v1029 = vld [vmem:[%s1028] sm:$0xff]
  %s1030 = scalar_lea.vmem [#allocation2], 72
  %v1031 = vld [vmem:[%s1030] sm:$0xff]
  %s1032 = scalar_lea.vmem [#allocation2], 136
  %v1033 = vld [vmem:[%s1032] sm:$0xff]
  %v1035 = vsel %vm63, %v767, 0
  %1037 = vmatprep.subr.mxu0 0.0
  %1038 = vmatpush1.msra.mxu0 0.0
  %1039 = vmatprep.subr.mxu0 0.0
  %1040 = vmatpush1.msra.mxu0 0.0
  %1041 = vmatprep.subr.mxu0 0.0
  %1042 = vmatpush1.msra.mxu0 0.0
  %1043 = vmatprep.subr.mxu0 0.0
  %1044 = vmatpush1.msra.mxu0 0.0
  %1045 = vmatprep.subr.mxu0 0.0
  %1046 = vmatpush1.msra.mxu0 0.0
  %1047 = vmatprep.subr.mxu0 0.0
  %1048 = vmatpush1.msra.mxu0 0.0
  %1049 = vmatprep.subr.mxu0 0.0
  %1050 = vmatpush1.msra.mxu0 0.0
  %1051 = vmatprep.subr.mxu0 0.0
  %1052 = vmatpush1.msra.mxu0 0.0
  %1053 = vmatprep.subr.mxu0 0.0
  %1054 = vmatpush1.msra.mxu0 0.0
  %1055 = vmatprep.subr.mxu0 0.0
  %1056 = vmatpush1.msra.mxu0 0.0
  %1057 = vmatprep.subr.mxu0 0.0
  %1058 = vmatpush1.msra.mxu0 0.0
  %1059 = vmatprep.subr.mxu0 0.0
  %1060 = vmatpush1.msra.mxu0 0.0
  %1061 = vmatprep.subr.mxu0 0.0
  %1062 = vmatpush1.msra.mxu0 %v476
  %1063 = vmatprep.subr.mxu0 0.0
  %1064 = vmatpush1.msra.mxu0 %v475
  %1065 = vmatprep.subr.mxu0 0.0
  %1066 = vmatpush1.msra.mxu0 %v474
  %1067 = vmatprep.subr.mxu0 0.0
  %1068 = vmatpush1.msra.mxu0 %v473
  %1069 = vmatprep.subr.mxu0 0.0
  %1070 = vmatpush2.msra.mxu0 0.0
  %1071 = vmatprep.subr.mxu0 0.0
  %1072 = vmatpush2.msra.mxu0 0.0
  %1073 = vmatprep.subr.mxu0 0.0
  %1074 = vmatpush2.msra.mxu0 0.0
  %1075 = vmatprep.subr.mxu0 0.0
  %1076 = vmatpush2.msra.mxu0 0.0
  %1077 = vmatprep.subr.mxu0 0.0
  %1078 = vmatpush2.msra.mxu0 0.0
  %1079 = vmatprep.subr.mxu0 0.0
  %1080 = vmatpush2.msra.mxu0 0.0
  %1081 = vmatprep.subr.mxu0 0.0
  %1082 = vmatpush2.msra.mxu0 0.0
  %1083 = vmatprep.subr.mxu0 0.0
  %1084 = vmatpush2.msra.mxu0 0.0
  %1085 = vmatprep.subr.mxu0 0.0
  %1086 = vmatpush2.msra.mxu0 0.0
  %1087 = vmatprep.subr.mxu0 0.0
  %1088 = vmatpush2.msra.mxu0 0.0
  %1089 = vmatprep.subr.mxu0 0.0
  %1090 = vmatpush2.msra.mxu0 0.0
  %1091 = vmatprep.subr.mxu0 0.0
  %1092 = vmatpush2.msra.mxu0 0.0
  %1093 = vmatprep.subr.mxu0 0.0
  %1094 = vmatpush2.msra.mxu0 0.0
  %1095 = vmatprep.subr.mxu0 0.0
  %1096 = vmatpush2.msra.mxu0 0.0
  %1097 = vmatprep.subr.mxu0 0.0
  %1098 = vmatpush2.msra.mxu0 0.0
  %1099 = vmatprep.subr.mxu0 0.0
  %1100 = vmatpush2.msra.mxu0 0.0
  %1101 = vmatprep.mubr.f32.mxu0 0.0
  %1102 = vmatmul.mubr.f32.gmra.mxu0 %v1035
  %v1103 = vpop.f32.mrf.mxu0
  %v1104 = vadd.f32 0.0, %v1103
  %v1105 = vpop.f32.mrf.mxu0
  %1106 = vdwg.mxu0
  %v1107 = vadd.f32 %v1029, %v1104
  %v1108 = vadd.f32 %v1107, %v592
  %v1109 = vxor.u32 %v1108, 2147483648
  %v1110 = vmul.f32 %v1109, 1.442695
  %v1111 = vpow.pop %v1110
  %v1112 = vadd.f32 %v1111, 1.0
  %v1113 = vrcp.pop %v1112
  %v1114 = vmul.f32 1.0, %v1113
  %1115 = vmatprep.subr.mxu0 0.0
  %1116 = vmatpush1.msra.mxu0 0.0
  %1117 = vmatprep.subr.mxu0 0.0
  %1118 = vmatpush1.msra.mxu0 0.0
  %1119 = vmatprep.subr.mxu0 0.0
  %1120 = vmatpush1.msra.mxu0 0.0
  %1121 = vmatprep.subr.mxu0 0.0
  %1122 = vmatpush1.msra.mxu0 0.0
  %1123 = vmatprep.subr.mxu0 0.0
  %1124 = vmatpush1.msra.mxu0 0.0
  %1125 = vmatprep.subr.mxu0 0.0
  %1126 = vmatpush1.msra.mxu0 0.0
  %1127 = vmatprep.subr.mxu0 0.0
  %1128 = vmatpush1.msra.mxu0 0.0
  %1129 = vmatprep.subr.mxu0 0.0
  %1130 = vmatpush1.msra.mxu0 0.0
  %1131 = vmatprep.subr.mxu0 0.0
  %1132 = vmatpush1.msra.mxu0 0.0
  %1133 = vmatprep.subr.mxu0 0.0
  %1134 = vmatpush1.msra.mxu0 0.0
  %1135 = vmatprep.subr.mxu0 0.0
  %1136 = vmatpush1.msra.mxu0 0.0
  %1137 = vmatprep.subr.mxu0 0.0
  %1138 = vmatpush1.msra.mxu0 0.0
  %1139 = vmatprep.subr.mxu0 0.0
  %1140 = vmatpush1.msra.mxu0 %v481
  %1141 = vmatprep.subr.mxu0 0.0
  %1142 = vmatpush1.msra.mxu0 %v480
  %1143 = vmatprep.subr.mxu0 0.0
  %1144 = vmatpush1.msra.mxu0 %v479
  %1145 = vmatprep.subr.mxu0 0.0
  %1146 = vmatpush1.msra.mxu0 %v478
  %1147 = vmatprep.subr.mxu0 0.0
  %1148 = vmatpush2.msra.mxu0 0.0
  %1149 = vmatprep.subr.mxu0 0.0
  %1150 = vmatpush2.msra.mxu0 0.0
  %1151 = vmatprep.subr.mxu0 0.0
  %1152 = vmatpush2.msra.mxu0 0.0
  %1153 = vmatprep.subr.mxu0 0.0
  %1154 = vmatpush2.msra.mxu0 0.0
  %1155 = vmatprep.subr.mxu0 0.0
  %1156 = vmatpush2.msra.mxu0 0.0
  %1157 = vmatprep.subr.mxu0 0.0
  %1158 = vmatpush2.msra.mxu0 0.0
  %1159 = vmatprep.subr.mxu0 0.0
  %1160 = vmatpush2.msra.mxu0 0.0
  %1161 = vmatprep.subr.mxu0 0.0
  %1162 = vmatpush2.msra.mxu0 0.0
  %1163 = vmatprep.subr.mxu0 0.0
  %1164 = vmatpush2.msra.mxu0 0.0
  %1165 = vmatprep.subr.mxu0 0.0
  %1166 = vmatpush2.msra.mxu0 0.0
  %1167 = vmatprep.subr.mxu0 0.0
  %1168 = vmatpush2.msra.mxu0 0.0
  %1169 = vmatprep.subr.mxu0 0.0
  %1170 = vmatpush2.msra.mxu0 0.0
  %1171 = vmatprep.subr.mxu0 0.0
  %1172 = vmatpush2.msra.mxu0 0.0
  %1173 = vmatprep.subr.mxu0 0.0
  %1174 = vmatpush2.msra.mxu0 0.0
  %1175 = vmatprep.subr.mxu0 0.0
  %1176 = vmatpush2.msra.mxu0 0.0
  %1177 = vmatprep.subr.mxu0 0.0
  %1178 = vmatpush2.msra.mxu0 0.0
  %1179 = vmatprep.mubr.f32.mxu0 0.0
  %1180 = vmatmul.mubr.f32.gmra.mxu0 %v1035
  %v1181 = vpop.f32.mrf.mxu0
  %v1182 = vadd.f32 0.0, %v1181
  %v1183 = vpop.f32.mrf.mxu0
  %1184 = vdwg.mxu0
  %v1185 = vadd.f32 %v1031, %v1182
  %v1186 = vadd.f32 %v1185, %v676
  %v1187 = vxor.u32 %v1186, 2147483648
  %v1188 = vmul.f32 %v1187, 1.442695
  %v1189 = vpow.pop %v1188
  %v1190 = vadd.f32 %v1189, 1.0
  %v1191 = vrcp.pop %v1190
  %v1192 = vmul.f32 1.0, %v1191
  %1193 = vmatprep.subr.mxu0 0.0
  %1194 = vmatpush1.msra.mxu0 0.0
  %1195 = vmatprep.subr.mxu0 0.0
  %1196 = vmatpush1.msra.mxu0 0.0
  %1197 = vmatprep.subr.mxu0 0.0
  %1198 = vmatpush1.msra.mxu0 0.0
  %1199 = vmatprep.subr.mxu0 0.0
  %1200 = vmatpush1.msra.mxu0 0.0
  %1201 = vmatprep.subr.mxu0 0.0
  %1202 = vmatpush1.msra.mxu0 0.0
  %1203 = vmatprep.subr.mxu0 0.0
  %1204 = vmatpush1.msra.mxu0 0.0
  %1205 = vmatprep.subr.mxu0 0.0
  %1206 = vmatpush1.msra.mxu0 0.0
  %1207 = vmatprep.subr.mxu0 0.0
  %1208 = vmatpush1.msra.mxu0 0.0
  %1209 = vmatprep.subr.mxu0 0.0
  %1210 = vmatpush1.msra.mxu0 0.0
  %1211 = vmatprep.subr.mxu0 0.0
  %1212 = vmatpush1.msra.mxu0 0.0
  %1213 = vmatprep.subr.mxu0 0.0
  %1214 = vmatpush1.msra.mxu0 0.0
  %1215 = vmatprep.subr.mxu0 0.0
  %1216 = vmatpush1.msra.mxu0 0.0
  %1217 = vmatprep.subr.mxu0 0.0
  %1218 = vmatpush1.msra.mxu0 %v486
  %1219 = vmatprep.subr.mxu0 0.0
  %1220 = vmatpush1.msra.mxu0 %v485
  %1221 = vmatprep.subr.mxu0 0.0
  %1222 = vmatpush1.msra.mxu0 %v484
  %1223 = vmatprep.subr.mxu0 0.0
  %1224 = vmatpush1.msra.mxu0 %v483
  %1225 = vmatprep.subr.mxu0 0.0
  %1226 = vmatpush2.msra.mxu0 0.0
  %1227 = vmatprep.subr.mxu0 0.0
  %1228 = vmatpush2.msra.mxu0 0.0
  %1229 = vmatprep.subr.mxu0 0.0
  %1230 = vmatpush2.msra.mxu0 0.0
  %1231 = vmatprep.subr.mxu0 0.0
  %1232 = vmatpush2.msra.mxu0 0.0
  %1233 = vmatprep.subr.mxu0 0.0
  %1234 = vmatpush2.msra.mxu0 0.0
  %1235 = vmatprep.subr.mxu0 0.0
  %1236 = vmatpush2.msra.mxu0 0.0
  %1237 = vmatprep.subr.mxu0 0.0
  %1238 = vmatpush2.msra.mxu0 0.0
  %1239 = vmatprep.subr.mxu0 0.0
  %1240 = vmatpush2.msra.mxu0 0.0
  %1241 = vmatprep.subr.mxu0 0.0
  %1242 = vmatpush2.msra.mxu0 0.0
  %1243 = vmatprep.subr.mxu0 0.0
  %1244 = vmatpush2.msra.mxu0 0.0
  %1245 = vmatprep.subr.mxu0 0.0
  %1246 = vmatpush2.msra.mxu0 0.0
  %1247 = vmatprep.subr.mxu0 0.0
  %1248 = vmatpush2.msra.mxu0 0.0
  %1249 = vmatprep.subr.mxu0 0.0
  %1250 = vmatpush2.msra.mxu0 0.0
  %1251 = vmatprep.subr.mxu0 0.0
  %1252 = vmatpush2.msra.mxu0 0.0
  %1253 = vmatprep.subr.mxu0 0.0
  %1254 = vmatpush2.msra.mxu0 0.0
  %1255 = vmatprep.subr.mxu0 0.0
  %1256 = vmatpush2.msra.mxu0 0.0
  %1257 = vmatprep.mubr.f32.mxu0 0.0
  %1258 = vmatmul.mubr.f32.gmra.mxu0 %v1035
  %v1259 = vpop.f32.mrf.mxu0
  %v1260 = vadd.f32 %v689, %v1259
  %v1261 = vpop.f32.mrf.mxu0
  %1262 = vdwg.mxu0
  %v1263 = vmul.f32 %v1114, %v1260
  %v1264 = vadd.f32 %v1033, %v1263
  %v1265 = vtanh.pop %v1264
  %v1266 = vsub.f32 1.0, %v1192
  %v1267 = vmul.f32 %v1266, %v1265
  %v1268 = vmul.f32 %v1192, %v767
  %v1269 = vadd.f32 %v1267, %v1268
  %s1270 = scalar_lea.vmem [#allocation3], 48
  %v1271 = vld [vmem:[%s1270] sm:$0xff]
  %s1272 = scalar_lea.vmem [#allocation3], 112
  %v1273 = vld [vmem:[%s1272] sm:$0xff]
  %s1274 = scalar_lea.vmem [#allocation3], 176
  %v1275 = vld [vmem:[%s1274] sm:$0xff]
  %v1277 = vsel %vm63, %v1024, 0
  %1279 = vmatprep.subr.mxu0 0.0
  %1280 = vmatpush1.msra.mxu0 0.0
  %1281 = vmatprep.subr.mxu0 0.0
  %1282 = vmatpush1.msra.mxu0 0.0
  %1283 = vmatprep.subr.mxu0 0.0
  %1284 = vmatpush1.msra.mxu0 0.0
  %1285 = vmatprep.subr.mxu0 0.0
  %1286 = vmatpush1.msra.mxu0 0.0
  %1287 = vmatprep.subr.mxu0 0.0
  %1288 = vmatpush1.msra.mxu0 0.0
  %1289 = vmatprep.subr.mxu0 0.0
  %1290 = vmatpush1.msra.mxu0 0.0
  %1291 = vmatprep.subr.mxu0 0.0
  %1292 = vmatpush1.msra.mxu0 0.0
  %1293 = vmatprep.subr.mxu0 0.0
  %1294 = vmatpush1.msra.mxu0 0.0
  %1295 = vmatprep.subr.mxu0 0.0
  %1296 = vmatpush1.msra.mxu0 0.0
  %1297 = vmatprep.subr.mxu0 0.0
  %1298 = vmatpush1.msra.mxu0 0.0
  %1299 = vmatprep.subr.mxu0 0.0
  %1300 = vmatpush1.msra.mxu0 0.0
  %1301 = vmatprep.subr.mxu0 0.0
  %1302 = vmatpush1.msra.mxu0 0.0
  %1303 = vmatprep.subr.mxu0 0.0
  %1304 = vmatpush1.msra.mxu0 %v495
  %1305 = vmatprep.subr.mxu0 0.0
  %1306 = vmatpush1.msra.mxu0 %v494
  %1307 = vmatprep.subr.mxu0 0.0
  %1308 = vmatpush1.msra.mxu0 %v493
  %1309 = vmatprep.subr.mxu0 0.0
  %1310 = vmatpush1.msra.mxu0 %v492
  %1311 = vmatprep.subr.mxu0 0.0
  %1312 = vmatpush2.msra.mxu0 0.0
  %1313 = vmatprep.subr.mxu0 0.0
  %1314 = vmatpush2.msra.mxu0 0.0
  %1315 = vmatprep.subr.mxu0 0.0
  %1316 = vmatpush2.msra.mxu0 0.0
  %1317 = vmatprep.subr.mxu0 0.0
  %1318 = vmatpush2.msra.mxu0 0.0
  %1319 = vmatprep.subr.mxu0 0.0
  %1320 = vmatpush2.msra.mxu0 0.0
  %1321 = vmatprep.subr.mxu0 0.0
  %1322 = vmatpush2.msra.mxu0 0.0
  %1323 = vmatprep.subr.mxu0 0.0
  %1324 = vmatpush2.msra.mxu0 0.0
  %1325 = vmatprep.subr.mxu0 0.0
  %1326 = vmatpush2.msra.mxu0 0.0
  %1327 = vmatprep.subr.mxu0 0.0
  %1328 = vmatpush2.msra.mxu0 0.0
  %1329 = vmatprep.subr.mxu0 0.0
  %1330 = vmatpush2.msra.mxu0 0.0
  %1331 = vmatprep.subr.mxu0 0.0
  %1332 = vmatpush2.msra.mxu0 0.0
  %1333 = vmatprep.subr.mxu0 0.0
  %1334 = vmatpush2.msra.mxu0 0.0
  %1335 = vmatprep.subr.mxu0 0.0
  %1336 = vmatpush2.msra.mxu0 0.0
  %1337 = vmatprep.subr.mxu0 0.0
  %1338 = vmatpush2.msra.mxu0 0.0
  %1339 = vmatprep.subr.mxu0 0.0
  %1340 = vmatpush2.msra.mxu0 0.0
  %1341 = vmatprep.subr.mxu0 0.0
  %1342 = vmatpush2.msra.mxu0 0.0
  %1343 = vmatprep.mubr.f32.mxu0 0.0
  %1344 = vmatmul.mubr.f32.gmra.mxu0 %v1277
  %v1345 = vpop.f32.mrf.mxu0
  %v1346 = vadd.f32 0.0, %v1345
  %v1347 = vpop.f32.mrf.mxu0
  %1348 = vdwg.mxu0
  %v1349 = vadd.f32 %v1271, %v1346
  %v1350 = vadd.f32 %v1349, %v849
  %v1351 = vxor.u32 %v1350, 2147483648
  %v1352 = vmul.f32 %v1351, 1.442695
  %v1353 = vpow.pop %v1352
  %v1354 = vadd.f32 %v1353, 1.0
  %v1355 = vrcp.pop %v1354
  %v1356 = vmul.f32 1.0, %v1355
  %1357 = vmatprep.subr.mxu0 0.0
  %1358 = vmatpush1.msra.mxu0 0.0
  %1359 = vmatprep.subr.mxu0 0.0
  %1360 = vmatpush1.msra.mxu0 0.0
  %1361 = vmatprep.subr.mxu0 0.0
  %1362 = vmatpush1.msra.mxu0 0.0
  %1363 = vmatprep.subr.mxu0 0.0
  %1364 = vmatpush1.msra.mxu0 0.0
  %1365 = vmatprep.subr.mxu0 0.0
  %1366 = vmatpush1.msra.mxu0 0.0
  %1367 = vmatprep.subr.mxu0 0.0
  %1368 = vmatpush1.msra.mxu0 0.0
  %1369 = vmatprep.subr.mxu0 0.0
  %1370 = vmatpush1.msra.mxu0 0.0
  %1371 = vmatprep.subr.mxu0 0.0
  %1372 = vmatpush1.msra.mxu0 0.0
  %1373 = vmatprep.subr.mxu0 0.0
  %1374 = vmatpush1.msra.mxu0 0.0
  %1375 = vmatprep.subr.mxu0 0.0
  %1376 = vmatpush1.msra.mxu0 0.0
  %1377 = vmatprep.subr.mxu0 0.0
  %1378 = vmatpush1.msra.mxu0 0.0
  %1379 = vmatprep.subr.mxu0 0.0
  %1380 = vmatpush1.msra.mxu0 0.0
  %1381 = vmatprep.subr.mxu0 0.0
  %1382 = vmatpush1.msra.mxu0 %v500
  %1383 = vmatprep.subr.mxu0 0.0
  %1384 = vmatpush1.msra.mxu0 %v499
  %1385 = vmatprep.subr.mxu0 0.0
  %1386 = vmatpush1.msra.mxu0 %v498
  %1387 = vmatprep.subr.mxu0 0.0
  %1388 = vmatpush1.msra.mxu0 %v497
  %1389 = vmatprep.subr.mxu0 0.0
  %1390 = vmatpush2.msra.mxu0 0.0
  %1391 = vmatprep.subr.mxu0 0.0
  %1392 = vmatpush2.msra.mxu0 0.0
  %1393 = vmatprep.subr.mxu0 0.0
  %1394 = vmatpush2.msra.mxu0 0.0
  %1395 = vmatprep.subr.mxu0 0.0
  %1396 = vmatpush2.msra.mxu0 0.0
  %1397 = vmatprep.subr.mxu0 0.0
  %1398 = vmatpush2.msra.mxu0 0.0
  %1399 = vmatprep.subr.mxu0 0.0
  %1400 = vmatpush2.msra.mxu0 0.0
  %1401 = vmatprep.subr.mxu0 0.0
  %1402 = vmatpush2.msra.mxu0 0.0
  %1403 = vmatprep.subr.mxu0 0.0
  %1404 = vmatpush2.msra.mxu0 0.0
  %1405 = vmatprep.subr.mxu0 0.0
  %1406 = vmatpush2.msra.mxu0 0.0
  %1407 = vmatprep.subr.mxu0 0.0
  %1408 = vmatpush2.msra.mxu0 0.0
  %1409 = vmatprep.subr.mxu0 0.0
  %1410 = vmatpush2.msra.mxu0 0.0
  %1411 = vmatprep.subr.mxu0 0.0
  %1412 = vmatpush2.msra.mxu0 0.0
  %1413 = vmatprep.subr.mxu0 0.0
  %1414 = vmatpush2.msra.mxu0 0.0
  %1415 = vmatprep.subr.mxu0 0.0
  %1416 = vmatpush2.msra.mxu0 0.0
  %1417 = vmatprep.subr.mxu0 0.0
  %1418 = vmatpush2.msra.mxu0 0.0
  %1419 = vmatprep.subr.mxu0 0.0
  %1420 = vmatpush2.msra.mxu0 0.0
  %1421 = vmatprep.mubr.f32.mxu0 0.0
  %1422 = vmatmul.mubr.f32.gmra.mxu0 %v1277
  %v1423 = vpop.f32.mrf.mxu0
  %v1424 = vadd.f32 0.0, %v1423
  %v1425 = vpop.f32.mrf.mxu0
  %1426 = vdwg.mxu0
  %v1427 = vadd.f32 %v1273, %v1424
  %v1428 = vadd.f32 %v1427, %v933
  %v1429 = vxor.u32 %v1428, 2147483648
  %v1430 = vmul.f32 %v1429, 1.442695
  %v1431 = vpow.pop %v1430
  %v1432 = vadd.f32 %v1431, 1.0
  %v1433 = vrcp.pop %v1432
  %v1434 = vmul.f32 1.0, %v1433
  %1435 = vmatprep.subr.mxu0 0.0
  %1436 = vmatpush1.msra.mxu0 0.0
  %1437 = vmatprep.subr.mxu0 0.0
  %1438 = vmatpush1.msra.mxu0 0.0
  %1439 = vmatprep.subr.mxu0 0.0
  %1440 = vmatpush1.msra.mxu0 0.0
  %1441 = vmatprep.subr.mxu0 0.0
  %1442 = vmatpush1.msra.mxu0 0.0
  %1443 = vmatprep.subr.mxu0 0.0
  %1444 = vmatpush1.msra.mxu0 0.0
  %1445 = vmatprep.subr.mxu0 0.0
  %1446 = vmatpush1.msra.mxu0 0.0
  %1447 = vmatprep.subr.mxu0 0.0
  %1448 = vmatpush1.msra.mxu0 0.0
  %1449 = vmatprep.subr.mxu0 0.0
  %1450 = vmatpush1.msra.mxu0 0.0
  %1451 = vmatprep.subr.mxu0 0.0
  %1452 = vmatpush1.msra.mxu0 0.0
  %1453 = vmatprep.subr.mxu0 0.0
  %1454 = vmatpush1.msra.mxu0 0.0
  %1455 = vmatprep.subr.mxu0 0.0
  %1456 = vmatpush1.msra.mxu0 0.0
  %1457 = vmatprep.subr.mxu0 0.0
  %1458 = vmatpush1.msra.mxu0 0.0
  %1459 = vmatprep.subr.mxu0 0.0
  %1460 = vmatpush1.msra.mxu0 %v505
  %1461 = vmatprep.subr.mxu0 0.0
  %1462 = vmatpush1.msra.mxu0 %v504
  %1463 = vmatprep.subr.mxu0 0.0
  %1464 = vmatpush1.msra.mxu0 %v503
  %1465 = vmatprep.subr.mxu0 0.0
  %1466 = vmatpush1.msra.mxu0 %v502
  %1467 = vmatprep.subr.mxu0 0.0
  %1468 = vmatpush2.msra.mxu0 0.0
  %1469 = vmatprep.subr.mxu0 0.0
  %1470 = vmatpush2.msra.mxu0 0.0
  %1471 = vmatprep.subr.mxu0 0.0
  %1472 = vmatpush2.msra.mxu0 0.0
  %1473 = vmatprep.subr.mxu0 0.0
  %1474 = vmatpush2.msra.mxu0 0.0
  %1475 = vmatprep.subr.mxu0 0.0
  %1476 = vmatpush2.msra.mxu0 0.0
  %1477 = vmatprep.subr.mxu0 0.0
  %1478 = vmatpush2.msra.mxu0 0.0
  %1479 = vmatprep.subr.mxu0 0.0
  %1480 = vmatpush2.msra.mxu0 0.0
  %1481 = vmatprep.subr.mxu0 0.0
  %1482 = vmatpush2.msra.mxu0 0.0
  %1483 = vmatprep.subr.mxu0 0.0
  %1484 = vmatpush2.msra.mxu0 0.0
  %1485 = vmatprep.subr.mxu0 0.0
  %1486 = vmatpush2.msra.mxu0 0.0
  %1487 = vmatprep.subr.mxu0 0.0
  %1488 = vmatpush2.msra.mxu0 0.0
  %1489 = vmatprep.subr.mxu0 0.0
  %1490 = vmatpush2.msra.mxu0 0.0
  %1491 = vmatprep.subr.mxu0 0.0
  %1492 = vmatpush2.msra.mxu0 0.0
  %1493 = vmatprep.subr.mxu0 0.0
  %1494 = vmatpush2.msra.mxu0 0.0
  %1495 = vmatprep.subr.mxu0 0.0
  %1496 = vmatpush2.msra.mxu0 0.0
  %1497 = vmatprep.subr.mxu0 0.0
  %1498 = vmatpush2.msra.mxu0 0.0
  %1499 = vmatprep.mubr.f32.mxu0 0.0
  %1500 = vmatmul.mubr.f32.gmra.mxu0 %v1277
  %v1501 = vpop.f32.mrf.mxu0
  %v1502 = vadd.f32 %v946, %v1501
  %v1503 = vpop.f32.mrf.mxu0
  %1504 = vdwg.mxu0
  %v1505 = vmul.f32 %v1356, %v1502
  %v1506 = vadd.f32 %v1275, %v1505
  %v1507 = vtanh.pop %v1506
  %v1508 = vsub.f32 1.0, %v1434
  %v1509 = vmul.f32 %v1508, %v1507
  %v1510 = vmul.f32 %v1434, %v1024
  %v1511 = vadd.f32 %v1509, %v1510
  %s1512 = scalar_lea.vmem [#allocation4], 8
  %1513 = vst.msk [vmem:[%s1512] sm:$0xff] %vm63, %v1269
  %s1514 = scalar_lea.vmem [#allocation5], 48
  %1515 = vst.msk [vmem:[%s1514] sm:$0xff] %vm63, %v1511
  %s1516 = scalar_lea.vmem [#allocation2], 16
  %v1517 = vld [vmem:[%s1516] sm:$0xff]
  %s1518 = scalar_lea.vmem [#allocation2], 80
  %v1519 = vld [vmem:[%s1518] sm:$0xff]
  %s1520 = scalar_lea.vmem [#allocation2], 144
  %v1521 = vld [vmem:[%s1520] sm:$0xff]
  %v1523 = vsel %vm63, %v1269, 0
  %1525 = vmatprep.subr.mxu0 0.0
  %1526 = vmatpush1.msra.mxu0 0.0
  %1527 = vmatprep.subr.mxu0 0.0
  %1528 = vmatpush1.msra.mxu0 0.0
  %1529 = vmatprep.subr.mxu0 0.0
  %1530 = vmatpush1.msra.mxu0 0.0
  %1531 = vmatprep.subr.mxu0 0.0
  %1532 = vmatpush1.msra.mxu0 0.0
  %1533 = vmatprep.subr.mxu0 0.0
  %1534 = vmatpush1.msra.mxu0 0.0
  %1535 = vmatprep.subr.mxu0 0.0
  %1536 = vmatpush1.msra.mxu0 0.0
  %1537 = vmatprep.subr.mxu0 0.0
  %1538 = vmatpush1.msra.mxu0 0.0
  %1539 = vmatprep.subr.mxu0 0.0
  %1540 = vmatpush1.msra.mxu0 0.0
  %1541 = vmatprep.subr.mxu0 0.0
  %1542 = vmatpush1.msra.mxu0 0.0
  %1543 = vmatprep.subr.mxu0 0.0
  %1544 = vmatpush1.msra.mxu0 0.0
  %1545 = vmatprep.subr.mxu0 0.0
  %1546 = vmatpush1.msra.mxu0 0.0
  %1547 = vmatprep.subr.mxu0 0.0
  %1548 = vmatpush1.msra.mxu0 0.0
  %1549 = vmatprep.subr.mxu0 0.0
  %1550 = vmatpush1.msra.mxu0 %v476
  %1551 = vmatprep.subr.mxu0 0.0
  %1552 = vmatpush1.msra.mxu0 %v475
  %1553 = vmatprep.subr.mxu0 0.0
  %1554 = vmatpush1.msra.mxu0 %v474
  %1555 = vmatprep.subr.mxu0 0.0
  %1556 = vmatpush1.msra.mxu0 %v473
  %1557 = vmatprep.subr.mxu0 0.0
  %1558 = vmatpush2.msra.mxu0 0.0
  %1559 = vmatprep.subr.mxu0 0.0
  %1560 = vmatpush2.msra.mxu0 0.0
  %1561 = vmatprep.subr.mxu0 0.0
  %1562 = vmatpush2.msra.mxu0 0.0
  %1563 = vmatprep.subr.mxu0 0.0
  %1564 = vmatpush2.msra.mxu0 0.0
  %1565 = vmatprep.subr.mxu0 0.0
  %1566 = vmatpush2.msra.mxu0 0.0
  %1567 = vmatprep.subr.mxu0 0.0
  %1568 = vmatpush2.msra.mxu0 0.0
  %1569 = vmatprep.subr.mxu0 0.0
  %1570 = vmatpush2.msra.mxu0 0.0
  %1571 = vmatprep.subr.mxu0 0.0
  %1572 = vmatpush2.msra.mxu0 0.0
  %1573 = vmatprep.subr.mxu0 0.0
  %1574 = vmatpush2.msra.mxu0 0.0
  %1575 = vmatprep.subr.mxu0 0.0
  %1576 = vmatpush2.msra.mxu0 0.0
  %1577 = vmatprep.subr.mxu0 0.0
  %1578 = vmatpush2.msra.mxu0 0.0
  %1579 = vmatprep.subr.mxu0 0.0
  %1580 = vmatpush2.msra.mxu0 0.0
  %1581 = vmatprep.subr.mxu0 0.0
  %1582 = vmatpush2.msra.mxu0 0.0
  %1583 = vmatprep.subr.mxu0 0.0
  %1584 = vmatpush2.msra.mxu0 0.0
  %1585 = vmatprep.subr.mxu0 0.0
  %1586 = vmatpush2.msra.mxu0 0.0
  %1587 = vmatprep.subr.mxu0 0.0
  %1588 = vmatpush2.msra.mxu0 0.0
  %1589 = vmatprep.mubr.f32.mxu0 0.0
  %1590 = vmatmul.mubr.f32.gmra.mxu0 %v1523
  %v1591 = vpop.f32.mrf.mxu0
  %v1592 = vadd.f32 0.0, %v1591
  %v1593 = vpop.f32.mrf.mxu0
  %1594 = vdwg.mxu0
  %v1595 = vadd.f32 %v1517, %v1592
  %v1596 = vadd.f32 %v1595, %v592
  %v1597 = vxor.u32 %v1596, 2147483648
  %v1598 = vmul.f32 %v1597, 1.442695
  %v1599 = vpow.pop %v1598
  %v1600 = vadd.f32 %v1599, 1.0
  %v1601 = vrcp.pop %v1600
  %v1602 = vmul.f32 1.0, %v1601
  %1603 = vmatprep.subr.mxu0 0.0
  %1604 = vmatpush1.msra.mxu0 0.0
  %1605 = vmatprep.subr.mxu0 0.0
  %1606 = vmatpush1.msra.mxu0 0.0
  %1607 = vmatprep.subr.mxu0 0.0
  %1608 = vmatpush1.msra.mxu0 0.0
  %1609 = vmatprep.subr.mxu0 0.0
  %1610 = vmatpush1.msra.mxu0 0.0
  %1611 = vmatprep.subr.mxu0 0.0
  %1612 = vmatpush1.msra.mxu0 0.0
  %1613 = vmatprep.subr.mxu0 0.0
  %1614 = vmatpush1.msra.mxu0 0.0
  %1615 = vmatprep.subr.mxu0 0.0
  %1616 = vmatpush1.msra.mxu0 0.0
  %1617 = vmatprep.subr.mxu0 0.0
  %1618 = vmatpush1.msra.mxu0 0.0
  %1619 = vmatprep.subr.mxu0 0.0
  %1620 = vmatpush1.msra.mxu0 0.0
  %1621 = vmatprep.subr.mxu0 0.0
  %1622 = vmatpush1.msra.mxu0 0.0
  %1623 = vmatprep.subr.mxu0 0.0
  %1624 = vmatpush1.msra.mxu0 0.0
  %1625 = vmatprep.subr.mxu0 0.0
  %1626 = vmatpush1.msra.mxu0 0.0
  %1627 = vmatprep.subr.mxu0 0.0
  %1628 = vmatpush1.msra.mxu0 %v481
  %1629 = vmatprep.subr.mxu0 0.0
  %1630 = vmatpush1.msra.mxu0 %v480
  %1631 = vmatprep.subr.mxu0 0.0
  %1632 = vmatpush1.msra.mxu0 %v479
  %1633 = vmatprep.subr.mxu0 0.0
  %1634 = vmatpush1.msra.mxu0 %v478
  %1635 = vmatprep.subr.mxu0 0.0
  %1636 = vmatpush2.msra.mxu0 0.0
  %1637 = vmatprep.subr.mxu0 0.0
  %1638 = vmatpush2.msra.mxu0 0.0
  %1639 = vmatprep.subr.mxu0 0.0
  %1640 = vmatpush2.msra.mxu0 0.0
  %1641 = vmatprep.subr.mxu0 0.0
  %1642 = vmatpush2.msra.mxu0 0.0
  %1643 = vmatprep.subr.mxu0 0.0
  %1644 = vmatpush2.msra.mxu0 0.0
  %1645 = vmatprep.subr.mxu0 0.0
  %1646 = vmatpush2.msra.mxu0 0.0
  %1647 = vmatprep.subr.mxu0 0.0
  %1648 = vmatpush2.msra.mxu0 0.0
  %1649 = vmatprep.subr.mxu0 0.0
  %1650 = vmatpush2.msra.mxu0 0.0
  %1651 = vmatprep.subr.mxu0 0.0
  %1652 = vmatpush2.msra.mxu0 0.0
  %1653 = vmatprep.subr.mxu0 0.0
  %1654 = vmatpush2.msra.mxu0 0.0
  %1655 = vmatprep.subr.mxu0 0.0
  %1656 = vmatpush2.msra.mxu0 0.0
  %1657 = vmatprep.subr.mxu0 0.0
  %1658 = vmatpush2.msra.mxu0 0.0
  %1659 = vmatprep.subr.mxu0 0.0
  %1660 = vmatpush2.msra.mxu0 0.0
  %1661 = vmatprep.subr.mxu0 0.0
  %1662 = vmatpush2.msra.mxu0 0.0
  %1663 = vmatprep.subr.mxu0 0.0
  %1664 = vmatpush2.msra.mxu0 0.0
  %1665 = vmatprep.subr.mxu0 0.0
  %1666 = vmatpush2.msra.mxu0 0.0
  %1667 = vmatprep.mubr.f32.mxu0 0.0
  %1668 = vmatmul.mubr.f32.gmra.mxu0 %v1523
  %v1669 = vpop.f32.mrf.mxu0
  %v1670 = vadd.f32 0.0, %v1669
  %v1671 = vpop.f32.mrf.mxu0
  %1672 = vdwg.mxu0
  %v1673 = vadd.f32 %v1519, %v1670
  %v1674 = vadd.f32 %v1673, %v676
  %v1675 = vxor.u32 %v1674, 2147483648
  %v1676 = vmul.f32 %v1675, 1.442695
  %v1677 = vpow.pop %v1676
  %v1678 = vadd.f32 %v1677, 1.0
  %v1679 = vrcp.pop %v1678
  %v1680 = vmul.f32 1.0, %v1679
  %1681 = vmatprep.subr.mxu0 0.0
  %1682 = vmatpush1.msra.mxu0 0.0
  %1683 = vmatprep.subr.mxu0 0.0
  %1684 = vmatpush1.msra.mxu0 0.0
  %1685 = vmatprep.subr.mxu0 0.0
  %1686 = vmatpush1.msra.mxu0 0.0
  %1687 = vmatprep.subr.mxu0 0.0
  %1688 = vmatpush1.msra.mxu0 0.0
  %1689 = vmatprep.subr.mxu0 0.0
  %1690 = vmatpush1.msra.mxu0 0.0
  %1691 = vmatprep.subr.mxu0 0.0
  %1692 = vmatpush1.msra.mxu0 0.0
  %1693 = vmatprep.subr.mxu0 0.0
  %1694 = vmatpush1.msra.mxu0 0.0
  %1695 = vmatprep.subr.mxu0 0.0
  %1696 = vmatpush1.msra.mxu0 0.0
  %1697 = vmatprep.subr.mxu0 0.0
  %1698 = vmatpush1.msra.mxu0 0.0
  %1699 = vmatprep.subr.mxu0 0.0
  %1700 = vmatpush1.msra.mxu0 0.0
  %1701 = vmatprep.subr.mxu0 0.0
  %1702 = vmatpush1.msra.mxu0 0.0
  %1703 = vmatprep.subr.mxu0 0.0
  %1704 = vmatpush1.msra.mxu0 0.0
  %1705 = vmatprep.subr.mxu0 0.0
  %1706 = vmatpush1.msra.mxu0 %v486
  %1707 = vmatprep.subr.mxu0 0.0
  %1708 = vmatpush1.msra.mxu0 %v485
  %1709 = vmatprep.subr.mxu0 0.0
  %1710 = vmatpush1.msra.mxu0 %v484
  %1711 = vmatprep.subr.mxu0 0.0
  %1712 = vmatpush1.msra.mxu0 %v483
  %1713 = vmatprep.subr.mxu0 0.0
  %1714 = vmatpush2.msra.mxu0 0.0
  %1715 = vmatprep.subr.mxu0 0.0
  %1716 = vmatpush2.msra.mxu0 0.0
  %1717 = vmatprep.subr.mxu0 0.0
  %1718 = vmatpush2.msra.mxu0 0.0
  %1719 = vmatprep.subr.mxu0 0.0
  %1720 = vmatpush2.msra.mxu0 0.0
  %1721 = vmatprep.subr.mxu0 0.0
  %1722 = vmatpush2.msra.mxu0 0.0
  %1723 = vmatprep.subr.mxu0 0.0
  %1724 = vmatpush2.msra.mxu0 0.0
  %1725 = vmatprep.subr.mxu0 0.0
  %1726 = vmatpush2.msra.mxu0 0.0
  %1727 = vmatprep.subr.mxu0 0.0
  %1728 = vmatpush2.msra.mxu0 0.0
  %1729 = vmatprep.subr.mxu0 0.0
  %1730 = vmatpush2.msra.mxu0 0.0
  %1731 = vmatprep.subr.mxu0 0.0
  %1732 = vmatpush2.msra.mxu0 0.0
  %1733 = vmatprep.subr.mxu0 0.0
  %1734 = vmatpush2.msra.mxu0 0.0
  %1735 = vmatprep.subr.mxu0 0.0
  %1736 = vmatpush2.msra.mxu0 0.0
  %1737 = vmatprep.subr.mxu0 0.0
  %1738 = vmatpush2.msra.mxu0 0.0
  %1739 = vmatprep.subr.mxu0 0.0
  %1740 = vmatpush2.msra.mxu0 0.0
  %1741 = vmatprep.subr.mxu0 0.0
  %1742 = vmatpush2.msra.mxu0 0.0
  %1743 = vmatprep.subr.mxu0 0.0
  %1744 = vmatpush2.msra.mxu0 0.0
  %1745 = vmatprep.mubr.f32.mxu0 0.0
  %1746 = vmatmul.mubr.f32.gmra.mxu0 %v1523
  %v1747 = vpop.f32.mrf.mxu0
  %v1748 = vadd.f32 %v689, %v1747
  %v1749 = vpop.f32.mrf.mxu0
  %1750 = vdwg.mxu0
  %v1751 = vmul.f32 %v1602, %v1748
  %v1752 = vadd.f32 %v1521, %v1751
  %v1753 = vtanh.pop %v1752
  %v1754 = vsub.f32 1.0, %v1680
  %v1755 = vmul.f32 %v1754, %v1753
  %v1756 = vmul.f32 %v1680, %v1269
  %v1757 = vadd.f32 %v1755, %v1756
  %s1758 = scalar_lea.vmem [#allocation3], 40
  %v1759 = vld [vmem:[%s1758] sm:$0xff]
  %s1760 = scalar_lea.vmem [#allocation3], 104
  %v1761 = vld [vmem:[%s1760] sm:$0xff]
  %s1762 = scalar_lea.vmem [#allocation3], 168
  %v1763 = vld [vmem:[%s1762] sm:$0xff]
  %v1765 = vsel %vm63, %v1511, 0
  %1767 = vmatprep.subr.mxu0 0.0
  %1768 = vmatpush1.msra.mxu0 0.0
  %1769 = vmatprep.subr.mxu0 0.0
  %1770 = vmatpush1.msra.mxu0 0.0
  %1771 = vmatprep.subr.mxu0 0.0
  %1772 = vmatpush1.msra.mxu0 0.0
  %1773 = vmatprep.subr.mxu0 0.0
  %1774 = vmatpush1.msra.mxu0 0.0
  %1775 = vmatprep.subr.mxu0 0.0
  %1776 = vmatpush1.msra.mxu0 0.0
  %1777 = vmatprep.subr.mxu0 0.0
  %1778 = vmatpush1.msra.mxu0 0.0
  %1779 = vmatprep.subr.mxu0 0.0
  %1780 = vmatpush1.msra.mxu0 0.0
  %1781 = vmatprep.subr.mxu0 0.0
  %1782 = vmatpush1.msra.mxu0 0.0
  %1783 = vmatprep.subr.mxu0 0.0
  %1784 = vmatpush1.msra.mxu0 0.0
  %1785 = vmatprep.subr.mxu0 0.0
  %1786 = vmatpush1.msra.mxu0 0.0
  %1787 = vmatprep.subr.mxu0 0.0
  %1788 = vmatpush1.msra.mxu0 0.0
  %1789 = vmatprep.subr.mxu0 0.0
  %1790 = vmatpush1.msra.mxu0 0.0
  %1791 = vmatprep.subr.mxu0 0.0
  %1792 = vmatpush1.msra.mxu0 %v495
  %1793 = vmatprep.subr.mxu0 0.0
  %1794 = vmatpush1.msra.mxu0 %v494
  %1795 = vmatprep.subr.mxu0 0.0
  %1796 = vmatpush1.msra.mxu0 %v493
  %1797 = vmatprep.subr.mxu0 0.0
  %1798 = vmatpush1.msra.mxu0 %v492
  %1799 = vmatprep.subr.mxu0 0.0
  %1800 = vmatpush2.msra.mxu0 0.0
  %1801 = vmatprep.subr.mxu0 0.0
  %1802 = vmatpush2.msra.mxu0 0.0
  %1803 = vmatprep.subr.mxu0 0.0
  %1804 = vmatpush2.msra.mxu0 0.0
  %1805 = vmatprep.subr.mxu0 0.0
  %1806 = vmatpush2.msra.mxu0 0.0
  %1807 = vmatprep.subr.mxu0 0.0
  %1808 = vmatpush2.msra.mxu0 0.0
  %1809 = vmatprep.subr.mxu0 0.0
  %1810 = vmatpush2.msra.mxu0 0.0
  %1811 = vmatprep.subr.mxu0 0.0
  %1812 = vmatpush2.msra.mxu0 0.0
  %1813 = vmatprep.subr.mxu0 0.0
  %1814 = vmatpush2.msra.mxu0 0.0
  %1815 = vmatprep.subr.mxu0 0.0
  %1816 = vmatpush2.msra.mxu0 0.0
  %1817 = vmatprep.subr.mxu0 0.0
  %1818 = vmatpush2.msra.mxu0 0.0
  %1819 = vmatprep.subr.mxu0 0.0
  %1820 = vmatpush2.msra.mxu0 0.0
  %1821 = vmatprep.subr.mxu0 0.0
  %1822 = vmatpush2.msra.mxu0 0.0
  %1823 = vmatprep.subr.mxu0 0.0
  %1824 = vmatpush2.msra.mxu0 0.0
  %1825 = vmatprep.subr.mxu0 0.0
  %1826 = vmatpush2.msra.mxu0 0.0
  %1827 = vmatprep.subr.mxu0 0.0
  %1828 = vmatpush2.msra.mxu0 0.0
  %1829 = vmatprep.subr.mxu0 0.0
  %1830 = vmatpush2.msra.mxu0 0.0
  %1831 = vmatprep.mubr.f32.mxu0 0.0
  %1832 = vmatmul.mubr.f32.gmra.mxu0 %v1765
  %v1833 = vpop.f32.mrf.mxu0
  %v1834 = vadd.f32 0.0, %v1833
  %v1835 = vpop.f32.mrf.mxu0
  %1836 = vdwg.mxu0
  %v1837 = vadd.f32 %v1759, %v1834
  %v1838 = vadd.f32 %v1837, %v849
  %v1839 = vxor.u32 %v1838, 2147483648
  %v1840 = vmul.f32 %v1839, 1.442695
  %v1841 = vpow.pop %v1840
  %v1842 = vadd.f32 %v1841, 1.0
  %v1843 = vrcp.pop %v1842
  %v1844 = vmul.f32 1.0, %v1843
  %1845 = vmatprep.subr.mxu0 0.0
  %1846 = vmatpush1.msra.mxu0 0.0
  %1847 = vmatprep.subr.mxu0 0.0
  %1848 = vmatpush1.msra.mxu0 0.0
  %1849 = vmatprep.subr.mxu0 0.0
  %1850 = vmatpush1.msra.mxu0 0.0
  %1851 = vmatprep.subr.mxu0 0.0
  %1852 = vmatpush1.msra.mxu0 0.0
  %1853 = vmatprep.subr.mxu0 0.0
  %1854 = vmatpush1.msra.mxu0 0.0
  %1855 = vmatprep.subr.mxu0 0.0
  %1856 = vmatpush1.msra.mxu0 0.0
  %1857 = vmatprep.subr.mxu0 0.0
  %1858 = vmatpush1.msra.mxu0 0.0
  %1859 = vmatprep.subr.mxu0 0.0
  %1860 = vmatpush1.msra.mxu0 0.0
  %1861 = vmatprep.subr.mxu0 0.0
  %1862 = vmatpush1.msra.mxu0 0.0
  %1863 = vmatprep.subr.mxu0 0.0
  %1864 = vmatpush1.msra.mxu0 0.0
  %1865 = vmatprep.subr.mxu0 0.0
  %1866 = vmatpush1.msra.mxu0 0.0
  %1867 = vmatprep.subr.mxu0 0.0
  %1868 = vmatpush1.msra.mxu0 0.0
  %1869 = vmatprep.subr.mxu0 0.0
  %1870 = vmatpush1.msra.mxu0 %v500
  %1871 = vmatprep.subr.mxu0 0.0
  %1872 = vmatpush1.msra.mxu0 %v499
  %1873 = vmatprep.subr.mxu0 0.0
  %1874 = vmatpush1.msra.mxu0 %v498
  %1875 = vmatprep.subr.mxu0 0.0
  %1876 = vmatpush1.msra.mxu0 %v497
  %1877 = vmatprep.subr.mxu0 0.0
  %1878 = vmatpush2.msra.mxu0 0.0
  %1879 = vmatprep.subr.mxu0 0.0
  %1880 = vmatpush2.msra.mxu0 0.0
  %1881 = vmatprep.subr.mxu0 0.0
  %1882 = vmatpush2.msra.mxu0 0.0
  %1883 = vmatprep.subr.mxu0 0.0
  %1884 = vmatpush2.msra.mxu0 0.0
  %1885 = vmatprep.subr.mxu0 0.0
  %1886 = vmatpush2.msra.mxu0 0.0
  %1887 = vmatprep.subr.mxu0 0.0
  %1888 = vmatpush2.msra.mxu0 0.0
  %1889 = vmatprep.subr.mxu0 0.0
  %1890 = vmatpush2.msra.mxu0 0.0
  %1891 = vmatprep.subr.mxu0 0.0
  %1892 = vmatpush2.msra.mxu0 0.0
  %1893 = vmatprep.subr.mxu0 0.0
  %1894 = vmatpush2.msra.mxu0 0.0
  %1895 = vmatprep.subr.mxu0 0.0
  %1896 = vmatpush2.msra.mxu0 0.0
  %1897 = vmatprep.subr.mxu0 0.0
  %1898 = vmatpush2.msra.mxu0 0.0
  %1899 = vmatprep.subr.mxu0 0.0
  %1900 = vmatpush2.msra.mxu0 0.0
  %1901 = vmatprep.subr.mxu0 0.0
  %1902 = vmatpush2.msra.mxu0 0.0
  %1903 = vmatprep.subr.mxu0 0.0
  %1904 = vmatpush2.msra.mxu0 0.0
  %1905 = vmatprep.subr.mxu0 0.0
  %1906 = vmatpush2.msra.mxu0 0.0
  %1907 = vmatprep.subr.mxu0 0.0
  %1908 = vmatpush2.msra.mxu0 0.0
  %1909 = vmatprep.mubr.f32.mxu0 0.0
  %1910 = vmatmul.mubr.f32.gmra.mxu0 %v1765
  %v1911 = vpop.f32.mrf.mxu0
  %v1912 = vadd.f32 0.0, %v1911
  %v1913 = vpop.f32.mrf.mxu0
  %1914 = vdwg.mxu0
  %v1915 = vadd.f32 %v1761, %v1912
  %v1916 = vadd.f32 %v1915, %v933
  %v1917 = vxor.u32 %v1916, 2147483648
  %v1918 = vmul.f32 %v1917, 1.442695
  %v1919 = vpow.pop %v1918
  %v1920 = vadd.f32 %v1919, 1.0
  %v1921 = vrcp.pop %v1920
  %v1922 = vmul.f32 1.0, %v1921
  %1923 = vmatprep.subr.mxu0 0.0
  %1924 = vmatpush1.msra.mxu0 0.0
  %1925 = vmatprep.subr.mxu0 0.0
  %1926 = vmatpush1.msra.mxu0 0.0
  %1927 = vmatprep.subr.mxu0 0.0
  %1928 = vmatpush1.msra.mxu0 0.0
  %1929 = vmatprep.subr.mxu0 0.0
  %1930 = vmatpush1.msra.mxu0 0.0
  %1931 = vmatprep.subr.mxu0 0.0
  %1932 = vmatpush1.msra.mxu0 0.0
  %1933 = vmatprep.subr.mxu0 0.0
  %1934 = vmatpush1.msra.mxu0 0.0
  %1935 = vmatprep.subr.mxu0 0.0
  %1936 = vmatpush1.msra.mxu0 0.0
  %1937 = vmatprep.subr.mxu0 0.0
  %1938 = vmatpush1.msra.mxu0 0.0
  %1939 = vmatprep.subr.mxu0 0.0
  %1940 = vmatpush1.msra.mxu0 0.0
  %1941 = vmatprep.subr.mxu0 0.0
  %1942 = vmatpush1.msra.mxu0 0.0
  %1943 = vmatprep.subr.mxu0 0.0
  %1944 = vmatpush1.msra.mxu0 0.0
  %1945 = vmatprep.subr.mxu0 0.0
  %1946 = vmatpush1.msra.mxu0 0.0
  %1947 = vmatprep.subr.mxu0 0.0
  %1948 = vmatpush1.msra.mxu0 %v505
  %1949 = vmatprep.subr.mxu0 0.0
  %1950 = vmatpush1.msra.mxu0 %v504
  %1951 = vmatprep.subr.mxu0 0.0
  %1952 = vmatpush1.msra.mxu0 %v503
  %1953 = vmatprep.subr.mxu0 0.0
  %1954 = vmatpush1.msra.mxu0 %v502
  %1955 = vmatprep.subr.mxu0 0.0
  %1956 = vmatpush2.msra.mxu0 0.0
  %1957 = vmatprep.subr.mxu0 0.0
  %1958 = vmatpush2.msra.mxu0 0.0
  %1959 = vmatprep.subr.mxu0 0.0
  %1960 = vmatpush2.msra.mxu0 0.0
  %1961 = vmatprep.subr.mxu0 0.0
  %1962 = vmatpush2.msra.mxu0 0.0
  %1963 = vmatprep.subr.mxu0 0.0
  %1964 = vmatpush2.msra.mxu0 0.0
  %1965 = vmatprep.subr.mxu0 0.0
  %1966 = vmatpush2.msra.mxu0 0.0
  %1967 = vmatprep.subr.mxu0 0.0
  %1968 = vmatpush2.msra.mxu0 0.0
  %1969 = vmatprep.subr.mxu0 0.0
  %1970 = vmatpush2.msra.mxu0 0.0
  %1971 = vmatprep.subr.mxu0 0.0
  %1972 = vmatpush2.msra.mxu0 0.0
  %1973 = vmatprep.subr.mxu0 0.0
  %1974 = vmatpush2.msra.mxu0 0.0
  %1975 = vmatprep.subr.mxu0 0.0
  %1976 = vmatpush2.msra.mxu0 0.0
  %1977 = vmatprep.subr.mxu0 0.0
  %1978 = vmatpush2.msra.mxu0 0.0
  %1979 = vmatprep.subr.mxu0 0.0
  %1980 = vmatpush2.msra.mxu0 0.0
  %1981 = vmatprep.subr.mxu0 0.0
  %1982 = vmatpush2.msra.mxu0 0.0
  %1983 = vmatprep.subr.mxu0 0.0
  %1984 = vmatpush2.msra.mxu0 0.0
  %1985 = vmatprep.subr.mxu0 0.0
  %1986 = vmatpush2.msra.mxu0 0.0
  %1987 = vmatprep.mubr.f32.mxu0 0.0
  %1988 = vmatmul.mubr.f32.gmra.mxu0 %v1765
  %v1989 = vpop.f32.mrf.mxu0
  %v1990 = vadd.f32 %v946, %v1989
  %v1991 = vpop.f32.mrf.mxu0
  %1992 = vdwg.mxu0
  %v1993 = vmul.f32 %v1844, %v1990
  %v1994 = vadd.f32 %v1763, %v1993
  %v1995 = vtanh.pop %v1994
  %v1996 = vsub.f32 1.0, %v1922
  %v1997 = vmul.f32 %v1996, %v1995
  %v1998 = vmul.f32 %v1922, %v1511
  %v1999 = vadd.f32 %v1997, %v1998
  %s2000 = scalar_lea.vmem [#allocation4], 16
  %2001 = vst.msk [vmem:[%s2000] sm:$0xff] %vm63, %v1757
  %s2002 = scalar_lea.vmem [#allocation5], 40
  %2003 = vst.msk [vmem:[%s2002] sm:$0xff] %vm63, %v1999
  %s2004 = scalar_lea.vmem [#allocation2], 24
  %v2005 = vld [vmem:[%s2004] sm:$0xff]
  %s2006 = scalar_lea.vmem [#allocation2], 88
  %v2007 = vld [vmem:[%s2006] sm:$0xff]
  %s2008 = scalar_lea.vmem [#allocation2], 152
  %v2009 = vld [vmem:[%s2008] sm:$0xff]
  %v2011 = vsel %vm63, %v1757, 0
  %2013 = vmatprep.subr.mxu0 0.0
  %2014 = vmatpush1.msra.mxu0 0.0
  %2015 = vmatprep.subr.mxu0 0.0
  %2016 = vmatpush1.msra.mxu0 0.0
  %2017 = vmatprep.subr.mxu0 0.0
  %2018 = vmatpush1.msra.mxu0 0.0
  %2019 = vmatprep.subr.mxu0 0.0
  %2020 = vmatpush1.msra.mxu0 0.0
  %2021 = vmatprep.subr.mxu0 0.0
  %2022 = vmatpush1.msra.mxu0 0.0
  %2023 = vmatprep.subr.mxu0 0.0
  %2024 = vmatpush1.msra.mxu0 0.0
  %2025 = vmatprep.subr.mxu0 0.0
  %2026 = vmatpush1.msra.mxu0 0.0
  %2027 = vmatprep.subr.mxu0 0.0
  %2028 = vmatpush1.msra.mxu0 0.0
  %2029 = vmatprep.subr.mxu0 0.0
  %2030 = vmatpush1.msra.mxu0 0.0
  %2031 = vmatprep.subr.mxu0 0.0
  %2032 = vmatpush1.msra.mxu0 0.0
  %2033 = vmatprep.subr.mxu0 0.0
  %2034 = vmatpush1.msra.mxu0 0.0
  %2035 = vmatprep.subr.mxu0 0.0
  %2036 = vmatpush1.msra.mxu0 0.0
  %2037 = vmatprep.subr.mxu0 0.0
  %2038 = vmatpush1.msra.mxu0 %v476
  %2039 = vmatprep.subr.mxu0 0.0
  %2040 = vmatpush1.msra.mxu0 %v475
  %2041 = vmatprep.subr.mxu0 0.0
  %2042 = vmatpush1.msra.mxu0 %v474
  %2043 = vmatprep.subr.mxu0 0.0
  %2044 = vmatpush1.msra.mxu0 %v473
  %2045 = vmatprep.subr.mxu0 0.0
  %2046 = vmatpush2.msra.mxu0 0.0
  %2047 = vmatprep.subr.mxu0 0.0
  %2048 = vmatpush2.msra.mxu0 0.0
  %2049 = vmatprep.subr.mxu0 0.0
  %2050 = vmatpush2.msra.mxu0 0.0
  %2051 = vmatprep.subr.mxu0 0.0
  %2052 = vmatpush2.msra.mxu0 0.0
  %2053 = vmatprep.subr.mxu0 0.0
  %2054 = vmatpush2.msra.mxu0 0.0
  %2055 = vmatprep.subr.mxu0 0.0
  %2056 = vmatpush2.msra.mxu0 0.0
  %2057 = vmatprep.subr.mxu0 0.0
  %2058 = vmatpush2.msra.mxu0 0.0
  %2059 = vmatprep.subr.mxu0 0.0
  %2060 = vmatpush2.msra.mxu0 0.0
  %2061 = vmatprep.subr.mxu0 0.0
  %2062 = vmatpush2.msra.mxu0 0.0
  %2063 = vmatprep.subr.mxu0 0.0
  %2064 = vmatpush2.msra.mxu0 0.0
  %2065 = vmatprep.subr.mxu0 0.0
  %2066 = vmatpush2.msra.mxu0 0.0
  %2067 = vmatprep.subr.mxu0 0.0
  %2068 = vmatpush2.msra.mxu0 0.0
  %2069 = vmatprep.subr.mxu0 0.0
  %2070 = vmatpush2.msra.mxu0 0.0
  %2071 = vmatprep.subr.mxu0 0.0
  %2072 = vmatpush2.msra.mxu0 0.0
  %2073 = vmatprep.subr.mxu0 0.0
  %2074 = vmatpush2.msra.mxu0 0.0
  %2075 = vmatprep.subr.mxu0 0.0
  %2076 = vmatpush2.msra.mxu0 0.0
  %2077 = vmatprep.mubr.f32.mxu0 0.0
  %2078 = vmatmul.mubr.f32.gmra.mxu0 %v2011
  %v2079 = vpop.f32.mrf.mxu0
  %v2080 = vadd.f32 0.0, %v2079
  %v2081 = vpop.f32.mrf.mxu0
  %2082 = vdwg.mxu0
  %v2083 = vadd.f32 %v2005, %v2080
  %v2084 = vadd.f32 %v2083, %v592
  %v2085 = vxor.u32 %v2084, 2147483648
  %v2086 = vmul.f32 %v2085, 1.442695
  %v2087 = vpow.pop %v2086
  %v2088 = vadd.f32 %v2087, 1.0
  %v2089 = vrcp.pop %v2088
  %v2090 = vmul.f32 1.0, %v2089
  %2091 = vmatprep.subr.mxu0 0.0
  %2092 = vmatpush1.msra.mxu0 0.0
  %2093 = vmatprep.subr.mxu0 0.0
  %2094 = vmatpush1.msra.mxu0 0.0
  %2095 = vmatprep.subr.mxu0 0.0
  %2096 = vmatpush1.msra.mxu0 0.0
  %2097 = vmatprep.subr.mxu0 0.0
  %2098 = vmatpush1.msra.mxu0 0.0
  %2099 = vmatprep.subr.mxu0 0.0
  %2100 = vmatpush1.msra.mxu0 0.0
  %2101 = vmatprep.subr.mxu0 0.0
  %2102 = vmatpush1.msra.mxu0 0.0
  %2103 = vmatprep.subr.mxu0 0.0
  %2104 = vmatpush1.msra.mxu0 0.0
  %2105 = vmatprep.subr.mxu0 0.0
  %2106 = vmatpush1.msra.mxu0 0.0
  %2107 = vmatprep.subr.mxu0 0.0
  %2108 = vmatpush1.msra.mxu0 0.0
  %2109 = vmatprep.subr.mxu0 0.0
  %2110 = vmatpush1.msra.mxu0 0.0
  %2111 = vmatprep.subr.mxu0 0.0
  %2112 = vmatpush1.msra.mxu0 0.0
  %2113 = vmatprep.subr.mxu0 0.0
  %2114 = vmatpush1.msra.mxu0 0.0
  %2115 = vmatprep.subr.mxu0 0.0
  %2116 = vmatpush1.msra.mxu0 %v481
  %2117 = vmatprep.subr.mxu0 0.0
  %2118 = vmatpush1.msra.mxu0 %v480
  %2119 = vmatprep.subr.mxu0 0.0
  %2120 = vmatpush1.msra.mxu0 %v479
  %2121 = vmatprep.subr.mxu0 0.0
  %2122 = vmatpush1.msra.mxu0 %v478
  %2123 = vmatprep.subr.mxu0 0.0
  %2124 = vmatpush2.msra.mxu0 0.0
  %2125 = vmatprep.subr.mxu0 0.0
  %2126 = vmatpush2.msra.mxu0 0.0
  %2127 = vmatprep.subr.mxu0 0.0
  %2128 = vmatpush2.msra.mxu0 0.0
  %2129 = vmatprep.subr.mxu0 0.0
  %2130 = vmatpush2.msra.mxu0 0.0
  %2131 = vmatprep.subr.mxu0 0.0
  %2132 = vmatpush2.msra.mxu0 0.0
  %2133 = vmatprep.subr.mxu0 0.0
  %2134 = vmatpush2.msra.mxu0 0.0
  %2135 = vmatprep.subr.mxu0 0.0
  %2136 = vmatpush2.msra.mxu0 0.0
  %2137 = vmatprep.subr.mxu0 0.0
  %2138 = vmatpush2.msra.mxu0 0.0
  %2139 = vmatprep.subr.mxu0 0.0
  %2140 = vmatpush2.msra.mxu0 0.0
  %2141 = vmatprep.subr.mxu0 0.0
  %2142 = vmatpush2.msra.mxu0 0.0
  %2143 = vmatprep.subr.mxu0 0.0
  %2144 = vmatpush2.msra.mxu0 0.0
  %2145 = vmatprep.subr.mxu0 0.0
  %2146 = vmatpush2.msra.mxu0 0.0
  %2147 = vmatprep.subr.mxu0 0.0
  %2148 = vmatpush2.msra.mxu0 0.0
  %2149 = vmatprep.subr.mxu0 0.0
  %2150 = vmatpush2.msra.mxu0 0.0
  %2151 = vmatprep.subr.mxu0 0.0
  %2152 = vmatpush2.msra.mxu0 0.0
  %2153 = vmatprep.subr.mxu0 0.0
  %2154 = vmatpush2.msra.mxu0 0.0
  %2155 = vmatprep.mubr.f32.mxu0 0.0
  %2156 = vmatmul.mubr.f32.gmra.mxu0 %v2011
  %v2157 = vpop.f32.mrf.mxu0
  %v2158 = vadd.f32 0.0, %v2157
  %v2159 = vpop.f32.mrf.mxu0
  %2160 = vdwg.mxu0
  %v2161 = vadd.f32 %v2007, %v2158
  %v2162 = vadd.f32 %v2161, %v676
  %v2163 = vxor.u32 %v2162, 2147483648
  %v2164 = vmul.f32 %v2163, 1.442695
  %v2165 = vpow.pop %v2164
  %v2166 = vadd.f32 %v2165, 1.0
  %v2167 = vrcp.pop %v2166
  %v2168 = vmul.f32 1.0, %v2167
  %2169 = vmatprep.subr.mxu0 0.0
  %2170 = vmatpush1.msra.mxu0 0.0
  %2171 = vmatprep.subr.mxu0 0.0
  %2172 = vmatpush1.msra.mxu0 0.0
  %2173 = vmatprep.subr.mxu0 0.0
  %2174 = vmatpush1.msra.mxu0 0.0
  %2175 = vmatprep.subr.mxu0 0.0
  %2176 = vmatpush1.msra.mxu0 0.0
  %2177 = vmatprep.subr.mxu0 0.0
  %2178 = vmatpush1.msra.mxu0 0.0
  %2179 = vmatprep.subr.mxu0 0.0
  %2180 = vmatpush1.msra.mxu0 0.0
  %2181 = vmatprep.subr.mxu0 0.0
  %2182 = vmatpush1.msra.mxu0 0.0
  %2183 = vmatprep.subr.mxu0 0.0
  %2184 = vmatpush1.msra.mxu0 0.0
  %2185 = vmatprep.subr.mxu0 0.0
  %2186 = vmatpush1.msra.mxu0 0.0
  %2187 = vmatprep.subr.mxu0 0.0
  %2188 = vmatpush1.msra.mxu0 0.0
  %2189 = vmatprep.subr.mxu0 0.0
  %2190 = vmatpush1.msra.mxu0 0.0
  %2191 = vmatprep.subr.mxu0 0.0
  %2192 = vmatpush1.msra.mxu0 0.0
  %2193 = vmatprep.subr.mxu0 0.0
  %2194 = vmatpush1.msra.mxu0 %v486
  %2195 = vmatprep.subr.mxu0 0.0
  %2196 = vmatpush1.msra.mxu0 %v485
  %2197 = vmatprep.subr.mxu0 0.0
  %2198 = vmatpush1.msra.mxu0 %v484
  %2199 = vmatprep.subr.mxu0 0.0
  %2200 = vmatpush1.msra.mxu0 %v483
  %2201 = vmatprep.subr.mxu0 0.0
  %2202 = vmatpush2.msra.mxu0 0.0
  %2203 = vmatprep.subr.mxu0 0.0
  %2204 = vmatpush2.msra.mxu0 0.0
  %2205 = vmatprep.subr.mxu0 0.0
  %2206 = vmatpush2.msra.mxu0 0.0
  %2207 = vmatprep.subr.mxu0 0.0
  %2208 = vmatpush2.msra.mxu0 0.0
  %2209 = vmatprep.subr.mxu0 0.0
  %2210 = vmatpush2.msra.mxu0 0.0
  %2211 = vmatprep.subr.mxu0 0.0
  %2212 = vmatpush2.msra.mxu0 0.0
  %2213 = vmatprep.subr.mxu0 0.0
  %2214 = vmatpush2.msra.mxu0 0.0
  %2215 = vmatprep.subr.mxu0 0.0
  %2216 = vmatpush2.msra.mxu0 0.0
  %2217 = vmatprep.subr.mxu0 0.0
  %2218 = vmatpush2.msra.mxu0 0.0
  %2219 = vmatprep.subr.mxu0 0.0
  %2220 = vmatpush2.msra.mxu0 0.0
  %2221 = vmatprep.subr.mxu0 0.0
  %2222 = vmatpush2.msra.mxu0 0.0
  %2223 = vmatprep.subr.mxu0 0.0
  %2224 = vmatpush2.msra.mxu0 0.0
  %2225 = vmatprep.subr.mxu0 0.0
  %2226 = vmatpush2.msra.mxu0 0.0
  %2227 = vmatprep.subr.mxu0 0.0
  %2228 = vmatpush2.msra.mxu0 0.0
  %2229 = vmatprep.subr.mxu0 0.0
  %2230 = vmatpush2.msra.mxu0 0.0
  %2231 = vmatprep.subr.mxu0 0.0
  %2232 = vmatpush2.msra.mxu0 0.0
  %2233 = vmatprep.mubr.f32.mxu0 0.0
  %2234 = vmatmul.mubr.f32.gmra.mxu0 %v2011
  %v2235 = vpop.f32.mrf.mxu0
  %v2236 = vadd.f32 %v689, %v2235
  %v2237 = vpop.f32.mrf.mxu0
  %2238 = vdwg.mxu0
  %v2239 = vmul.f32 %v2090, %v2236
  %v2240 = vadd.f32 %v2009, %v2239
  %v2241 = vtanh.pop %v2240
  %v2242 = vsub.f32 1.0, %v2168
  %v2243 = vmul.f32 %v2242, %v2241
  %v2244 = vmul.f32 %v2168, %v1757
  %v2245 = vadd.f32 %v2243, %v2244
  %s2246 = scalar_lea.vmem [#allocation3], 32
  %v2247 = vld [vmem:[%s2246] sm:$0xff]
  %s2248 = scalar_lea.vmem [#allocation3], 96
  %v2249 = vld [vmem:[%s2248] sm:$0xff]
  %s2250 = scalar_lea.vmem [#allocation3], 160
  %v2251 = vld [vmem:[%s2250] sm:$0xff]
  %v2253 = vsel %vm63, %v1999, 0
  %2255 = vmatprep.subr.mxu0 0.0
  %2256 = vmatpush1.msra.mxu0 0.0
  %2257 = vmatprep.subr.mxu0 0.0
  %2258 = vmatpush1.msra.mxu0 0.0
  %2259 = vmatprep.subr.mxu0 0.0
  %2260 = vmatpush1.msra.mxu0 0.0
  %2261 = vmatprep.subr.mxu0 0.0
  %2262 = vmatpush1.msra.mxu0 0.0
  %2263 = vmatprep.subr.mxu0 0.0
  %2264 = vmatpush1.msra.mxu0 0.0
  %2265 = vmatprep.subr.mxu0 0.0
  %2266 = vmatpush1.msra.mxu0 0.0
  %2267 = vmatprep.subr.mxu0 0.0
  %2268 = vmatpush1.msra.mxu0 0.0
  %2269 = vmatprep.subr.mxu0 0.0
  %2270 = vmatpush1.msra.mxu0 0.0
  %2271 = vmatprep.subr.mxu0 0.0
  %2272 = vmatpush1.msra.mxu0 0.0
  %2273 = vmatprep.subr.mxu0 0.0
  %2274 = vmatpush1.msra.mxu0 0.0
  %2275 = vmatprep.subr.mxu0 0.0
  %2276 = vmatpush1.msra.mxu0 0.0
  %2277 = vmatprep.subr.mxu0 0.0
  %2278 = vmatpush1.msra.mxu0 0.0
  %2279 = vmatprep.subr.mxu0 0.0
  %2280 = vmatpush1.msra.mxu0 %v495
  %2281 = vmatprep.subr.mxu0 0.0
  %2282 = vmatpush1.msra.mxu0 %v494
  %2283 = vmatprep.subr.mxu0 0.0
  %2284 = vmatpush1.msra.mxu0 %v493
  %2285 = vmatprep.subr.mxu0 0.0
  %2286 = vmatpush1.msra.mxu0 %v492
  %2287 = vmatprep.subr.mxu0 0.0
  %2288 = vmatpush2.msra.mxu0 0.0
  %2289 = vmatprep.subr.mxu0 0.0
  %2290 = vmatpush2.msra.mxu0 0.0
  %2291 = vmatprep.subr.mxu0 0.0
  %2292 = vmatpush2.msra.mxu0 0.0
  %2293 = vmatprep.subr.mxu0 0.0
  %2294 = vmatpush2.msra.mxu0 0.0
  %2295 = vmatprep.subr.mxu0 0.0
  %2296 = vmatpush2.msra.mxu0 0.0
  %2297 = vmatprep.subr.mxu0 0.0
  %2298 = vmatpush2.msra.mxu0 0.0
  %2299 = vmatprep.subr.mxu0 0.0
  %2300 = vmatpush2.msra.mxu0 0.0
  %2301 = vmatprep.subr.mxu0 0.0
  %2302 = vmatpush2.msra.mxu0 0.0
  %2303 = vmatprep.subr.mxu0 0.0
  %2304 = vmatpush2.msra.mxu0 0.0
  %2305 = vmatprep.subr.mxu0 0.0
  %2306 = vmatpush2.msra.mxu0 0.0
  %2307 = vmatprep.subr.mxu0 0.0
  %2308 = vmatpush2.msra.mxu0 0.0
  %2309 = vmatprep.subr.mxu0 0.0
  %2310 = vmatpush2.msra.mxu0 0.0
  %2311 = vmatprep.subr.mxu0 0.0
  %2312 = vmatpush2.msra.mxu0 0.0
  %2313 = vmatprep.subr.mxu0 0.0
  %2314 = vmatpush2.msra.mxu0 0.0
  %2315 = vmatprep.subr.mxu0 0.0
  %2316 = vmatpush2.msra.mxu0 0.0
  %2317 = vmatprep.subr.mxu0 0.0
  %2318 = vmatpush2.msra.mxu0 0.0
  %2319 = vmatprep.mubr.f32.mxu0 0.0
  %2320 = vmatmul.mubr.f32.gmra.mxu0 %v2253
  %v2321 = vpop.f32.mrf.mxu0
  %v2322 = vadd.f32 0.0, %v2321
  %v2323 = vpop.f32.mrf.mxu0
  %2324 = vdwg.mxu0
  %v2325 = vadd.f32 %v2247, %v2322
  %v2326 = vadd.f32 %v2325, %v849
  %v2327 = vxor.u32 %v2326, 2147483648
  %v2328 = vmul.f32 %v2327, 1.442695
  %v2329 = vpow.pop %v2328
  %v2330 = vadd.f32 %v2329, 1.0
  %v2331 = vrcp.pop %v2330
  %v2332 = vmul.f32 1.0, %v2331
  %2333 = vmatprep.subr.mxu0 0.0
  %2334 = vmatpush1.msra.mxu0 0.0
  %2335 = vmatprep.subr.mxu0 0.0
  %2336 = vmatpush1.msra.mxu0 0.0
  %2337 = vmatprep.subr.mxu0 0.0
  %2338 = vmatpush1.msra.mxu0 0.0
  %2339 = vmatprep.subr.mxu0 0.0
  %2340 = vmatpush1.msra.mxu0 0.0
  %2341 = vmatprep.subr.mxu0 0.0
  %2342 = vmatpush1.msra.mxu0 0.0
  %2343 = vmatprep.subr.mxu0 0.0
  %2344 = vmatpush1.msra.mxu0 0.0
  %2345 = vmatprep.subr.mxu0 0.0
  %2346 = vmatpush1.msra.mxu0 0.0
  %2347 = vmatprep.subr.mxu0 0.0
  %2348 = vmatpush1.msra.mxu0 0.0
  %2349 = vmatprep.subr.mxu0 0.0
  %2350 = vmatpush1.msra.mxu0 0.0
  %2351 = vmatprep.subr.mxu0 0.0
  %2352 = vmatpush1.msra.mxu0 0.0
  %2353 = vmatprep.subr.mxu0 0.0
  %2354 = vmatpush1.msra.mxu0 0.0
  %2355 = vmatprep.subr.mxu0 0.0
  %2356 = vmatpush1.msra.mxu0 0.0
  %2357 = vmatprep.subr.mxu0 0.0
  %2358 = vmatpush1.msra.mxu0 %v500
  %2359 = vmatprep.subr.mxu0 0.0
  %2360 = vmatpush1.msra.mxu0 %v499
  %2361 = vmatprep.subr.mxu0 0.0
  %2362 = vmatpush1.msra.mxu0 %v498
  %2363 = vmatprep.subr.mxu0 0.0
  %2364 = vmatpush1.msra.mxu0 %v497
  %2365 = vmatprep.subr.mxu0 0.0
  %2366 = vmatpush2.msra.mxu0 0.0
  %2367 = vmatprep.subr.mxu0 0.0
  %2368 = vmatpush2.msra.mxu0 0.0
  %2369 = vmatprep.subr.mxu0 0.0
  %2370 = vmatpush2.msra.mxu0 0.0
  %2371 = vmatprep.subr.mxu0 0.0
  %2372 = vmatpush2.msra.mxu0 0.0
  %2373 = vmatprep.subr.mxu0 0.0
  %2374 = vmatpush2.msra.mxu0 0.0
  %2375 = vmatprep.subr.mxu0 0.0
  %2376 = vmatpush2.msra.mxu0 0.0
  %2377 = vmatprep.subr.mxu0 0.0
  %2378 = vmatpush2.msra.mxu0 0.0
  %2379 = vmatprep.subr.mxu0 0.0
  %2380 = vmatpush2.msra.mxu0 0.0
  %2381 = vmatprep.subr.mxu0 0.0
  %2382 = vmatpush2.msra.mxu0 0.0
  %2383 = vmatprep.subr.mxu0 0.0
  %2384 = vmatpush2.msra.mxu0 0.0
  %2385 = vmatprep.subr.mxu0 0.0
  %2386 = vmatpush2.msra.mxu0 0.0
  %2387 = vmatprep.subr.mxu0 0.0
  %2388 = vmatpush2.msra.mxu0 0.0
  %2389 = vmatprep.subr.mxu0 0.0
  %2390 = vmatpush2.msra.mxu0 0.0
  %2391 = vmatprep.subr.mxu0 0.0
  %2392 = vmatpush2.msra.mxu0 0.0
  %2393 = vmatprep.subr.mxu0 0.0
  %2394 = vmatpush2.msra.mxu0 0.0
  %2395 = vmatprep.subr.mxu0 0.0
  %2396 = vmatpush2.msra.mxu0 0.0
  %2397 = vmatprep.mubr.f32.mxu0 0.0
  %2398 = vmatmul.mubr.f32.gmra.mxu0 %v2253
  %v2399 = vpop.f32.mrf.mxu0
  %v2400 = vadd.f32 0.0, %v2399
  %v2401 = vpop.f32.mrf.mxu0
  %2402 = vdwg.mxu0
  %v2403 = vadd.f32 %v2249, %v2400
  %v2404 = vadd.f32 %v2403, %v933
  %v2405 = vxor.u32 %v2404, 2147483648
  %v2406 = vmul.f32 %v2405, 1.442695
  %v2407 = vpow.pop %v2406
  %v2408 = vadd.f32 %v2407, 1.0
  %v2409 = vrcp.pop %v2408
  %v2410 = vmul.f32 1.0, %v2409
  %2411 = vmatprep.subr.mxu0 0.0
  %2412 = vmatpush1.msra.mxu0 0.0
  %2413 = vmatprep.subr.mxu0 0.0
  %2414 = vmatpush1.msra.mxu0 0.0
  %2415 = vmatprep.subr.mxu0 0.0
  %2416 = vmatpush1.msra.mxu0 0.0
  %2417 = vmatprep.subr.mxu0 0.0
  %2418 = vmatpush1.msra.mxu0 0.0
  %2419 = vmatprep.subr.mxu0 0.0
  %2420 = vmatpush1.msra.mxu0 0.0
  %2421 = vmatprep.subr.mxu0 0.0
  %2422 = vmatpush1.msra.mxu0 0.0
  %2423 = vmatprep.subr.mxu0 0.0
  %2424 = vmatpush1.msra.mxu0 0.0
  %2425 = vmatprep.subr.mxu0 0.0
  %2426 = vmatpush1.msra.mxu0 0.0
  %2427 = vmatprep.subr.mxu0 0.0
  %2428 = vmatpush1.msra.mxu0 0.0
  %2429 = vmatprep.subr.mxu0 0.0
  %2430 = vmatpush1.msra.mxu0 0.0
  %2431 = vmatprep.subr.mxu0 0.0
  %2432 = vmatpush1.msra.mxu0 0.0
  %2433 = vmatprep.subr.mxu0 0.0
  %2434 = vmatpush1.msra.mxu0 0.0
  %2435 = vmatprep.subr.mxu0 0.0
  %2436 = vmatpush1.msra.mxu0 %v505
  %2437 = vmatprep.subr.mxu0 0.0
  %2438 = vmatpush1.msra.mxu0 %v504
  %2439 = vmatprep.subr.mxu0 0.0
  %2440 = vmatpush1.msra.mxu0 %v503
  %2441 = vmatprep.subr.mxu0 0.0
  %2442 = vmatpush1.msra.mxu0 %v502
  %2443 = vmatprep.subr.mxu0 0.0
  %2444 = vmatpush2.msra.mxu0 0.0
  %2445 = vmatprep.subr.mxu0 0.0
  %2446 = vmatpush2.msra.mxu0 0.0
  %2447 = vmatprep.subr.mxu0 0.0
  %2448 = vmatpush2.msra.mxu0 0.0
  %2449 = vmatprep.subr.mxu0 0.0
  %2450 = vmatpush2.msra.mxu0 0.0
  %2451 = vmatprep.subr.mxu0 0.0
  %2452 = vmatpush2.msra.mxu0 0.0
  %2453 = vmatprep.subr.mxu0 0.0
  %2454 = vmatpush2.msra.mxu0 0.0
  %2455 = vmatprep.subr.mxu0 0.0
  %2456 = vmatpush2.msra.mxu0 0.0
  %2457 = vmatprep.subr.mxu0 0.0
  %2458 = vmatpush2.msra.mxu0 0.0
  %2459 = vmatprep.subr.mxu0 0.0
  %2460 = vmatpush2.msra.mxu0 0.0
  %2461 = vmatprep.subr.mxu0 0.0
  %2462 = vmatpush2.msra.mxu0 0.0
  %2463 = vmatprep.subr.mxu0 0.0
  %2464 = vmatpush2.msra.mxu0 0.0
  %2465 = vmatprep.subr.mxu0 0.0
  %2466 = vmatpush2.msra.mxu0 0.0
  %2467 = vmatprep.subr.mxu0 0.0
  %2468 = vmatpush2.msra.mxu0 0.0
  %2469 = vmatprep.subr.mxu0 0.0
  %2470 = vmatpush2.msra.mxu0 0.0
  %2471 = vmatprep.subr.mxu0 0.0
  %2472 = vmatpush2.msra.mxu0 0.0
  %2473 = vmatprep.subr.mxu0 0.0
  %2474 = vmatpush2.msra.mxu0 0.0
  %2475 = vmatprep.mubr.f32.mxu0 0.0
  %2476 = vmatmul.mubr.f32.gmra.mxu0 %v2253
  %v2477 = vpop.f32.mrf.mxu0
  %v2478 = vadd.f32 %v946, %v2477
  %v2479 = vpop.f32.mrf.mxu0
  %2480 = vdwg.mxu0
  %v2481 = vmul.f32 %v2332, %v2478
  %v2482 = vadd.f32 %v2251, %v2481
  %v2483 = vtanh.pop %v2482
  %v2484 = vsub.f32 1.0, %v2410
  %v2485 = vmul.f32 %v2484, %v2483
  %v2486 = vmul.f32 %v2410, %v1999
  %v2487 = vadd.f32 %v2485, %v2486
  %s2488 = scalar_lea.vmem [#allocation4], 24
  %2489 = vst.msk [vmem:[%s2488] sm:$0xff] %vm63, %v2245
  %s2490 = scalar_lea.vmem [#allocation5], 32
  %2491 = vst.msk [vmem:[%s2490] sm:$0xff] %vm63, %v2487
  %s2492 = scalar_lea.vmem [#allocation2], 32
  %v2493 = vld [vmem:[%s2492] sm:$0xff]
  %s2494 = scalar_lea.vmem [#allocation2], 96
  %v2495 = vld [vmem:[%s2494] sm:$0xff]
  %s2496 = scalar_lea.vmem [#allocation2], 160
  %v2497 = vld [vmem:[%s2496] sm:$0xff]
  %v2499 = vsel %vm63, %v2245, 0
  %2501 = vmatprep.subr.mxu0 0.0
  %2502 = vmatpush1.msra.mxu0 0.0
  %2503 = vmatprep.subr.mxu0 0.0
  %2504 = vmatpush1.msra.mxu0 0.0
  %2505 = vmatprep.subr.mxu0 0.0
  %2506 = vmatpush1.msra.mxu0 0.0
  %2507 = vmatprep.subr.mxu0 0.0
  %2508 = vmatpush1.msra.mxu0 0.0
  %2509 = vmatprep.subr.mxu0 0.0
  %2510 = vmatpush1.msra.mxu0 0.0
  %2511 = vmatprep.subr.mxu0 0.0
  %2512 = vmatpush1.msra.mxu0 0.0
  %2513 = vmatprep.subr.mxu0 0.0
  %2514 = vmatpush1.msra.mxu0 0.0
  %2515 = vmatprep.subr.mxu0 0.0
  %2516 = vmatpush1.msra.mxu0 0.0
  %2517 = vmatprep.subr.mxu0 0.0
  %2518 = vmatpush1.msra.mxu0 0.0
  %2519 = vmatprep.subr.mxu0 0.0
  %2520 = vmatpush1.msra.mxu0 0.0
  %2521 = vmatprep.subr.mxu0 0.0
  %2522 = vmatpush1.msra.mxu0 0.0
  %2523 = vmatprep.subr.mxu0 0.0
  %2524 = vmatpush1.msra.mxu0 0.0
  %2525 = vmatprep.subr.mxu0 0.0
  %2526 = vmatpush1.msra.mxu0 %v476
  %2527 = vmatprep.subr.mxu0 0.0
  %2528 = vmatpush1.msra.mxu0 %v475
  %2529 = vmatprep.subr.mxu0 0.0
  %2530 = vmatpush1.msra.mxu0 %v474
  %2531 = vmatprep.subr.mxu0 0.0
  %2532 = vmatpush1.msra.mxu0 %v473
  %2533 = vmatprep.subr.mxu0 0.0
  %2534 = vmatpush2.msra.mxu0 0.0
  %2535 = vmatprep.subr.mxu0 0.0
  %2536 = vmatpush2.msra.mxu0 0.0
  %2537 = vmatprep.subr.mxu0 0.0
  %2538 = vmatpush2.msra.mxu0 0.0
  %2539 = vmatprep.subr.mxu0 0.0
  %2540 = vmatpush2.msra.mxu0 0.0
  %2541 = vmatprep.subr.mxu0 0.0
  %2542 = vmatpush2.msra.mxu0 0.0
  %2543 = vmatprep.subr.mxu0 0.0
  %2544 = vmatpush2.msra.mxu0 0.0
  %2545 = vmatprep.subr.mxu0 0.0
  %2546 = vmatpush2.msra.mxu0 0.0
  %2547 = vmatprep.subr.mxu0 0.0
  %2548 = vmatpush2.msra.mxu0 0.0
  %2549 = vmatprep.subr.mxu0 0.0
  %2550 = vmatpush2.msra.mxu0 0.0
  %2551 = vmatprep.subr.mxu0 0.0
  %2552 = vmatpush2.msra.mxu0 0.0
  %2553 = vmatprep.subr.mxu0 0.0
  %2554 = vmatpush2.msra.mxu0 0.0
  %2555 = vmatprep.subr.mxu0 0.0
  %2556 = vmatpush2.msra.mxu0 0.0
  %2557 = vmatprep.subr.mxu0 0.0
  %2558 = vmatpush2.msra.mxu0 0.0
  %2559 = vmatprep.subr.mxu0 0.0
  %2560 = vmatpush2.msra.mxu0 0.0
  %2561 = vmatprep.subr.mxu0 0.0
  %2562 = vmatpush2.msra.mxu0 0.0
  %2563 = vmatprep.subr.mxu0 0.0
  %2564 = vmatpush2.msra.mxu0 0.0
  %2565 = vmatprep.mubr.f32.mxu0 0.0
  %2566 = vmatmul.mubr.f32.gmra.mxu0 %v2499
  %v2567 = vpop.f32.mrf.mxu0
  %v2568 = vadd.f32 0.0, %v2567
  %v2569 = vpop.f32.mrf.mxu0
  %2570 = vdwg.mxu0
  %v2571 = vadd.f32 %v2493, %v2568
  %v2572 = vadd.f32 %v2571, %v592
  %v2573 = vxor.u32 %v2572, 2147483648
  %v2574 = vmul.f32 %v2573, 1.442695
  %v2575 = vpow.pop %v2574
  %v2576 = vadd.f32 %v2575, 1.0
  %v2577 = vrcp.pop %v2576
  %v2578 = vmul.f32 1.0, %v2577
  %2579 = vmatprep.subr.mxu0 0.0
  %2580 = vmatpush1.msra.mxu0 0.0
  %2581 = vmatprep.subr.mxu0 0.0
  %2582 = vmatpush1.msra.mxu0 0.0
  %2583 = vmatprep.subr.mxu0 0.0
  %2584 = vmatpush1.msra.mxu0 0.0
  %2585 = vmatprep.subr.mxu0 0.0
  %2586 = vmatpush1.msra.mxu0 0.0
  %2587 = vmatprep.subr.mxu0 0.0
  %2588 = vmatpush1.msra.mxu0 0.0
  %2589 = vmatprep.subr.mxu0 0.0
  %2590 = vmatpush1.msra.mxu0 0.0
  %2591 = vmatprep.subr.mxu0 0.0
  %2592 = vmatpush1.msra.mxu0 0.0
  %2593 = vmatprep.subr.mxu0 0.0
  %2594 = vmatpush1.msra.mxu0 0.0
  %2595 = vmatprep.subr.mxu0 0.0
  %2596 = vmatpush1.msra.mxu0 0.0
  %2597 = vmatprep.subr.mxu0 0.0
  %2598 = vmatpush1.msra.mxu0 0.0
  %2599 = vmatprep.subr.mxu0 0.0
  %2600 = vmatpush1.msra.mxu0 0.0
  %2601 = vmatprep.subr.mxu0 0.0
  %2602 = vmatpush1.msra.mxu0 0.0
  %2603 = vmatprep.subr.mxu0 0.0
  %2604 = vmatpush1.msra.mxu0 %v481
  %2605 = vmatprep.subr.mxu0 0.0
  %2606 = vmatpush1.msra.mxu0 %v480
  %2607 = vmatprep.subr.mxu0 0.0
  %2608 = vmatpush1.msra.mxu0 %v479
  %2609 = vmatprep.subr.mxu0 0.0
  %2610 = vmatpush1.msra.mxu0 %v478
  %2611 = vmatprep.subr.mxu0 0.0
  %2612 = vmatpush2.msra.mxu0 0.0
  %2613 = vmatprep.subr.mxu0 0.0
  %2614 = vmatpush2.msra.mxu0 0.0
  %2615 = vmatprep.subr.mxu0 0.0
  %2616 = vmatpush2.msra.mxu0 0.0
  %2617 = vmatprep.subr.mxu0 0.0
  %2618 = vmatpush2.msra.mxu0 0.0
  %2619 = vmatprep.subr.mxu0 0.0
  %2620 = vmatpush2.msra.mxu0 0.0
  %2621 = vmatprep.subr.mxu0 0.0
  %2622 = vmatpush2.msra.mxu0 0.0
  %2623 = vmatprep.subr.mxu0 0.0
  %2624 = vmatpush2.msra.mxu0 0.0
  %2625 = vmatprep.subr.mxu0 0.0
  %2626 = vmatpush2.msra.mxu0 0.0
  %2627 = vmatprep.subr.mxu0 0.0
  %2628 = vmatpush2.msra.mxu0 0.0
  %2629 = vmatprep.subr.mxu0 0.0
  %2630 = vmatpush2.msra.mxu0 0.0
  %2631 = vmatprep.subr.mxu0 0.0
  %2632 = vmatpush2.msra.mxu0 0.0
  %2633 = vmatprep.subr.mxu0 0.0
  %2634 = vmatpush2.msra.mxu0 0.0
  %2635 = vmatprep.subr.mxu0 0.0
  %2636 = vmatpush2.msra.mxu0 0.0
  %2637 = vmatprep.subr.mxu0 0.0
  %2638 = vmatpush2.msra.mxu0 0.0
  %2639 = vmatprep.subr.mxu0 0.0
  %2640 = vmatpush2.msra.mxu0 0.0
  %2641 = vmatprep.subr.mxu0 0.0
  %2642 = vmatpush2.msra.mxu0 0.0
  %2643 = vmatprep.mubr.f32.mxu0 0.0
  %2644 = vmatmul.mubr.f32.gmra.mxu0 %v2499
  %v2645 = vpop.f32.mrf.mxu0
  %v2646 = vadd.f32 0.0, %v2645
  %v2647 = vpop.f32.mrf.mxu0
  %2648 = vdwg.mxu0
  %v2649 = vadd.f32 %v2495, %v2646
  %v2650 = vadd.f32 %v2649, %v676
  %v2651 = vxor.u32 %v2650, 2147483648
  %v2652 = vmul.f32 %v2651, 1.442695
  %v2653 = vpow.pop %v2652
  %v2654 = vadd.f32 %v2653, 1.0
  %v2655 = vrcp.pop %v2654
  %v2656 = vmul.f32 1.0, %v2655
  %2657 = vmatprep.subr.mxu0 0.0
  %2658 = vmatpush1.msra.mxu0 0.0
  %2659 = vmatprep.subr.mxu0 0.0
  %2660 = vmatpush1.msra.mxu0 0.0
  %2661 = vmatprep.subr.mxu0 0.0
  %2662 = vmatpush1.msra.mxu0 0.0
  %2663 = vmatprep.subr.mxu0 0.0
  %2664 = vmatpush1.msra.mxu0 0.0
  %2665 = vmatprep.subr.mxu0 0.0
  %2666 = vmatpush1.msra.mxu0 0.0
  %2667 = vmatprep.subr.mxu0 0.0
  %2668 = vmatpush1.msra.mxu0 0.0
  %2669 = vmatprep.subr.mxu0 0.0
  %2670 = vmatpush1.msra.mxu0 0.0
  %2671 = vmatprep.subr.mxu0 0.0
  %2672 = vmatpush1.msra.mxu0 0.0
  %2673 = vmatprep.subr.mxu0 0.0
  %2674 = vmatpush1.msra.mxu0 0.0
  %2675 = vmatprep.subr.mxu0 0.0
  %2676 = vmatpush1.msra.mxu0 0.0
  %2677 = vmatprep.subr.mxu0 0.0
  %2678 = vmatpush1.msra.mxu0 0.0
  %2679 = vmatprep.subr.mxu0 0.0
  %2680 = vmatpush1.msra.mxu0 0.0
  %2681 = vmatprep.subr.mxu0 0.0
  %2682 = vmatpush1.msra.mxu0 %v486
  %2683 = vmatprep.subr.mxu0 0.0
  %2684 = vmatpush1.msra.mxu0 %v485
  %2685 = vmatprep.subr.mxu0 0.0
  %2686 = vmatpush1.msra.mxu0 %v484
  %2687 = vmatprep.subr.mxu0 0.0
  %2688 = vmatpush1.msra.mxu0 %v483
  %2689 = vmatprep.subr.mxu0 0.0
  %2690 = vmatpush2.msra.mxu0 0.0
  %2691 = vmatprep.subr.mxu0 0.0
  %2692 = vmatpush2.msra.mxu0 0.0
  %2693 = vmatprep.subr.mxu0 0.0
  %2694 = vmatpush2.msra.mxu0 0.0
  %2695 = vmatprep.subr.mxu0 0.0
  %2696 = vmatpush2.msra.mxu0 0.0
  %2697 = vmatprep.subr.mxu0 0.0
  %2698 = vmatpush2.msra.mxu0 0.0
  %2699 = vmatprep.subr.mxu0 0.0
  %2700 = vmatpush2.msra.mxu0 0.0
  %2701 = vmatprep.subr.mxu0 0.0
  %2702 = vmatpush2.msra.mxu0 0.0
  %2703 = vmatprep.subr.mxu0 0.0
  %2704 = vmatpush2.msra.mxu0 0.0
  %2705 = vmatprep.subr.mxu0 0.0
  %2706 = vmatpush2.msra.mxu0 0.0
  %2707 = vmatprep.subr.mxu0 0.0
  %2708 = vmatpush2.msra.mxu0 0.0
  %2709 = vmatprep.subr.mxu0 0.0
  %2710 = vmatpush2.msra.mxu0 0.0
  %2711 = vmatprep.subr.mxu0 0.0
  %2712 = vmatpush2.msra.mxu0 0.0
  %2713 = vmatprep.subr.mxu0 0.0
  %2714 = vmatpush2.msra.mxu0 0.0
  %2715 = vmatprep.subr.mxu0 0.0
  %2716 = vmatpush2.msra.mxu0 0.0
  %2717 = vmatprep.subr.mxu0 0.0
  %2718 = vmatpush2.msra.mxu0 0.0
  %2719 = vmatprep.subr.mxu0 0.0
  %2720 = vmatpush2.msra.mxu0 0.0
  %2721 = vmatprep.mubr.f32.mxu0 0.0
  %2722 = vmatmul.mubr.f32.gmra.mxu0 %v2499
  %v2723 = vpop.f32.mrf.mxu0
  %v2724 = vadd.f32 %v689, %v2723
  %v2725 = vpop.f32.mrf.mxu0
  %2726 = vdwg.mxu0
  %v2727 = vmul.f32 %v2578, %v2724
  %v2728 = vadd.f32 %v2497, %v2727
  %v2729 = vtanh.pop %v2728
  %v2730 = vsub.f32 1.0, %v2656
  %v2731 = vmul.f32 %v2730, %v2729
  %v2732 = vmul.f32 %v2656, %v2245
  %v2733 = vadd.f32 %v2731, %v2732
  %s2734 = scalar_lea.vmem [#allocation3], 24
  %v2735 = vld [vmem:[%s2734] sm:$0xff]
  %s2736 = scalar_lea.vmem [#allocation3], 88
  %v2737 = vld [vmem:[%s2736] sm:$0xff]
  %s2738 = scalar_lea.vmem [#allocation3], 152
  %v2739 = vld [vmem:[%s2738] sm:$0xff]
  %v2741 = vsel %vm63, %v2487, 0
  %2743 = vmatprep.subr.mxu0 0.0
  %2744 = vmatpush1.msra.mxu0 0.0
  %2745 = vmatprep.subr.mxu0 0.0
  %2746 = vmatpush1.msra.mxu0 0.0
  %2747 = vmatprep.subr.mxu0 0.0
  %2748 = vmatpush1.msra.mxu0 0.0
  %2749 = vmatprep.subr.mxu0 0.0
  %2750 = vmatpush1.msra.mxu0 0.0
  %2751 = vmatprep.subr.mxu0 0.0
  %2752 = vmatpush1.msra.mxu0 0.0
  %2753 = vmatprep.subr.mxu0 0.0
  %2754 = vmatpush1.msra.mxu0 0.0
  %2755 = vmatprep.subr.mxu0 0.0
  %2756 = vmatpush1.msra.mxu0 0.0
  %2757 = vmatprep.subr.mxu0 0.0
  %2758 = vmatpush1.msra.mxu0 0.0
  %2759 = vmatprep.subr.mxu0 0.0
  %2760 = vmatpush1.msra.mxu0 0.0
  %2761 = vmatprep.subr.mxu0 0.0
  %2762 = vmatpush1.msra.mxu0 0.0
  %2763 = vmatprep.subr.mxu0 0.0
  %2764 = vmatpush1.msra.mxu0 0.0
  %2765 = vmatprep.subr.mxu0 0.0
  %2766 = vmatpush1.msra.mxu0 0.0
  %2767 = vmatprep.subr.mxu0 0.0
  %2768 = vmatpush1.msra.mxu0 %v495
  %2769 = vmatprep.subr.mxu0 0.0
  %2770 = vmatpush1.msra.mxu0 %v494
  %2771 = vmatprep.subr.mxu0 0.0
  %2772 = vmatpush1.msra.mxu0 %v493
  %2773 = vmatprep.subr.mxu0 0.0
  %2774 = vmatpush1.msra.mxu0 %v492
  %2775 = vmatprep.subr.mxu0 0.0
  %2776 = vmatpush2.msra.mxu0 0.0
  %2777 = vmatprep.subr.mxu0 0.0
  %2778 = vmatpush2.msra.mxu0 0.0
  %2779 = vmatprep.subr.mxu0 0.0
  %2780 = vmatpush2.msra.mxu0 0.0
  %2781 = vmatprep.subr.mxu0 0.0
  %2782 = vmatpush2.msra.mxu0 0.0
  %2783 = vmatprep.subr.mxu0 0.0
  %2784 = vmatpush2.msra.mxu0 0.0
  %2785 = vmatprep.subr.mxu0 0.0
  %2786 = vmatpush2.msra.mxu0 0.0
  %2787 = vmatprep.subr.mxu0 0.0
  %2788 = vmatpush2.msra.mxu0 0.0
  %2789 = vmatprep.subr.mxu0 0.0
  %2790 = vmatpush2.msra.mxu0 0.0
  %2791 = vmatprep.subr.mxu0 0.0
  %2792 = vmatpush2.msra.mxu0 0.0
  %2793 = vmatprep.subr.mxu0 0.0
  %2794 = vmatpush2.msra.mxu0 0.0
  %2795 = vmatprep.subr.mxu0 0.0
  %2796 = vmatpush2.msra.mxu0 0.0
  %2797 = vmatprep.subr.mxu0 0.0
  %2798 = vmatpush2.msra.mxu0 0.0
  %2799 = vmatprep.subr.mxu0 0.0
  %2800 = vmatpush2.msra.mxu0 0.0
  %2801 = vmatprep.subr.mxu0 0.0
  %2802 = vmatpush2.msra.mxu0 0.0
  %2803 = vmatprep.subr.mxu0 0.0
  %2804 = vmatpush2.msra.mxu0 0.0
  %2805 = vmatprep.subr.mxu0 0.0
  %2806 = vmatpush2.msra.mxu0 0.0
  %2807 = vmatprep.mubr.f32.mxu0 0.0
  %2808 = vmatmul.mubr.f32.gmra.mxu0 %v2741
  %v2809 = vpop.f32.mrf.mxu0
  %v2810 = vadd.f32 0.0, %v2809
  %v2811 = vpop.f32.mrf.mxu0
  %2812 = vdwg.mxu0
  %v2813 = vadd.f32 %v2735, %v2810
  %v2814 = vadd.f32 %v2813, %v849
  %v2815 = vxor.u32 %v2814, 2147483648
  %v2816 = vmul.f32 %v2815, 1.442695
  %v2817 = vpow.pop %v2816
  %v2818 = vadd.f32 %v2817, 1.0
  %v2819 = vrcp.pop %v2818
  %v2820 = vmul.f32 1.0, %v2819
  %2821 = vmatprep.subr.mxu0 0.0
  %2822 = vmatpush1.msra.mxu0 0.0
  %2823 = vmatprep.subr.mxu0 0.0
  %2824 = vmatpush1.msra.mxu0 0.0
  %2825 = vmatprep.subr.mxu0 0.0
  %2826 = vmatpush1.msra.mxu0 0.0
  %2827 = vmatprep.subr.mxu0 0.0
  %2828 = vmatpush1.msra.mxu0 0.0
  %2829 = vmatprep.subr.mxu0 0.0
  %2830 = vmatpush1.msra.mxu0 0.0
  %2831 = vmatprep.subr.mxu0 0.0
  %2832 = vmatpush1.msra.mxu0 0.0
  %2833 = vmatprep.subr.mxu0 0.0
  %2834 = vmatpush1.msra.mxu0 0.0
  %2835 = vmatprep.subr.mxu0 0.0
  %2836 = vmatpush1.msra.mxu0 0.0
  %2837 = vmatprep.subr.mxu0 0.0
  %2838 = vmatpush1.msra.mxu0 0.0
  %2839 = vmatprep.subr.mxu0 0.0
  %2840 = vmatpush1.msra.mxu0 0.0
  %2841 = vmatprep.subr.mxu0 0.0
  %2842 = vmatpush1.msra.mxu0 0.0
  %2843 = vmatprep.subr.mxu0 0.0
  %2844 = vmatpush1.msra.mxu0 0.0
  %2845 = vmatprep.subr.mxu0 0.0
  %2846 = vmatpush1.msra.mxu0 %v500
  %2847 = vmatprep.subr.mxu0 0.0
  %2848 = vmatpush1.msra.mxu0 %v499
  %2849 = vmatprep.subr.mxu0 0.0
  %2850 = vmatpush1.msra.mxu0 %v498
  %2851 = vmatprep.subr.mxu0 0.0
  %2852 = vmatpush1.msra.mxu0 %v497
  %2853 = vmatprep.subr.mxu0 0.0
  %2854 = vmatpush2.msra.mxu0 0.0
  %2855 = vmatprep.subr.mxu0 0.0
  %2856 = vmatpush2.msra.mxu0 0.0
  %2857 = vmatprep.subr.mxu0 0.0
  %2858 = vmatpush2.msra.mxu0 0.0
  %2859 = vmatprep.subr.mxu0 0.0
  %2860 = vmatpush2.msra.mxu0 0.0
  %2861 = vmatprep.subr.mxu0 0.0
  %2862 = vmatpush2.msra.mxu0 0.0
  %2863 = vmatprep.subr.mxu0 0.0
  %2864 = vmatpush2.msra.mxu0 0.0
  %2865 = vmatprep.subr.mxu0 0.0
  %2866 = vmatpush2.msra.mxu0 0.0
  %2867 = vmatprep.subr.mxu0 0.0
  %2868 = vmatpush2.msra.mxu0 0.0
  %2869 = vmatprep.subr.mxu0 0.0
  %2870 = vmatpush2.msra.mxu0 0.0
  %2871 = vmatprep.subr.mxu0 0.0
  %2872 = vmatpush2.msra.mxu0 0.0
  %2873 = vmatprep.subr.mxu0 0.0
  %2874 = vmatpush2.msra.mxu0 0.0
  %2875 = vmatprep.subr.mxu0 0.0
  %2876 = vmatpush2.msra.mxu0 0.0
  %2877 = vmatprep.subr.mxu0 0.0
  %2878 = vmatpush2.msra.mxu0 0.0
  %2879 = vmatprep.subr.mxu0 0.0
  %2880 = vmatpush2.msra.mxu0 0.0
  %2881 = vmatprep.subr.mxu0 0.0
  %2882 = vmatpush2.msra.mxu0 0.0
  %2883 = vmatprep.subr.mxu0 0.0
  %2884 = vmatpush2.msra.mxu0 0.0
  %2885 = vmatprep.mubr.f32.mxu0 0.0
  %2886 = vmatmul.mubr.f32.gmra.mxu0 %v2741
  %v2887 = vpop.f32.mrf.mxu0
  %v2888 = vadd.f32 0.0, %v2887
  %v2889 = vpop.f32.mrf.mxu0
  %2890 = vdwg.mxu0
  %v2891 = vadd.f32 %v2737, %v2888
  %v2892 = vadd.f32 %v2891, %v933
  %v2893 = vxor.u32 %v2892, 2147483648
  %v2894 = vmul.f32 %v2893, 1.442695
  %v2895 = vpow.pop %v2894
  %v2896 = vadd.f32 %v2895, 1.0
  %v2897 = vrcp.pop %v2896
  %v2898 = vmul.f32 1.0, %v2897
  %2899 = vmatprep.subr.mxu0 0.0
  %2900 = vmatpush1.msra.mxu0 0.0
  %2901 = vmatprep.subr.mxu0 0.0
  %2902 = vmatpush1.msra.mxu0 0.0
  %2903 = vmatprep.subr.mxu0 0.0
  %2904 = vmatpush1.msra.mxu0 0.0
  %2905 = vmatprep.subr.mxu0 0.0
  %2906 = vmatpush1.msra.mxu0 0.0
  %2907 = vmatprep.subr.mxu0 0.0
  %2908 = vmatpush1.msra.mxu0 0.0
  %2909 = vmatprep.subr.mxu0 0.0
  %2910 = vmatpush1.msra.mxu0 0.0
  %2911 = vmatprep.subr.mxu0 0.0
  %2912 = vmatpush1.msra.mxu0 0.0
  %2913 = vmatprep.subr.mxu0 0.0
  %2914 = vmatpush1.msra.mxu0 0.0
  %2915 = vmatprep.subr.mxu0 0.0
  %2916 = vmatpush1.msra.mxu0 0.0
  %2917 = vmatprep.subr.mxu0 0.0
  %2918 = vmatpush1.msra.mxu0 0.0
  %2919 = vmatprep.subr.mxu0 0.0
  %2920 = vmatpush1.msra.mxu0 0.0
  %2921 = vmatprep.subr.mxu0 0.0
  %2922 = vmatpush1.msra.mxu0 0.0
  %2923 = vmatprep.subr.mxu0 0.0
  %2924 = vmatpush1.msra.mxu0 %v505
  %2925 = vmatprep.subr.mxu0 0.0
  %2926 = vmatpush1.msra.mxu0 %v504
  %2927 = vmatprep.subr.mxu0 0.0
  %2928 = vmatpush1.msra.mxu0 %v503
  %2929 = vmatprep.subr.mxu0 0.0
  %2930 = vmatpush1.msra.mxu0 %v502
  %2931 = vmatprep.subr.mxu0 0.0
  %2932 = vmatpush2.msra.mxu0 0.0
  %2933 = vmatprep.subr.mxu0 0.0
  %2934 = vmatpush2.msra.mxu0 0.0
  %2935 = vmatprep.subr.mxu0 0.0
  %2936 = vmatpush2.msra.mxu0 0.0
  %2937 = vmatprep.subr.mxu0 0.0
  %2938 = vmatpush2.msra.mxu0 0.0
  %2939 = vmatprep.subr.mxu0 0.0
  %2940 = vmatpush2.msra.mxu0 0.0
  %2941 = vmatprep.subr.mxu0 0.0
  %2942 = vmatpush2.msra.mxu0 0.0
  %2943 = vmatprep.subr.mxu0 0.0
  %2944 = vmatpush2.msra.mxu0 0.0
  %2945 = vmatprep.subr.mxu0 0.0
  %2946 = vmatpush2.msra.mxu0 0.0
  %2947 = vmatprep.subr.mxu0 0.0
  %2948 = vmatpush2.msra.mxu0 0.0
  %2949 = vmatprep.subr.mxu0 0.0
  %2950 = vmatpush2.msra.mxu0 0.0
  %2951 = vmatprep.subr.mxu0 0.0
  %2952 = vmatpush2.msra.mxu0 0.0
  %2953 = vmatprep.subr.mxu0 0.0
  %2954 = vmatpush2.msra.mxu0 0.0
  %2955 = vmatprep.subr.mxu0 0.0
  %2956 = vmatpush2.msra.mxu0 0.0
  %2957 = vmatprep.subr.mxu0 0.0
  %2958 = vmatpush2.msra.mxu0 0.0
  %2959 = vmatprep.subr.mxu0 0.0
  %2960 = vmatpush2.msra.mxu0 0.0
  %2961 = vmatprep.subr.mxu0 0.0
  %2962 = vmatpush2.msra.mxu0 0.0
  %2963 = vmatprep.mubr.f32.mxu0 0.0
  %2964 = vmatmul.mubr.f32.gmra.mxu0 %v2741
  %v2965 = vpop.f32.mrf.mxu0
  %v2966 = vadd.f32 %v946, %v2965
  %v2967 = vpop.f32.mrf.mxu0
  %2968 = vdwg.mxu0
  %v2969 = vmul.f32 %v2820, %v2966
  %v2970 = vadd.f32 %v2739, %v2969
  %v2971 = vtanh.pop %v2970
  %v2972 = vsub.f32 1.0, %v2898
  %v2973 = vmul.f32 %v2972, %v2971
  %v2974 = vmul.f32 %v2898, %v2487
  %v2975 = vadd.f32 %v2973, %v2974
  %s2976 = scalar_lea.vmem [#allocation4], 32
  %2977 = vst.msk [vmem:[%s2976] sm:$0xff] %vm63, %v2733
  %s2978 = scalar_lea.vmem [#allocation5], 24
  %2979 = vst.msk [vmem:[%s2978] sm:$0xff] %vm63, %v2975
  %s2980 = scalar_lea.vmem [#allocation2], 40
  %v2981 = vld [vmem:[%s2980] sm:$0xff]
  %s2982 = scalar_lea.vmem [#allocation2], 104
  %v2983 = vld [vmem:[%s2982] sm:$0xff]
  %s2984 = scalar_lea.vmem [#allocation2], 168
  %v2985 = vld [vmem:[%s2984] sm:$0xff]
  %v2987 = vsel %vm63, %v2733, 0
  %2989 = vmatprep.subr.mxu0 0.0
  %2990 = vmatpush1.msra.mxu0 0.0
  %2991 = vmatprep.subr.mxu0 0.0
  %2992 = vmatpush1.msra.mxu0 0.0
  %2993 = vmatprep.subr.mxu0 0.0
  %2994 = vmatpush1.msra.mxu0 0.0
  %2995 = vmatprep.subr.mxu0 0.0
  %2996 = vmatpush1.msra.mxu0 0.0
  %2997 = vmatprep.subr.mxu0 0.0
  %2998 = vmatpush1.msra.mxu0 0.0
  %2999 = vmatprep.subr.mxu0 0.0
  %3000 = vmatpush1.msra.mxu0 0.0
  %3001 = vmatprep.subr.mxu0 0.0
  %3002 = vmatpush1.msra.mxu0 0.0
  %3003 = vmatprep.subr.mxu0 0.0
  %3004 = vmatpush1.msra.mxu0 0.0
  %3005 = vmatprep.subr.mxu0 0.0
  %3006 = vmatpush1.msra.mxu0 0.0
  %3007 = vmatprep.subr.mxu0 0.0
  %3008 = vmatpush1.msra.mxu0 0.0
  %3009 = vmatprep.subr.mxu0 0.0
  %3010 = vmatpush1.msra.mxu0 0.0
  %3011 = vmatprep.subr.mxu0 0.0
  %3012 = vmatpush1.msra.mxu0 0.0
  %3013 = vmatprep.subr.mxu0 0.0
  %3014 = vmatpush1.msra.mxu0 %v476
  %3015 = vmatprep.subr.mxu0 0.0
  %3016 = vmatpush1.msra.mxu0 %v475
  %3017 = vmatprep.subr.mxu0 0.0
  %3018 = vmatpush1.msra.mxu0 %v474
  %3019 = vmatprep.subr.mxu0 0.0
  %3020 = vmatpush1.msra.mxu0 %v473
  %3021 = vmatprep.subr.mxu0 0.0
  %3022 = vmatpush2.msra.mxu0 0.0
  %3023 = vmatprep.subr.mxu0 0.0
  %3024 = vmatpush2.msra.mxu0 0.0
  %3025 = vmatprep.subr.mxu0 0.0
  %3026 = vmatpush2.msra.mxu0 0.0
  %3027 = vmatprep.subr.mxu0 0.0
  %3028 = vmatpush2.msra.mxu0 0.0
  %3029 = vmatprep.subr.mxu0 0.0
  %3030 = vmatpush2.msra.mxu0 0.0
  %3031 = vmatprep.subr.mxu0 0.0
  %3032 = vmatpush2.msra.mxu0 0.0
  %3033 = vmatprep.subr.mxu0 0.0
  %3034 = vmatpush2.msra.mxu0 0.0
  %3035 = vmatprep.subr.mxu0 0.0
  %3036 = vmatpush2.msra.mxu0 0.0
  %3037 = vmatprep.subr.mxu0 0.0
  %3038 = vmatpush2.msra.mxu0 0.0
  %3039 = vmatprep.subr.mxu0 0.0
  %3040 = vmatpush2.msra.mxu0 0.0
  %3041 = vmatprep.subr.mxu0 0.0
  %3042 = vmatpush2.msra.mxu0 0.0
  %3043 = vmatprep.subr.mxu0 0.0
  %3044 = vmatpush2.msra.mxu0 0.0
  %3045 = vmatprep.subr.mxu0 0.0
  %3046 = vmatpush2.msra.mxu0 0.0
  %3047 = vmatprep.subr.mxu0 0.0
  %3048 = vmatpush2.msra.mxu0 0.0
  %3049 = vmatprep.subr.mxu0 0.0
  %3050 = vmatpush2.msra.mxu0 0.0
  %3051 = vmatprep.subr.mxu0 0.0
  %3052 = vmatpush2.msra.mxu0 0.0
  %3053 = vmatprep.mubr.f32.mxu0 0.0
  %3054 = vmatmul.mubr.f32.gmra.mxu0 %v2987
  %v3055 = vpop.f32.mrf.mxu0
  %v3056 = vadd.f32 0.0, %v3055
  %v3057 = vpop.f32.mrf.mxu0
  %3058 = vdwg.mxu0
  %v3059 = vadd.f32 %v2981, %v3056
  %v3060 = vadd.f32 %v3059, %v592
  %v3061 = vxor.u32 %v3060, 2147483648
  %v3062 = vmul.f32 %v3061, 1.442695
  %v3063 = vpow.pop %v3062
  %v3064 = vadd.f32 %v3063, 1.0
  %v3065 = vrcp.pop %v3064
  %v3066 = vmul.f32 1.0, %v3065
  %3067 = vmatprep.subr.mxu0 0.0
  %3068 = vmatpush1.msra.mxu0 0.0
  %3069 = vmatprep.subr.mxu0 0.0
  %3070 = vmatpush1.msra.mxu0 0.0
  %3071 = vmatprep.subr.mxu0 0.0
  %3072 = vmatpush1.msra.mxu0 0.0
  %3073 = vmatprep.subr.mxu0 0.0
  %3074 = vmatpush1.msra.mxu0 0.0
  %3075 = vmatprep.subr.mxu0 0.0
  %3076 = vmatpush1.msra.mxu0 0.0
  %3077 = vmatprep.subr.mxu0 0.0
  %3078 = vmatpush1.msra.mxu0 0.0
  %3079 = vmatprep.subr.mxu0 0.0
  %3080 = vmatpush1.msra.mxu0 0.0
  %3081 = vmatprep.subr.mxu0 0.0
  %3082 = vmatpush1.msra.mxu0 0.0
  %3083 = vmatprep.subr.mxu0 0.0
  %3084 = vmatpush1.msra.mxu0 0.0
  %3085 = vmatprep.subr.mxu0 0.0
  %3086 = vmatpush1.msra.mxu0 0.0
  %3087 = vmatprep.subr.mxu0 0.0
  %3088 = vmatpush1.msra.mxu0 0.0
  %3089 = vmatprep.subr.mxu0 0.0
  %3090 = vmatpush1.msra.mxu0 0.0
  %3091 = vmatprep.subr.mxu0 0.0
  %3092 = vmatpush1.msra.mxu0 %v481
  %3093 = vmatprep.subr.mxu0 0.0
  %3094 = vmatpush1.msra.mxu0 %v480
  %3095 = vmatprep.subr.mxu0 0.0
  %3096 = vmatpush1.msra.mxu0 %v479
  %3097 = vmatprep.subr.mxu0 0.0
  %3098 = vmatpush1.msra.mxu0 %v478
  %3099 = vmatprep.subr.mxu0 0.0
  %3100 = vmatpush2.msra.mxu0 0.0
  %3101 = vmatprep.subr.mxu0 0.0
  %3102 = vmatpush2.msra.mxu0 0.0
  %3103 = vmatprep.subr.mxu0 0.0
  %3104 = vmatpush2.msra.mxu0 0.0
  %3105 = vmatprep.subr.mxu0 0.0
  %3106 = vmatpush2.msra.mxu0 0.0
  %3107 = vmatprep.subr.mxu0 0.0
  %3108 = vmatpush2.msra.mxu0 0.0
  %3109 = vmatprep.subr.mxu0 0.0
  %3110 = vmatpush2.msra.mxu0 0.0
  %3111 = vmatprep.subr.mxu0 0.0
  %3112 = vmatpush2.msra.mxu0 0.0
  %3113 = vmatprep.subr.mxu0 0.0
  %3114 = vmatpush2.msra.mxu0 0.0
  %3115 = vmatprep.subr.mxu0 0.0
  %3116 = vmatpush2.msra.mxu0 0.0
  %3117 = vmatprep.subr.mxu0 0.0
  %3118 = vmatpush2.msra.mxu0 0.0
  %3119 = vmatprep.subr.mxu0 0.0
  %3120 = vmatpush2.msra.mxu0 0.0
  %3121 = vmatprep.subr.mxu0 0.0
  %3122 = vmatpush2.msra.mxu0 0.0
  %3123 = vmatprep.subr.mxu0 0.0
  %3124 = vmatpush2.msra.mxu0 0.0
  %3125 = vmatprep.subr.mxu0 0.0
  %3126 = vmatpush2.msra.mxu0 0.0
  %3127 = vmatprep.subr.mxu0 0.0
  %3128 = vmatpush2.msra.mxu0 0.0
  %3129 = vmatprep.subr.mxu0 0.0
  %3130 = vmatpush2.msra.mxu0 0.0
  %3131 = vmatprep.mubr.f32.mxu0 0.0
  %3132 = vmatmul.mubr.f32.gmra.mxu0 %v2987
  %v3133 = vpop.f32.mrf.mxu0
  %v3134 = vadd.f32 0.0, %v3133
  %v3135 = vpop.f32.mrf.mxu0
  %3136 = vdwg.mxu0
  %v3137 = vadd.f32 %v2983, %v3134
  %v3138 = vadd.f32 %v3137, %v676
  %v3139 = vxor.u32 %v3138, 2147483648
  %v3140 = vmul.f32 %v3139, 1.442695
  %v3141 = vpow.pop %v3140
  %v3142 = vadd.f32 %v3141, 1.0
  %v3143 = vrcp.pop %v3142
  %v3144 = vmul.f32 1.0, %v3143
  %3145 = vmatprep.subr.mxu0 0.0
  %3146 = vmatpush1.msra.mxu0 0.0
  %3147 = vmatprep.subr.mxu0 0.0
  %3148 = vmatpush1.msra.mxu0 0.0
  %3149 = vmatprep.subr.mxu0 0.0
  %3150 = vmatpush1.msra.mxu0 0.0
  %3151 = vmatprep.subr.mxu0 0.0
  %3152 = vmatpush1.msra.mxu0 0.0
  %3153 = vmatprep.subr.mxu0 0.0
  %3154 = vmatpush1.msra.mxu0 0.0
  %3155 = vmatprep.subr.mxu0 0.0
  %3156 = vmatpush1.msra.mxu0 0.0
  %3157 = vmatprep.subr.mxu0 0.0
  %3158 = vmatpush1.msra.mxu0 0.0
  %3159 = vmatprep.subr.mxu0 0.0
  %3160 = vmatpush1.msra.mxu0 0.0
  %3161 = vmatprep.subr.mxu0 0.0
  %3162 = vmatpush1.msra.mxu0 0.0
  %3163 = vmatprep.subr.mxu0 0.0
  %3164 = vmatpush1.msra.mxu0 0.0
  %3165 = vmatprep.subr.mxu0 0.0
  %3166 = vmatpush1.msra.mxu0 0.0
  %3167 = vmatprep.subr.mxu0 0.0
  %3168 = vmatpush1.msra.mxu0 0.0
  %3169 = vmatprep.subr.mxu0 0.0
  %3170 = vmatpush1.msra.mxu0 %v486
  %3171 = vmatprep.subr.mxu0 0.0
  %3172 = vmatpush1.msra.mxu0 %v485
  %3173 = vmatprep.subr.mxu0 0.0
  %3174 = vmatpush1.msra.mxu0 %v484
  %3175 = vmatprep.subr.mxu0 0.0
  %3176 = vmatpush1.msra.mxu0 %v483
  %3177 = vmatprep.subr.mxu0 0.0
  %3178 = vmatpush2.msra.mxu0 0.0
  %3179 = vmatprep.subr.mxu0 0.0
  %3180 = vmatpush2.msra.mxu0 0.0
  %3181 = vmatprep.subr.mxu0 0.0
  %3182 = vmatpush2.msra.mxu0 0.0
  %3183 = vmatprep.subr.mxu0 0.0
  %3184 = vmatpush2.msra.mxu0 0.0
  %3185 = vmatprep.subr.mxu0 0.0
  %3186 = vmatpush2.msra.mxu0 0.0
  %3187 = vmatprep.subr.mxu0 0.0
  %3188 = vmatpush2.msra.mxu0 0.0
  %3189 = vmatprep.subr.mxu0 0.0
  %3190 = vmatpush2.msra.mxu0 0.0
  %3191 = vmatprep.subr.mxu0 0.0
  %3192 = vmatpush2.msra.mxu0 0.0
  %3193 = vmatprep.subr.mxu0 0.0
  %3194 = vmatpush2.msra.mxu0 0.0
  %3195 = vmatprep.subr.mxu0 0.0
  %3196 = vmatpush2.msra.mxu0 0.0
  %3197 = vmatprep.subr.mxu0 0.0
  %3198 = vmatpush2.msra.mxu0 0.0
  %3199 = vmatprep.subr.mxu0 0.0
  %3200 = vmatpush2.msra.mxu0 0.0
  %3201 = vmatprep.subr.mxu0 0.0
  %3202 = vmatpush2.msra.mxu0 0.0
  %3203 = vmatprep.subr.mxu0 0.0
  %3204 = vmatpush2.msra.mxu0 0.0
  %3205 = vmatprep.subr.mxu0 0.0
  %3206 = vmatpush2.msra.mxu0 0.0
  %3207 = vmatprep.subr.mxu0 0.0
  %3208 = vmatpush2.msra.mxu0 0.0
  %3209 = vmatprep.mubr.f32.mxu0 0.0
  %3210 = vmatmul.mubr.f32.gmra.mxu0 %v2987
  %v3211 = vpop.f32.mrf.mxu0
  %v3212 = vadd.f32 %v689, %v3211
  %v3213 = vpop.f32.mrf.mxu0
  %3214 = vdwg.mxu0
  %v3215 = vmul.f32 %v3066, %v3212
  %v3216 = vadd.f32 %v2985, %v3215
  %v3217 = vtanh.pop %v3216
  %v3218 = vsub.f32 1.0, %v3144
  %v3219 = vmul.f32 %v3218, %v3217
  %v3220 = vmul.f32 %v3144, %v2733
  %v3221 = vadd.f32 %v3219, %v3220
  %s3222 = scalar_lea.vmem [#allocation3], 16
  %v3223 = vld [vmem:[%s3222] sm:$0xff]
  %s3224 = scalar_lea.vmem [#allocation3], 80
  %v3225 = vld [vmem:[%s3224] sm:$0xff]
  %s3226 = scalar_lea.vmem [#allocation3], 144
  %v3227 = vld [vmem:[%s3226] sm:$0xff]
  %v3229 = vsel %vm63, %v2975, 0
  %3231 = vmatprep.subr.mxu0 0.0
  %3232 = vmatpush1.msra.mxu0 0.0
  %3233 = vmatprep.subr.mxu0 0.0
  %3234 = vmatpush1.msra.mxu0 0.0
  %3235 = vmatprep.subr.mxu0 0.0
  %3236 = vmatpush1.msra.mxu0 0.0
  %3237 = vmatprep.subr.mxu0 0.0
  %3238 = vmatpush1.msra.mxu0 0.0
  %3239 = vmatprep.subr.mxu0 0.0
  %3240 = vmatpush1.msra.mxu0 0.0
  %3241 = vmatprep.subr.mxu0 0.0
  %3242 = vmatpush1.msra.mxu0 0.0
  %3243 = vmatprep.subr.mxu0 0.0
  %3244 = vmatpush1.msra.mxu0 0.0
  %3245 = vmatprep.subr.mxu0 0.0
  %3246 = vmatpush1.msra.mxu0 0.0
  %3247 = vmatprep.subr.mxu0 0.0
  %3248 = vmatpush1.msra.mxu0 0.0
  %3249 = vmatprep.subr.mxu0 0.0
  %3250 = vmatpush1.msra.mxu0 0.0
  %3251 = vmatprep.subr.mxu0 0.0
  %3252 = vmatpush1.msra.mxu0 0.0
  %3253 = vmatprep.subr.mxu0 0.0
  %3254 = vmatpush1.msra.mxu0 0.0
  %3255 = vmatprep.subr.mxu0 0.0
  %3256 = vmatpush1.msra.mxu0 %v495
  %3257 = vmatprep.subr.mxu0 0.0
  %3258 = vmatpush1.msra.mxu0 %v494
  %3259 = vmatprep.subr.mxu0 0.0
  %3260 = vmatpush1.msra.mxu0 %v493
  %3261 = vmatprep.subr.mxu0 0.0
  %3262 = vmatpush1.msra.mxu0 %v492
  %3263 = vmatprep.subr.mxu0 0.0
  %3264 = vmatpush2.msra.mxu0 0.0
  %3265 = vmatprep.subr.mxu0 0.0
  %3266 = vmatpush2.msra.mxu0 0.0
  %3267 = vmatprep.subr.mxu0 0.0
  %3268 = vmatpush2.msra.mxu0 0.0
  %3269 = vmatprep.subr.mxu0 0.0
  %3270 = vmatpush2.msra.mxu0 0.0
  %3271 = vmatprep.subr.mxu0 0.0
  %3272 = vmatpush2.msra.mxu0 0.0
  %3273 = vmatprep.subr.mxu0 0.0
  %3274 = vmatpush2.msra.mxu0 0.0
  %3275 = vmatprep.subr.mxu0 0.0
  %3276 = vmatpush2.msra.mxu0 0.0
  %3277 = vmatprep.subr.mxu0 0.0
  %3278 = vmatpush2.msra.mxu0 0.0
  %3279 = vmatprep.subr.mxu0 0.0
  %3280 = vmatpush2.msra.mxu0 0.0
  %3281 = vmatprep.subr.mxu0 0.0
  %3282 = vmatpush2.msra.mxu0 0.0
  %3283 = vmatprep.subr.mxu0 0.0
  %3284 = vmatpush2.msra.mxu0 0.0
  %3285 = vmatprep.subr.mxu0 0.0
  %3286 = vmatpush2.msra.mxu0 0.0
  %3287 = vmatprep.subr.mxu0 0.0
  %3288 = vmatpush2.msra.mxu0 0.0
  %3289 = vmatprep.subr.mxu0 0.0
  %3290 = vmatpush2.msra.mxu0 0.0
  %3291 = vmatprep.subr.mxu0 0.0
  %3292 = vmatpush2.msra.mxu0 0.0
  %3293 = vmatprep.subr.mxu0 0.0
  %3294 = vmatpush2.msra.mxu0 0.0
  %3295 = vmatprep.mubr.f32.mxu0 0.0
  %3296 = vmatmul.mubr.f32.gmra.mxu0 %v3229
  %v3297 = vpop.f32.mrf.mxu0
  %v3298 = vadd.f32 0.0, %v3297
  %v3299 = vpop.f32.mrf.mxu0
  %3300 = vdwg.mxu0
  %v3301 = vadd.f32 %v3223, %v3298
  %v3302 = vadd.f32 %v3301, %v849
  %v3303 = vxor.u32 %v3302, 2147483648
  %v3304 = vmul.f32 %v3303, 1.442695
  %v3305 = vpow.pop %v3304
  %v3306 = vadd.f32 %v3305, 1.0
  %v3307 = vrcp.pop %v3306
  %v3308 = vmul.f32 1.0, %v3307
  %3309 = vmatprep.subr.mxu0 0.0
  %3310 = vmatpush1.msra.mxu0 0.0
  %3311 = vmatprep.subr.mxu0 0.0
  %3312 = vmatpush1.msra.mxu0 0.0
  %3313 = vmatprep.subr.mxu0 0.0
  %3314 = vmatpush1.msra.mxu0 0.0
  %3315 = vmatprep.subr.mxu0 0.0
  %3316 = vmatpush1.msra.mxu0 0.0
  %3317 = vmatprep.subr.mxu0 0.0
  %3318 = vmatpush1.msra.mxu0 0.0
  %3319 = vmatprep.subr.mxu0 0.0
  %3320 = vmatpush1.msra.mxu0 0.0
  %3321 = vmatprep.subr.mxu0 0.0
  %3322 = vmatpush1.msra.mxu0 0.0
  %3323 = vmatprep.subr.mxu0 0.0
  %3324 = vmatpush1.msra.mxu0 0.0
  %3325 = vmatprep.subr.mxu0 0.0
  %3326 = vmatpush1.msra.mxu0 0.0
  %3327 = vmatprep.subr.mxu0 0.0
  %3328 = vmatpush1.msra.mxu0 0.0
  %3329 = vmatprep.subr.mxu0 0.0
  %3330 = vmatpush1.msra.mxu0 0.0
  %3331 = vmatprep.subr.mxu0 0.0
  %3332 = vmatpush1.msra.mxu0 0.0
  %3333 = vmatprep.subr.mxu0 0.0
  %3334 = vmatpush1.msra.mxu0 %v500
  %3335 = vmatprep.subr.mxu0 0.0
  %3336 = vmatpush1.msra.mxu0 %v499
  %3337 = vmatprep.subr.mxu0 0.0
  %3338 = vmatpush1.msra.mxu0 %v498
  %3339 = vmatprep.subr.mxu0 0.0
  %3340 = vmatpush1.msra.mxu0 %v497
  %3341 = vmatprep.subr.mxu0 0.0
  %3342 = vmatpush2.msra.mxu0 0.0
  %3343 = vmatprep.subr.mxu0 0.0
  %3344 = vmatpush2.msra.mxu0 0.0
  %3345 = vmatprep.subr.mxu0 0.0
  %3346 = vmatpush2.msra.mxu0 0.0
  %3347 = vmatprep.subr.mxu0 0.0
  %3348 = vmatpush2.msra.mxu0 0.0
  %3349 = vmatprep.subr.mxu0 0.0
  %3350 = vmatpush2.msra.mxu0 0.0
  %3351 = vmatprep.subr.mxu0 0.0
  %3352 = vmatpush2.msra.mxu0 0.0
  %3353 = vmatprep.subr.mxu0 0.0
  %3354 = vmatpush2.msra.mxu0 0.0
  %3355 = vmatprep.subr.mxu0 0.0
  %3356 = vmatpush2.msra.mxu0 0.0
  %3357 = vmatprep.subr.mxu0 0.0
  %3358 = vmatpush2.msra.mxu0 0.0
  %3359 = vmatprep.subr.mxu0 0.0
  %3360 = vmatpush2.msra.mxu0 0.0
  %3361 = vmatprep.subr.mxu0 0.0
  %3362 = vmatpush2.msra.mxu0 0.0
  %3363 = vmatprep.subr.mxu0 0.0
  %3364 = vmatpush2.msra.mxu0 0.0
  %3365 = vmatprep.subr.mxu0 0.0
  %3366 = vmatpush2.msra.mxu0 0.0
  %3367 = vmatprep.subr.mxu0 0.0
  %3368 = vmatpush2.msra.mxu0 0.0
  %3369 = vmatprep.subr.mxu0 0.0
  %3370 = vmatpush2.msra.mxu0 0.0
  %3371 = vmatprep.subr.mxu0 0.0
  %3372 = vmatpush2.msra.mxu0 0.0
  %3373 = vmatprep.mubr.f32.mxu0 0.0
  %3374 = vmatmul.mubr.f32.gmra.mxu0 %v3229
  %v3375 = vpop.f32.mrf.mxu0
  %v3376 = vadd.f32 0.0, %v3375
  %v3377 = vpop.f32.mrf.mxu0
  %3378 = vdwg.mxu0
  %v3379 = vadd.f32 %v3225, %v3376
  %v3380 = vadd.f32 %v3379, %v933
  %v3381 = vxor.u32 %v3380, 2147483648
  %v3382 = vmul.f32 %v3381, 1.442695
  %v3383 = vpow.pop %v3382
  %v3384 = vadd.f32 %v3383, 1.0
  %v3385 = vrcp.pop %v3384
  %v3386 = vmul.f32 1.0, %v3385
  %3387 = vmatprep.subr.mxu0 0.0
  %3388 = vmatpush1.msra.mxu0 0.0
  %3389 = vmatprep.subr.mxu0 0.0
  %3390 = vmatpush1.msra.mxu0 0.0
  %3391 = vmatprep.subr.mxu0 0.0
  %3392 = vmatpush1.msra.mxu0 0.0
  %3393 = vmatprep.subr.mxu0 0.0
  %3394 = vmatpush1.msra.mxu0 0.0
  %3395 = vmatprep.subr.mxu0 0.0
  %3396 = vmatpush1.msra.mxu0 0.0
  %3397 = vmatprep.subr.mxu0 0.0
  %3398 = vmatpush1.msra.mxu0 0.0
  %3399 = vmatprep.subr.mxu0 0.0
  %3400 = vmatpush1.msra.mxu0 0.0
  %3401 = vmatprep.subr.mxu0 0.0
  %3402 = vmatpush1.msra.mxu0 0.0
  %3403 = vmatprep.subr.mxu0 0.0
  %3404 = vmatpush1.msra.mxu0 0.0
  %3405 = vmatprep.subr.mxu0 0.0
  %3406 = vmatpush1.msra.mxu0 0.0
  %3407 = vmatprep.subr.mxu0 0.0
  %3408 = vmatpush1.msra.mxu0 0.0
  %3409 = vmatprep.subr.mxu0 0.0
  %3410 = vmatpush1.msra.mxu0 0.0
  %3411 = vmatprep.subr.mxu0 0.0
  %3412 = vmatpush1.msra.mxu0 %v505
  %3413 = vmatprep.subr.mxu0 0.0
  %3414 = vmatpush1.msra.mxu0 %v504
  %3415 = vmatprep.subr.mxu0 0.0
  %3416 = vmatpush1.msra.mxu0 %v503
  %3417 = vmatprep.subr.mxu0 0.0
  %3418 = vmatpush1.msra.mxu0 %v502
  %3419 = vmatprep.subr.mxu0 0.0
  %3420 = vmatpush2.msra.mxu0 0.0
  %3421 = vmatprep.subr.mxu0 0.0
  %3422 = vmatpush2.msra.mxu0 0.0
  %3423 = vmatprep.subr.mxu0 0.0
  %3424 = vmatpush2.msra.mxu0 0.0
  %3425 = vmatprep.subr.mxu0 0.0
  %3426 = vmatpush2.msra.mxu0 0.0
  %3427 = vmatprep.subr.mxu0 0.0
  %3428 = vmatpush2.msra.mxu0 0.0
  %3429 = vmatprep.subr.mxu0 0.0
  %3430 = vmatpush2.msra.mxu0 0.0
  %3431 = vmatprep.subr.mxu0 0.0
  %3432 = vmatpush2.msra.mxu0 0.0
  %3433 = vmatprep.subr.mxu0 0.0
  %3434 = vmatpush2.msra.mxu0 0.0
  %3435 = vmatprep.subr.mxu0 0.0
  %3436 = vmatpush2.msra.mxu0 0.0
  %3437 = vmatprep.subr.mxu0 0.0
  %3438 = vmatpush2.msra.mxu0 0.0
  %3439 = vmatprep.subr.mxu0 0.0
  %3440 = vmatpush2.msra.mxu0 0.0
  %3441 = vmatprep.subr.mxu0 0.0
  %3442 = vmatpush2.msra.mxu0 0.0
  %3443 = vmatprep.subr.mxu0 0.0
  %3444 = vmatpush2.msra.mxu0 0.0
  %3445 = vmatprep.subr.mxu0 0.0
  %3446 = vmatpush2.msra.mxu0 0.0
  %3447 = vmatprep.subr.mxu0 0.0
  %3448 = vmatpush2.msra.mxu0 0.0
  %3449 = vmatprep.subr.mxu0 0.0
  %3450 = vmatpush2.msra.mxu0 0.0
  %3451 = vmatprep.mubr.f32.mxu0 0.0
  %3452 = vmatmul.mubr.f32.gmra.mxu0 %v3229
  %v3453 = vpop.f32.mrf.mxu0
  %v3454 = vadd.f32 %v946, %v3453
  %v3455 = vpop.f32.mrf.mxu0
  %3456 = vdwg.mxu0
  %v3457 = vmul.f32 %v3308, %v3454
  %v3458 = vadd.f32 %v3227, %v3457
  %v3459 = vtanh.pop %v3458
  %v3460 = vsub.f32 1.0, %v3386
  %v3461 = vmul.f32 %v3460, %v3459
  %v3462 = vmul.f32 %v3386, %v2975
  %v3463 = vadd.f32 %v3461, %v3462
  %s3464 = scalar_lea.vmem [#allocation4], 40
  %3465 = vst.msk [vmem:[%s3464] sm:$0xff] %vm63, %v3221
  %s3466 = scalar_lea.vmem [#allocation5], 16
  %3467 = vst.msk [vmem:[%s3466] sm:$0xff] %vm63, %v3463
  %s3468 = scalar_lea.vmem [#allocation2], 48
  %v3469 = vld [vmem:[%s3468] sm:$0xff]
  %s3470 = scalar_lea.vmem [#allocation2], 112
  %v3471 = vld [vmem:[%s3470] sm:$0xff]
  %s3472 = scalar_lea.vmem [#allocation2], 176
  %v3473 = vld [vmem:[%s3472] sm:$0xff]
  %v3475 = vsel %vm63, %v3221, 0
  %3477 = vmatprep.subr.mxu0 0.0
  %3478 = vmatpush1.msra.mxu0 0.0
  %3479 = vmatprep.subr.mxu0 0.0
  %3480 = vmatpush1.msra.mxu0 0.0
  %3481 = vmatprep.subr.mxu0 0.0
  %3482 = vmatpush1.msra.mxu0 0.0
  %3483 = vmatprep.subr.mxu0 0.0
  %3484 = vmatpush1.msra.mxu0 0.0
  %3485 = vmatprep.subr.mxu0 0.0
  %3486 = vmatpush1.msra.mxu0 0.0
  %3487 = vmatprep.subr.mxu0 0.0
  %3488 = vmatpush1.msra.mxu0 0.0
  %3489 = vmatprep.subr.mxu0 0.0
  %3490 = vmatpush1.msra.mxu0 0.0
  %3491 = vmatprep.subr.mxu0 0.0
  %3492 = vmatpush1.msra.mxu0 0.0
  %3493 = vmatprep.subr.mxu0 0.0
  %3494 = vmatpush1.msra.mxu0 0.0
  %3495 = vmatprep.subr.mxu0 0.0
  %3496 = vmatpush1.msra.mxu0 0.0
  %3497 = vmatprep.subr.mxu0 0.0
  %3498 = vmatpush1.msra.mxu0 0.0
  %3499 = vmatprep.subr.mxu0 0.0
  %3500 = vmatpush1.msra.mxu0 0.0
  %3501 = vmatprep.subr.mxu0 0.0
  %3502 = vmatpush1.msra.mxu0 %v476
  %3503 = vmatprep.subr.mxu0 0.0
  %3504 = vmatpush1.msra.mxu0 %v475
  %3505 = vmatprep.subr.mxu0 0.0
  %3506 = vmatpush1.msra.mxu0 %v474
  %3507 = vmatprep.subr.mxu0 0.0
  %3508 = vmatpush1.msra.mxu0 %v473
  %3509 = vmatprep.subr.mxu0 0.0
  %3510 = vmatpush2.msra.mxu0 0.0
  %3511 = vmatprep.subr.mxu0 0.0
  %3512 = vmatpush2.msra.mxu0 0.0
  %3513 = vmatprep.subr.mxu0 0.0
  %3514 = vmatpush2.msra.mxu0 0.0
  %3515 = vmatprep.subr.mxu0 0.0
  %3516 = vmatpush2.msra.mxu0 0.0
  %3517 = vmatprep.subr.mxu0 0.0
  %3518 = vmatpush2.msra.mxu0 0.0
  %3519 = vmatprep.subr.mxu0 0.0
  %3520 = vmatpush2.msra.mxu0 0.0
  %3521 = vmatprep.subr.mxu0 0.0
  %3522 = vmatpush2.msra.mxu0 0.0
  %3523 = vmatprep.subr.mxu0 0.0
  %3524 = vmatpush2.msra.mxu0 0.0
  %3525 = vmatprep.subr.mxu0 0.0
  %3526 = vmatpush2.msra.mxu0 0.0
  %3527 = vmatprep.subr.mxu0 0.0
  %3528 = vmatpush2.msra.mxu0 0.0
  %3529 = vmatprep.subr.mxu0 0.0
  %3530 = vmatpush2.msra.mxu0 0.0
  %3531 = vmatprep.subr.mxu0 0.0
  %3532 = vmatpush2.msra.mxu0 0.0
  %3533 = vmatprep.subr.mxu0 0.0
  %3534 = vmatpush2.msra.mxu0 0.0
  %3535 = vmatprep.subr.mxu0 0.0
  %3536 = vmatpush2.msra.mxu0 0.0
  %3537 = vmatprep.subr.mxu0 0.0
  %3538 = vmatpush2.msra.mxu0 0.0
  %3539 = vmatprep.subr.mxu0 0.0
  %3540 = vmatpush2.msra.mxu0 0.0
  %3541 = vmatprep.mubr.f32.mxu0 0.0
  %3542 = vmatmul.mubr.f32.gmra.mxu0 %v3475
  %v3543 = vpop.f32.mrf.mxu0
  %v3544 = vadd.f32 0.0, %v3543
  %v3545 = vpop.f32.mrf.mxu0
  %3546 = vdwg.mxu0
  %v3547 = vadd.f32 %v3469, %v3544
  %v3548 = vadd.f32 %v3547, %v592
  %v3549 = vxor.u32 %v3548, 2147483648
  %v3550 = vmul.f32 %v3549, 1.442695
  %v3551 = vpow.pop %v3550
  %v3552 = vadd.f32 %v3551, 1.0
  %v3553 = vrcp.pop %v3552
  %v3554 = vmul.f32 1.0, %v3553
  %3555 = vmatprep.subr.mxu0 0.0
  %3556 = vmatpush1.msra.mxu0 0.0
  %3557 = vmatprep.subr.mxu0 0.0
  %3558 = vmatpush1.msra.mxu0 0.0
  %3559 = vmatprep.subr.mxu0 0.0
  %3560 = vmatpush1.msra.mxu0 0.0
  %3561 = vmatprep.subr.mxu0 0.0
  %3562 = vmatpush1.msra.mxu0 0.0
  %3563 = vmatprep.subr.mxu0 0.0
  %3564 = vmatpush1.msra.mxu0 0.0
  %3565 = vmatprep.subr.mxu0 0.0
  %3566 = vmatpush1.msra.mxu0 0.0
  %3567 = vmatprep.subr.mxu0 0.0
  %3568 = vmatpush1.msra.mxu0 0.0
  %3569 = vmatprep.subr.mxu0 0.0
  %3570 = vmatpush1.msra.mxu0 0.0
  %3571 = vmatprep.subr.mxu0 0.0
  %3572 = vmatpush1.msra.mxu0 0.0
  %3573 = vmatprep.subr.mxu0 0.0
  %3574 = vmatpush1.msra.mxu0 0.0
  %3575 = vmatprep.subr.mxu0 0.0
  %3576 = vmatpush1.msra.mxu0 0.0
  %3577 = vmatprep.subr.mxu0 0.0
  %3578 = vmatpush1.msra.mxu0 0.0
  %3579 = vmatprep.subr.mxu0 0.0
  %3580 = vmatpush1.msra.mxu0 %v481
  %3581 = vmatprep.subr.mxu0 0.0
  %3582 = vmatpush1.msra.mxu0 %v480
  %3583 = vmatprep.subr.mxu0 0.0
  %3584 = vmatpush1.msra.mxu0 %v479
  %3585 = vmatprep.subr.mxu0 0.0
  %3586 = vmatpush1.msra.mxu0 %v478
  %3587 = vmatprep.subr.mxu0 0.0
  %3588 = vmatpush2.msra.mxu0 0.0
  %3589 = vmatprep.subr.mxu0 0.0
  %3590 = vmatpush2.msra.mxu0 0.0
  %3591 = vmatprep.subr.mxu0 0.0
  %3592 = vmatpush2.msra.mxu0 0.0
  %3593 = vmatprep.subr.mxu0 0.0
  %3594 = vmatpush2.msra.mxu0 0.0
  %3595 = vmatprep.subr.mxu0 0.0
  %3596 = vmatpush2.msra.mxu0 0.0
  %3597 = vmatprep.subr.mxu0 0.0
  %3598 = vmatpush2.msra.mxu0 0.0
  %3599 = vmatprep.subr.mxu0 0.0
  %3600 = vmatpush2.msra.mxu0 0.0
  %3601 = vmatprep.subr.mxu0 0.0
  %3602 = vmatpush2.msra.mxu0 0.0
  %3603 = vmatprep.subr.mxu0 0.0
  %3604 = vmatpush2.msra.mxu0 0.0
  %3605 = vmatprep.subr.mxu0 0.0
  %3606 = vmatpush2.msra.mxu0 0.0
  %3607 = vmatprep.subr.mxu0 0.0
  %3608 = vmatpush2.msra.mxu0 0.0
  %3609 = vmatprep.subr.mxu0 0.0
  %3610 = vmatpush2.msra.mxu0 0.0
  %3611 = vmatprep.subr.mxu0 0.0
  %3612 = vmatpush2.msra.mxu0 0.0
  %3613 = vmatprep.subr.mxu0 0.0
  %3614 = vmatpush2.msra.mxu0 0.0
  %3615 = vmatprep.subr.mxu0 0.0
  %3616 = vmatpush2.msra.mxu0 0.0
  %3617 = vmatprep.subr.mxu0 0.0
  %3618 = vmatpush2.msra.mxu0 0.0
  %3619 = vmatprep.mubr.f32.mxu0 0.0
  %3620 = vmatmul.mubr.f32.gmra.mxu0 %v3475
  %v3621 = vpop.f32.mrf.mxu0
  %v3622 = vadd.f32 0.0, %v3621
  %v3623 = vpop.f32.mrf.mxu0
  %3624 = vdwg.mxu0
  %v3625 = vadd.f32 %v3471, %v3622
  %v3626 = vadd.f32 %v3625, %v676
  %v3627 = vxor.u32 %v3626, 2147483648
  %v3628 = vmul.f32 %v3627, 1.442695
  %v3629 = vpow.pop %v3628
  %v3630 = vadd.f32 %v3629, 1.0
  %v3631 = vrcp.pop %v3630
  %v3632 = vmul.f32 1.0, %v3631
  %3633 = vmatprep.subr.mxu0 0.0
  %3634 = vmatpush1.msra.mxu0 0.0
  %3635 = vmatprep.subr.mxu0 0.0
  %3636 = vmatpush1.msra.mxu0 0.0
  %3637 = vmatprep.subr.mxu0 0.0
  %3638 = vmatpush1.msra.mxu0 0.0
  %3639 = vmatprep.subr.mxu0 0.0
  %3640 = vmatpush1.msra.mxu0 0.0
  %3641 = vmatprep.subr.mxu0 0.0
  %3642 = vmatpush1.msra.mxu0 0.0
  %3643 = vmatprep.subr.mxu0 0.0
  %3644 = vmatpush1.msra.mxu0 0.0
  %3645 = vmatprep.subr.mxu0 0.0
  %3646 = vmatpush1.msra.mxu0 0.0
  %3647 = vmatprep.subr.mxu0 0.0
  %3648 = vmatpush1.msra.mxu0 0.0
  %3649 = vmatprep.subr.mxu0 0.0
  %3650 = vmatpush1.msra.mxu0 0.0
  %3651 = vmatprep.subr.mxu0 0.0
  %3652 = vmatpush1.msra.mxu0 0.0
  %3653 = vmatprep.subr.mxu0 0.0
  %3654 = vmatpush1.msra.mxu0 0.0
  %3655 = vmatprep.subr.mxu0 0.0
  %3656 = vmatpush1.msra.mxu0 0.0
  %3657 = vmatprep.subr.mxu0 0.0
  %3658 = vmatpush1.msra.mxu0 %v486
  %3659 = vmatprep.subr.mxu0 0.0
  %3660 = vmatpush1.msra.mxu0 %v485
  %3661 = vmatprep.subr.mxu0 0.0
  %3662 = vmatpush1.msra.mxu0 %v484
  %3663 = vmatprep.subr.mxu0 0.0
  %3664 = vmatpush1.msra.mxu0 %v483
  %3665 = vmatprep.subr.mxu0 0.0
  %3666 = vmatpush2.msra.mxu0 0.0
  %3667 = vmatprep.subr.mxu0 0.0
  %3668 = vmatpush2.msra.mxu0 0.0
  %3669 = vmatprep.subr.mxu0 0.0
  %3670 = vmatpush2.msra.mxu0 0.0
  %3671 = vmatprep.subr.mxu0 0.0
  %3672 = vmatpush2.msra.mxu0 0.0
  %3673 = vmatprep.subr.mxu0 0.0
  %3674 = vmatpush2.msra.mxu0 0.0
  %3675 = vmatprep.subr.mxu0 0.0
  %3676 = vmatpush2.msra.mxu0 0.0
  %3677 = vmatprep.subr.mxu0 0.0
  %3678 = vmatpush2.msra.mxu0 0.0
  %3679 = vmatprep.subr.mxu0 0.0
  %3680 = vmatpush2.msra.mxu0 0.0
  %3681 = vmatprep.subr.mxu0 0.0
  %3682 = vmatpush2.msra.mxu0 0.0
  %3683 = vmatprep.subr.mxu0 0.0
  %3684 = vmatpush2.msra.mxu0 0.0
  %3685 = vmatprep.subr.mxu0 0.0
  %3686 = vmatpush2.msra.mxu0 0.0
  %3687 = vmatprep.subr.mxu0 0.0
  %3688 = vmatpush2.msra.mxu0 0.0
  %3689 = vmatprep.subr.mxu0 0.0
  %3690 = vmatpush2.msra.mxu0 0.0
  %3691 = vmatprep.subr.mxu0 0.0
  %3692 = vmatpush2.msra.mxu0 0.0
  %3693 = vmatprep.subr.mxu0 0.0
  %3694 = vmatpush2.msra.mxu0 0.0
  %3695 = vmatprep.subr.mxu0 0.0
  %3696 = vmatpush2.msra.mxu0 0.0
  %3697 = vmatprep.mubr.f32.mxu0 0.0
  %3698 = vmatmul.mubr.f32.gmra.mxu0 %v3475
  %v3699 = vpop.f32.mrf.mxu0
  %v3700 = vadd.f32 %v689, %v3699
  %v3701 = vpop.f32.mrf.mxu0
  %3702 = vdwg.mxu0
  %v3703 = vmul.f32 %v3554, %v3700
  %v3704 = vadd.f32 %v3473, %v3703
  %v3705 = vtanh.pop %v3704
  %v3706 = vsub.f32 1.0, %v3632
  %v3707 = vmul.f32 %v3706, %v3705
  %v3708 = vmul.f32 %v3632, %v3221
  %v3709 = vadd.f32 %v3707, %v3708
  %s3710 = scalar_lea.vmem [#allocation3], 8
  %v3711 = vld [vmem:[%s3710] sm:$0xff]
  %s3712 = scalar_lea.vmem [#allocation3], 72
  %v3713 = vld [vmem:[%s3712] sm:$0xff]
  %s3714 = scalar_lea.vmem [#allocation3], 136
  %v3715 = vld [vmem:[%s3714] sm:$0xff]
  %v3717 = vsel %vm63, %v3463, 0
  %3719 = vmatprep.subr.mxu0 0.0
  %3720 = vmatpush1.msra.mxu0 0.0
  %3721 = vmatprep.subr.mxu0 0.0
  %3722 = vmatpush1.msra.mxu0 0.0
  %3723 = vmatprep.subr.mxu0 0.0
  %3724 = vmatpush1.msra.mxu0 0.0
  %3725 = vmatprep.subr.mxu0 0.0
  %3726 = vmatpush1.msra.mxu0 0.0
  %3727 = vmatprep.subr.mxu0 0.0
  %3728 = vmatpush1.msra.mxu0 0.0
  %3729 = vmatprep.subr.mxu0 0.0
  %3730 = vmatpush1.msra.mxu0 0.0
  %3731 = vmatprep.subr.mxu0 0.0
  %3732 = vmatpush1.msra.mxu0 0.0
  %3733 = vmatprep.subr.mxu0 0.0
  %3734 = vmatpush1.msra.mxu0 0.0
  %3735 = vmatprep.subr.mxu0 0.0
  %3736 = vmatpush1.msra.mxu0 0.0
  %3737 = vmatprep.subr.mxu0 0.0
  %3738 = vmatpush1.msra.mxu0 0.0
  %3739 = vmatprep.subr.mxu0 0.0
  %3740 = vmatpush1.msra.mxu0 0.0
  %3741 = vmatprep.subr.mxu0 0.0
  %3742 = vmatpush1.msra.mxu0 0.0
  %3743 = vmatprep.subr.mxu0 0.0
  %3744 = vmatpush1.msra.mxu0 %v495
  %3745 = vmatprep.subr.mxu0 0.0
  %3746 = vmatpush1.msra.mxu0 %v494
  %3747 = vmatprep.subr.mxu0 0.0
  %3748 = vmatpush1.msra.mxu0 %v493
  %3749 = vmatprep.subr.mxu0 0.0
  %3750 = vmatpush1.msra.mxu0 %v492
  %3751 = vmatprep.subr.mxu0 0.0
  %3752 = vmatpush2.msra.mxu0 0.0
  %3753 = vmatprep.subr.mxu0 0.0
  %3754 = vmatpush2.msra.mxu0 0.0
  %3755 = vmatprep.subr.mxu0 0.0
  %3756 = vmatpush2.msra.mxu0 0.0
  %3757 = vmatprep.subr.mxu0 0.0
  %3758 = vmatpush2.msra.mxu0 0.0
  %3759 = vmatprep.subr.mxu0 0.0
  %3760 = vmatpush2.msra.mxu0 0.0
  %3761 = vmatprep.subr.mxu0 0.0
  %3762 = vmatpush2.msra.mxu0 0.0
  %3763 = vmatprep.subr.mxu0 0.0
  %3764 = vmatpush2.msra.mxu0 0.0
  %3765 = vmatprep.subr.mxu0 0.0
  %3766 = vmatpush2.msra.mxu0 0.0
  %3767 = vmatprep.subr.mxu0 0.0
  %3768 = vmatpush2.msra.mxu0 0.0
  %3769 = vmatprep.subr.mxu0 0.0
  %3770 = vmatpush2.msra.mxu0 0.0
  %3771 = vmatprep.subr.mxu0 0.0
  %3772 = vmatpush2.msra.mxu0 0.0
  %3773 = vmatprep.subr.mxu0 0.0
  %3774 = vmatpush2.msra.mxu0 0.0
  %3775 = vmatprep.subr.mxu0 0.0
  %3776 = vmatpush2.msra.mxu0 0.0
  %3777 = vmatprep.subr.mxu0 0.0
  %3778 = vmatpush2.msra.mxu0 0.0
  %3779 = vmatprep.subr.mxu0 0.0
  %3780 = vmatpush2.msra.mxu0 0.0
  %3781 = vmatprep.subr.mxu0 0.0
  %3782 = vmatpush2.msra.mxu0 0.0
  %3783 = vmatprep.mubr.f32.mxu0 0.0
  %3784 = vmatmul.mubr.f32.gmra.mxu0 %v3717
  %v3785 = vpop.f32.mrf.mxu0
  %v3786 = vadd.f32 0.0, %v3785
  %v3787 = vpop.f32.mrf.mxu0
  %3788 = vdwg.mxu0
  %v3789 = vadd.f32 %v3711, %v3786
  %v3790 = vadd.f32 %v3789, %v849
  %v3791 = vxor.u32 %v3790, 2147483648
  %v3792 = vmul.f32 %v3791, 1.442695
  %v3793 = vpow.pop %v3792
  %v3794 = vadd.f32 %v3793, 1.0
  %v3795 = vrcp.pop %v3794
  %v3796 = vmul.f32 1.0, %v3795
  %3797 = vmatprep.subr.mxu0 0.0
  %3798 = vmatpush1.msra.mxu0 0.0
  %3799 = vmatprep.subr.mxu0 0.0
  %3800 = vmatpush1.msra.mxu0 0.0
  %3801 = vmatprep.subr.mxu0 0.0
  %3802 = vmatpush1.msra.mxu0 0.0
  %3803 = vmatprep.subr.mxu0 0.0
  %3804 = vmatpush1.msra.mxu0 0.0
  %3805 = vmatprep.subr.mxu0 0.0
  %3806 = vmatpush1.msra.mxu0 0.0
  %3807 = vmatprep.subr.mxu0 0.0
  %3808 = vmatpush1.msra.mxu0 0.0
  %3809 = vmatprep.subr.mxu0 0.0
  %3810 = vmatpush1.msra.mxu0 0.0
  %3811 = vmatprep.subr.mxu0 0.0
  %3812 = vmatpush1.msra.mxu0 0.0
  %3813 = vmatprep.subr.mxu0 0.0
  %3814 = vmatpush1.msra.mxu0 0.0
  %3815 = vmatprep.subr.mxu0 0.0
  %3816 = vmatpush1.msra.mxu0 0.0
  %3817 = vmatprep.subr.mxu0 0.0
  %3818 = vmatpush1.msra.mxu0 0.0
  %3819 = vmatprep.subr.mxu0 0.0
  %3820 = vmatpush1.msra.mxu0 0.0
  %3821 = vmatprep.subr.mxu0 0.0
  %3822 = vmatpush1.msra.mxu0 %v500
  %3823 = vmatprep.subr.mxu0 0.0
  %3824 = vmatpush1.msra.mxu0 %v499
  %3825 = vmatprep.subr.mxu0 0.0
  %3826 = vmatpush1.msra.mxu0 %v498
  %3827 = vmatprep.subr.mxu0 0.0
  %3828 = vmatpush1.msra.mxu0 %v497
  %3829 = vmatprep.subr.mxu0 0.0
  %3830 = vmatpush2.msra.mxu0 0.0
  %3831 = vmatprep.subr.mxu0 0.0
  %3832 = vmatpush2.msra.mxu0 0.0
  %3833 = vmatprep.subr.mxu0 0.0
  %3834 = vmatpush2.msra.mxu0 0.0
  %3835 = vmatprep.subr.mxu0 0.0
  %3836 = vmatpush2.msra.mxu0 0.0
  %3837 = vmatprep.subr.mxu0 0.0
  %3838 = vmatpush2.msra.mxu0 0.0
  %3839 = vmatprep.subr.mxu0 0.0
  %3840 = vmatpush2.msra.mxu0 0.0
  %3841 = vmatprep.subr.mxu0 0.0
  %3842 = vmatpush2.msra.mxu0 0.0
  %3843 = vmatprep.subr.mxu0 0.0
  %3844 = vmatpush2.msra.mxu0 0.0
  %3845 = vmatprep.subr.mxu0 0.0
  %3846 = vmatpush2.msra.mxu0 0.0
  %3847 = vmatprep.subr.mxu0 0.0
  %3848 = vmatpush2.msra.mxu0 0.0
  %3849 = vmatprep.subr.mxu0 0.0
  %3850 = vmatpush2.msra.mxu0 0.0
  %3851 = vmatprep.subr.mxu0 0.0
  %3852 = vmatpush2.msra.mxu0 0.0
  %3853 = vmatprep.subr.mxu0 0.0
  %3854 = vmatpush2.msra.mxu0 0.0
  %3855 = vmatprep.subr.mxu0 0.0
  %3856 = vmatpush2.msra.mxu0 0.0
  %3857 = vmatprep.subr.mxu0 0.0
  %3858 = vmatpush2.msra.mxu0 0.0
  %3859 = vmatprep.subr.mxu0 0.0
  %3860 = vmatpush2.msra.mxu0 0.0
  %3861 = vmatprep.mubr.f32.mxu0 0.0
  %3862 = vmatmul.mubr.f32.gmra.mxu0 %v3717
  %v3863 = vpop.f32.mrf.mxu0
  %v3864 = vadd.f32 0.0, %v3863
  %v3865 = vpop.f32.mrf.mxu0
  %3866 = vdwg.mxu0
  %v3867 = vadd.f32 %v3713, %v3864
  %v3868 = vadd.f32 %v3867, %v933
  %v3869 = vxor.u32 %v3868, 2147483648
  %v3870 = vmul.f32 %v3869, 1.442695
  %v3871 = vpow.pop %v3870
  %v3872 = vadd.f32 %v3871, 1.0
  %v3873 = vrcp.pop %v3872
  %v3874 = vmul.f32 1.0, %v3873
  %3875 = vmatprep.subr.mxu0 0.0
  %3876 = vmatpush1.msra.mxu0 0.0
  %3877 = vmatprep.subr.mxu0 0.0
  %3878 = vmatpush1.msra.mxu0 0.0
  %3879 = vmatprep.subr.mxu0 0.0
  %3880 = vmatpush1.msra.mxu0 0.0
  %3881 = vmatprep.subr.mxu0 0.0
  %3882 = vmatpush1.msra.mxu0 0.0
  %3883 = vmatprep.subr.mxu0 0.0
  %3884 = vmatpush1.msra.mxu0 0.0
  %3885 = vmatprep.subr.mxu0 0.0
  %3886 = vmatpush1.msra.mxu0 0.0
  %3887 = vmatprep.subr.mxu0 0.0
  %3888 = vmatpush1.msra.mxu0 0.0
  %3889 = vmatprep.subr.mxu0 0.0
  %3890 = vmatpush1.msra.mxu0 0.0
  %3891 = vmatprep.subr.mxu0 0.0
  %3892 = vmatpush1.msra.mxu0 0.0
  %3893 = vmatprep.subr.mxu0 0.0
  %3894 = vmatpush1.msra.mxu0 0.0
  %3895 = vmatprep.subr.mxu0 0.0
  %3896 = vmatpush1.msra.mxu0 0.0
  %3897 = vmatprep.subr.mxu0 0.0
  %3898 = vmatpush1.msra.mxu0 0.0
  %3899 = vmatprep.subr.mxu0 0.0
  %3900 = vmatpush1.msra.mxu0 %v505
  %3901 = vmatprep.subr.mxu0 0.0
  %3902 = vmatpush1.msra.mxu0 %v504
  %3903 = vmatprep.subr.mxu0 0.0
  %3904 = vmatpush1.msra.mxu0 %v503
  %3905 = vmatprep.subr.mxu0 0.0
  %3906 = vmatpush1.msra.mxu0 %v502
  %3907 = vmatprep.subr.mxu0 0.0
  %3908 = vmatpush2.msra.mxu0 0.0
  %3909 = vmatprep.subr.mxu0 0.0
  %3910 = vmatpush2.msra.mxu0 0.0
  %3911 = vmatprep.subr.mxu0 0.0
  %3912 = vmatpush2.msra.mxu0 0.0
  %3913 = vmatprep.subr.mxu0 0.0
  %3914 = vmatpush2.msra.mxu0 0.0
  %3915 = vmatprep.subr.mxu0 0.0
  %3916 = vmatpush2.msra.mxu0 0.0
  %3917 = vmatprep.subr.mxu0 0.0
  %3918 = vmatpush2.msra.mxu0 0.0
  %3919 = vmatprep.subr.mxu0 0.0
  %3920 = vmatpush2.msra.mxu0 0.0
  %3921 = vmatprep.subr.mxu0 0.0
  %3922 = vmatpush2.msra.mxu0 0.0
  %3923 = vmatprep.subr.mxu0 0.0
  %3924 = vmatpush2.msra.mxu0 0.0
  %3925 = vmatprep.subr.mxu0 0.0
  %3926 = vmatpush2.msra.mxu0 0.0
  %3927 = vmatprep.subr.mxu0 0.0
  %3928 = vmatpush2.msra.mxu0 0.0
  %3929 = vmatprep.subr.mxu0 0.0
  %3930 = vmatpush2.msra.mxu0 0.0
  %3931 = vmatprep.subr.mxu0 0.0
  %3932 = vmatpush2.msra.mxu0 0.0
  %3933 = vmatprep.subr.mxu0 0.0
  %3934 = vmatpush2.msra.mxu0 0.0
  %3935 = vmatprep.subr.mxu0 0.0
  %3936 = vmatpush2.msra.mxu0 0.0
  %3937 = vmatprep.subr.mxu0 0.0
  %3938 = vmatpush2.msra.mxu0 0.0
  %3939 = vmatprep.mubr.f32.mxu0 0.0
  %3940 = vmatmul.mubr.f32.gmra.mxu0 %v3717
  %v3941 = vpop.f32.mrf.mxu0
  %v3942 = vadd.f32 %v946, %v3941
  %v3943 = vpop.f32.mrf.mxu0
  %3944 = vdwg.mxu0
  %v3945 = vmul.f32 %v3796, %v3942
  %v3946 = vadd.f32 %v3715, %v3945
  %v3947 = vtanh.pop %v3946
  %v3948 = vsub.f32 1.0, %v3874
  %v3949 = vmul.f32 %v3948, %v3947
  %v3950 = vmul.f32 %v3874, %v3463
  %v3951 = vadd.f32 %v3949, %v3950
  %s3952 = scalar_lea.vmem [#allocation4], 48
  %3953 = vst.msk [vmem:[%s3952] sm:$0xff] %vm63, %v3709
  %s3954 = scalar_lea.vmem [#allocation5], 8
  %3955 = vst.msk [vmem:[%s3954] sm:$0xff] %vm63, %v3951
  %s3956 = scalar_lea.vmem [#allocation2], 56
  %v3957 = vld [vmem:[%s3956] sm:$0xff]
  %s3958 = scalar_lea.vmem [#allocation2], 120
  %v3959 = vld [vmem:[%s3958] sm:$0xff]
  %s3960 = scalar_lea.vmem [#allocation2], 184
  %v3961 = vld [vmem:[%s3960] sm:$0xff]
  %v3963 = vsel %vm63, %v3709, 0
  %3965 = vmatprep.subr.mxu0 0.0
  %3966 = vmatpush1.msra.mxu0 0.0
  %3967 = vmatprep.subr.mxu0 0.0
  %3968 = vmatpush1.msra.mxu0 0.0
  %3969 = vmatprep.subr.mxu0 0.0
  %3970 = vmatpush1.msra.mxu0 0.0
  %3971 = vmatprep.subr.mxu0 0.0
  %3972 = vmatpush1.msra.mxu0 0.0
  %3973 = vmatprep.subr.mxu0 0.0
  %3974 = vmatpush1.msra.mxu0 0.0
  %3975 = vmatprep.subr.mxu0 0.0
  %3976 = vmatpush1.msra.mxu0 0.0
  %3977 = vmatprep.subr.mxu0 0.0
  %3978 = vmatpush1.msra.mxu0 0.0
  %3979 = vmatprep.subr.mxu0 0.0
  %3980 = vmatpush1.msra.mxu0 0.0
  %3981 = vmatprep.subr.mxu0 0.0
  %3982 = vmatpush1.msra.mxu0 0.0
  %3983 = vmatprep.subr.mxu0 0.0
  %3984 = vmatpush1.msra.mxu0 0.0
  %3985 = vmatprep.subr.mxu0 0.0
  %3986 = vmatpush1.msra.mxu0 0.0
  %3987 = vmatprep.subr.mxu0 0.0
  %3988 = vmatpush1.msra.mxu0 0.0
  %3989 = vmatprep.subr.mxu0 0.0
  %3990 = vmatpush1.msra.mxu0 %v476
  %3991 = vmatprep.subr.mxu0 0.0
  %3992 = vmatpush1.msra.mxu0 %v475
  %3993 = vmatprep.subr.mxu0 0.0
  %3994 = vmatpush1.msra.mxu0 %v474
  %3995 = vmatprep.subr.mxu0 0.0
  %3996 = vmatpush1.msra.mxu0 %v473
  %3997 = vmatprep.subr.mxu0 0.0
  %3998 = vmatpush2.msra.mxu0 0.0
  %3999 = vmatprep.subr.mxu0 0.0
  %4000 = vmatpush2.msra.mxu0 0.0
  %4001 = vmatprep.subr.mxu0 0.0
  %4002 = vmatpush2.msra.mxu0 0.0
  %4003 = vmatprep.subr.mxu0 0.0
  %4004 = vmatpush2.msra.mxu0 0.0
  %4005 = vmatprep.subr.mxu0 0.0
  %4006 = vmatpush2.msra.mxu0 0.0
  %4007 = vmatprep.subr.mxu0 0.0
  %4008 = vmatpush2.msra.mxu0 0.0
  %4009 = vmatprep.subr.mxu0 0.0
  %4010 = vmatpush2.msra.mxu0 0.0
  %4011 = vmatprep.subr.mxu0 0.0
  %4012 = vmatpush2.msra.mxu0 0.0
  %4013 = vmatprep.subr.mxu0 0.0
  %4014 = vmatpush2.msra.mxu0 0.0
  %4015 = vmatprep.subr.mxu0 0.0
  %4016 = vmatpush2.msra.mxu0 0.0
  %4017 = vmatprep.subr.mxu0 0.0
  %4018 = vmatpush2.msra.mxu0 0.0
  %4019 = vmatprep.subr.mxu0 0.0
  %4020 = vmatpush2.msra.mxu0 0.0
  %4021 = vmatprep.subr.mxu0 0.0
  %4022 = vmatpush2.msra.mxu0 0.0
  %4023 = vmatprep.subr.mxu0 0.0
  %4024 = vmatpush2.msra.mxu0 0.0
  %4025 = vmatprep.subr.mxu0 0.0
  %4026 = vmatpush2.msra.mxu0 0.0
  %4027 = vmatprep.subr.mxu0 0.0
  %4028 = vmatpush2.msra.mxu0 0.0
  %4029 = vmatprep.mubr.f32.mxu0 0.0
  %4030 = vmatmul.mubr.f32.gmra.mxu0 %v3963
  %v4031 = vpop.f32.mrf.mxu0
  %v4032 = vadd.f32 0.0, %v4031
  %v4033 = vpop.f32.mrf.mxu0
  %4034 = vdwg.mxu0
  %v4035 = vadd.f32 %v3957, %v4032
  %v4036 = vadd.f32 %v4035, %v592
  %v4037 = vxor.u32 %v4036, 2147483648
  %v4038 = vmul.f32 %v4037, 1.442695
  %v4039 = vpow.pop %v4038
  %v4040 = vadd.f32 %v4039, 1.0
  %v4041 = vrcp.pop %v4040
  %v4042 = vmul.f32 1.0, %v4041
  %4043 = vmatprep.subr.mxu0 0.0
  %4044 = vmatpush1.msra.mxu0 0.0
  %4045 = vmatprep.subr.mxu0 0.0
  %4046 = vmatpush1.msra.mxu0 0.0
  %4047 = vmatprep.subr.mxu0 0.0
  %4048 = vmatpush1.msra.mxu0 0.0
  %4049 = vmatprep.subr.mxu0 0.0
  %4050 = vmatpush1.msra.mxu0 0.0
  %4051 = vmatprep.subr.mxu0 0.0
  %4052 = vmatpush1.msra.mxu0 0.0
  %4053 = vmatprep.subr.mxu0 0.0
  %4054 = vmatpush1.msra.mxu0 0.0
  %4055 = vmatprep.subr.mxu0 0.0
  %4056 = vmatpush1.msra.mxu0 0.0
  %4057 = vmatprep.subr.mxu0 0.0
  %4058 = vmatpush1.msra.mxu0 0.0
  %4059 = vmatprep.subr.mxu0 0.0
  %4060 = vmatpush1.msra.mxu0 0.0
  %4061 = vmatprep.subr.mxu0 0.0
  %4062 = vmatpush1.msra.mxu0 0.0
  %4063 = vmatprep.subr.mxu0 0.0
  %4064 = vmatpush1.msra.mxu0 0.0
  %4065 = vmatprep.subr.mxu0 0.0
  %4066 = vmatpush1.msra.mxu0 0.0
  %4067 = vmatprep.subr.mxu0 0.0
  %4068 = vmatpush1.msra.mxu0 %v481
  %4069 = vmatprep.subr.mxu0 0.0
  %4070 = vmatpush1.msra.mxu0 %v480
  %4071 = vmatprep.subr.mxu0 0.0
  %4072 = vmatpush1.msra.mxu0 %v479
  %4073 = vmatprep.subr.mxu0 0.0
  %4074 = vmatpush1.msra.mxu0 %v478
  %4075 = vmatprep.subr.mxu0 0.0
  %4076 = vmatpush2.msra.mxu0 0.0
  %4077 = vmatprep.subr.mxu0 0.0
  %4078 = vmatpush2.msra.mxu0 0.0
  %4079 = vmatprep.subr.mxu0 0.0
  %4080 = vmatpush2.msra.mxu0 0.0
  %4081 = vmatprep.subr.mxu0 0.0
  %4082 = vmatpush2.msra.mxu0 0.0
  %4083 = vmatprep.subr.mxu0 0.0
  %4084 = vmatpush2.msra.mxu0 0.0
  %4085 = vmatprep.subr.mxu0 0.0
  %4086 = vmatpush2.msra.mxu0 0.0
  %4087 = vmatprep.subr.mxu0 0.0
  %4088 = vmatpush2.msra.mxu0 0.0
  %4089 = vmatprep.subr.mxu0 0.0
  %4090 = vmatpush2.msra.mxu0 0.0
  %4091 = vmatprep.subr.mxu0 0.0
  %4092 = vmatpush2.msra.mxu0 0.0
  %4093 = vmatprep.subr.mxu0 0.0
  %4094 = vmatpush2.msra.mxu0 0.0
  %4095 = vmatprep.subr.mxu0 0.0
  %4096 = vmatpush2.msra.mxu0 0.0
  %4097 = vmatprep.subr.mxu0 0.0
  %4098 = vmatpush2.msra.mxu0 0.0
  %4099 = vmatprep.subr.mxu0 0.0
  %4100 = vmatpush2.msra.mxu0 0.0
  %4101 = vmatprep.subr.mxu0 0.0
  %4102 = vmatpush2.msra.mxu0 0.0
  %4103 = vmatprep.subr.mxu0 0.0
  %4104 = vmatpush2.msra.mxu0 0.0
  %4105 = vmatprep.subr.mxu0 0.0
  %4106 = vmatpush2.msra.mxu0 0.0
  %4107 = vmatprep.mubr.f32.mxu0 0.0
  %4108 = vmatmul.mubr.f32.gmra.mxu0 %v3963
  %v4109 = vpop.f32.mrf.mxu0
  %v4110 = vadd.f32 0.0, %v4109
  %v4111 = vpop.f32.mrf.mxu0
  %4112 = vdwg.mxu0
  %v4113 = vadd.f32 %v3959, %v4110
  %v4114 = vadd.f32 %v4113, %v676
  %v4115 = vxor.u32 %v4114, 2147483648
  %v4116 = vmul.f32 %v4115, 1.442695
  %v4117 = vpow.pop %v4116
  %v4118 = vadd.f32 %v4117, 1.0
  %v4119 = vrcp.pop %v4118
  %v4120 = vmul.f32 1.0, %v4119
  %4121 = vmatprep.subr.mxu0 0.0
  %4122 = vmatpush1.msra.mxu0 0.0
  %4123 = vmatprep.subr.mxu0 0.0
  %4124 = vmatpush1.msra.mxu0 0.0
  %4125 = vmatprep.subr.mxu0 0.0
  %4126 = vmatpush1.msra.mxu0 0.0
  %4127 = vmatprep.subr.mxu0 0.0
  %4128 = vmatpush1.msra.mxu0 0.0
  %4129 = vmatprep.subr.mxu0 0.0
  %4130 = vmatpush1.msra.mxu0 0.0
  %4131 = vmatprep.subr.mxu0 0.0
  %4132 = vmatpush1.msra.mxu0 0.0
  %4133 = vmatprep.subr.mxu0 0.0
  %4134 = vmatpush1.msra.mxu0 0.0
  %4135 = vmatprep.subr.mxu0 0.0
  %4136 = vmatpush1.msra.mxu0 0.0
  %4137 = vmatprep.subr.mxu0 0.0
  %4138 = vmatpush1.msra.mxu0 0.0
  %4139 = vmatprep.subr.mxu0 0.0
  %4140 = vmatpush1.msra.mxu0 0.0
  %4141 = vmatprep.subr.mxu0 0.0
  %4142 = vmatpush1.msra.mxu0 0.0
  %4143 = vmatprep.subr.mxu0 0.0
  %4144 = vmatpush1.msra.mxu0 0.0
  %4145 = vmatprep.subr.mxu0 0.0
  %4146 = vmatpush1.msra.mxu0 %v486
  %4147 = vmatprep.subr.mxu0 0.0
  %4148 = vmatpush1.msra.mxu0 %v485
  %4149 = vmatprep.subr.mxu0 0.0
  %4150 = vmatpush1.msra.mxu0 %v484
  %4151 = vmatprep.subr.mxu0 0.0
  %4152 = vmatpush1.msra.mxu0 %v483
  %4153 = vmatprep.subr.mxu0 0.0
  %4154 = vmatpush2.msra.mxu0 0.0
  %4155 = vmatprep.subr.mxu0 0.0
  %4156 = vmatpush2.msra.mxu0 0.0
  %4157 = vmatprep.subr.mxu0 0.0
  %4158 = vmatpush2.msra.mxu0 0.0
  %4159 = vmatprep.subr.mxu0 0.0
  %4160 = vmatpush2.msra.mxu0 0.0
  %4161 = vmatprep.subr.mxu0 0.0
  %4162 = vmatpush2.msra.mxu0 0.0
  %4163 = vmatprep.subr.mxu0 0.0
  %4164 = vmatpush2.msra.mxu0 0.0
  %4165 = vmatprep.subr.mxu0 0.0
  %4166 = vmatpush2.msra.mxu0 0.0
  %4167 = vmatprep.subr.mxu0 0.0
  %4168 = vmatpush2.msra.mxu0 0.0
  %4169 = vmatprep.subr.mxu0 0.0
  %4170 = vmatpush2.msra.mxu0 0.0
  %4171 = vmatprep.subr.mxu0 0.0
  %4172 = vmatpush2.msra.mxu0 0.0
  %4173 = vmatprep.subr.mxu0 0.0
  %4174 = vmatpush2.msra.mxu0 0.0
  %4175 = vmatprep.subr.mxu0 0.0
  %4176 = vmatpush2.msra.mxu0 0.0
  %4177 = vmatprep.subr.mxu0 0.0
  %4178 = vmatpush2.msra.mxu0 0.0
  %4179 = vmatprep.subr.mxu0 0.0
  %4180 = vmatpush2.msra.mxu0 0.0
  %4181 = vmatprep.subr.mxu0 0.0
  %4182 = vmatpush2.msra.mxu0 0.0
  %4183 = vmatprep.subr.mxu0 0.0
  %4184 = vmatpush2.msra.mxu0 0.0
  %4185 = vmatprep.mubr.f32.mxu0 0.0
  %4186 = vmatmul.mubr.f32.gmra.mxu0 %v3963
  %v4187 = vpop.f32.mrf.mxu0
  %v4188 = vadd.f32 %v689, %v4187
  %v4189 = vpop.f32.mrf.mxu0
  %4190 = vdwg.mxu0
  %v4191 = vmul.f32 %v4042, %v4188
  %v4192 = vadd.f32 %v3961, %v4191
  %v4193 = vtanh.pop %v4192
  %v4194 = vsub.f32 1.0, %v4120
  %v4195 = vmul.f32 %v4194, %v4193
  %v4196 = vmul.f32 %v4120, %v3709
  %v4197 = vadd.f32 %v4195, %v4196
  %v4198 = vld [vmem:[#allocation3] sm:$0xff]
  %v4199 = vld [vmem:[%s398] sm:$0xff]
  %v4200 = vld [vmem:[%s464] sm:$0xff]
  %v4202 = vsel %vm63, %v3951, 0
  %4204 = vmatprep.subr.mxu0 0.0
  %4205 = vmatpush1.msra.mxu0 0.0
  %4206 = vmatprep.subr.mxu0 0.0
  %4207 = vmatpush1.msra.mxu0 0.0
  %4208 = vmatprep.subr.mxu0 0.0
  %4209 = vmatpush1.msra.mxu0 0.0
  %4210 = vmatprep.subr.mxu0 0.0
  %4211 = vmatpush1.msra.mxu0 0.0
  %4212 = vmatprep.subr.mxu0 0.0
  %4213 = vmatpush1.msra.mxu0 0.0
  %4214 = vmatprep.subr.mxu0 0.0
  %4215 = vmatpush1.msra.mxu0 0.0
  %4216 = vmatprep.subr.mxu0 0.0
  %4217 = vmatpush1.msra.mxu0 0.0
  %4218 = vmatprep.subr.mxu0 0.0
  %4219 = vmatpush1.msra.mxu0 0.0
  %4220 = vmatprep.subr.mxu0 0.0
  %4221 = vmatpush1.msra.mxu0 0.0
  %4222 = vmatprep.subr.mxu0 0.0
  %4223 = vmatpush1.msra.mxu0 0.0
  %4224 = vmatprep.subr.mxu0 0.0
  %4225 = vmatpush1.msra.mxu0 0.0
  %4226 = vmatprep.subr.mxu0 0.0
  %4227 = vmatpush1.msra.mxu0 0.0
  %4228 = vmatprep.subr.mxu0 0.0
  %4229 = vmatpush1.msra.mxu0 %v495
  %4230 = vmatprep.subr.mxu0 0.0
  %4231 = vmatpush1.msra.mxu0 %v494
  %4232 = vmatprep.subr.mxu0 0.0
  %4233 = vmatpush1.msra.mxu0 %v493
  %4234 = vmatprep.subr.mxu0 0.0
  %4235 = vmatpush1.msra.mxu0 %v492
  %4236 = vmatprep.subr.mxu0 0.0
  %4237 = vmatpush2.msra.mxu0 0.0
  %4238 = vmatprep.subr.mxu0 0.0
  %4239 = vmatpush2.msra.mxu0 0.0
  %4240 = vmatprep.subr.mxu0 0.0
  %4241 = vmatpush2.msra.mxu0 0.0
  %4242 = vmatprep.subr.mxu0 0.0
  %4243 = vmatpush2.msra.mxu0 0.0
  %4244 = vmatprep.subr.mxu0 0.0
  %4245 = vmatpush2.msra.mxu0 0.0
  %4246 = vmatprep.subr.mxu0 0.0
  %4247 = vmatpush2.msra.mxu0 0.0
  %4248 = vmatprep.subr.mxu0 0.0
  %4249 = vmatpush2.msra.mxu0 0.0
  %4250 = vmatprep.subr.mxu0 0.0
  %4251 = vmatpush2.msra.mxu0 0.0
  %4252 = vmatprep.subr.mxu0 0.0
  %4253 = vmatpush2.msra.mxu0 0.0
  %4254 = vmatprep.subr.mxu0 0.0
  %4255 = vmatpush2.msra.mxu0 0.0
  %4256 = vmatprep.subr.mxu0 0.0
  %4257 = vmatpush2.msra.mxu0 0.0
  %4258 = vmatprep.subr.mxu0 0.0
  %4259 = vmatpush2.msra.mxu0 0.0
  %4260 = vmatprep.subr.mxu0 0.0
  %4261 = vmatpush2.msra.mxu0 0.0
  %4262 = vmatprep.subr.mxu0 0.0
  %4263 = vmatpush2.msra.mxu0 0.0
  %4264 = vmatprep.subr.mxu0 0.0
  %4265 = vmatpush2.msra.mxu0 0.0
  %4266 = vmatprep.subr.mxu0 0.0
  %4267 = vmatpush2.msra.mxu0 0.0
  %4268 = vmatprep.mubr.f32.mxu0 0.0
  %4269 = vmatmul.mubr.f32.gmra.mxu0 %v4202
  %v4270 = vpop.f32.mrf.mxu0
  %v4271 = vadd.f32 0.0, %v4270
  %v4272 = vpop.f32.mrf.mxu0
  %4273 = vdwg.mxu0
  %v4274 = vadd.f32 %v4198, %v4271
  %v4275 = vadd.f32 %v4274, %v849
  %v4276 = vxor.u32 %v4275, 2147483648
  %v4277 = vmul.f32 %v4276, 1.442695
  %v4278 = vpow.pop %v4277
  %v4279 = vadd.f32 %v4278, 1.0
  %v4280 = vrcp.pop %v4279
  %v4281 = vmul.f32 1.0, %v4280
  %4282 = vmatprep.subr.mxu0 0.0
  %4283 = vmatpush1.msra.mxu0 0.0
  %4284 = vmatprep.subr.mxu0 0.0
  %4285 = vmatpush1.msra.mxu0 0.0
  %4286 = vmatprep.subr.mxu0 0.0
  %4287 = vmatpush1.msra.mxu0 0.0
  %4288 = vmatprep.subr.mxu0 0.0
  %4289 = vmatpush1.msra.mxu0 0.0
  %4290 = vmatprep.subr.mxu0 0.0
  %4291 = vmatpush1.msra.mxu0 0.0
  %4292 = vmatprep.subr.mxu0 0.0
  %4293 = vmatpush1.msra.mxu0 0.0
  %4294 = vmatprep.subr.mxu0 0.0
  %4295 = vmatpush1.msra.mxu0 0.0
  %4296 = vmatprep.subr.mxu0 0.0
  %4297 = vmatpush1.msra.mxu0 0.0
  %4298 = vmatprep.subr.mxu0 0.0
  %4299 = vmatpush1.msra.mxu0 0.0
  %4300 = vmatprep.subr.mxu0 0.0
  %4301 = vmatpush1.msra.mxu0 0.0
  %4302 = vmatprep.subr.mxu0 0.0
  %4303 = vmatpush1.msra.mxu0 0.0
  %4304 = vmatprep.subr.mxu0 0.0
  %4305 = vmatpush1.msra.mxu0 0.0
  %4306 = vmatprep.subr.mxu0 0.0
  %4307 = vmatpush1.msra.mxu0 %v500
  %4308 = vmatprep.subr.mxu0 0.0
  %4309 = vmatpush1.msra.mxu0 %v499
  %4310 = vmatprep.subr.mxu0 0.0
  %4311 = vmatpush1.msra.mxu0 %v498
  %4312 = vmatprep.subr.mxu0 0.0
  %4313 = vmatpush1.msra.mxu0 %v497
  %4314 = vmatprep.subr.mxu0 0.0
  %4315 = vmatpush2.msra.mxu0 0.0
  %4316 = vmatprep.subr.mxu0 0.0
  %4317 = vmatpush2.msra.mxu0 0.0
  %4318 = vmatprep.subr.mxu0 0.0
  %4319 = vmatpush2.msra.mxu0 0.0
  %4320 = vmatprep.subr.mxu0 0.0
  %4321 = vmatpush2.msra.mxu0 0.0
  %4322 = vmatprep.subr.mxu0 0.0
  %4323 = vmatpush2.msra.mxu0 0.0
  %4324 = vmatprep.subr.mxu0 0.0
  %4325 = vmatpush2.msra.mxu0 0.0
  %4326 = vmatprep.subr.mxu0 0.0
  %4327 = vmatpush2.msra.mxu0 0.0
  %4328 = vmatprep.subr.mxu0 0.0
  %4329 = vmatpush2.msra.mxu0 0.0
  %4330 = vmatprep.subr.mxu0 0.0
  %4331 = vmatpush2.msra.mxu0 0.0
  %4332 = vmatprep.subr.mxu0 0.0
  %4333 = vmatpush2.msra.mxu0 0.0
  %4334 = vmatprep.subr.mxu0 0.0
  %4335 = vmatpush2.msra.mxu0 0.0
  %4336 = vmatprep.subr.mxu0 0.0
  %4337 = vmatpush2.msra.mxu0 0.0
  %4338 = vmatprep.subr.mxu0 0.0
  %4339 = vmatpush2.msra.mxu0 0.0
  %4340 = vmatprep.subr.mxu0 0.0
  %4341 = vmatpush2.msra.mxu0 0.0
  %4342 = vmatprep.subr.mxu0 0.0
  %4343 = vmatpush2.msra.mxu0 0.0
  %4344 = vmatprep.subr.mxu0 0.0
  %4345 = vmatpush2.msra.mxu0 0.0
  %4346 = vmatprep.mubr.f32.mxu0 0.0
  %4347 = vmatmul.mubr.f32.gmra.mxu0 %v4202
  %v4348 = vpop.f32.mrf.mxu0
  %v4349 = vadd.f32 0.0, %v4348
  %v4350 = vpop.f32.mrf.mxu0
  %4351 = vdwg.mxu0
  %v4352 = vadd.f32 %v4199, %v4349
  %v4353 = vadd.f32 %v4352, %v933
  %v4354 = vxor.u32 %v4353, 2147483648
  %v4355 = vmul.f32 %v4354, 1.442695
  %v4356 = vpow.pop %v4355
  %v4357 = vadd.f32 %v4356, 1.0
  %v4358 = vrcp.pop %v4357
  %v4359 = vmul.f32 1.0, %v4358
  %4360 = vmatprep.subr.mxu0 0.0
  %4361 = vmatpush1.msra.mxu0 0.0
  %4362 = vmatprep.subr.mxu0 0.0
  %4363 = vmatpush1.msra.mxu0 0.0
  %4364 = vmatprep.subr.mxu0 0.0
  %4365 = vmatpush1.msra.mxu0 0.0
  %4366 = vmatprep.subr.mxu0 0.0
  %4367 = vmatpush1.msra.mxu0 0.0
  %4368 = vmatprep.subr.mxu0 0.0
  %4369 = vmatpush1.msra.mxu0 0.0
  %4370 = vmatprep.subr.mxu0 0.0
  %4371 = vmatpush1.msra.mxu0 0.0
  %4372 = vmatprep.subr.mxu0 0.0
  %4373 = vmatpush1.msra.mxu0 0.0
  %4374 = vmatprep.subr.mxu0 0.0
  %4375 = vmatpush1.msra.mxu0 0.0
  %4376 = vmatprep.subr.mxu0 0.0
  %4377 = vmatpush1.msra.mxu0 0.0
  %4378 = vmatprep.subr.mxu0 0.0
  %4379 = vmatpush1.msra.mxu0 0.0
  %4380 = vmatprep.subr.mxu0 0.0
  %4381 = vmatpush1.msra.mxu0 0.0
  %4382 = vmatprep.subr.mxu0 0.0
  %4383 = vmatpush1.msra.mxu0 0.0
  %4384 = vmatprep.subr.mxu0 0.0
  %4385 = vmatpush1.msra.mxu0 %v505
  %4386 = vmatprep.subr.mxu0 0.0
  %4387 = vmatpush1.msra.mxu0 %v504
  %4388 = vmatprep.subr.mxu0 0.0
  %4389 = vmatpush1.msra.mxu0 %v503
  %4390 = vmatprep.subr.mxu0 0.0
  %4391 = vmatpush1.msra.mxu0 %v502
  %4392 = vmatprep.subr.mxu0 0.0
  %4393 = vmatpush2.msra.mxu0 0.0
  %4394 = vmatprep.subr.mxu0 0.0
  %4395 = vmatpush2.msra.mxu0 0.0
  %4396 = vmatprep.subr.mxu0 0.0
  %4397 = vmatpush2.msra.mxu0 0.0
  %4398 = vmatprep.subr.mxu0 0.0
  %4399 = vmatpush2.msra.mxu0 0.0
  %4400 = vmatprep.subr.mxu0 0.0
  %4401 = vmatpush2.msra.mxu0 0.0
  %4402 = vmatprep.subr.mxu0 0.0
  %4403 = vmatpush2.msra.mxu0 0.0
  %4404 = vmatprep.subr.mxu0 0.0
  %4405 = vmatpush2.msra.mxu0 0.0
  %4406 = vmatprep.subr.mxu0 0.0
  %4407 = vmatpush2.msra.mxu0 0.0
  %4408 = vmatprep.subr.mxu0 0.0
  %4409 = vmatpush2.msra.mxu0 0.0
  %4410 = vmatprep.subr.mxu0 0.0
  %4411 = vmatpush2.msra.mxu0 0.0
  %4412 = vmatprep.subr.mxu0 0.0
  %4413 = vmatpush2.msra.mxu0 0.0
  %4414 = vmatprep.subr.mxu0 0.0
  %4415 = vmatpush2.msra.mxu0 0.0
  %4416 = vmatprep.subr.mxu0 0.0
  %4417 = vmatpush2.msra.mxu0 0.0
  %4418 = vmatprep.subr.mxu0 0.0
  %4419 = vmatpush2.msra.mxu0 0.0
  %4420 = vmatprep.subr.mxu0 0.0
  %4421 = vmatpush2.msra.mxu0 0.0
  %4422 = vmatprep.subr.mxu0 0.0
  %4423 = vmatpush2.msra.mxu0 0.0
  %4424 = vmatprep.mubr.f32.mxu0 0.0
  %4425 = vmatmul.mubr.f32.gmra.mxu0 %v4202
  %v4426 = vpop.f32.mrf.mxu0
  %v4427 = vadd.f32 %v946, %v4426
  %v4428 = vpop.f32.mrf.mxu0
  %4429 = vdwg.mxu0
  %v4430 = vmul.f32 %v4281, %v4427
  %v4431 = vadd.f32 %v4200, %v4430
  %v4432 = vtanh.pop %v4431
  %v4433 = vsub.f32 1.0, %v4359
  %v4434 = vmul.f32 %v4433, %v4432
  %v4435 = vmul.f32 %v4359, %v3951
  %v4436 = vadd.f32 %v4434, %v4435
  %s4437 = scalar_lea.vmem [#allocation4], 56
  %4438 = vst.msk [vmem:[%s4437] sm:$0xff] %vm63, %v4197
  %4439 = vst.msk [vmem:[#allocation5] sm:$0xff] %vm63, %v4436
  %v4440 = vld [vmem:[#allocation4] sm:$0xff]
  %v4441 = vld [vmem:[#allocation4 + $0x8] sm:$0xff]
  %v4442 = vld [vmem:[#allocation4 + $0x10] sm:$0xff]
  %v4443 = vld [vmem:[#allocation4 + $0x18] sm:$0xff]
  %v4444 = vld [vmem:[#allocation4 + $0x20] sm:$0xff]
  %v4445 = vld [vmem:[#allocation4 + $0x28] sm:$0xff]
  %v4446 = vld [vmem:[#allocation4 + $0x30] sm:$0xff]
  %v4447 = vld [vmem:[#allocation4 + $0x38] sm:$0xff]
  %v4448 = vld [vmem:[#allocation5] sm:$0xff]
  %v4449 = vld [vmem:[#allocation5 + $0x8] sm:$0xff]
  %v4450 = vld [vmem:[#allocation5 + $0x10] sm:$0xff]
  %v4451 = vld [vmem:[#allocation5 + $0x18] sm:$0xff]
  %v4452 = vld [vmem:[#allocation5 + $0x20] sm:$0xff]
  %v4453 = vld [vmem:[#allocation5 + $0x28] sm:$0xff]
  %v4454 = vld [vmem:[#allocation5 + $0x30] sm:$0xff]
  %v4455 = vld [vmem:[#allocation5 + $0x38] sm:$0xff]
  %4464 = vrot.lane.b32.xlu0 %v4448, 32
  %v4465 = vpop.permute.xlu0 %4464
  %4466 = vrot.lane.b32.xlu0 %v4449, 32
  %v4467 = vpop.permute.xlu0 %4466
  %4468 = vrot.lane.b32.xlu0 %v4450, 32
  %v4469 = vpop.permute.xlu0 %4468
  %4470 = vrot.lane.b32.xlu0 %v4451, 32
  %v4471 = vpop.permute.xlu0 %4470
  %4472 = vrot.lane.b32.xlu0 %v4452, 32
  %v4473 = vpop.permute.xlu0 %4472
  %4474 = vrot.lane.b32.xlu0 %v4453, 32
  %v4475 = vpop.permute.xlu0 %4474
  %4476 = vrot.lane.b32.xlu0 %v4454, 32
  %v4477 = vpop.permute.xlu0 %4476
  %4478 = vrot.lane.b32.xlu0 %v4455, 32
  %v4479 = vpop.permute.xlu0 %4478
  %v4488 = vsel %vm63, %v4440, %v4465
  %v4489 = vsel %vm63, %v4441, %v4467
  %v4490 = vsel %vm63, %v4442, %v4469
  %v4491 = vsel %vm63, %v4443, %v4471
  %v4492 = vsel %vm63, %v4444, %v4473
  %v4493 = vsel %vm63, %v4445, %v4475
  %v4494 = vsel %vm63, %v4446, %v4477
  %v4495 = vsel %vm63, %v4447, %v4479
  %v4496 = vld [vmem:[%s10] sm:$0xff]
  %v4497 = vld [vmem:[%s10 + $0x8] sm:$0xff]
  %v4498 = vld [vmem:[%s10 + $0x10] sm:$0xff]
  %v4499 = vld [vmem:[%s10 + $0x18] sm:$0xff]
  %v4500 = vld [vmem:[%s10 + $0x20] sm:$0xff]
  %v4501 = vld [vmem:[%s10 + $0x28] sm:$0xff]
  %v4502 = vld [vmem:[%s10 + $0x30] sm:$0xff]
  %v4503 = vld [vmem:[%s10 + $0x38] sm:$0xff]
  %v4504 = vld [vmem:[%s11] sm:$0x1]
  %v4506 = vlaneseq
  %v4507 = vshrl.u32 %v4506, 7
  %v4508 = vsub.s32 0, %v4507
  %v4509 = vrot.slane %v4504, %v4508
  %vm4511 = vcmask 523264
  %v4513 = vsel %vm4511, %v4488, 0
  %v4516 = vsel %vm4511, %v4489, 0
  %v4519 = vsel %vm4511, %v4490, 0
  %v4522 = vsel %vm4511, %v4491, 0
  %v4525 = vsel %vm4511, %v4492, 0
  %v4528 = vsel %vm4511, %v4493, 0
  %v4531 = vsel %vm4511, %v4494, 0
  %v4534 = vsel %vm4511, %v4495, 0
  %4536 = vmatprep.subr.mxu0 0.0
  %4537 = vmatpush1.msra.mxu0 0.0
  %4538 = vmatprep.subr.mxu0 0.0
  %4539 = vmatpush1.msra.mxu0 0.0
  %4540 = vmatprep.subr.mxu0 0.0
  %4541 = vmatpush1.msra.mxu0 0.0
  %4542 = vmatprep.subr.mxu0 0.0
  %4543 = vmatpush1.msra.mxu0 0.0
  %4544 = vmatprep.subr.mxu0 0.0
  %4545 = vmatpush1.msra.mxu0 0.0
  %4546 = vmatprep.subr.mxu0 0.0
  %4547 = vmatpush1.msra.mxu0 0.0
  %4548 = vmatprep.subr.mxu0 0.0
  %4549 = vmatpush1.msra.mxu0 0.0
  %4550 = vmatprep.subr.mxu0 0.0
  %4551 = vmatpush1.msra.mxu0 0.0
  %4552 = vmatprep.subr.mxu0 0.0
  %4553 = vmatpush1.msra.mxu0 %v4503
  %4554 = vmatprep.subr.mxu0 0.0
  %4555 = vmatpush1.msra.mxu0 %v4502
  %4556 = vmatprep.subr.mxu0 0.0
  %4557 = vmatpush1.msra.mxu0 %v4501
  %4558 = vmatprep.subr.mxu0 0.0
  %4559 = vmatpush1.msra.mxu0 %v4500
  %4560 = vmatprep.subr.mxu0 0.0
  %4561 = vmatpush1.msra.mxu0 %v4499
  %4562 = vmatprep.subr.mxu0 0.0
  %4563 = vmatpush1.msra.mxu0 %v4498
  %4564 = vmatprep.subr.mxu0 0.0
  %4565 = vmatpush1.msra.mxu0 %v4497
  %4566 = vmatprep.subr.mxu0 0.0
  %4567 = vmatpush1.msra.mxu0 %v4496
  %4568 = vmatprep.subr.mxu0 0.0
  %4569 = vmatpush2.msra.mxu0 0.0
  %4570 = vmatprep.subr.mxu0 0.0
  %4571 = vmatpush2.msra.mxu0 0.0
  %4572 = vmatprep.subr.mxu0 0.0
  %4573 = vmatpush2.msra.mxu0 0.0
  %4574 = vmatprep.subr.mxu0 0.0
  %4575 = vmatpush2.msra.mxu0 0.0
  %4576 = vmatprep.subr.mxu0 0.0
  %4577 = vmatpush2.msra.mxu0 0.0
  %4578 = vmatprep.subr.mxu0 0.0
  %4579 = vmatpush2.msra.mxu0 0.0
  %4580 = vmatprep.subr.mxu0 0.0
  %4581 = vmatpush2.msra.mxu0 0.0
  %4582 = vmatprep.subr.mxu0 0.0
  %4583 = vmatpush2.msra.mxu0 0.0
  %4584 = vmatprep.subr.mxu0 0.0
  %4585 = vmatpush2.msra.mxu0 0.0
  %4586 = vmatprep.subr.mxu0 0.0
  %4587 = vmatpush2.msra.mxu0 0.0
  %4588 = vmatprep.subr.mxu0 0.0
  %4589 = vmatpush2.msra.mxu0 0.0
  %4590 = vmatprep.subr.mxu0 0.0
  %4591 = vmatpush2.msra.mxu0 0.0
  %4592 = vmatprep.subr.mxu0 0.0
  %4593 = vmatpush2.msra.mxu0 0.0
  %4594 = vmatprep.subr.mxu0 0.0
  %4595 = vmatpush2.msra.mxu0 0.0
  %4596 = vmatprep.subr.mxu0 0.0
  %4597 = vmatpush2.msra.mxu0 0.0
  %4598 = vmatprep.subr.mxu0 0.0
  %4599 = vmatpush2.msra.mxu0 0.0
  %4600 = vmatprep.mubr.f32.mxu0 0.0
  %4601 = vmatmul.mubr.f32.gmra.mxu0 %v4513
  %v4602 = vpop.f32.mrf.mxu0
  %v4603 = vadd.f32 %v4509, %v4602
  %v4604 = vpop.f32.mrf.mxu0
  %4605 = vmatprep.mubr.f32.mxu0 0.0
  %4606 = vmatmul.mubr.f32.gmra.mxu0 %v4516
  %v4607 = vpop.f32.mrf.mxu0
  %v4608 = vadd.f32 %v4509, %v4607
  %v4609 = vpop.f32.mrf.mxu0
  %4610 = vmatprep.mubr.f32.mxu0 0.0
  %4611 = vmatmul.mubr.f32.gmra.mxu0 %v4519
  %v4612 = vpop.f32.mrf.mxu0
  %v4613 = vadd.f32 %v4509, %v4612
  %v4614 = vpop.f32.mrf.mxu0
  %4615 = vmatprep.mubr.f32.mxu0 0.0
  %4616 = vmatmul.mubr.f32.gmra.mxu0 %v4522
  %v4617 = vpop.f32.mrf.mxu0
  %v4618 = vadd.f32 %v4509, %v4617
  %v4619 = vpop.f32.mrf.mxu0
  %4620 = vmatprep.mubr.f32.mxu0 0.0
  %4621 = vmatmul.mubr.f32.gmra.mxu0 %v4525
  %v4622 = vpop.f32.mrf.mxu0
  %v4623 = vadd.f32 %v4509, %v4622
  %v4624 = vpop.f32.mrf.mxu0
  %4625 = vmatprep.mubr.f32.mxu0 0.0
  %4626 = vmatmul.mubr.f32.gmra.mxu0 %v4528
  %v4627 = vpop.f32.mrf.mxu0
  %v4628 = vadd.f32 %v4509, %v4627
  %v4629 = vpop.f32.mrf.mxu0
  %4630 = vmatprep.mubr.f32.mxu0 0.0
  %4631 = vmatmul.mubr.f32.gmra.mxu0 %v4531
  %v4632 = vpop.f32.mrf.mxu0
  %v4633 = vadd.f32 %v4509, %v4632
  %v4634 = vpop.f32.mrf.mxu0
  %4635 = vmatprep.mubr.f32.mxu0 0.0
  %4636 = vmatmul.mubr.f32.gmra.mxu0 %v4534
  %v4637 = vpop.f32.mrf.mxu0
  %v4638 = vadd.f32 %v4509, %v4637
  %v4639 = vpop.f32.mrf.mxu0
  %4640 = vdwg.mxu0
  %v4641 = vtanh.pop %v4603
  %v4642 = vtanh.pop %v4608
  %v4643 = vtanh.pop %v4613
  %v4644 = vtanh.pop %v4618
  %v4645 = vtanh.pop %v4623
  %v4646 = vtanh.pop %v4628
  %v4647 = vtanh.pop %v4633
  %v4648 = vtanh.pop %v4638
  %v4649 = vld [vmem:[%s12] sm:$0x1]
  %v4651 = vlaneseq
  %v4652 = vshrl.u32 %v4651, 7
  %v4653 = vsub.s32 0, %v4652
  %v4654 = vrot.slane %v4649, %v4653
  %v4656 = vmul.f32 %v4641, %v4654
  %v4657 = vmul.f32 %v4642, %v4654
  %v4658 = vmul.f32 %v4643, %v4654
  %v4659 = vmul.f32 %v4644, %v4654
  %v4660 = vmul.f32 %v4645, %v4654
  %v4661 = vmul.f32 %v4646, %v4654
  %v4662 = vmul.f32 %v4647, %v4654
  %v4663 = vmul.f32 %v4648, %v4654
  %v4664 = vsel %vm4511, %v4656, 0.0
  %4665 = vadd.xlane.f32.xlu0 %v4664
  %v4666 = vpop.xlane.xlu0 %4665
  %v4667 = vsel %vm4511, %v4657, 0.0
  %4668 = vadd.xlane.f32.xlu0 %v4667
  %v4669 = vpop.xlane.xlu0 %4668
  %v4670 = vsel %vm4511, %v4658, 0.0
  %4671 = vadd.xlane.f32.xlu0 %v4670
  %v4672 = vpop.xlane.xlu0 %4671
  %v4673 = vsel %vm4511, %v4659, 0.0
  %4674 = vadd.xlane.f32.xlu0 %v4673
  %v4675 = vpop.xlane.xlu0 %4674
  %v4676 = vsel %vm4511, %v4660, 0.0
  %4677 = vadd.xlane.f32.xlu0 %v4676
  %v4678 = vpop.xlane.xlu0 %4677
  %v4679 = vsel %vm4511, %v4661, 0.0
  %4680 = vadd.xlane.f32.xlu0 %v4679
  %v4681 = vpop.xlane.xlu0 %4680
  %v4682 = vsel %vm4511, %v4662, 0.0
  %4683 = vadd.xlane.f32.xlu0 %v4682
  %v4684 = vpop.xlane.xlu0 %4683
  %v4685 = vsel %vm4511, %v4663, 0.0
  %4686 = vadd.xlane.f32.xlu0 %v4685
  %v4687 = vpop.xlane.xlu0 %4686
  %v4688 = vmax.f32 %v4666, %v4678
  %v4689 = vmax.f32 %v4669, %v4681
  %v4690 = vmax.f32 %v4672, %v4684
  %v4691 = vmax.f32 %v4675, %v4687
  %v4692 = vmax.f32 %v4688, %v4689
  %v4693 = vmax.f32 %v4690, %v4691
  %v4694 = vmax.f32 %v4692, %v4693
  %v4695 = vsub.f32 %v4666, %v4694
  %v4696 = vsub.f32 %v4669, %v4694
  %v4697 = vsub.f32 %v4672, %v4694
  %v4698 = vsub.f32 %v4675, %v4694
  %v4699 = vsub.f32 %v4678, %v4694
  %v4700 = vsub.f32 %v4681, %v4694
  %v4701 = vsub.f32 %v4684, %v4694
  %v4702 = vsub.f32 %v4687, %v4694
  %v4703 = vmul.f32 %v4695, 1.442695
  %v4704 = vpow.pop %v4703
  %v4705 = vmul.f32 %v4696, 1.442695
  %v4706 = vpow.pop %v4705
  %v4707 = vmul.f32 %v4697, 1.442695
  %v4708 = vpow.pop %v4707
  %v4709 = vmul.f32 %v4698, 1.442695
  %v4710 = vpow.pop %v4709
  %v4711 = vmul.f32 %v4699, 1.442695
  %v4712 = vpow.pop %v4711
  %v4713 = vmul.f32 %v4700, 1.442695
  %v4714 = vpow.pop %v4713
  %v4715 = vmul.f32 %v4701, 1.442695
  %v4716 = vpow.pop %v4715
  %v4717 = vmul.f32 %v4702, 1.442695
  %v4718 = vpow.pop %v4717
  %v4719 = vadd.f32 %v4704, %v4706
  %v4720 = vadd.f32 %v4719, %v4708
  %v4721 = vadd.f32 %v4720, %v4710
  %v4722 = vadd.f32 %v4721, %v4712
  %v4723 = vadd.f32 %v4722, %v4714
  %v4724 = vadd.f32 %v4723, %v4716
  %v4725 = vadd.f32 %v4724, %v4718
  %v4726 = vrcp.pop %v4725
  %v4727 = vmul.f32 %v4704, %v4726
  %v4728 = vmul.f32 %v4706, %v4726
  %v4729 = vmul.f32 %v4708, %v4726
  %v4730 = vmul.f32 %v4710, %v4726
  %v4731 = vmul.f32 %v4712, %v4726
  %v4732 = vmul.f32 %v4714, %v4726
  %v4733 = vmul.f32 %v4716, %v4726
  %v4734 = vmul.f32 %v4718, %v4726
  %v4735 = vld [vmem:[%s1] sm:$0xff]
  %v4736 = vld [vmem:[%s1 + $0x8] sm:$0xff]
  %v4737 = vld [vmem:[%s1 + $0x10] sm:$0xff]
  %v4738 = vld [vmem:[%s1 + $0x18] sm:$0xff]
  %v4739 = vld [vmem:[%s1 + $0x20] sm:$0xff]
  %v4740 = vld [vmem:[%s1 + $0x28] sm:$0xff]
  %v4741 = vld [vmem:[%s1 + $0x30] sm:$0xff]
  %v4742 = vld [vmem:[%s1 + $0x38] sm:$0xff]
  %vm4743 = vcmp.ne.f32.partialorder %v4735, 0.0
  %vm4744 = vcmp.ne.f32.partialorder %v4736, 0.0
  %vm4745 = vcmp.ne.f32.partialorder %v4737, 0.0
  %vm4746 = vcmp.ne.f32.partialorder %v4738, 0.0
  %vm4747 = vcmp.ne.f32.partialorder %v4739, 0.0
  %vm4748 = vcmp.ne.f32.partialorder %v4740, 0.0
  %vm4749 = vcmp.ne.f32.partialorder %v4741, 0.0
  %vm4750 = vcmp.ne.f32.partialorder %v4742, 0.0
  %v4751 = vsel %vm4743, %v4727, 0.0
  %v4752 = vsel %vm4744, %v4728, 0.0
  %v4753 = vsel %vm4745, %v4729, 0.0
  %v4754 = vsel %vm4746, %v4730, 0.0
  %v4755 = vsel %vm4747, %v4731, 0.0
  %v4756 = vsel %vm4748, %v4732, 0.0
  %v4757 = vsel %vm4749, %v4733, 0.0
  %v4758 = vsel %vm4750, %v4734, 0.0
  %vm4759 = vcmask 7168
  %v4760 = vsel %vm4759, %v4751, 0.0
  %v4761 = vsel %vm4759, %v4752, 0.0
  %v4762 = vadd.f32 %v4760, %v4761
  %v4763 = vsel %vm4759, %v4753, 0.0
  %v4764 = vadd.f32 %v4762, %v4763
  %v4765 = vsel %vm4759, %v4754, 0.0
  %v4766 = vadd.f32 %v4764, %v4765
  %v4767 = vsel %vm4759, %v4755, 0.0
  %v4768 = vadd.f32 %v4766, %v4767
  %v4769 = vsel %vm4759, %v4756, 0.0
  %v4770 = vadd.f32 %v4768, %v4769
  %v4771 = vsel %vm4759, %v4757, 0.0
  %v4772 = vadd.f32 %v4770, %v4771
  %v4773 = vsel %vm4759, %v4758, 0.0
  %v4774 = vadd.f32 %v4772, %v4773
  %v4775 = vadd.f32 %v4774, 0.0001
  %v4776 = vrcp.pop %v4775
  %v4777 = vmul.f32 %v4751, %v4776
  %v4778 = vmul.f32 %v4752, %v4776
  %v4779 = vmul.f32 %v4753, %v4776
  %v4780 = vmul.f32 %v4754, %v4776
  %v4781 = vmul.f32 %v4755, %v4776
  %v4782 = vmul.f32 %v4756, %v4776
  %v4783 = vmul.f32 %v4757, %v4776
  %v4784 = vmul.f32 %v4758, %v4776
  %4786 = vset.pattern.permute.xlu0 0
  %4787 = vperm.xlu0 %4786, %v4777
  %v4788 = vpop.permute.xlu0 %4787
  %4791 = vset.pattern.permute.xlu0 0
  %4792 = vperm.xlu0 %4791, %v4778
  %v4793 = vpop.permute.xlu0 %4792
  %4796 = vset.pattern.permute.xlu0 0
  %4797 = vperm.xlu0 %4796, %v4779
  %v4798 = vpop.permute.xlu0 %4797
  %4801 = vset.pattern.permute.xlu0 0
  %4802 = vperm.xlu0 %4801, %v4780
  %v4803 = vpop.permute.xlu0 %4802
  %4806 = vset.pattern.permute.xlu0 0
  %4807 = vperm.xlu0 %4806, %v4781
  %v4808 = vpop.permute.xlu0 %4807
  %4811 = vset.pattern.permute.xlu0 0
  %4812 = vperm.xlu0 %4811, %v4782
  %v4813 = vpop.permute.xlu0 %4812
  %4816 = vset.pattern.permute.xlu0 0
  %4817 = vperm.xlu0 %4816, %v4783
  %v4818 = vpop.permute.xlu0 %4817
  %4821 = vset.pattern.permute.xlu0 0
  %4822 = vperm.xlu0 %4821, %v4784
  %v4823 = vpop.permute.xlu0 %4822
  %v4825 = vmul.f32 %v4488, %v4788
  %v4826 = vmul.f32 %v4489, %v4793
  %v4827 = vmul.f32 %v4490, %v4798
  %v4828 = vmul.f32 %v4491, %v4803
  %v4829 = vmul.f32 %v4492, %v4808
  %v4830 = vmul.f32 %v4493, %v4813
  %v4831 = vmul.f32 %v4494, %v4818
  %v4832 = vmul.f32 %v4495, %v4823
  %v4833 = vsel %vm4511, %v4825, 0.0
  %v4834 = vsel %vm4511, %v4826, 0.0
  %v4835 = vadd.f32 %v4833, %v4834
  %v4836 = vsel %vm4511, %v4827, 0.0
  %v4837 = vadd.f32 %v4835, %v4836
  %v4838 = vsel %vm4511, %v4828, 0.0
  %v4839 = vadd.f32 %v4837, %v4838
  %v4840 = vsel %vm4511, %v4829, 0.0
  %v4841 = vadd.f32 %v4839, %v4840
  %v4842 = vsel %vm4511, %v4830, 0.0
  %v4843 = vadd.f32 %v4841, %v4842
  %v4844 = vsel %vm4511, %v4831, 0.0
  %v4845 = vadd.f32 %v4843, %v4844
  %v4846 = vsel %vm4511, %v4832, 0.0
  %v4847 = vadd.f32 %v4845, %v4846
  %4848 = vst.msk [vmem:[%s13] sm:$0xff] %vm4511, %v4847
  // Predicated region
  $region54: #{han_forward.2} parent=0 // pred_check
    _
  $region55: #{han_forward.2} parent=0 // pred_check_branch
    %4850 = sbr.rel (0) target = $region57
  $region56: #{han_forward.2} parent=0 // pred_region
    _
  $region57: #{han_forward.2} parent=0 // pred_fallthru
    _
  // Predicated region
  $region58: #{han_forward.2} parent=0 // pred_check
    _
  $region59: #{han_forward.2} parent=0 // pred_check_branch
    %4852 = sbr.rel (0) target = $region61
  $region60: #{han_forward.2} parent=0 // pred_region
    _
  $region61: #{han_forward.2} parent=0 // pred_fallthru
    _

</llo_original>
